<compile_context>
chip_gen: v7x
topology: tpu7x:2x2x1
jax: 0.10.0
libtpu: 0.0.40
codegen_flags: <defaults>
</compile_context>

<pallas_src>
import functools

import jax
import jax.numpy as jnp
from jax import lax
from jax.experimental import pallas as pl
from jax.experimental.pallas import tpu as pltpu


HIDDEN = 48        # self.hidR
NUM_LAYERS = 2     # settings['lstm_layer']
GP = 128           # per-gate lane block (vreg-aligned)
G3 = 3 * GP        # fused r|z|n width


def _round_up(n, m):
    return (n + m - 1) // m * m


# ----------------------------- Pallas kernel -------------------------------


def gru_forward_kernel(x_ref, w_ref, b_ref, o_ref, gi_scratch,
                       *, output_len, hidden):
    """Whole forward pass in a single kernel invocation.

    x_ref:      (L, B, C_pad) time-major encoder input (feature-padded with zeros; pad timesteps
                are handled analytically, never materialized)
    w_ref:      (C_pad + 4H, 384) packed weights, rows:
                  [0:C_pad)          wih0   (gate g in lanes [g*128 : g*128+H])
                  [C_pad:C_pad+H)    whh0
                  [C_pad+H:C_pad+2H) wih1
                  [C_pad+2H:+3H)     whh1
                  [C_pad+3H:+4H)     wp     (live in lanes [0:out])
    b_ref:      (8, 384) packed biases: rows 0..3 = bih0,bhh0,bih1,bhh1 ; row 4 = bp (lanes [0:out])
    o_ref:      (output_len, B, out)   time-major output (wrapper transposes back)
    gi_scratch: (T, B, 384) VMEM scratch holding the layer-0 input-side gates for every timestep.
    """
    L, B, C_pad = x_ref.shape
    H = hidden
    T = L + output_len
    out_dim = o_ref.shape[2]

    OFF_WIH0 = 0
    OFF_WHH0 = C_pad
    OFF_WIH1 = C_pad + H
    OFF_WHH1 = C_pad + 2 * H
    OFF_WP = C_pad + 3 * H

    # ---- biases (hoisted; lane layout already r|z|n at 128-lane blocks) ----
    bih0 = b_ref[0:1, :]                                       # (1, 384)
    bhh0 = jnp.broadcast_to(b_ref[1:2, :], (B, G3))
    bih1 = jnp.broadcast_to(b_ref[2:3, :], (B, G3))
    bhh1 = jnp.broadcast_to(b_ref[3:4, :], (B, G3))
    bp = b_ref[4:5, :]                                         # (1, 384)

    # ---- prologue: batched layer-0 input projection for the L real timesteps (one MXU call) ----
    x_flat = x_ref[...].reshape(L * B, C_pad)                  # leading-dim merge: free
    wih0 = w_ref[OFF_WIH0:OFF_WIH0 + C_pad, :]
    gi_enc = jnp.dot(x_flat, wih0, preferred_element_type=jnp.float32) + bih0
    gi_scratch[0:L] = gi_enc.reshape(L, B, G3)
    # zero-pad steps (t >= L): x_t == 0, so the input-side gates collapse to the bias.
    gi_scratch[L:T] = jnp.broadcast_to(bih0.reshape(1, 1, G3), (T - L, B, G3))

    whh0 = w_ref[OFF_WHH0:OFF_WHH0 + H, :]
    wih1 = w_ref[OFF_WIH1:OFF_WIH1 + H, :]
    whh1 = w_ref[OFF_WHH1:OFF_WHH1 + H, :]

    def gru_update(gi, gh, h_prev):
        # each gate lives at a 128-lane boundary -> aligned slices, no lane rotates
        r = jax.nn.sigmoid(gi[:, 0:H] + gh[:, 0:H])
        z = jax.nn.sigmoid(gi[:, GP:GP + H] + gh[:, GP:GP + H])
        n = jnp.tanh(gi[:, 2 * GP:2 * GP + H] + r * gh[:, 2 * GP:2 * GP + H])
        return (1.0 - z) * n + z * h_prev

    h0 = jnp.zeros((B, H), jnp.float32)
    h1 = jnp.zeros((B, H), jnp.float32)
    last_h = []
    # static trip count, fully unrolled; only h0/h1 (and the last output_len h1's) are loop-carried
    # TODO(synk): if a bundle dump ever shows vreg spills here, switch to
    #             lax.fori_loop(..., unroll=True) over gi_scratch + an h VMEM scratch.
    for t in range(T):
        gi0 = gi_scratch[t]                                    # aligned leading-axis vld
        gh0 = jnp.dot(h0, whh0, preferred_element_type=jnp.float32) + bhh0
        h0 = gru_update(gi0, gh0, h0)

        gi1 = jnp.dot(h0, wih1, preferred_element_type=jnp.float32) + bih1
        gh1 = jnp.dot(h1, whh1, preferred_element_type=jnp.float32) + bhh1
        h1 = gru_update(gi1, gh1, h1)

        if t >= L:                                             # only the steps the module returns
            last_h.append(h1)

    # ---- epilogue: one batched projection + a single store (Dropout == identity in eval) ----
    h_stack = jnp.concatenate(last_h, axis=0)                  # (output_len*B, H), time-major
    wp = w_ref[OFF_WP:OFF_WP + H, :]
    proj = jnp.dot(h_stack, wp, preferred_element_type=jnp.float32) + bp    # (output_len*B, 384)
    o_ref[...] = proj[:, 0:out_dim].reshape(output_len, B, out_dim).astype(o_ref.dtype)


# ------------------------------ packing / wrapper ----------------------------


def pack_params(params, in_var, out_var):
    """Pack all weights into one (C_pad+4H, 384) array and all biases into one (8, 384) array.

    Gate order r|z|n, each gate padded to its own 128-lane block; wp/bp live in lanes [0:out_var].
    """
    H = HIDDEN
    C_pad = _round_up(in_var, 8)

    def place_gates(dst, row0, w3):                  # w3: (3, rows, H)
        rows = w3.shape[1]
        for g in range(3):
            dst = dst.at[row0:row0 + rows, g * GP:g * GP + H].set(w3[g])
        return dst

    W = jnp.zeros((C_pad + 4 * H, G3), jnp.float32)
    W = place_gates(W, 0, params["wih0"])
    W = place_gates(W, C_pad, params["whh0"])
    W = place_gates(W, C_pad + H, params["wih1"])
    W = place_gates(W, C_pad + 2 * H, params["whh1"])
    W = W.at[C_pad + 3 * H:C_pad + 4 * H, 0:out_var].set(params["wp"])

    def place_bias(dst, row, b3):                    # b3: (3, 1, H)
        for g in range(3):
            dst = dst.at[row, g * GP:g * GP + H].set(b3[g, 0])
        return dst

    Bm = jnp.zeros((8, G3), jnp.float32)
    Bm = place_bias(Bm, 0, params["bih0"])
    Bm = place_bias(Bm, 1, params["bhh0"])
    Bm = place_bias(Bm, 2, params["bih1"])
    Bm = place_bias(Bm, 3, params["bhh1"])
    Bm = Bm.at[4, 0:out_var].set(params["bp"][0])

    return {"W": W, "B": Bm, "C_pad": C_pad, "out_var": out_var}


def baseline_gru_forward(x_enc, packed, output_len):
    """Pallas implementation of BaselineGruModel.forward (takes packed params)."""
    B, L, C = x_enc.shape
    C_pad = packed["C_pad"]
    out_dim = packed["out_var"]
    T = L + output_len

    # time-major + feature pad (cheap one-shot XLA ops; keeps the kernel's loads aligned)
    x_tm = jnp.transpose(x_enc, (1, 0, 2))
    if C_pad > C:
        x_tm = jnp.pad(x_tm, ((0, 0), (0, 0), (0, C_pad - C)))

    kernel = functools.partial(gru_forward_kernel, output_len=output_len, hidden=HIDDEN)

    # TODO(synk): for large batches on v7x, add a grid over batch tiles with
    # dimension_semantics=("parallel",) so both TensorCores are used; unnecessary at B=2.
    out_tm = pl.pallas_call(
        kernel,
        out_shape=jax.ShapeDtypeStruct((output_len, B, out_dim), jnp.float32),
        in_specs=[pl.BlockSpec(memory_space=pltpu.MemorySpace.VMEM)] * 3,
        out_specs=pl.BlockSpec(memory_space=pltpu.MemorySpace.VMEM),
        scratch_shapes=[pltpu.VMEM((T, B, G3), jnp.float32)],
    )(x_tm, packed["W"], packed["B"])

    return jnp.transpose(out_tm, (1, 0, 2))          # -> (B, output_len, out)


# ------------------------- pure-JAX reference --------------------------------


def baseline_gru_reference(x_enc, params, output_len):
    B, L, C = x_enc.shape
    H = HIDDEN
    out_dim = params["wp"].shape[1]
    pad = jnp.zeros((B, output_len, C), dtype=x_enc.dtype)
    x = jnp.transpose(jnp.concatenate([x_enc, pad], axis=1), (1, 0, 2))  # (T,B,C)

    def cell(inp, h, wih, whh, bih, bhh):
        ir = inp @ wih[0] + bih[0]
        iz = inp @ wih[1] + bih[1]
        ic = inp @ wih[2] + bih[2]
        hr = h @ whh[0] + bhh[0]
        hz = h @ whh[1] + bhh[1]
        hc = h @ whh[2] + bhh[2]
        r = jax.nn.sigmoid(ir + hr)
        z = jax.nn.sigmoid(iz + hz)
        n = jnp.tanh(ic + r * hc)
        return (1.0 - z) * n + z * h

    def step(h, x_t):
        h0 = cell(x_t, h[0], params["wih0"], params["whh0"],
                  params["bih0"], params["bhh0"])
        h1 = cell(h0, h[1], params["wih1"], params["whh1"],
                  params["bih1"], params["bhh1"])
        return jnp.stack([h0, h1]), h1

    _, hs = lax.scan(step, jnp.zeros((NUM_LAYERS, B, H), jnp.float32), x)
    dec = jnp.einsum("tbh,ho->tbo", hs, params["wp"]) + params["bp"]
    dec = jnp.transpose(dec, (1, 0, 2))
    return dec[:, -output_len:, -out_dim:]


# --------------------------------- main --------------------------------------


def make_params(key, in_var, out_var):
    """Deterministic parameter init (PyTorch-style uniform(-1/sqrt(H), 1/sqrt(H)))."""
    H = HIDDEN
    k = 1.0 / jnp.sqrt(jnp.float32(H))
    keys = jax.random.split(key, 10)
    u = lambda kk, shape: jax.random.uniform(kk, shape, jnp.float32, -k, k)
    return {
        "wih0": u(keys[0], (3, in_var, H)),
        "whh0": u(keys[1], (3, H, H)),
        "bih0": u(keys[2], (3, 1, H)),
        "bhh0": u(keys[3], (3, 1, H)),
        "wih1": u(keys[4], (3, H, H)),
        "whh1": u(keys[5], (3, H, H)),
        "bih1": u(keys[6], (3, 1, H)),
        "bhh1": u(keys[7], (3, 1, H)),
        "wp":   u(keys[8], (H, out_var)),
        "bp":   u(keys[9], (1, out_var)),
    }


if __name__ == "__main__":
    # settings = {'output_len': 4, 'in_var': 10, 'out_var': 3,
    #             'dropout': 0.05, 'lstm_layer': 2}
    B, input_len, in_var = 2, 8, 10
    output_len, out_var = 4, 3

    key = jax.random.PRNGKey(0)
    k_x, k_p = jax.random.split(key)
    x_enc = jax.random.normal(k_x, (B, input_len, in_var), dtype=jnp.float32)
    params = make_params(k_p, in_var, out_var)
    packed = pack_params(params, in_var, out_var)
    jax.block_until_ready((packed["W"], packed["B"]))

    out = baseline_gru_forward(x_enc, packed, output_len)
    out = jax.block_until_ready(out)
    assert out.shape == (B, output_len, out_var), out.shape

    ref = jax.block_until_ready(baseline_gru_reference(x_enc, params, output_len))
    assert jnp.allclose(out, ref, atol=1e-5, rtol=1e-5), (
        float(jnp.max(jnp.abs(out - ref))))

    print("KERNEL_OK")
</pallas_src>

<mosaic_0001>
module attributes {stable_mosaic.version = 11 : i64} {
  func.func @gru_forward_kernel(%arg0: memref<8x2x16xf32, #tpu.memory_space<vmem>>, %arg1: memref<208x384xf32, #tpu.memory_space<vmem>>, %arg2: memref<8x384xf32, #tpu.memory_space<vmem>>, %arg3: memref<4x2x3xf32, #tpu.memory_space<vmem>>, %arg4: memref<12x2x384xf32, #tpu.memory_space<vmem>>) attributes {dimension_semantics = [], scalar_prefetch = 0 : i64, scratch_operands = 1 : i64, tpu.core_type = #tpu.core_type<tc>} {
    %c0 = arith.constant 0 : index
    %c0_0 = arith.constant 0 : index
    %0 = vector.load %arg2[%c0, %c0_0] : memref<8x384xf32, #tpu.memory_space<vmem>>, vector<1x384xf32>
    %c1 = arith.constant 1 : index
    %c0_1 = arith.constant 0 : index
    %1 = vector.load %arg2[%c1, %c0_1] : memref<8x384xf32, #tpu.memory_space<vmem>>, vector<1x384xf32>
    %2 = vector.shape_cast %1 : vector<1x384xf32> to vector<1x384xf32>
    %3 = vector.broadcast %2 : vector<1x384xf32> to vector<2x384xf32>
    %c2 = arith.constant 2 : index
    %c0_2 = arith.constant 0 : index
    %4 = vector.load %arg2[%c2, %c0_2] : memref<8x384xf32, #tpu.memory_space<vmem>>, vector<1x384xf32>
    %5 = vector.shape_cast %4 : vector<1x384xf32> to vector<1x384xf32>
    %6 = vector.broadcast %5 : vector<1x384xf32> to vector<2x384xf32>
    %c3 = arith.constant 3 : index
    %c0_3 = arith.constant 0 : index
    %7 = vector.load %arg2[%c3, %c0_3] : memref<8x384xf32, #tpu.memory_space<vmem>>, vector<1x384xf32>
    %8 = vector.shape_cast %7 : vector<1x384xf32> to vector<1x384xf32>
    %9 = vector.broadcast %8 : vector<1x384xf32> to vector<2x384xf32>
    %c4 = arith.constant 4 : index
    %c0_4 = arith.constant 0 : index
    %10 = vector.load %arg2[%c4, %c0_4] : memref<8x384xf32, #tpu.memory_space<vmem>>, vector<1x384xf32>
    %c0_5 = arith.constant 0 : index
    %c0_6 = arith.constant 0 : index
    %c0_7 = arith.constant 0 : index
    %11 = vector.load %arg0[%c0_5, %c0_6, %c0_7] : memref<8x2x16xf32, #tpu.memory_space<vmem>>, vector<8x2x16xf32>
    %12 = vector.shape_cast %11 : vector<8x2x16xf32> to vector<16x16xf32>
    %c0_8 = arith.constant 0 : index
    %c0_9 = arith.constant 0 : index
    %13 = vector.load %arg1[%c0_8, %c0_9] : memref<208x384xf32, #tpu.memory_space<vmem>>, vector<16x384xf32>
    %cst = arith.constant dense<0.000000e+00> : vector<16x384xf32>
    %14 = tpu.matmul %12, %13, %cst {dimension_numbers = #tpu.dot_dimension_numbers<[1], [0], [0], [1], [0, 0, 1, 1], [], []>} : vector<16x16xf32>, vector<16x384xf32>, vector<16x384xf32> -> vector<16x384xf32>
    %15 = vector.broadcast %0 : vector<1x384xf32> to vector<16x384xf32>
    %16 = arith.addf %14, %15 : vector<16x384xf32>
    %17 = vector.shape_cast %16 : vector<16x384xf32> to vector<8x2x384xf32>
    %c0_10 = arith.constant 0 : index
    %c0_11 = arith.constant 0 : index
    %c0_12 = arith.constant 0 : index
    %18 = vector.load %arg4[%c0_10, %c0_11, %c0_12] : memref<12x2x384xf32, #tpu.memory_space<vmem>>, vector<8x2x384xf32>
    tpu.vector_store %arg4[%c0_10, %c0_11, %c0_12], %17 {strides = array<i32>} : memref<12x2x384xf32, #tpu.memory_space<vmem>>, vector<8x2x384xf32>,
    %19 = vector.shape_cast %0 : vector<1x384xf32> to vector<1x1x384xf32>
    %20 = vector.shape_cast %19 : vector<1x1x384xf32> to vector<1x1x384xf32>
    %21 = vector.broadcast %20 : vector<1x1x384xf32> to vector<4x2x384xf32>
    %c8 = arith.constant 8 : index
    %c0_13 = arith.constant 0 : index
    %c0_14 = arith.constant 0 : index
    %22 = vector.load %arg4[%c8, %c0_13, %c0_14] : memref<12x2x384xf32, #tpu.memory_space<vmem>>, vector<4x2x384xf32>
    tpu.vector_store %arg4[%c8, %c0_13, %c0_14], %21 {strides = array<i32>} : memref<12x2x384xf32, #tpu.memory_space<vmem>>, vector<4x2x384xf32>,
    %c16 = arith.constant 16 : index
    %c0_15 = arith.constant 0 : index
    %23 = vector.load %arg1[%c16, %c0_15] : memref<208x384xf32, #tpu.memory_space<vmem>>, vector<48x384xf32>
    %c64 = arith.constant 64 : index
    %c0_16 = arith.constant 0 : index
    %24 = vector.load %arg1[%c64, %c0_16] : memref<208x384xf32, #tpu.memory_space<vmem>>, vector<48x384xf32>
    %c112 = arith.constant 112 : index
    %c0_17 = arith.constant 0 : index
    %25 = vector.load %arg1[%c112, %c0_17] : memref<208x384xf32, #tpu.memory_space<vmem>>, vector<48x384xf32>
    %cst_18 = arith.constant 0.000000e+00 : f32
    %26 = vector.broadcast %cst_18 : f32 to vector<2x48xf32>
    %cst_19 = arith.constant 0.000000e+00 : f32
    %27 = vector.broadcast %cst_19 : f32 to vector<2x48xf32>
    %c0_20 = arith.constant 0 : index
    %c0_21 = arith.constant 0 : index
    %c0_22 = arith.constant 0 : index
    %28 = vector.load %arg4[%c0_20, %c0_21, %c0_22] : memref<12x2x384xf32, #tpu.memory_space<vmem>>, vector<1x2x384xf32>
    %29 = vector.shape_cast %28 : vector<1x2x384xf32> to vector<2x384xf32>
    %cst_23 = arith.constant dense<0.000000e+00> : vector<2x384xf32>
    %30 = tpu.matmul %26, %23, %cst_23 {dimension_numbers = #tpu.dot_dimension_numbers<[1], [0], [0], [1], [0, 0, 1, 1], [], []>} : vector<2x48xf32>, vector<48x384xf32>, vector<2x384xf32> -> vector<2x384xf32>
    %31 = arith.addf %30, %3 : vector<2x384xf32>
    %32 = vector.extract_strided_slice %29 {offsets = [0, 0], sizes = [2, 48], strides = [1, 1]} : vector<2x384xf32> to vector<2x48xf32>
    %33 = vector.extract_strided_slice %31 {offsets = [0, 0], sizes = [2, 48], strides = [1, 1]} : vector<2x384xf32> to vector<2x48xf32>
    %34 = arith.addf %32, %33 : vector<2x48xf32>
    %35 = arith.negf %34 : vector<2x48xf32>
    %36 = math.exp %35 : vector<2x48xf32>
    %cst_24 = arith.constant 1.000000e+00 : f32
    %37 = vector.broadcast %cst_24 : f32 to vector<2x48xf32>
    %38 = arith.addf %37, %36 : vector<2x48xf32>
    %39 = arith.divf %37, %38 : vector<2x48xf32>
    %40 = vector.extract_strided_slice %29 {offsets = [0, 128], sizes = [2, 48], strides = [1, 1]} : vector<2x384xf32> to vector<2x48xf32>
    %41 = vector.extract_strided_slice %31 {offsets = [0, 128], sizes = [2, 48], strides = [1, 1]} : vector<2x384xf32> to vector<2x48xf32>
    %42 = arith.addf %40, %41 : vector<2x48xf32>
    %43 = arith.negf %42 : vector<2x48xf32>
    %44 = math.exp %43 : vector<2x48xf32>
    %cst_25 = arith.constant 1.000000e+00 : f32
    %45 = vector.broadcast %cst_25 : f32 to vector<2x48xf32>
    %46 = arith.addf %45, %44 : vector<2x48xf32>
    %47 = arith.divf %45, %46 : vector<2x48xf32>
    %48 = vector.extract_strided_slice %29 {offsets = [0, 256], sizes = [2, 48], strides = [1, 1]} : vector<2x384xf32> to vector<2x48xf32>
    %49 = vector.extract_strided_slice %31 {offsets = [0, 256], sizes = [2, 48], strides = [1, 1]} : vector<2x384xf32> to vector<2x48xf32>
    %50 = arith.mulf %39, %49 : vector<2x48xf32>
    %51 = arith.addf %48, %50 : vector<2x48xf32>
    %52 = math.tanh %51 : vector<2x48xf32>
    %cst_26 = arith.constant 1.000000e+00 : f32
    %53 = vector.broadcast %cst_26 : f32 to vector<2x48xf32>
    %54 = arith.subf %53, %47 : vector<2x48xf32>
    %55 = arith.mulf %54, %52 : vector<2x48xf32>
    %56 = arith.mulf %47, %26 : vector<2x48xf32>
    %57 = arith.addf %55, %56 : vector<2x48xf32>
    %cst_27 = arith.constant dense<0.000000e+00> : vector<2x384xf32>
    %58 = tpu.matmul %57, %24, %cst_27 {dimension_numbers = #tpu.dot_dimension_numbers<[1], [0], [0], [1], [0, 0, 1, 1], [], []>} : vector<2x48xf32>, vector<48x384xf32>, vector<2x384xf32> -> vector<2x384xf32>
    %59 = arith.addf %58, %6 : vector<2x384xf32>
    %cst_28 = arith.constant dense<0.000000e+00> : vector<2x384xf32>
    %60 = tpu.matmul %27, %25, %cst_28 {dimension_numbers = #tpu.dot_dimension_numbers<[1], [0], [0], [1], [0, 0, 1, 1], [], []>} : vector<2x48xf32>, vector<48x384xf32>, vector<2x384xf32> -> vector<2x384xf32>
    %61 = arith.addf %60, %9 : vector<2x384xf32>
    %62 = vector.extract_strided_slice %59 {offsets = [0, 0], sizes = [2, 48], strides = [1, 1]} : vector<2x384xf32> to vector<2x48xf32>
    %63 = vector.extract_strided_slice %61 {offsets = [0, 0], sizes = [2, 48], strides = [1, 1]} : vector<2x384xf32> to vector<2x48xf32>
    %64 = arith.addf %62, %63 : vector<2x48xf32>
    %65 = arith.negf %64 : vector<2x48xf32>
    %66 = math.exp %65 : vector<2x48xf32>
    %cst_29 = arith.constant 1.000000e+00 : f32
    %67 = vector.broadcast %cst_29 : f32 to vector<2x48xf32>
    %68 = arith.addf %67, %66 : vector<2x48xf32>
    %69 = arith.divf %67, %68 : vector<2x48xf32>
    %70 = vector.extract_strided_slice %59 {offsets = [0, 128], sizes = [2, 48], strides = [1, 1]} : vector<2x384xf32> to vector<2x48xf32>
    %71 = vector.extract_strided_slice %61 {offsets = [0, 128], sizes = [2, 48], strides = [1, 1]} : vector<2x384xf32> to vector<2x48xf32>
    %72 = arith.addf %70, %71 : vector<2x48xf32>
    %73 = arith.negf %72 : vector<2x48xf32>
    %74 = math.exp %73 : vector<2x48xf32>
    %cst_30 = arith.constant 1.000000e+00 : f32
    %75 = vector.broadcast %cst_30 : f32 to vector<2x48xf32>
    %76 = arith.addf %75, %74 : vector<2x48xf32>
    %77 = arith.divf %75, %76 : vector<2x48xf32>
    %78 = vector.extract_strided_slice %59 {offsets = [0, 256], sizes = [2, 48], strides = [1, 1]} : vector<2x384xf32> to vector<2x48xf32>
    %79 = vector.extract_strided_slice %61 {offsets = [0, 256], sizes = [2, 48], strides = [1, 1]} : vector<2x384xf32> to vector<2x48xf32>
    %80 = arith.mulf %69, %79 : vector<2x48xf32>
    %81 = arith.addf %78, %80 : vector<2x48xf32>
    %82 = math.tanh %81 : vector<2x48xf32>
    %cst_31 = arith.constant 1.000000e+00 : f32
    %83 = vector.broadcast %cst_31 : f32 to vector<2x48xf32>
    %84 = arith.subf %83, %77 : vector<2x48xf32>
    %85 = arith.mulf %84, %82 : vector<2x48xf32>
    %86 = arith.mulf %77, %27 : vector<2x48xf32>
    %87 = arith.addf %85, %86 : vector<2x48xf32>
    %c1_32 = arith.constant 1 : index
    %c0_33 = arith.constant 0 : index
    %c0_34 = arith.constant 0 : index
    %88 = vector.load %arg4[%c1_32, %c0_33, %c0_34] : memref<12x2x384xf32, #tpu.memory_space<vmem>>, vector<1x2x384xf32>
    %89 = vector.shape_cast %88 : vector<1x2x384xf32> to vector<2x384xf32>
    %cst_35 = arith.constant dense<0.000000e+00> : vector<2x384xf32>
    %90 = tpu.matmul %57, %23, %cst_35 {dimension_numbers = #tpu.dot_dimension_numbers<[1], [0], [0], [1], [0, 0, 1, 1], [], []>} : vector<2x48xf32>, vector<48x384xf32>, vector<2x384xf32> -> vector<2x384xf32>
    %91 = arith.addf %90, %3 : vector<2x384xf32>
    %92 = vector.extract_strided_slice %89 {offsets = [0, 0], sizes = [2, 48], strides = [1, 1]} : vector<2x384xf32> to vector<2x48xf32>
    %93 = vector.extract_strided_slice %91 {offsets = [0, 0], sizes = [2, 48], strides = [1, 1]} : vector<2x384xf32> to vector<2x48xf32>
    %94 = arith.addf %92, %93 : vector<2x48xf32>
    %95 = arith.negf %94 : vector<2x48xf32>
    %96 = math.exp %95 : vector<2x48xf32>
    %cst_36 = arith.constant 1.000000e+00 : f32
    %97 = vector.broadcast %cst_36 : f32 to vector<2x48xf32>
    %98 = arith.addf %97, %96 : vector<2x48xf32>
    %99 = arith.divf %97, %98 : vector<2x48xf32>
    %100 = vector.extract_strided_slice %89 {offsets = [0, 128], sizes = [2, 48], strides = [1, 1]} : vector<2x384xf32> to vector<2x48xf32>
    %101 = vector.extract_strided_slice %91 {offsets = [0, 128], sizes = [2, 48], strides = [1, 1]} : vector<2x384xf32> to vector<2x48xf32>
    %102 = arith.addf %100, %101 : vector<2x48xf32>
    %103 = arith.negf %102 : vector<2x48xf32>
    %104 = math.exp %103 : vector<2x48xf32>
    %cst_37 = arith.constant 1.000000e+00 : f32
    %105 = vector.broadcast %cst_37 : f32 to vector<2x48xf32>
    %106 = arith.addf %105, %104 : vector<2x48xf32>
    %107 = arith.divf %105, %106 : vector<2x48xf32>
    %108 = vector.extract_strided_slice %89 {offsets = [0, 256], sizes = [2, 48], strides = [1, 1]} : vector<2x384xf32> to vector<2x48xf32>
    %109 = vector.extract_strided_slice %91 {offsets = [0, 256], sizes = [2, 48], strides = [1, 1]} : vector<2x384xf32> to vector<2x48xf32>
    %110 = arith.mulf %99, %109 : vector<2x48xf32>
    %111 = arith.addf %108, %110 : vector<2x48xf32>
    %112 = math.tanh %111 : vector<2x48xf32>
    %cst_38 = arith.constant 1.000000e+00 : f32
    %113 = vector.broadcast %cst_38 : f32 to vector<2x48xf32>
    %114 = arith.subf %113, %107 : vector<2x48xf32>
    %115 = arith.mulf %114, %112 : vector<2x48xf32>
    %116 = arith.mulf %107, %57 : vector<2x48xf32>
    %117 = arith.addf %115, %116 : vector<2x48xf32>
    %cst_39 = arith.constant dense<0.000000e+00> : vector<2x384xf32>
    %118 = tpu.matmul %117, %24, %cst_39 {dimension_numbers = #tpu.dot_dimension_numbers<[1], [0], [0], [1], [0, 0, 1, 1], [], []>} : vector<2x48xf32>, vector<48x384xf32>, vector<2x384xf32> -> vector<2x384xf32>
    %119 = arith.addf %118, %6 : vector<2x384xf32>
    %cst_40 = arith.constant dense<0.000000e+00> : vector<2x384xf32>
    %120 = tpu.matmul %87, %25, %cst_40 {dimension_numbers = #tpu.dot_dimension_numbers<[1], [0], [0], [1], [0, 0, 1, 1], [], []>} : vector<2x48xf32>, vector<48x384xf32>, vector<2x384xf32> -> vector<2x384xf32>
    %121 = arith.addf %120, %9 : vector<2x384xf32>
    %122 = vector.extract_strided_slice %119 {offsets = [0, 0], sizes = [2, 48], strides = [1, 1]} : vector<2x384xf32> to vector<2x48xf32>
    %123 = vector.extract_strided_slice %121 {offsets = [0, 0], sizes = [2, 48], strides = [1, 1]} : vector<2x384xf32> to vector<2x48xf32>
    %124 = arith.addf %122, %123 : vector<2x48xf32>
    %125 = arith.negf %124 : vector<2x48xf32>
    %126 = math.exp %125 : vector<2x48xf32>
    %cst_41 = arith.constant 1.000000e+00 : f32
    %127 = vector.broadcast %cst_41 : f32 to vector<2x48xf32>
    %128 = arith.addf %127, %126 : vector<2x48xf32>
    %129 = arith.divf %127, %128 : vector<2x48xf32>
    %130 = vector.extract_strided_slice %119 {offsets = [0, 128], sizes = [2, 48], strides = [1, 1]} : vector<2x384xf32> to vector<2x48xf32>
    %131 = vector.extract_strided_slice %121 {offsets = [0, 128], sizes = [2, 48], strides = [1, 1]} : vector<2x384xf32> to vector<2x48xf32>
    %132 = arith.addf %130, %131 : vector<2x48xf32>
    %133 = arith.negf %132 : vector<2x48xf32>
    %134 = math.exp %133 : vector<2x48xf32>
    %cst_42 = arith.constant 1.000000e+00 : f32
    %135 = vector.broadcast %cst_42 : f32 to vector<2x48xf32>
    %136 = arith.addf %135, %134 : vector<2x48xf32>
    %137 = arith.divf %135, %136 : vector<2x48xf32>
    %138 = vector.extract_strided_slice %119 {offsets = [0, 256], sizes = [2, 48], strides = [1, 1]} : vector<2x384xf32> to vector<2x48xf32>
    %139 = vector.extract_strided_slice %121 {offsets = [0, 256], sizes = [2, 48], strides = [1, 1]} : vector<2x384xf32> to vector<2x48xf32>
    %140 = arith.mulf %129, %139 : vector<2x48xf32>
    %141 = arith.addf %138, %140 : vector<2x48xf32>
    %142 = math.tanh %141 : vector<2x48xf32>
    %cst_43 = arith.constant 1.000000e+00 : f32
    %143 = vector.broadcast %cst_43 : f32 to vector<2x48xf32>
    %144 = arith.subf %143, %137 : vector<2x48xf32>
    %145 = arith.mulf %144, %142 : vector<2x48xf32>
    %146 = arith.mulf %137, %87 : vector<2x48xf32>
    %147 = arith.addf %145, %146 : vector<2x48xf32>
    %c2_44 = arith.constant 2 : index
    %c0_45 = arith.constant 0 : index
    %c0_46 = arith.constant 0 : index
    %148 = vector.load %arg4[%c2_44, %c0_45, %c0_46] : memref<12x2x384xf32, #tpu.memory_space<vmem>>, vector<1x2x384xf32>
    %149 = vector.shape_cast %148 : vector<1x2x384xf32> to vector<2x384xf32>
    %cst_47 = arith.constant dense<0.000000e+00> : vector<2x384xf32>
    %150 = tpu.matmul %117, %23, %cst_47 {dimension_numbers = #tpu.dot_dimension_numbers<[1], [0], [0], [1], [0, 0, 1, 1], [], []>} : vector<2x48xf32>, vector<48x384xf32>, vector<2x384xf32> -> vector<2x384xf32>
    %151 = arith.addf %150, %3 : vector<2x384xf32>
    %152 = vector.extract_strided_slice %149 {offsets = [0, 0], sizes = [2, 48], strides = [1, 1]} : vector<2x384xf32> to vector<2x48xf32>
    %153 = vector.extract_strided_slice %151 {offsets = [0, 0], sizes = [2, 48], strides = [1, 1]} : vector<2x384xf32> to vector<2x48xf32>
    %154 = arith.addf %152, %153 : vector<2x48xf32>
    %155 = arith.negf %154 : vector<2x48xf32>
    %156 = math.exp %155 : vector<2x48xf32>
    %cst_48 = arith.constant 1.000000e+00 : f32
    %157 = vector.broadcast %cst_48 : f32 to vector<2x48xf32>
    %158 = arith.addf %157, %156 : vector<2x48xf32>
    %159 = arith.divf %157, %158 : vector<2x48xf32>
    %160 = vector.extract_strided_slice %149 {offsets = [0, 128], sizes = [2, 48], strides = [1, 1]} : vector<2x384xf32> to vector<2x48xf32>
    %161 = vector.extract_strided_slice %151 {offsets = [0, 128], sizes = [2, 48], strides = [1, 1]} : vector<2x384xf32> to vector<2x48xf32>
    %162 = arith.addf %160, %161 : vector<2x48xf32>
    %163 = arith.negf %162 : vector<2x48xf32>
    %164 = math.exp %163 : vector<2x48xf32>
    %cst_49 = arith.constant 1.000000e+00 : f32
    %165 = vector.broadcast %cst_49 : f32 to vector<2x48xf32>
    %166 = arith.addf %165, %164 : vector<2x48xf32>
    %167 = arith.divf %165, %166 : vector<2x48xf32>
    %168 = vector.extract_strided_slice %149 {offsets = [0, 256], sizes = [2, 48], strides = [1, 1]} : vector<2x384xf32> to vector<2x48xf32>
    %169 = vector.extract_strided_slice %151 {offsets = [0, 256], sizes = [2, 48], strides = [1, 1]} : vector<2x384xf32> to vector<2x48xf32>
    %170 = arith.mulf %159, %169 : vector<2x48xf32>
    %171 = arith.addf %168, %170 : vector<2x48xf32>
    %172 = math.tanh %171 : vector<2x48xf32>
    %cst_50 = arith.constant 1.000000e+00 : f32
    %173 = vector.broadcast %cst_50 : f32 to vector<2x48xf32>
    %174 = arith.subf %173, %167 : vector<2x48xf32>
    %175 = arith.mulf %174, %172 : vector<2x48xf32>
    %176 = arith.mulf %167, %117 : vector<2x48xf32>
    %177 = arith.addf %175, %176 : vector<2x48xf32>
    %cst_51 = arith.constant dense<0.000000e+00> : vector<2x384xf32>
    %178 = tpu.matmul %177, %24, %cst_51 {dimension_numbers = #tpu.dot_dimension_numbers<[1], [0], [0], [1], [0, 0, 1, 1], [], []>} : vector<2x48xf32>, vector<48x384xf32>, vector<2x384xf32> -> vector<2x384xf32>
    %179 = arith.addf %178, %6 : vector<2x384xf32>
    %cst_52 = arith.constant dense<0.000000e+00> : vector<2x384xf32>
    %180 = tpu.matmul %147, %25, %cst_52 {dimension_numbers = #tpu.dot_dimension_numbers<[1], [0], [0], [1], [0, 0, 1, 1], [], []>} : vector<2x48xf32>, vector<48x384xf32>, vector<2x384xf32> -> vector<2x384xf32>
    %181 = arith.addf %180, %9 : vector<2x384xf32>
    %182 = vector.extract_strided_slice %179 {offsets = [0, 0], sizes = [2, 48], strides = [1, 1]} : vector<2x384xf32> to vector<2x48xf32>
    %183 = vector.extract_strided_slice %181 {offsets = [0, 0], sizes = [2, 48], strides = [1, 1]} : vector<2x384xf32> to vector<2x48xf32>
    %184 = arith.addf %182, %183 : vector<2x48xf32>
    %185 = arith.negf %184 : vector<2x48xf32>
    %186 = math.exp %185 : vector<2x48xf32>
    %cst_53 = arith.constant 1.000000e+00 : f32
    %187 = vector.broadcast %cst_53 : f32 to vector<2x48xf32>
    %188 = arith.addf %187, %186 : vector<2x48xf32>
    %189 = arith.divf %187, %188 : vector<2x48xf32>
    %190 = vector.extract_strided_slice %179 {offsets = [0, 128], sizes = [2, 48], strides = [1, 1]} : vector<2x384xf32> to vector<2x48xf32>
    %191 = vector.extract_strided_slice %181 {offsets = [0, 128], sizes = [2, 48], strides = [1, 1]} : vector<2x384xf32> to vector<2x48xf32>
    %192 = arith.addf %190, %191 : vector<2x48xf32>
    %193 = arith.negf %192 : vector<2x48xf32>
    %194 = math.exp %193 : vector<2x48xf32>
    %cst_54 = arith.constant 1.000000e+00 : f32
    %195 = vector.broadcast %cst_54 : f32 to vector<2x48xf32>
    %196 = arith.addf %195, %194 : vector<2x48xf32>
    %197 = arith.divf %195, %196 : vector<2x48xf32>
    %198 = vector.extract_strided_slice %179 {offsets = [0, 256], sizes = [2, 48], strides = [1, 1]} : vector<2x384xf32> to vector<2x48xf32>
    %199 = vector.extract_strided_slice %181 {offsets = [0, 256], sizes = [2, 48], strides = [1, 1]} : vector<2x384xf32> to vector<2x48xf32>
    %200 = arith.mulf %189, %199 : vector<2x48xf32>
    %201 = arith.addf %198, %200 : vector<2x48xf32>
    %202 = math.tanh %201 : vector<2x48xf32>
    %cst_55 = arith.constant 1.000000e+00 : f32
    %203 = vector.broadcast %cst_55 : f32 to vector<2x48xf32>
    %204 = arith.subf %203, %197 : vector<2x48xf32>
    %205 = arith.mulf %204, %202 : vector<2x48xf32>
    %206 = arith.mulf %197, %147 : vector<2x48xf32>
    %207 = arith.addf %205, %206 : vector<2x48xf32>
    %c3_56 = arith.constant 3 : index
    %c0_57 = arith.constant 0 : index
    %c0_58 = arith.constant 0 : index
    %208 = vector.load %arg4[%c3_56, %c0_57, %c0_58] : memref<12x2x384xf32, #tpu.memory_space<vmem>>, vector<1x2x384xf32>
    %209 = vector.shape_cast %208 : vector<1x2x384xf32> to vector<2x384xf32>
    %cst_59 = arith.constant dense<0.000000e+00> : vector<2x384xf32>
    %210 = tpu.matmul %177, %23, %cst_59 {dimension_numbers = #tpu.dot_dimension_numbers<[1], [0], [0], [1], [0, 0, 1, 1], [], []>} : vector<2x48xf32>, vector<48x384xf32>, vector<2x384xf32> -> vector<2x384xf32>
    %211 = arith.addf %210, %3 : vector<2x384xf32>
    %212 = vector.extract_strided_slice %209 {offsets = [0, 0], sizes = [2, 48], strides = [1, 1]} : vector<2x384xf32> to vector<2x48xf32>
    %213 = vector.extract_strided_slice %211 {offsets = [0, 0], sizes = [2, 48], strides = [1, 1]} : vector<2x384xf32> to vector<2x48xf32>
    %214 = arith.addf %212, %213 : vector<2x48xf32>
    %215 = arith.negf %214 : vector<2x48xf32>
    %216 = math.exp %215 : vector<2x48xf32>
    %cst_60 = arith.constant 1.000000e+00 : f32
    %217 = vector.broadcast %cst_60 : f32 to vector<2x48xf32>
    %218 = arith.addf %217, %216 : vector<2x48xf32>
    %219 = arith.divf %217, %218 : vector<2x48xf32>
    %220 = vector.extract_strided_slice %209 {offsets = [0, 128], sizes = [2, 48], strides = [1, 1]} : vector<2x384xf32> to vector<2x48xf32>
    %221 = vector.extract_strided_slice %211 {offsets = [0, 128], sizes = [2, 48], strides = [1, 1]} : vector<2x384xf32> to vector<2x48xf32>
    %222 = arith.addf %220, %221 : vector<2x48xf32>
    %223 = arith.negf %222 : vector<2x48xf32>
    %224 = math.exp %223 : vector<2x48xf32>
    %cst_61 = arith.constant 1.000000e+00 : f32
    %225 = vector.broadcast %cst_61 : f32 to vector<2x48xf32>
    %226 = arith.addf %225, %224 : vector<2x48xf32>
    %227 = arith.divf %225, %226 : vector<2x48xf32>
    %228 = vector.extract_strided_slice %209 {offsets = [0, 256], sizes = [2, 48], strides = [1, 1]} : vector<2x384xf32> to vector<2x48xf32>
    %229 = vector.extract_strided_slice %211 {offsets = [0, 256], sizes = [2, 48], strides = [1, 1]} : vector<2x384xf32> to vector<2x48xf32>
    %230 = arith.mulf %219, %229 : vector<2x48xf32>
    %231 = arith.addf %228, %230 : vector<2x48xf32>
    %232 = math.tanh %231 : vector<2x48xf32>
    %cst_62 = arith.constant 1.000000e+00 : f32
    %233 = vector.broadcast %cst_62 : f32 to vector<2x48xf32>
    %234 = arith.subf %233, %227 : vector<2x48xf32>
    %235 = arith.mulf %234, %232 : vector<2x48xf32>
    %236 = arith.mulf %227, %177 : vector<2x48xf32>
    %237 = arith.addf %235, %236 : vector<2x48xf32>
    %cst_63 = arith.constant dense<0.000000e+00> : vector<2x384xf32>
    %238 = tpu.matmul %237, %24, %cst_63 {dimension_numbers = #tpu.dot_dimension_numbers<[1], [0], [0], [1], [0, 0, 1, 1], [], []>} : vector<2x48xf32>, vector<48x384xf32>, vector<2x384xf32> -> vector<2x384xf32>
    %239 = arith.addf %238, %6 : vector<2x384xf32>
    %cst_64 = arith.constant dense<0.000000e+00> : vector<2x384xf32>
    %240 = tpu.matmul %207, %25, %cst_64 {dimension_numbers = #tpu.dot_dimension_numbers<[1], [0], [0], [1], [0, 0, 1, 1], [], []>} : vector<2x48xf32>, vector<48x384xf32>, vector<2x384xf32> -> vector<2x384xf32>
    %241 = arith.addf %240, %9 : vector<2x384xf32>
    %242 = vector.extract_strided_slice %239 {offsets = [0, 0], sizes = [2, 48], strides = [1, 1]} : vector<2x384xf32> to vector<2x48xf32>
    %243 = vector.extract_strided_slice %241 {offsets = [0, 0], sizes = [2, 48], strides = [1, 1]} : vector<2x384xf32> to vector<2x48xf32>
    %244 = arith.addf %242, %243 : vector<2x48xf32>
    %245 = arith.negf %244 : vector<2x48xf32>
    %246 = math.exp %245 : vector<2x48xf32>
    %cst_65 = arith.constant 1.000000e+00 : f32
    %247 = vector.broadcast %cst_65 : f32 to vector<2x48xf32>
    %248 = arith.addf %247, %246 : vector<2x48xf32>
    %249 = arith.divf %247, %248 : vector<2x48xf32>
    %250 = vector.extract_strided_slice %239 {offsets = [0, 128], sizes = [2, 48], strides = [1, 1]} : vector<2x384xf32> to vector<2x48xf32>
    %251 = vector.extract_strided_slice %241 {offsets = [0, 128], sizes = [2, 48], strides = [1, 1]} : vector<2x384xf32> to vector<2x48xf32>
    %252 = arith.addf %250, %251 : vector<2x48xf32>
    %253 = arith.negf %252 : vector<2x48xf32>
    %254 = math.exp %253 : vector<2x48xf32>
    %cst_66 = arith.constant 1.000000e+00 : f32
    %255 = vector.broadcast %cst_66 : f32 to vector<2x48xf32>
    %256 = arith.addf %255, %254 : vector<2x48xf32>
    %257 = arith.divf %255, %256 : vector<2x48xf32>
    %258 = vector.extract_strided_slice %239 {offsets = [0, 256], sizes = [2, 48], strides = [1, 1]} : vector<2x384xf32> to vector<2x48xf32>
    %259 = vector.extract_strided_slice %241 {offsets = [0, 256], sizes = [2, 48], strides = [1, 1]} : vector<2x384xf32> to vector<2x48xf32>
    %260 = arith.mulf %249, %259 : vector<2x48xf32>
    %261 = arith.addf %258, %260 : vector<2x48xf32>
    %262 = math.tanh %261 : vector<2x48xf32>
    %cst_67 = arith.constant 1.000000e+00 : f32
    %263 = vector.broadcast %cst_67 : f32 to vector<2x48xf32>
    %264 = arith.subf %263, %257 : vector<2x48xf32>
    %265 = arith.mulf %264, %262 : vector<2x48xf32>
    %266 = arith.mulf %257, %207 : vector<2x48xf32>
    %267 = arith.addf %265, %266 : vector<2x48xf32>
    %c4_68 = arith.constant 4 : index
    %c0_69 = arith.constant 0 : index
    %c0_70 = arith.constant 0 : index
    %268 = vector.load %arg4[%c4_68, %c0_69, %c0_70] : memref<12x2x384xf32, #tpu.memory_space<vmem>>, vector<1x2x384xf32>
    %269 = vector.shape_cast %268 : vector<1x2x384xf32> to vector<2x384xf32>
    %cst_71 = arith.constant dense<0.000000e+00> : vector<2x384xf32>
    %270 = tpu.matmul %237, %23, %cst_71 {dimension_numbers = #tpu.dot_dimension_numbers<[1], [0], [0], [1], [0, 0, 1, 1], [], []>} : vector<2x48xf32>, vector<48x384xf32>, vector<2x384xf32> -> vector<2x384xf32>
    %271 = arith.addf %270, %3 : vector<2x384xf32>
    %272 = vector.extract_strided_slice %269 {offsets = [0, 0], sizes = [2, 48], strides = [1, 1]} : vector<2x384xf32> to vector<2x48xf32>
    %273 = vector.extract_strided_slice %271 {offsets = [0, 0], sizes = [2, 48], strides = [1, 1]} : vector<2x384xf32> to vector<2x48xf32>
    %274 = arith.addf %272, %273 : vector<2x48xf32>
    %275 = arith.negf %274 : vector<2x48xf32>
    %276 = math.exp %275 : vector<2x48xf32>
    %cst_72 = arith.constant 1.000000e+00 : f32
    %277 = vector.broadcast %cst_72 : f32 to vector<2x48xf32>
    %278 = arith.addf %277, %276 : vector<2x48xf32>
    %279 = arith.divf %277, %278 : vector<2x48xf32>
    %280 = vector.extract_strided_slice %269 {offsets = [0, 128], sizes = [2, 48], strides = [1, 1]} : vector<2x384xf32> to vector<2x48xf32>
    %281 = vector.extract_strided_slice %271 {offsets = [0, 128], sizes = [2, 48], strides = [1, 1]} : vector<2x384xf32> to vector<2x48xf32>
    %282 = arith.addf %280, %281 : vector<2x48xf32>
    %283 = arith.negf %282 : vector<2x48xf32>
    %284 = math.exp %283 : vector<2x48xf32>
    %cst_73 = arith.constant 1.000000e+00 : f32
    %285 = vector.broadcast %cst_73 : f32 to vector<2x48xf32>
    %286 = arith.addf %285, %284 : vector<2x48xf32>
    %287 = arith.divf %285, %286 : vector<2x48xf32>
    %288 = vector.extract_strided_slice %269 {offsets = [0, 256], sizes = [2, 48], strides = [1, 1]} : vector<2x384xf32> to vector<2x48xf32>
    %289 = vector.extract_strided_slice %271 {offsets = [0, 256], sizes = [2, 48], strides = [1, 1]} : vector<2x384xf32> to vector<2x48xf32>
    %290 = arith.mulf %279, %289 : vector<2x48xf32>
    %291 = arith.addf %288, %290 : vector<2x48xf32>
    %292 = math.tanh %291 : vector<2x48xf32>
    %cst_74 = arith.constant 1.000000e+00 : f32
    %293 = vector.broadcast %cst_74 : f32 to vector<2x48xf32>
    %294 = arith.subf %293, %287 : vector<2x48xf32>
    %295 = arith.mulf %294, %292 : vector<2x48xf32>
    %296 = arith.mulf %287, %237 : vector<2x48xf32>
    %297 = arith.addf %295, %296 : vector<2x48xf32>
    %cst_75 = arith.constant dense<0.000000e+00> : vector<2x384xf32>
    %298 = tpu.matmul %297, %24, %cst_75 {dimension_numbers = #tpu.dot_dimension_numbers<[1], [0], [0], [1], [0, 0, 1, 1], [], []>} : vector<2x48xf32>, vector<48x384xf32>, vector<2x384xf32> -> vector<2x384xf32>
    %299 = arith.addf %298, %6 : vector<2x384xf32>
    %cst_76 = arith.constant dense<0.000000e+00> : vector<2x384xf32>
    %300 = tpu.matmul %267, %25, %cst_76 {dimension_numbers = #tpu.dot_dimension_numbers<[1], [0], [0], [1], [0, 0, 1, 1], [], []>} : vector<2x48xf32>, vector<48x384xf32>, vector<2x384xf32> -> vector<2x384xf32>
    %301 = arith.addf %300, %9 : vector<2x384xf32>
    %302 = vector.extract_strided_slice %299 {offsets = [0, 0], sizes = [2, 48], strides = [1, 1]} : vector<2x384xf32> to vector<2x48xf32>
    %303 = vector.extract_strided_slice %301 {offsets = [0, 0], sizes = [2, 48], strides = [1, 1]} : vector<2x384xf32> to vector<2x48xf32>
    %304 = arith.addf %302, %303 : vector<2x48xf32>
    %305 = arith.negf %304 : vector<2x48xf32>
    %306 = math.exp %305 : vector<2x48xf32>
    %cst_77 = arith.constant 1.000000e+00 : f32
    %307 = vector.broadcast %cst_77 : f32 to vector<2x48xf32>
    %308 = arith.addf %307, %306 : vector<2x48xf32>
    %309 = arith.divf %307, %308 : vector<2x48xf32>
    %310 = vector.extract_strided_slice %299 {offsets = [0, 128], sizes = [2, 48], strides = [1, 1]} : vector<2x384xf32> to vector<2x48xf32>
    %311 = vector.extract_strided_slice %301 {offsets = [0, 128], sizes = [2, 48], strides = [1, 1]} : vector<2x384xf32> to vector<2x48xf32>
    %312 = arith.addf %310, %311 : vector<2x48xf32>
    %313 = arith.negf %312 : vector<2x48xf32>
    %314 = math.exp %313 : vector<2x48xf32>
    %cst_78 = arith.constant 1.000000e+00 : f32
    %315 = vector.broadcast %cst_78 : f32 to vector<2x48xf32>
    %316 = arith.addf %315, %314 : vector<2x48xf32>
    %317 = arith.divf %315, %316 : vector<2x48xf32>
    %318 = vector.extract_strided_slice %299 {offsets = [0, 256], sizes = [2, 48], strides = [1, 1]} : vector<2x384xf32> to vector<2x48xf32>
    %319 = vector.extract_strided_slice %301 {offsets = [0, 256], sizes = [2, 48], strides = [1, 1]} : vector<2x384xf32> to vector<2x48xf32>
    %320 = arith.mulf %309, %319 : vector<2x48xf32>
    %321 = arith.addf %318, %320 : vector<2x48xf32>
    %322 = math.tanh %321 : vector<2x48xf32>
    %cst_79 = arith.constant 1.000000e+00 : f32
    %323 = vector.broadcast %cst_79 : f32 to vector<2x48xf32>
    %324 = arith.subf %323, %317 : vector<2x48xf32>
    %325 = arith.mulf %324, %322 : vector<2x48xf32>
    %326 = arith.mulf %317, %267 : vector<2x48xf32>
    %327 = arith.addf %325, %326 : vector<2x48xf32>
    %c5 = arith.constant 5 : index
    %c0_80 = arith.constant 0 : index
    %c0_81 = arith.constant 0 : index
    %328 = vector.load %arg4[%c5, %c0_80, %c0_81] : memref<12x2x384xf32, #tpu.memory_space<vmem>>, vector<1x2x384xf32>
    %329 = vector.shape_cast %328 : vector<1x2x384xf32> to vector<2x384xf32>
    %cst_82 = arith.constant dense<0.000000e+00> : vector<2x384xf32>
    %330 = tpu.matmul %297, %23, %cst_82 {dimension_numbers = #tpu.dot_dimension_numbers<[1], [0], [0], [1], [0, 0, 1, 1], [], []>} : vector<2x48xf32>, vector<48x384xf32>, vector<2x384xf32> -> vector<2x384xf32>
    %331 = arith.addf %330, %3 : vector<2x384xf32>
    %332 = vector.extract_strided_slice %329 {offsets = [0, 0], sizes = [2, 48], strides = [1, 1]} : vector<2x384xf32> to vector<2x48xf32>
    %333 = vector.extract_strided_slice %331 {offsets = [0, 0], sizes = [2, 48], strides = [1, 1]} : vector<2x384xf32> to vector<2x48xf32>
    %334 = arith.addf %332, %333 : vector<2x48xf32>
    %335 = arith.negf %334 : vector<2x48xf32>
    %336 = math.exp %335 : vector<2x48xf32>
    %cst_83 = arith.constant 1.000000e+00 : f32
    %337 = vector.broadcast %cst_83 : f32 to vector<2x48xf32>
    %338 = arith.addf %337, %336 : vector<2x48xf32>
    %339 = arith.divf %337, %338 : vector<2x48xf32>
    %340 = vector.extract_strided_slice %329 {offsets = [0, 128], sizes = [2, 48], strides = [1, 1]} : vector<2x384xf32> to vector<2x48xf32>
    %341 = vector.extract_strided_slice %331 {offsets = [0, 128], sizes = [2, 48], strides = [1, 1]} : vector<2x384xf32> to vector<2x48xf32>
    %342 = arith.addf %340, %341 : vector<2x48xf32>
    %343 = arith.negf %342 : vector<2x48xf32>
    %344 = math.exp %343 : vector<2x48xf32>
    %cst_84 = arith.constant 1.000000e+00 : f32
    %345 = vector.broadcast %cst_84 : f32 to vector<2x48xf32>
    %346 = arith.addf %345, %344 : vector<2x48xf32>
    %347 = arith.divf %345, %346 : vector<2x48xf32>
    %348 = vector.extract_strided_slice %329 {offsets = [0, 256], sizes = [2, 48], strides = [1, 1]} : vector<2x384xf32> to vector<2x48xf32>
    %349 = vector.extract_strided_slice %331 {offsets = [0, 256], sizes = [2, 48], strides = [1, 1]} : vector<2x384xf32> to vector<2x48xf32>
    %350 = arith.mulf %339, %349 : vector<2x48xf32>
    %351 = arith.addf %348, %350 : vector<2x48xf32>
    %352 = math.tanh %351 : vector<2x48xf32>
    %cst_85 = arith.constant 1.000000e+00 : f32
    %353 = vector.broadcast %cst_85 : f32 to vector<2x48xf32>
    %354 = arith.subf %353, %347 : vector<2x48xf32>
    %355 = arith.mulf %354, %352 : vector<2x48xf32>
    %356 = arith.mulf %347, %297 : vector<2x48xf32>
    %357 = arith.addf %355, %356 : vector<2x48xf32>
    %cst_86 = arith.constant dense<0.000000e+00> : vector<2x384xf32>
    %358 = tpu.matmul %357, %24, %cst_86 {dimension_numbers = #tpu.dot_dimension_numbers<[1], [0], [0], [1], [0, 0, 1, 1], [], []>} : vector<2x48xf32>, vector<48x384xf32>, vector<2x384xf32> -> vector<2x384xf32>
    %359 = arith.addf %358, %6 : vector<2x384xf32>
    %cst_87 = arith.constant dense<0.000000e+00> : vector<2x384xf32>
    %360 = tpu.matmul %327, %25, %cst_87 {dimension_numbers = #tpu.dot_dimension_numbers<[1], [0], [0], [1], [0, 0, 1, 1], [], []>} : vector<2x48xf32>, vector<48x384xf32>, vector<2x384xf32> -> vector<2x384xf32>
    %361 = arith.addf %360, %9 : vector<2x384xf32>
    %362 = vector.extract_strided_slice %359 {offsets = [0, 0], sizes = [2, 48], strides = [1, 1]} : vector<2x384xf32> to vector<2x48xf32>
    %363 = vector.extract_strided_slice %361 {offsets = [0, 0], sizes = [2, 48], strides = [1, 1]} : vector<2x384xf32> to vector<2x48xf32>
    %364 = arith.addf %362, %363 : vector<2x48xf32>
    %365 = arith.negf %364 : vector<2x48xf32>
    %366 = math.exp %365 : vector<2x48xf32>
    %cst_88 = arith.constant 1.000000e+00 : f32
    %367 = vector.broadcast %cst_88 : f32 to vector<2x48xf32>
    %368 = arith.addf %367, %366 : vector<2x48xf32>
    %369 = arith.divf %367, %368 : vector<2x48xf32>
    %370 = vector.extract_strided_slice %359 {offsets = [0, 128], sizes = [2, 48], strides = [1, 1]} : vector<2x384xf32> to vector<2x48xf32>
    %371 = vector.extract_strided_slice %361 {offsets = [0, 128], sizes = [2, 48], strides = [1, 1]} : vector<2x384xf32> to vector<2x48xf32>
    %372 = arith.addf %370, %371 : vector<2x48xf32>
    %373 = arith.negf %372 : vector<2x48xf32>
    %374 = math.exp %373 : vector<2x48xf32>
    %cst_89 = arith.constant 1.000000e+00 : f32
    %375 = vector.broadcast %cst_89 : f32 to vector<2x48xf32>
    %376 = arith.addf %375, %374 : vector<2x48xf32>
    %377 = arith.divf %375, %376 : vector<2x48xf32>
    %378 = vector.extract_strided_slice %359 {offsets = [0, 256], sizes = [2, 48], strides = [1, 1]} : vector<2x384xf32> to vector<2x48xf32>
    %379 = vector.extract_strided_slice %361 {offsets = [0, 256], sizes = [2, 48], strides = [1, 1]} : vector<2x384xf32> to vector<2x48xf32>
    %380 = arith.mulf %369, %379 : vector<2x48xf32>
    %381 = arith.addf %378, %380 : vector<2x48xf32>
    %382 = math.tanh %381 : vector<2x48xf32>
    %cst_90 = arith.constant 1.000000e+00 : f32
    %383 = vector.broadcast %cst_90 : f32 to vector<2x48xf32>
    %384 = arith.subf %383, %377 : vector<2x48xf32>
    %385 = arith.mulf %384, %382 : vector<2x48xf32>
    %386 = arith.mulf %377, %327 : vector<2x48xf32>
    %387 = arith.addf %385, %386 : vector<2x48xf32>
    %c6 = arith.constant 6 : index
    %c0_91 = arith.constant 0 : index
    %c0_92 = arith.constant 0 : index
    %388 = vector.load %arg4[%c6, %c0_91, %c0_92] : memref<12x2x384xf32, #tpu.memory_space<vmem>>, vector<1x2x384xf32>
    %389 = vector.shape_cast %388 : vector<1x2x384xf32> to vector<2x384xf32>
    %cst_93 = arith.constant dense<0.000000e+00> : vector<2x384xf32>
    %390 = tpu.matmul %357, %23, %cst_93 {dimension_numbers = #tpu.dot_dimension_numbers<[1], [0], [0], [1], [0, 0, 1, 1], [], []>} : vector<2x48xf32>, vector<48x384xf32>, vector<2x384xf32> -> vector<2x384xf32>
    %391 = arith.addf %390, %3 : vector<2x384xf32>
    %392 = vector.extract_strided_slice %389 {offsets = [0, 0], sizes = [2, 48], strides = [1, 1]} : vector<2x384xf32> to vector<2x48xf32>
    %393 = vector.extract_strided_slice %391 {offsets = [0, 0], sizes = [2, 48], strides = [1, 1]} : vector<2x384xf32> to vector<2x48xf32>
    %394 = arith.addf %392, %393 : vector<2x48xf32>
    %395 = arith.negf %394 : vector<2x48xf32>
    %396 = math.exp %395 : vector<2x48xf32>
    %cst_94 = arith.constant 1.000000e+00 : f32
    %397 = vector.broadcast %cst_94 : f32 to vector<2x48xf32>
    %398 = arith.addf %397, %396 : vector<2x48xf32>
    %399 = arith.divf %397, %398 : vector<2x48xf32>
    %400 = vector.extract_strided_slice %389 {offsets = [0, 128], sizes = [2, 48], strides = [1, 1]} : vector<2x384xf32> to vector<2x48xf32>
    %401 = vector.extract_strided_slice %391 {offsets = [0, 128], sizes = [2, 48], strides = [1, 1]} : vector<2x384xf32> to vector<2x48xf32>
    %402 = arith.addf %400, %401 : vector<2x48xf32>
    %403 = arith.negf %402 : vector<2x48xf32>
    %404 = math.exp %403 : vector<2x48xf32>
    %cst_95 = arith.constant 1.000000e+00 : f32
    %405 = vector.broadcast %cst_95 : f32 to vector<2x48xf32>
    %406 = arith.addf %405, %404 : vector<2x48xf32>
    %407 = arith.divf %405, %406 : vector<2x48xf32>
    %408 = vector.extract_strided_slice %389 {offsets = [0, 256], sizes = [2, 48], strides = [1, 1]} : vector<2x384xf32> to vector<2x48xf32>
    %409 = vector.extract_strided_slice %391 {offsets = [0, 256], sizes = [2, 48], strides = [1, 1]} : vector<2x384xf32> to vector<2x48xf32>
    %410 = arith.mulf %399, %409 : vector<2x48xf32>
    %411 = arith.addf %408, %410 : vector<2x48xf32>
    %412 = math.tanh %411 : vector<2x48xf32>
    %cst_96 = arith.constant 1.000000e+00 : f32
    %413 = vector.broadcast %cst_96 : f32 to vector<2x48xf32>
    %414 = arith.subf %413, %407 : vector<2x48xf32>
    %415 = arith.mulf %414, %412 : vector<2x48xf32>
    %416 = arith.mulf %407, %357 : vector<2x48xf32>
    %417 = arith.addf %415, %416 : vector<2x48xf32>
    %cst_97 = arith.constant dense<0.000000e+00> : vector<2x384xf32>
    %418 = tpu.matmul %417, %24, %cst_97 {dimension_numbers = #tpu.dot_dimension_numbers<[1], [0], [0], [1], [0, 0, 1, 1], [], []>} : vector<2x48xf32>, vector<48x384xf32>, vector<2x384xf32> -> vector<2x384xf32>
    %419 = arith.addf %418, %6 : vector<2x384xf32>
    %cst_98 = arith.constant dense<0.000000e+00> : vector<2x384xf32>
    %420 = tpu.matmul %387, %25, %cst_98 {dimension_numbers = #tpu.dot_dimension_numbers<[1], [0], [0], [1], [0, 0, 1, 1], [], []>} : vector<2x48xf32>, vector<48x384xf32>, vector<2x384xf32> -> vector<2x384xf32>
    %421 = arith.addf %420, %9 : vector<2x384xf32>
    %422 = vector.extract_strided_slice %419 {offsets = [0, 0], sizes = [2, 48], strides = [1, 1]} : vector<2x384xf32> to vector<2x48xf32>
    %423 = vector.extract_strided_slice %421 {offsets = [0, 0], sizes = [2, 48], strides = [1, 1]} : vector<2x384xf32> to vector<2x48xf32>
    %424 = arith.addf %422, %423 : vector<2x48xf32>
    %425 = arith.negf %424 : vector<2x48xf32>
    %426 = math.exp %425 : vector<2x48xf32>
    %cst_99 = arith.constant 1.000000e+00 : f32
    %427 = vector.broadcast %cst_99 : f32 to vector<2x48xf32>
    %428 = arith.addf %427, %426 : vector<2x48xf32>
    %429 = arith.divf %427, %428 : vector<2x48xf32>
    %430 = vector.extract_strided_slice %419 {offsets = [0, 128], sizes = [2, 48], strides = [1, 1]} : vector<2x384xf32> to vector<2x48xf32>
    %431 = vector.extract_strided_slice %421 {offsets = [0, 128], sizes = [2, 48], strides = [1, 1]} : vector<2x384xf32> to vector<2x48xf32>
    %432 = arith.addf %430, %431 : vector<2x48xf32>
    %433 = arith.negf %432 : vector<2x48xf32>
    %434 = math.exp %433 : vector<2x48xf32>
    %cst_100 = arith.constant 1.000000e+00 : f32
    %435 = vector.broadcast %cst_100 : f32 to vector<2x48xf32>
    %436 = arith.addf %435, %434 : vector<2x48xf32>
    %437 = arith.divf %435, %436 : vector<2x48xf32>
    %438 = vector.extract_strided_slice %419 {offsets = [0, 256], sizes = [2, 48], strides = [1, 1]} : vector<2x384xf32> to vector<2x48xf32>
    %439 = vector.extract_strided_slice %421 {offsets = [0, 256], sizes = [2, 48], strides = [1, 1]} : vector<2x384xf32> to vector<2x48xf32>
    %440 = arith.mulf %429, %439 : vector<2x48xf32>
    %441 = arith.addf %438, %440 : vector<2x48xf32>
    %442 = math.tanh %441 : vector<2x48xf32>
    %cst_101 = arith.constant 1.000000e+00 : f32
    %443 = vector.broadcast %cst_101 : f32 to vector<2x48xf32>
    %444 = arith.subf %443, %437 : vector<2x48xf32>
    %445 = arith.mulf %444, %442 : vector<2x48xf32>
    %446 = arith.mulf %437, %387 : vector<2x48xf32>
    %447 = arith.addf %445, %446 : vector<2x48xf32>
    %c7 = arith.constant 7 : index
    %c0_102 = arith.constant 0 : index
    %c0_103 = arith.constant 0 : index
    %448 = vector.load %arg4[%c7, %c0_102, %c0_103] : memref<12x2x384xf32, #tpu.memory_space<vmem>>, vector<1x2x384xf32>
    %449 = vector.shape_cast %448 : vector<1x2x384xf32> to vector<2x384xf32>
    %cst_104 = arith.constant dense<0.000000e+00> : vector<2x384xf32>
    %450 = tpu.matmul %417, %23, %cst_104 {dimension_numbers = #tpu.dot_dimension_numbers<[1], [0], [0], [1], [0, 0, 1, 1], [], []>} : vector<2x48xf32>, vector<48x384xf32>, vector<2x384xf32> -> vector<2x384xf32>
    %451 = arith.addf %450, %3 : vector<2x384xf32>
    %452 = vector.extract_strided_slice %449 {offsets = [0, 0], sizes = [2, 48], strides = [1, 1]} : vector<2x384xf32> to vector<2x48xf32>
    %453 = vector.extract_strided_slice %451 {offsets = [0, 0], sizes = [2, 48], strides = [1, 1]} : vector<2x384xf32> to vector<2x48xf32>
    %454 = arith.addf %452, %453 : vector<2x48xf32>
    %455 = arith.negf %454 : vector<2x48xf32>
    %456 = math.exp %455 : vector<2x48xf32>
    %cst_105 = arith.constant 1.000000e+00 : f32
    %457 = vector.broadcast %cst_105 : f32 to vector<2x48xf32>
    %458 = arith.addf %457, %456 : vector<2x48xf32>
    %459 = arith.divf %457, %458 : vector<2x48xf32>
    %460 = vector.extract_strided_slice %449 {offsets = [0, 128], sizes = [2, 48], strides = [1, 1]} : vector<2x384xf32> to vector<2x48xf32>
    %461 = vector.extract_strided_slice %451 {offsets = [0, 128], sizes = [2, 48], strides = [1, 1]} : vector<2x384xf32> to vector<2x48xf32>
    %462 = arith.addf %460, %461 : vector<2x48xf32>
    %463 = arith.negf %462 : vector<2x48xf32>
    %464 = math.exp %463 : vector<2x48xf32>
    %cst_106 = arith.constant 1.000000e+00 : f32
    %465 = vector.broadcast %cst_106 : f32 to vector<2x48xf32>
    %466 = arith.addf %465, %464 : vector<2x48xf32>
    %467 = arith.divf %465, %466 : vector<2x48xf32>
    %468 = vector.extract_strided_slice %449 {offsets = [0, 256], sizes = [2, 48], strides = [1, 1]} : vector<2x384xf32> to vector<2x48xf32>
    %469 = vector.extract_strided_slice %451 {offsets = [0, 256], sizes = [2, 48], strides = [1, 1]} : vector<2x384xf32> to vector<2x48xf32>
    %470 = arith.mulf %459, %469 : vector<2x48xf32>
    %471 = arith.addf %468, %470 : vector<2x48xf32>
    %472 = math.tanh %471 : vector<2x48xf32>
    %cst_107 = arith.constant 1.000000e+00 : f32
    %473 = vector.broadcast %cst_107 : f32 to vector<2x48xf32>
    %474 = arith.subf %473, %467 : vector<2x48xf32>
    %475 = arith.mulf %474, %472 : vector<2x48xf32>
    %476 = arith.mulf %467, %417 : vector<2x48xf32>
    %477 = arith.addf %475, %476 : vector<2x48xf32>
    %cst_108 = arith.constant dense<0.000000e+00> : vector<2x384xf32>
    %478 = tpu.matmul %477, %24, %cst_108 {dimension_numbers = #tpu.dot_dimension_numbers<[1], [0], [0], [1], [0, 0, 1, 1], [], []>} : vector<2x48xf32>, vector<48x384xf32>, vector<2x384xf32> -> vector<2x384xf32>
    %479 = arith.addf %478, %6 : vector<2x384xf32>
    %cst_109 = arith.constant dense<0.000000e+00> : vector<2x384xf32>
    %480 = tpu.matmul %447, %25, %cst_109 {dimension_numbers = #tpu.dot_dimension_numbers<[1], [0], [0], [1], [0, 0, 1, 1], [], []>} : vector<2x48xf32>, vector<48x384xf32>, vector<2x384xf32> -> vector<2x384xf32>
    %481 = arith.addf %480, %9 : vector<2x384xf32>
    %482 = vector.extract_strided_slice %479 {offsets = [0, 0], sizes = [2, 48], strides = [1, 1]} : vector<2x384xf32> to vector<2x48xf32>
    %483 = vector.extract_strided_slice %481 {offsets = [0, 0], sizes = [2, 48], strides = [1, 1]} : vector<2x384xf32> to vector<2x48xf32>
    %484 = arith.addf %482, %483 : vector<2x48xf32>
    %485 = arith.negf %484 : vector<2x48xf32>
    %486 = math.exp %485 : vector<2x48xf32>
    %cst_110 = arith.constant 1.000000e+00 : f32
    %487 = vector.broadcast %cst_110 : f32 to vector<2x48xf32>
    %488 = arith.addf %487, %486 : vector<2x48xf32>
    %489 = arith.divf %487, %488 : vector<2x48xf32>
    %490 = vector.extract_strided_slice %479 {offsets = [0, 128], sizes = [2, 48], strides = [1, 1]} : vector<2x384xf32> to vector<2x48xf32>
    %491 = vector.extract_strided_slice %481 {offsets = [0, 128], sizes = [2, 48], strides = [1, 1]} : vector<2x384xf32> to vector<2x48xf32>
    %492 = arith.addf %490, %491 : vector<2x48xf32>
    %493 = arith.negf %492 : vector<2x48xf32>
    %494 = math.exp %493 : vector<2x48xf32>
    %cst_111 = arith.constant 1.000000e+00 : f32
    %495 = vector.broadcast %cst_111 : f32 to vector<2x48xf32>
    %496 = arith.addf %495, %494 : vector<2x48xf32>
    %497 = arith.divf %495, %496 : vector<2x48xf32>
    %498 = vector.extract_strided_slice %479 {offsets = [0, 256], sizes = [2, 48], strides = [1, 1]} : vector<2x384xf32> to vector<2x48xf32>
    %499 = vector.extract_strided_slice %481 {offsets = [0, 256], sizes = [2, 48], strides = [1, 1]} : vector<2x384xf32> to vector<2x48xf32>
    %500 = arith.mulf %489, %499 : vector<2x48xf32>
    %501 = arith.addf %498, %500 : vector<2x48xf32>
    %502 = math.tanh %501 : vector<2x48xf32>
    %cst_112 = arith.constant 1.000000e+00 : f32
    %503 = vector.broadcast %cst_112 : f32 to vector<2x48xf32>
    %504 = arith.subf %503, %497 : vector<2x48xf32>
    %505 = arith.mulf %504, %502 : vector<2x48xf32>
    %506 = arith.mulf %497, %447 : vector<2x48xf32>
    %507 = arith.addf %505, %506 : vector<2x48xf32>
    %c8_113 = arith.constant 8 : index
    %c0_114 = arith.constant 0 : index
    %c0_115 = arith.constant 0 : index
    %508 = vector.load %arg4[%c8_113, %c0_114, %c0_115] : memref<12x2x384xf32, #tpu.memory_space<vmem>>, vector<1x2x384xf32>
    %509 = vector.shape_cast %508 : vector<1x2x384xf32> to vector<2x384xf32>
    %cst_116 = arith.constant dense<0.000000e+00> : vector<2x384xf32>
    %510 = tpu.matmul %477, %23, %cst_116 {dimension_numbers = #tpu.dot_dimension_numbers<[1], [0], [0], [1], [0, 0, 1, 1], [], []>} : vector<2x48xf32>, vector<48x384xf32>, vector<2x384xf32> -> vector<2x384xf32>
    %511 = arith.addf %510, %3 : vector<2x384xf32>
    %512 = vector.extract_strided_slice %509 {offsets = [0, 0], sizes = [2, 48], strides = [1, 1]} : vector<2x384xf32> to vector<2x48xf32>
    %513 = vector.extract_strided_slice %511 {offsets = [0, 0], sizes = [2, 48], strides = [1, 1]} : vector<2x384xf32> to vector<2x48xf32>
    %514 = arith.addf %512, %513 : vector<2x48xf32>
    %515 = arith.negf %514 : vector<2x48xf32>
    %516 = math.exp %515 : vector<2x48xf32>
    %cst_117 = arith.constant 1.000000e+00 : f32
    %517 = vector.broadcast %cst_117 : f32 to vector<2x48xf32>
    %518 = arith.addf %517, %516 : vector<2x48xf32>
    %519 = arith.divf %517, %518 : vector<2x48xf32>
    %520 = vector.extract_strided_slice %509 {offsets = [0, 128], sizes = [2, 48], strides = [1, 1]} : vector<2x384xf32> to vector<2x48xf32>
    %521 = vector.extract_strided_slice %511 {offsets = [0, 128], sizes = [2, 48], strides = [1, 1]} : vector<2x384xf32> to vector<2x48xf32>
    %522 = arith.addf %520, %521 : vector<2x48xf32>
    %523 = arith.negf %522 : vector<2x48xf32>
    %524 = math.exp %523 : vector<2x48xf32>
    %cst_118 = arith.constant 1.000000e+00 : f32
    %525 = vector.broadcast %cst_118 : f32 to vector<2x48xf32>
    %526 = arith.addf %525, %524 : vector<2x48xf32>
    %527 = arith.divf %525, %526 : vector<2x48xf32>
    %528 = vector.extract_strided_slice %509 {offsets = [0, 256], sizes = [2, 48], strides = [1, 1]} : vector<2x384xf32> to vector<2x48xf32>
    %529 = vector.extract_strided_slice %511 {offsets = [0, 256], sizes = [2, 48], strides = [1, 1]} : vector<2x384xf32> to vector<2x48xf32>
    %530 = arith.mulf %519, %529 : vector<2x48xf32>
    %531 = arith.addf %528, %530 : vector<2x48xf32>
    %532 = math.tanh %531 : vector<2x48xf32>
    %cst_119 = arith.constant 1.000000e+00 : f32
    %533 = vector.broadcast %cst_119 : f32 to vector<2x48xf32>
    %534 = arith.subf %533, %527 : vector<2x48xf32>
    %535 = arith.mulf %534, %532 : vector<2x48xf32>
    %536 = arith.mulf %527, %477 : vector<2x48xf32>
    %537 = arith.addf %535, %536 : vector<2x48xf32>
    %cst_120 = arith.constant dense<0.000000e+00> : vector<2x384xf32>
    %538 = tpu.matmul %537, %24, %cst_120 {dimension_numbers = #tpu.dot_dimension_numbers<[1], [0], [0], [1], [0, 0, 1, 1], [], []>} : vector<2x48xf32>, vector<48x384xf32>, vector<2x384xf32> -> vector<2x384xf32>
    %539 = arith.addf %538, %6 : vector<2x384xf32>
    %cst_121 = arith.constant dense<0.000000e+00> : vector<2x384xf32>
    %540 = tpu.matmul %507, %25, %cst_121 {dimension_numbers = #tpu.dot_dimension_numbers<[1], [0], [0], [1], [0, 0, 1, 1], [], []>} : vector<2x48xf32>, vector<48x384xf32>, vector<2x384xf32> -> vector<2x384xf32>
    %541 = arith.addf %540, %9 : vector<2x384xf32>
    %542 = vector.extract_strided_slice %539 {offsets = [0, 0], sizes = [2, 48], strides = [1, 1]} : vector<2x384xf32> to vector<2x48xf32>
    %543 = vector.extract_strided_slice %541 {offsets = [0, 0], sizes = [2, 48], strides = [1, 1]} : vector<2x384xf32> to vector<2x48xf32>
    %544 = arith.addf %542, %543 : vector<2x48xf32>
    %545 = arith.negf %544 : vector<2x48xf32>
    %546 = math.exp %545 : vector<2x48xf32>
    %cst_122 = arith.constant 1.000000e+00 : f32
    %547 = vector.broadcast %cst_122 : f32 to vector<2x48xf32>
    %548 = arith.addf %547, %546 : vector<2x48xf32>
    %549 = arith.divf %547, %548 : vector<2x48xf32>
    %550 = vector.extract_strided_slice %539 {offsets = [0, 128], sizes = [2, 48], strides = [1, 1]} : vector<2x384xf32> to vector<2x48xf32>
    %551 = vector.extract_strided_slice %541 {offsets = [0, 128], sizes = [2, 48], strides = [1, 1]} : vector<2x384xf32> to vector<2x48xf32>
    %552 = arith.addf %550, %551 : vector<2x48xf32>
    %553 = arith.negf %552 : vector<2x48xf32>
    %554 = math.exp %553 : vector<2x48xf32>
    %cst_123 = arith.constant 1.000000e+00 : f32
    %555 = vector.broadcast %cst_123 : f32 to vector<2x48xf32>
    %556 = arith.addf %555, %554 : vector<2x48xf32>
    %557 = arith.divf %555, %556 : vector<2x48xf32>
    %558 = vector.extract_strided_slice %539 {offsets = [0, 256], sizes = [2, 48], strides = [1, 1]} : vector<2x384xf32> to vector<2x48xf32>
    %559 = vector.extract_strided_slice %541 {offsets = [0, 256], sizes = [2, 48], strides = [1, 1]} : vector<2x384xf32> to vector<2x48xf32>
    %560 = arith.mulf %549, %559 : vector<2x48xf32>
    %561 = arith.addf %558, %560 : vector<2x48xf32>
    %562 = math.tanh %561 : vector<2x48xf32>
    %cst_124 = arith.constant 1.000000e+00 : f32
    %563 = vector.broadcast %cst_124 : f32 to vector<2x48xf32>
    %564 = arith.subf %563, %557 : vector<2x48xf32>
    %565 = arith.mulf %564, %562 : vector<2x48xf32>
    %566 = arith.mulf %557, %507 : vector<2x48xf32>
    %567 = arith.addf %565, %566 : vector<2x48xf32>
    %c9 = arith.constant 9 : index
    %c0_125 = arith.constant 0 : index
    %c0_126 = arith.constant 0 : index
    %568 = vector.load %arg4[%c9, %c0_125, %c0_126] : memref<12x2x384xf32, #tpu.memory_space<vmem>>, vector<1x2x384xf32>
    %569 = vector.shape_cast %568 : vector<1x2x384xf32> to vector<2x384xf32>
    %cst_127 = arith.constant dense<0.000000e+00> : vector<2x384xf32>
    %570 = tpu.matmul %537, %23, %cst_127 {dimension_numbers = #tpu.dot_dimension_numbers<[1], [0], [0], [1], [0, 0, 1, 1], [], []>} : vector<2x48xf32>, vector<48x384xf32>, vector<2x384xf32> -> vector<2x384xf32>
    %571 = arith.addf %570, %3 : vector<2x384xf32>
    %572 = vector.extract_strided_slice %569 {offsets = [0, 0], sizes = [2, 48], strides = [1, 1]} : vector<2x384xf32> to vector<2x48xf32>
    %573 = vector.extract_strided_slice %571 {offsets = [0, 0], sizes = [2, 48], strides = [1, 1]} : vector<2x384xf32> to vector<2x48xf32>
    %574 = arith.addf %572, %573 : vector<2x48xf32>
    %575 = arith.negf %574 : vector<2x48xf32>
    %576 = math.exp %575 : vector<2x48xf32>
    %cst_128 = arith.constant 1.000000e+00 : f32
    %577 = vector.broadcast %cst_128 : f32 to vector<2x48xf32>
    %578 = arith.addf %577, %576 : vector<2x48xf32>
    %579 = arith.divf %577, %578 : vector<2x48xf32>
    %580 = vector.extract_strided_slice %569 {offsets = [0, 128], sizes = [2, 48], strides = [1, 1]} : vector<2x384xf32> to vector<2x48xf32>
    %581 = vector.extract_strided_slice %571 {offsets = [0, 128], sizes = [2, 48], strides = [1, 1]} : vector<2x384xf32> to vector<2x48xf32>
    %582 = arith.addf %580, %581 : vector<2x48xf32>
    %583 = arith.negf %582 : vector<2x48xf32>
    %584 = math.exp %583 : vector<2x48xf32>
    %cst_129 = arith.constant 1.000000e+00 : f32
    %585 = vector.broadcast %cst_129 : f32 to vector<2x48xf32>
    %586 = arith.addf %585, %584 : vector<2x48xf32>
    %587 = arith.divf %585, %586 : vector<2x48xf32>
    %588 = vector.extract_strided_slice %569 {offsets = [0, 256], sizes = [2, 48], strides = [1, 1]} : vector<2x384xf32> to vector<2x48xf32>
    %589 = vector.extract_strided_slice %571 {offsets = [0, 256], sizes = [2, 48], strides = [1, 1]} : vector<2x384xf32> to vector<2x48xf32>
    %590 = arith.mulf %579, %589 : vector<2x48xf32>
    %591 = arith.addf %588, %590 : vector<2x48xf32>
    %592 = math.tanh %591 : vector<2x48xf32>
    %cst_130 = arith.constant 1.000000e+00 : f32
    %593 = vector.broadcast %cst_130 : f32 to vector<2x48xf32>
    %594 = arith.subf %593, %587 : vector<2x48xf32>
    %595 = arith.mulf %594, %592 : vector<2x48xf32>
    %596 = arith.mulf %587, %537 : vector<2x48xf32>
    %597 = arith.addf %595, %596 : vector<2x48xf32>
    %cst_131 = arith.constant dense<0.000000e+00> : vector<2x384xf32>
    %598 = tpu.matmul %597, %24, %cst_131 {dimension_numbers = #tpu.dot_dimension_numbers<[1], [0], [0], [1], [0, 0, 1, 1], [], []>} : vector<2x48xf32>, vector<48x384xf32>, vector<2x384xf32> -> vector<2x384xf32>
    %599 = arith.addf %598, %6 : vector<2x384xf32>
    %cst_132 = arith.constant dense<0.000000e+00> : vector<2x384xf32>
    %600 = tpu.matmul %567, %25, %cst_132 {dimension_numbers = #tpu.dot_dimension_numbers<[1], [0], [0], [1], [0, 0, 1, 1], [], []>} : vector<2x48xf32>, vector<48x384xf32>, vector<2x384xf32> -> vector<2x384xf32>
    %601 = arith.addf %600, %9 : vector<2x384xf32>
    %602 = vector.extract_strided_slice %599 {offsets = [0, 0], sizes = [2, 48], strides = [1, 1]} : vector<2x384xf32> to vector<2x48xf32>
    %603 = vector.extract_strided_slice %601 {offsets = [0, 0], sizes = [2, 48], strides = [1, 1]} : vector<2x384xf32> to vector<2x48xf32>
    %604 = arith.addf %602, %603 : vector<2x48xf32>
    %605 = arith.negf %604 : vector<2x48xf32>
    %606 = math.exp %605 : vector<2x48xf32>
    %cst_133 = arith.constant 1.000000e+00 : f32
    %607 = vector.broadcast %cst_133 : f32 to vector<2x48xf32>
    %608 = arith.addf %607, %606 : vector<2x48xf32>
    %609 = arith.divf %607, %608 : vector<2x48xf32>
    %610 = vector.extract_strided_slice %599 {offsets = [0, 128], sizes = [2, 48], strides = [1, 1]} : vector<2x384xf32> to vector<2x48xf32>
    %611 = vector.extract_strided_slice %601 {offsets = [0, 128], sizes = [2, 48], strides = [1, 1]} : vector<2x384xf32> to vector<2x48xf32>
    %612 = arith.addf %610, %611 : vector<2x48xf32>
    %613 = arith.negf %612 : vector<2x48xf32>
    %614 = math.exp %613 : vector<2x48xf32>
    %cst_134 = arith.constant 1.000000e+00 : f32
    %615 = vector.broadcast %cst_134 : f32 to vector<2x48xf32>
    %616 = arith.addf %615, %614 : vector<2x48xf32>
    %617 = arith.divf %615, %616 : vector<2x48xf32>
    %618 = vector.extract_strided_slice %599 {offsets = [0, 256], sizes = [2, 48], strides = [1, 1]} : vector<2x384xf32> to vector<2x48xf32>
    %619 = vector.extract_strided_slice %601 {offsets = [0, 256], sizes = [2, 48], strides = [1, 1]} : vector<2x384xf32> to vector<2x48xf32>
    %620 = arith.mulf %609, %619 : vector<2x48xf32>
    %621 = arith.addf %618, %620 : vector<2x48xf32>
    %622 = math.tanh %621 : vector<2x48xf32>
    %cst_135 = arith.constant 1.000000e+00 : f32
    %623 = vector.broadcast %cst_135 : f32 to vector<2x48xf32>
    %624 = arith.subf %623, %617 : vector<2x48xf32>
    %625 = arith.mulf %624, %622 : vector<2x48xf32>
    %626 = arith.mulf %617, %567 : vector<2x48xf32>
    %627 = arith.addf %625, %626 : vector<2x48xf32>
    %c10 = arith.constant 10 : index
    %c0_136 = arith.constant 0 : index
    %c0_137 = arith.constant 0 : index
    %628 = vector.load %arg4[%c10, %c0_136, %c0_137] : memref<12x2x384xf32, #tpu.memory_space<vmem>>, vector<1x2x384xf32>
    %629 = vector.shape_cast %628 : vector<1x2x384xf32> to vector<2x384xf32>
    %cst_138 = arith.constant dense<0.000000e+00> : vector<2x384xf32>
    %630 = tpu.matmul %597, %23, %cst_138 {dimension_numbers = #tpu.dot_dimension_numbers<[1], [0], [0], [1], [0, 0, 1, 1], [], []>} : vector<2x48xf32>, vector<48x384xf32>, vector<2x384xf32> -> vector<2x384xf32>
    %631 = arith.addf %630, %3 : vector<2x384xf32>
    %632 = vector.extract_strided_slice %629 {offsets = [0, 0], sizes = [2, 48], strides = [1, 1]} : vector<2x384xf32> to vector<2x48xf32>
    %633 = vector.extract_strided_slice %631 {offsets = [0, 0], sizes = [2, 48], strides = [1, 1]} : vector<2x384xf32> to vector<2x48xf32>
    %634 = arith.addf %632, %633 : vector<2x48xf32>
    %635 = arith.negf %634 : vector<2x48xf32>
    %636 = math.exp %635 : vector<2x48xf32>
    %cst_139 = arith.constant 1.000000e+00 : f32
    %637 = vector.broadcast %cst_139 : f32 to vector<2x48xf32>
    %638 = arith.addf %637, %636 : vector<2x48xf32>
    %639 = arith.divf %637, %638 : vector<2x48xf32>
    %640 = vector.extract_strided_slice %629 {offsets = [0, 128], sizes = [2, 48], strides = [1, 1]} : vector<2x384xf32> to vector<2x48xf32>
    %641 = vector.extract_strided_slice %631 {offsets = [0, 128], sizes = [2, 48], strides = [1, 1]} : vector<2x384xf32> to vector<2x48xf32>
    %642 = arith.addf %640, %641 : vector<2x48xf32>
    %643 = arith.negf %642 : vector<2x48xf32>
    %644 = math.exp %643 : vector<2x48xf32>
    %cst_140 = arith.constant 1.000000e+00 : f32
    %645 = vector.broadcast %cst_140 : f32 to vector<2x48xf32>
    %646 = arith.addf %645, %644 : vector<2x48xf32>
    %647 = arith.divf %645, %646 : vector<2x48xf32>
    %648 = vector.extract_strided_slice %629 {offsets = [0, 256], sizes = [2, 48], strides = [1, 1]} : vector<2x384xf32> to vector<2x48xf32>
    %649 = vector.extract_strided_slice %631 {offsets = [0, 256], sizes = [2, 48], strides = [1, 1]} : vector<2x384xf32> to vector<2x48xf32>
    %650 = arith.mulf %639, %649 : vector<2x48xf32>
    %651 = arith.addf %648, %650 : vector<2x48xf32>
    %652 = math.tanh %651 : vector<2x48xf32>
    %cst_141 = arith.constant 1.000000e+00 : f32
    %653 = vector.broadcast %cst_141 : f32 to vector<2x48xf32>
    %654 = arith.subf %653, %647 : vector<2x48xf32>
    %655 = arith.mulf %654, %652 : vector<2x48xf32>
    %656 = arith.mulf %647, %597 : vector<2x48xf32>
    %657 = arith.addf %655, %656 : vector<2x48xf32>
    %cst_142 = arith.constant dense<0.000000e+00> : vector<2x384xf32>
    %658 = tpu.matmul %657, %24, %cst_142 {dimension_numbers = #tpu.dot_dimension_numbers<[1], [0], [0], [1], [0, 0, 1, 1], [], []>} : vector<2x48xf32>, vector<48x384xf32>, vector<2x384xf32> -> vector<2x384xf32>
    %659 = arith.addf %658, %6 : vector<2x384xf32>
    %cst_143 = arith.constant dense<0.000000e+00> : vector<2x384xf32>
    %660 = tpu.matmul %627, %25, %cst_143 {dimension_numbers = #tpu.dot_dimension_numbers<[1], [0], [0], [1], [0, 0, 1, 1], [], []>} : vector<2x48xf32>, vector<48x384xf32>, vector<2x384xf32> -> vector<2x384xf32>
    %661 = arith.addf %660, %9 : vector<2x384xf32>
    %662 = vector.extract_strided_slice %659 {offsets = [0, 0], sizes = [2, 48], strides = [1, 1]} : vector<2x384xf32> to vector<2x48xf32>
    %663 = vector.extract_strided_slice %661 {offsets = [0, 0], sizes = [2, 48], strides = [1, 1]} : vector<2x384xf32> to vector<2x48xf32>
    %664 = arith.addf %662, %663 : vector<2x48xf32>
    %665 = arith.negf %664 : vector<2x48xf32>
    %666 = math.exp %665 : vector<2x48xf32>
    %cst_144 = arith.constant 1.000000e+00 : f32
    %667 = vector.broadcast %cst_144 : f32 to vector<2x48xf32>
    %668 = arith.addf %667, %666 : vector<2x48xf32>
    %669 = arith.divf %667, %668 : vector<2x48xf32>
    %670 = vector.extract_strided_slice %659 {offsets = [0, 128], sizes = [2, 48], strides = [1, 1]} : vector<2x384xf32> to vector<2x48xf32>
    %671 = vector.extract_strided_slice %661 {offsets = [0, 128], sizes = [2, 48], strides = [1, 1]} : vector<2x384xf32> to vector<2x48xf32>
    %672 = arith.addf %670, %671 : vector<2x48xf32>
    %673 = arith.negf %672 : vector<2x48xf32>
    %674 = math.exp %673 : vector<2x48xf32>
    %cst_145 = arith.constant 1.000000e+00 : f32
    %675 = vector.broadcast %cst_145 : f32 to vector<2x48xf32>
    %676 = arith.addf %675, %674 : vector<2x48xf32>
    %677 = arith.divf %675, %676 : vector<2x48xf32>
    %678 = vector.extract_strided_slice %659 {offsets = [0, 256], sizes = [2, 48], strides = [1, 1]} : vector<2x384xf32> to vector<2x48xf32>
    %679 = vector.extract_strided_slice %661 {offsets = [0, 256], sizes = [2, 48], strides = [1, 1]} : vector<2x384xf32> to vector<2x48xf32>
    %680 = arith.mulf %669, %679 : vector<2x48xf32>
    %681 = arith.addf %678, %680 : vector<2x48xf32>
    %682 = math.tanh %681 : vector<2x48xf32>
    %cst_146 = arith.constant 1.000000e+00 : f32
    %683 = vector.broadcast %cst_146 : f32 to vector<2x48xf32>
    %684 = arith.subf %683, %677 : vector<2x48xf32>
    %685 = arith.mulf %684, %682 : vector<2x48xf32>
    %686 = arith.mulf %677, %627 : vector<2x48xf32>
    %687 = arith.addf %685, %686 : vector<2x48xf32>
    %c11 = arith.constant 11 : index
    %c0_147 = arith.constant 0 : index
    %c0_148 = arith.constant 0 : index
    %688 = vector.load %arg4[%c11, %c0_147, %c0_148] : memref<12x2x384xf32, #tpu.memory_space<vmem>>, vector<1x2x384xf32>
    %689 = vector.shape_cast %688 : vector<1x2x384xf32> to vector<2x384xf32>
    %cst_149 = arith.constant dense<0.000000e+00> : vector<2x384xf32>
    %690 = tpu.matmul %657, %23, %cst_149 {dimension_numbers = #tpu.dot_dimension_numbers<[1], [0], [0], [1], [0, 0, 1, 1], [], []>} : vector<2x48xf32>, vector<48x384xf32>, vector<2x384xf32> -> vector<2x384xf32>
    %691 = arith.addf %690, %3 : vector<2x384xf32>
    %692 = vector.extract_strided_slice %689 {offsets = [0, 0], sizes = [2, 48], strides = [1, 1]} : vector<2x384xf32> to vector<2x48xf32>
    %693 = vector.extract_strided_slice %691 {offsets = [0, 0], sizes = [2, 48], strides = [1, 1]} : vector<2x384xf32> to vector<2x48xf32>
    %694 = arith.addf %692, %693 : vector<2x48xf32>
    %695 = arith.negf %694 : vector<2x48xf32>
    %696 = math.exp %695 : vector<2x48xf32>
    %cst_150 = arith.constant 1.000000e+00 : f32
    %697 = vector.broadcast %cst_150 : f32 to vector<2x48xf32>
    %698 = arith.addf %697, %696 : vector<2x48xf32>
    %699 = arith.divf %697, %698 : vector<2x48xf32>
    %700 = vector.extract_strided_slice %689 {offsets = [0, 128], sizes = [2, 48], strides = [1, 1]} : vector<2x384xf32> to vector<2x48xf32>
    %701 = vector.extract_strided_slice %691 {offsets = [0, 128], sizes = [2, 48], strides = [1, 1]} : vector<2x384xf32> to vector<2x48xf32>
    %702 = arith.addf %700, %701 : vector<2x48xf32>
    %703 = arith.negf %702 : vector<2x48xf32>
    %704 = math.exp %703 : vector<2x48xf32>
    %cst_151 = arith.constant 1.000000e+00 : f32
    %705 = vector.broadcast %cst_151 : f32 to vector<2x48xf32>
    %706 = arith.addf %705, %704 : vector<2x48xf32>
    %707 = arith.divf %705, %706 : vector<2x48xf32>
    %708 = vector.extract_strided_slice %689 {offsets = [0, 256], sizes = [2, 48], strides = [1, 1]} : vector<2x384xf32> to vector<2x48xf32>
    %709 = vector.extract_strided_slice %691 {offsets = [0, 256], sizes = [2, 48], strides = [1, 1]} : vector<2x384xf32> to vector<2x48xf32>
    %710 = arith.mulf %699, %709 : vector<2x48xf32>
    %711 = arith.addf %708, %710 : vector<2x48xf32>
    %712 = math.tanh %711 : vector<2x48xf32>
    %cst_152 = arith.constant 1.000000e+00 : f32
    %713 = vector.broadcast %cst_152 : f32 to vector<2x48xf32>
    %714 = arith.subf %713, %707 : vector<2x48xf32>
    %715 = arith.mulf %714, %712 : vector<2x48xf32>
    %716 = arith.mulf %707, %657 : vector<2x48xf32>
    %717 = arith.addf %715, %716 : vector<2x48xf32>
    %cst_153 = arith.constant dense<0.000000e+00> : vector<2x384xf32>
    %718 = tpu.matmul %717, %24, %cst_153 {dimension_numbers = #tpu.dot_dimension_numbers<[1], [0], [0], [1], [0, 0, 1, 1], [], []>} : vector<2x48xf32>, vector<48x384xf32>, vector<2x384xf32> -> vector<2x384xf32>
    %719 = arith.addf %718, %6 : vector<2x384xf32>
    %cst_154 = arith.constant dense<0.000000e+00> : vector<2x384xf32>
    %720 = tpu.matmul %687, %25, %cst_154 {dimension_numbers = #tpu.dot_dimension_numbers<[1], [0], [0], [1], [0, 0, 1, 1], [], []>} : vector<2x48xf32>, vector<48x384xf32>, vector<2x384xf32> -> vector<2x384xf32>
    %721 = arith.addf %720, %9 : vector<2x384xf32>
    %722 = vector.extract_strided_slice %719 {offsets = [0, 0], sizes = [2, 48], strides = [1, 1]} : vector<2x384xf32> to vector<2x48xf32>
    %723 = vector.extract_strided_slice %721 {offsets = [0, 0], sizes = [2, 48], strides = [1, 1]} : vector<2x384xf32> to vector<2x48xf32>
    %724 = arith.addf %722, %723 : vector<2x48xf32>
    %725 = arith.negf %724 : vector<2x48xf32>
    %726 = math.exp %725 : vector<2x48xf32>
    %cst_155 = arith.constant 1.000000e+00 : f32
    %727 = vector.broadcast %cst_155 : f32 to vector<2x48xf32>
    %728 = arith.addf %727, %726 : vector<2x48xf32>
    %729 = arith.divf %727, %728 : vector<2x48xf32>
    %730 = vector.extract_strided_slice %719 {offsets = [0, 128], sizes = [2, 48], strides = [1, 1]} : vector<2x384xf32> to vector<2x48xf32>
    %731 = vector.extract_strided_slice %721 {offsets = [0, 128], sizes = [2, 48], strides = [1, 1]} : vector<2x384xf32> to vector<2x48xf32>
    %732 = arith.addf %730, %731 : vector<2x48xf32>
    %733 = arith.negf %732 : vector<2x48xf32>
    %734 = math.exp %733 : vector<2x48xf32>
    %cst_156 = arith.constant 1.000000e+00 : f32
    %735 = vector.broadcast %cst_156 : f32 to vector<2x48xf32>
    %736 = arith.addf %735, %734 : vector<2x48xf32>
    %737 = arith.divf %735, %736 : vector<2x48xf32>
    %738 = vector.extract_strided_slice %719 {offsets = [0, 256], sizes = [2, 48], strides = [1, 1]} : vector<2x384xf32> to vector<2x48xf32>
    %739 = vector.extract_strided_slice %721 {offsets = [0, 256], sizes = [2, 48], strides = [1, 1]} : vector<2x384xf32> to vector<2x48xf32>
    %740 = arith.mulf %729, %739 : vector<2x48xf32>
    %741 = arith.addf %738, %740 : vector<2x48xf32>
    %742 = math.tanh %741 : vector<2x48xf32>
    %cst_157 = arith.constant 1.000000e+00 : f32
    %743 = vector.broadcast %cst_157 : f32 to vector<2x48xf32>
    %744 = arith.subf %743, %737 : vector<2x48xf32>
    %745 = arith.mulf %744, %742 : vector<2x48xf32>
    %746 = arith.mulf %737, %687 : vector<2x48xf32>
    %747 = arith.addf %745, %746 : vector<2x48xf32>
    %748 = tpu.concatenate %567, %627, %687, %747 in 0 : vector<2x48xf32>, vector<2x48xf32>, vector<2x48xf32>, vector<2x48xf32> -> vector<8x48xf32>
    %c160 = arith.constant 160 : index
    %c0_158 = arith.constant 0 : index
    %749 = vector.load %arg1[%c160, %c0_158] : memref<208x384xf32, #tpu.memory_space<vmem>>, vector<48x384xf32>
    %cst_159 = arith.constant dense<0.000000e+00> : vector<8x384xf32>
    %750 = tpu.matmul %748, %749, %cst_159 {dimension_numbers = #tpu.dot_dimension_numbers<[1], [0], [0], [1], [0, 0, 1, 1], [], []>} : vector<8x48xf32>, vector<48x384xf32>, vector<8x384xf32> -> vector<8x384xf32>
    %751 = vector.broadcast %10 : vector<1x384xf32> to vector<8x384xf32>
    %752 = arith.addf %750, %751 : vector<8x384xf32>
    %753 = vector.extract_strided_slice %752 {offsets = [0, 0], sizes = [8, 3], strides = [1, 1]} : vector<8x384xf32> to vector<8x3xf32>
    %754 = vector.shape_cast %753 : vector<8x3xf32> to vector<4x2x3xf32>
    %c0_160 = arith.constant 0 : index
    %c0_161 = arith.constant 0 : index
    %c0_162 = arith.constant 0 : index
    %755 = vector.load %arg3[%c0_160, %c0_161, %c0_162] : memref<4x2x3xf32, #tpu.memory_space<vmem>>, vector<4x2x3xf32>
    tpu.vector_store %arg3[%c0_160, %c0_161, %c0_162], %754 {strides = array<i32>} : memref<4x2x3xf32, #tpu.memory_space<vmem>>, vector<4x2x3xf32>,
    return
  }
}

</mosaic_0001>

<llo_original>
// kernel: tpu_custom_call.1
$region0: #{tpu_custom_call.1}
  #allocation0 [shape = 'u32[]', space=smem, size = 0x4, offset = 0x4, fixed_abs, tag = 'smem constant byte address 0x4 - core index']
  #allocation1 [shape = 'u32[144,128]{1,0:T(1,128)}', space=vmem, size = 0x12000, scoped, tag = 'internal scratch']
  #allocation2 [shape = 'f32[12,2,384]{2,1,0:T(2,128)}', space=vmem, size = 0x9000, scoped, tag = 'scratch operand']
  %s0 = inlined_call_operand.hbm [shape: f32[8,2,16], index: 0, kind: input, shape index: {}]
  %s1 = inlined_call_operand.hbm [shape: f32[208,384], index: 1, kind: input, shape index: {}]
  %s2 = inlined_call_operand.hbm [shape: f32[8,384], index: 2, kind: input, shape index: {}]
  %s3 = inlined_call_operand.vmem [shape: f32[4,2,3], index: 3, kind: output, shape index: {}]
  %s4 = sld [smem:[#allocation0]]
  $region34: #{tpu_custom_call.1} parent=0
    _
  %s6 = ssub.s32 1, %s4
  %s7 = scalar_select 0, %s6, %s4
  $region1: #{tpu_custom_call.1} parent=0
    #allocation3 [shape = 'u8[8192]{0}', space=vmem, size = 0x2000, scoped, tag = 'input window, operand 0, single buffered']
    #allocation4 [shape = 's32[1]{0}', space=sflag, size = 0x4, scoped, tag = 'scoped memory for tpu_custom_call.1']
    #allocation5 [shape = 'u8[319488]{0}', space=vmem, size = 0x4e000, scoped, tag = 'input window, operand 1, single buffered']
    #allocation6 [shape = 's32[1]{0}', space=sflag, size = 0x4, scoped, tag = 'scoped memory for tpu_custom_call.1']
    #allocation7 [shape = 'u8[12288]{0}', space=vmem, size = 0x3000, scoped, tag = 'input window, operand 2, single buffered']
    %8 = vsyncpa [#allocation4], 0
    %9 = vsyncpa [#allocation6], 0
    // Predicated region
    $region2: #{tpu_custom_call.1} parent=1 // pred_check
      _
    $region3: #{tpu_custom_call.1} parent=1 // pred_check_branch
      %11 = sbr.rel (0) target = $region5
    $region4: #{tpu_custom_call.1} parent=1 // pred_region
      %s13 = ssub.s32 256, 256
      %14 = vsyncadd [#allocation4], %s13
      %s15 = sshll.u32 [#allocation3], 4
      %s16 = int_to_ptr.vmem [resolvable:$true] %s15
      %21 = dma.hbm_to_vmem [thread:$0]  %s0, 256, %s16, [#allocation4], 32, 32, 2
    $region5: #{tpu_custom_call.1} parent=1 // pred_fallthru
      _
    // Predicated region
    $region6: #{tpu_custom_call.1} parent=1 // pred_check
      _
    $region7: #{tpu_custom_call.1} parent=1 // pred_check_branch
      %23 = sbr.rel (0) target = $region9
    $region8: #{tpu_custom_call.1} parent=1 // pred_region
      %s25 = ssub.s32 9984, 9984
      %26 = vsyncadd [#allocation6], %s25
      %s27 = sshll.u32 [#allocation5], 4
      %s28 = int_to_ptr.vmem [resolvable:$true] %s27
      %33 = dma.hbm_to_vmem [thread:$0]  %s1, 9984, %s28, [#allocation6], 384, 384, 24
    $region9: #{tpu_custom_call.1} parent=1 // pred_fallthru
      _
    // Predicated region
    $region10: #{tpu_custom_call.1} parent=1 // pred_check
      _
    $region11: #{tpu_custom_call.1} parent=1 // pred_check_branch
      %35 = sbr.rel (0) target = $region13
    $region12: #{tpu_custom_call.1} parent=1 // pred_region
      %s37 = ssub.s32 384, 384
      %38 = vsyncadd [#allocation6], %s37
      %s40 = sshll.u32 [#allocation7], 4
      %s41 = int_to_ptr.vmem [resolvable:$true] %s40
      %43 = dma.hbm_to_vmem [thread:$0]  %s2, 384, %s41, [#allocation6]
    $region13: #{tpu_custom_call.1} parent=1 // pred_fallthru
      _
    // Predicated region
    $region14: #{tpu_custom_call.1} parent=1 // pred_check
      _
    $region15: #{tpu_custom_call.1} parent=1 // pred_check_branch
      %45 = sbr.rel (0) target = $region17
    $region16: #{tpu_custom_call.1} parent=1 // pred_region
      %46 = dma.done [#allocation4], 256
    $region17: #{tpu_custom_call.1} parent=1 // pred_fallthru
      _
    // Predicated region
    $region18: #{tpu_custom_call.1} parent=1 // pred_check
      _
    $region19: #{tpu_custom_call.1} parent=1 // pred_check_branch
      %48 = sbr.rel (0) target = $region21
    $region20: #{tpu_custom_call.1} parent=1 // pred_region
      %49 = dma.done [#allocation6], 9984
    $region21: #{tpu_custom_call.1} parent=1 // pred_fallthru
      _
    // Predicated region
    $region22: #{tpu_custom_call.1} parent=1 // pred_check
      _
    $region23: #{tpu_custom_call.1} parent=1 // pred_check_branch
      %51 = sbr.rel (0) target = $region25
    $region24: #{tpu_custom_call.1} parent=1 // pred_region
      %52 = dma.done [#allocation6], 384
    $region25: #{tpu_custom_call.1} parent=1 // pred_fallthru
      _
    %v53 = vld [vmem:[#allocation7] ss:$8 sm:$0x7]
    %s54 = scalar_lea.vmem [#allocation7], 1
    %v55 = vld [vmem:[%s54] ss:$8 sm:$0x7]
    %v57 = vlaneseq
    %v58 = vshrl.u32 %v57, 7
    %v59 = vsub.s32 0, %v58
    %v60 = vrot.slane %v55, %v59
    %v61 = vlaneseq
    %v62 = vshrl.u32 %v61, 7
    %v63 = vsub.s32 1, %v62
    %v64 = vrot.slane %v55, %v63
    %v65 = vlaneseq
    %v66 = vshrl.u32 %v65, 7
    %v67 = vsub.s32 2, %v66
    %v68 = vrot.slane %v55, %v67
    %s72 = scalar_lea.vmem [#allocation7], 2
    %v73 = vld [vmem:[%s72] ss:$8 sm:$0x7]
    %v75 = vlaneseq
    %v76 = vshrl.u32 %v75, 7
    %v77 = vsub.s32 0, %v76
    %v78 = vrot.slane %v73, %v77
    %v79 = vlaneseq
    %v80 = vshrl.u32 %v79, 7
    %v81 = vsub.s32 1, %v80
    %v82 = vrot.slane %v73, %v81
    %v83 = vlaneseq
    %v84 = vshrl.u32 %v83, 7
    %v85 = vsub.s32 2, %v84
    %v86 = vrot.slane %v73, %v85
    %s90 = scalar_lea.vmem [#allocation7], 3
    %v91 = vld [vmem:[%s90] ss:$8 sm:$0x7]
    %v93 = vlaneseq
    %v94 = vshrl.u32 %v93, 7
    %v95 = vsub.s32 0, %v94
    %v96 = vrot.slane %v91, %v95
    %v97 = vlaneseq
    %v98 = vshrl.u32 %v97, 7
    %v99 = vsub.s32 1, %v98
    %v100 = vrot.slane %v91, %v99
    %v101 = vlaneseq
    %v102 = vshrl.u32 %v101, 7
    %v103 = vsub.s32 2, %v102
    %v104 = vrot.slane %v91, %v103
    %s108 = scalar_lea.vmem [#allocation7], 4
    %v109 = vld [vmem:[%s108] ss:$8 sm:$0x7]
    %v110 = vld [vmem:[#allocation3] sm:$0x3]
    %v111 = vld [vmem:[#allocation3 + $0x2] sm:$0x3]
    %v112 = vld [vmem:[#allocation3 + $0x4] sm:$0x3]
    %v113 = vld [vmem:[#allocation3 + $0x6] sm:$0x3]
    %v114 = vld [vmem:[#allocation3 + $0x8] sm:$0x3]
    %v115 = vld [vmem:[#allocation3 + $0xa] sm:$0x3]
    %v116 = vld [vmem:[#allocation3 + $0xc] sm:$0x3]
    %v117 = vld [vmem:[#allocation3 + $0xe] sm:$0x3]
    %v118 = vld [vmem:[#allocation5] sm:$0xff]
    %v119 = vld [vmem:[#allocation5 + $0x8] sm:$0xff]
    %v120 = vld [vmem:[#allocation5 + $0x10] sm:$0xff]
    %v121 = vld [vmem:[#allocation5 + $0x18] sm:$0xff]
    %v122 = vld [vmem:[#allocation5 + $0x20] sm:$0xff]
    %v123 = vld [vmem:[#allocation5 + $0x28] sm:$0xff]
    %v125 = vlaneseq
    %v126 = vshrl.u32 %v125, 7
    %v127 = vsub.s32 0, %v126
    %v128 = vrot.slane %v53, %v127
    %v129 = vlaneseq
    %v130 = vshrl.u32 %v129, 7
    %v131 = vsub.s32 1, %v130
    %v132 = vrot.slane %v53, %v131
    %v133 = vlaneseq
    %v134 = vshrl.u32 %v133, 7
    %v135 = vsub.s32 2, %v134
    %v136 = vrot.slane %v53, %v135
    %v148 = vcombine.low %v110, %v111
    %v149 = vcombine.low %v112, %v113
    %v151 = vunpack.c.l.s4 1983009808
    %v152 = vunpack.c.0.s8 %v151
    %v153 = vlaneseq
    %v154 = vshrl.u32 %v153, 7
    %v155 = vsub.s32 %v152, %v154
    %v156 = vrot.slane %v148, %v155
    %v158 = vunpack.c.l.s4 1983009808
    %v159 = vunpack.c.0.s8 %v158
    %v160 = vlaneseq
    %v161 = vshrl.u32 %v160, 7
    %v162 = vsub.s32 %v159, %v161
    %v163 = vrot.slane %v149, %v162
    %v164 = vcombine.low %v156, %v163
    %v165 = vcombine.low %v114, %v115
    %v166 = vcombine.low %v116, %v117
    %v168 = vunpack.c.l.s4 1983009808
    %v169 = vunpack.c.0.s8 %v168
    %v170 = vlaneseq
    %v171 = vshrl.u32 %v170, 7
    %v172 = vsub.s32 %v169, %v171
    %v173 = vrot.slane %v165, %v172
    %v175 = vunpack.c.l.s4 1983009808
    %v176 = vunpack.c.0.s8 %v175
    %v177 = vlaneseq
    %v178 = vshrl.u32 %v177, 7
    %v179 = vsub.s32 %v176, %v178
    %v180 = vrot.slane %v166, %v179
    %v181 = vcombine.low %v173, %v180
    %vm182 = vcmask 130048
    %v183 = vsel %vm182, %v164, 0
    %v185 = vsel %vm182, %v181, 0
    %187 = vmatprep.subr.mxu0 %v119
    %188 = vmatpush1.msra.mxu0 %v118
    %189 = vmatprep.subr.mxu0 %v122
    %190 = vmatpush1.msra.mxu0 %v121
    %191 = vmatprep.subr.mxu0 0.0
    %192 = vmatpush1.msra.mxu0 0.0
    %193 = vmatprep.subr.mxu0 0.0
    %194 = vmatpush1.msra.mxu0 0.0
    %195 = vmatprep.subr.mxu0 0.0
    %196 = vmatpush1.msra.mxu0 0.0
    %197 = vmatprep.subr.mxu0 0.0
    %198 = vmatpush1.msra.mxu0 0.0
    %199 = vmatprep.subr.mxu0 0.0
    %200 = vmatpush1.msra.mxu0 0.0
    %201 = vmatprep.subr.mxu0 0.0
    %202 = vmatpush1.msra.mxu0 0.0
    %203 = vmatprep.subr.mxu0 0.0
    %204 = vmatpush1.msra.mxu0 0.0
    %205 = vmatprep.subr.mxu0 0.0
    %206 = vmatpush1.msra.mxu0 0.0
    %207 = vmatprep.subr.mxu0 0.0
    %208 = vmatpush1.msra.mxu0 0.0
    %209 = vmatprep.subr.mxu0 0.0
    %210 = vmatpush1.msra.mxu0 0.0
    %211 = vmatprep.subr.mxu0 0.0
    %212 = vmatpush1.msra.mxu0 0.0
    %213 = vmatprep.subr.mxu0 0.0
    %214 = vmatpush1.msra.mxu0 0.0
    %215 = vmatprep.subr.mxu0 0.0
    %216 = vmatpush1.msra.mxu0 0.0
    %217 = vmatprep.subr.mxu0 0.0
    %218 = vmatpush1.msra.mxu0 0.0
    %219 = vmatprep.subr.mxu0 0.0
    %220 = vmatpush1.msra.mxu0 0.0
    %221 = vmatprep.subr.mxu0 0.0
    %222 = vmatpush1.msra.mxu0 0.0
    %223 = vmatprep.subr.mxu0 0.0
    %224 = vmatpush1.msra.mxu0 0.0
    %225 = vmatprep.subr.mxu0 0.0
    %226 = vmatpush1.msra.mxu0 0.0
    %227 = vmatprep.subr.mxu0 0.0
    %228 = vmatpush1.msra.mxu0 0.0
    %229 = vmatprep.subr.mxu0 0.0
    %230 = vmatpush1.msra.mxu0 0.0
    %231 = vmatprep.subr.mxu0 0.0
    %232 = vmatpush1.msra.mxu0 0.0
    %233 = vmatprep.subr.mxu0 0.0
    %234 = vmatpush1.msra.mxu0 0.0
    %235 = vmatprep.subr.mxu0 0.0
    %236 = vmatpush1.msra.mxu0 0.0
    %237 = vmatprep.subr.mxu0 0.0
    %238 = vmatpush1.msra.mxu0 0.0
    %239 = vmatprep.subr.mxu0 0.0
    %240 = vmatpush1.msra.mxu0 0.0
    %241 = vmatprep.subr.mxu0 0.0
    %242 = vmatpush1.msra.mxu0 0.0
    %243 = vmatprep.subr.mxu0 0.0
    %244 = vmatpush1.msra.mxu0 0.0
    %245 = vmatprep.subr.mxu0 0.0
    %246 = vmatpush1.msra.mxu0 0.0
    %247 = vmatprep.subr.mxu0 0.0
    %248 = vmatpush1.msra.mxu0 0.0
    %249 = vmatprep.subr.mxu0 0.0
    %250 = vmatpush1.msra.mxu0 0.0
    %251 = vmatprep.mubr.f32.mxu0 0.0
    %252 = vmatmul.mubr.f32.gmra.mrb[0].mxu0 %v183
    %v253 = vpop.f32.mrb[0].mxu0
    %v254 = vadd.f32 %v128, %v253
    %v255 = vpop.f32.mrb[0].mxu0
    %v256 = vadd.f32 %v132, %v255
    %257 = vmatprep.mubr.f32.mxu0 0.0
    %258 = vmatmul.mubr.f32.gmra.mrb[0].mxu0 %v185
    %v259 = vpop.f32.mrb[0].mxu0
    %v260 = vadd.f32 %v128, %v259
    %v261 = vpop.f32.mrb[0].mxu0
    %v262 = vadd.f32 %v132, %v261
    %263 = vdwg.mxu0
    %264 = vmatprep.subr.mxu0 0.0
    %265 = vmatpush1.msra.mxu0 %v120
    %266 = vmatprep.subr.mxu0 0.0
    %267 = vmatpush1.msra.mxu0 %v123
    %268 = vmatprep.subr.mxu0 0.0
    %269 = vmatpush1.msra.mxu0 0.0
    %270 = vmatprep.subr.mxu0 0.0
    %271 = vmatpush1.msra.mxu0 0.0
    %272 = vmatprep.subr.mxu0 0.0
    %273 = vmatpush1.msra.mxu0 0.0
    %274 = vmatprep.subr.mxu0 0.0
    %275 = vmatpush1.msra.mxu0 0.0
    %276 = vmatprep.subr.mxu0 0.0
    %277 = vmatpush1.msra.mxu0 0.0
    %278 = vmatprep.subr.mxu0 0.0
    %279 = vmatpush1.msra.mxu0 0.0
    %280 = vmatprep.subr.mxu0 0.0
    %281 = vmatpush1.msra.mxu0 0.0
    %282 = vmatprep.subr.mxu0 0.0
    %283 = vmatpush1.msra.mxu0 0.0
    %284 = vmatprep.subr.mxu0 0.0
    %285 = vmatpush1.msra.mxu0 0.0
    %286 = vmatprep.subr.mxu0 0.0
    %287 = vmatpush1.msra.mxu0 0.0
    %288 = vmatprep.subr.mxu0 0.0
    %289 = vmatpush1.msra.mxu0 0.0
    %290 = vmatprep.subr.mxu0 0.0
    %291 = vmatpush1.msra.mxu0 0.0
    %292 = vmatprep.subr.mxu0 0.0
    %293 = vmatpush1.msra.mxu0 0.0
    %294 = vmatprep.subr.mxu0 0.0
    %295 = vmatpush1.msra.mxu0 0.0
    %296 = vmatprep.subr.mxu0 0.0
    %297 = vmatpush1.msra.mxu0 0.0
    %298 = vmatprep.subr.mxu0 0.0
    %299 = vmatpush1.msra.mxu0 0.0
    %300 = vmatprep.subr.mxu0 0.0
    %301 = vmatpush1.msra.mxu0 0.0
    %302 = vmatprep.subr.mxu0 0.0
    %303 = vmatpush1.msra.mxu0 0.0
    %304 = vmatprep.subr.mxu0 0.0
    %305 = vmatpush1.msra.mxu0 0.0
    %306 = vmatprep.subr.mxu0 0.0
    %307 = vmatpush1.msra.mxu0 0.0
    %308 = vmatprep.subr.mxu0 0.0
    %309 = vmatpush1.msra.mxu0 0.0
    %310 = vmatprep.subr.mxu0 0.0
    %311 = vmatpush1.msra.mxu0 0.0
    %312 = vmatprep.subr.mxu0 0.0
    %313 = vmatpush1.msra.mxu0 0.0
    %314 = vmatprep.subr.mxu0 0.0
    %315 = vmatpush1.msra.mxu0 0.0
    %316 = vmatprep.subr.mxu0 0.0
    %317 = vmatpush1.msra.mxu0 0.0
    %318 = vmatprep.subr.mxu0 0.0
    %319 = vmatpush1.msra.mxu0 0.0
    %320 = vmatprep.subr.mxu0 0.0
    %321 = vmatpush1.msra.mxu0 0.0
    %322 = vmatprep.subr.mxu0 0.0
    %323 = vmatpush1.msra.mxu0 0.0
    %324 = vmatprep.subr.mxu0 0.0
    %325 = vmatpush1.msra.mxu0 0.0
    %326 = vmatprep.subr.mxu0 0.0
    %327 = vmatpush1.msra.mxu0 0.0
    %328 = vmatprep.mubr.f32.mxu0 0.0
    %329 = vmatmul.mubr.f32.gmra.mrb[0].mxu0 %v183
    %v330 = vpop.f32.mrb[0].mxu0
    %v331 = vadd.f32 %v136, %v330
    %v332 = vpop.f32.mrb[0].mxu0
    %333 = vmatprep.mubr.f32.mxu0 0.0
    %334 = vmatmul.mubr.f32.gmra.mrb[0].mxu0 %v185
    %v335 = vpop.f32.mrb[0].mxu0
    %v336 = vadd.f32 %v136, %v335
    %v337 = vpop.f32.mrb[0].mxu0
    %338 = vdwg.mxu0
    %v345 = vcombine.low %v254, %v256
    %v346 = vcombine.high %v254, %v256
    %v347 = vcombine.high %v331, %v331
    %v349 = vunpack.c.l.s4 1983009808
    %v350 = vunpack.c.0.s8 %v349
    %v351 = vlaneseq
    %v352 = vshrl.u32 %v351, 7
    %v353 = vsub.s32 %v350, %v352
    %v354 = vrot.slane %v345, %v353
    %v356 = vunpack.c.l.s4 1983009808
    %v357 = vunpack.c.0.s8 %v356
    %v358 = vlaneseq
    %v359 = vshrl.u32 %v358, 7
    %v360 = vsub.s32 %v357, %v359
    %v361 = vrot.slane %v346, %v360
    %v363 = vunpack.c.l.s4 1983009808
    %v364 = vunpack.c.0.s8 %v363
    %v365 = vlaneseq
    %v366 = vshrl.u32 %v365, 7
    %v367 = vsub.s32 %v364, %v366
    %v368 = vrot.slane %v331, %v367
    %v370 = vunpack.c.l.s4 1983009808
    %v371 = vunpack.c.0.s8 %v370
    %v372 = vlaneseq
    %v373 = vshrl.u32 %v372, 7
    %v374 = vsub.s32 %v371, %v373
    %v375 = vrot.slane %v347, %v374
    %v376 = vcombine.low %v354, %v368
    %v377 = vcombine.high %v354, %v368
    %v378 = vcombine.low %v361, %v375
    %v379 = vcombine.high %v361, %v375
    %v380 = vcombine.low %v260, %v262
    %v381 = vcombine.high %v260, %v262
    %v382 = vcombine.high %v336, %v336
    %v384 = vunpack.c.l.s4 1983009808
    %v385 = vunpack.c.0.s8 %v384
    %v386 = vlaneseq
    %v387 = vshrl.u32 %v386, 7
    %v388 = vsub.s32 %v385, %v387
    %v389 = vrot.slane %v380, %v388
    %v391 = vunpack.c.l.s4 1983009808
    %v392 = vunpack.c.0.s8 %v391
    %v393 = vlaneseq
    %v394 = vshrl.u32 %v393, 7
    %v395 = vsub.s32 %v392, %v394
    %v396 = vrot.slane %v381, %v395
    %v398 = vunpack.c.l.s4 1983009808
    %v399 = vunpack.c.0.s8 %v398
    %v400 = vlaneseq
    %v401 = vshrl.u32 %v400, 7
    %v402 = vsub.s32 %v399, %v401
    %v403 = vrot.slane %v336, %v402
    %v405 = vunpack.c.l.s4 1983009808
    %v406 = vunpack.c.0.s8 %v405
    %v407 = vlaneseq
    %v408 = vshrl.u32 %v407, 7
    %v409 = vsub.s32 %v406, %v408
    %v410 = vrot.slane %v382, %v409
    %v411 = vcombine.low %v389, %v403
    %v412 = vcombine.high %v389, %v403
    %v413 = vcombine.low %v396, %v410
    %v414 = vcombine.high %v396, %v410
    %423 = vst [vmem:[#allocation2] sm:$0x3f] %v376
    %424 = vst [vmem:[#allocation2 + $0x6] sm:$0x3f] %v377
    %425 = vst [vmem:[#allocation2 + $0xc] sm:$0x3f] %v378
    %426 = vst [vmem:[#allocation2 + $0x12] sm:$0x3f] %v379
    %427 = vst [vmem:[#allocation2 + $0x18] sm:$0x3f] %v411
    %428 = vst [vmem:[#allocation2 + $0x1e] sm:$0x3f] %v412
    %429 = vst [vmem:[#allocation2 + $0x24] sm:$0x3f] %v413
    %430 = vst [vmem:[#allocation2 + $0x2a] sm:$0x3f] %v414
    %v431 = vcombine.low %v128, %v132
    %v433 = vunpack.c.l.s4 1983009808
    %v434 = vunpack.c.0.s8 %v433
    %v435 = vlaneseq
    %v436 = vshrl.u32 %v435, 7
    %v437 = vsub.s32 %v434, %v436
    %v438 = vrot.slane %v431, %v437
    %v440 = vunpack.c.l.s4 1983009808
    %v441 = vunpack.c.0.s8 %v440
    %v442 = vlaneseq
    %v443 = vshrl.u32 %v442, 7
    %v444 = vsub.s32 %v441, %v443
    %v445 = vrot.slane %v136, %v444
    %v446 = vcombine.low %v438, %v445
    %s448 = scalar_lea.vmem [#allocation2], 48
    %449 = vst [vmem:[%s448] sm:$0x3f] %v446
    %450 = vst [vmem:[%s448 + $0x6] sm:$0x3f] %v446
    %451 = vst [vmem:[%s448 + $0xc] sm:$0x3f] %v446
    %452 = vst [vmem:[%s448 + $0x12] sm:$0x3f] %v446
    %v453 = vld [vmem:[#allocation5 + $0x30] sm:$0xff]
    %v454 = vld [vmem:[#allocation5 + $0x38] sm:$0xff]
    %v455 = vld [vmem:[#allocation5 + $0x40] sm:$0xff]
    %v456 = vld [vmem:[#allocation5 + $0x48] sm:$0xff]
    %v457 = vld [vmem:[#allocation5 + $0x50] sm:$0xff]
    %v458 = vld [vmem:[#allocation5 + $0x58] sm:$0xff]
    %v459 = vld [vmem:[#allocation5 + $0x60] sm:$0xff]
    %v460 = vld [vmem:[#allocation5 + $0x68] sm:$0xff]
    %v461 = vld [vmem:[#allocation5 + $0x70] sm:$0xff]
    %v462 = vld [vmem:[#allocation5 + $0x78] sm:$0xff]
    %v463 = vld [vmem:[#allocation5 + $0x80] sm:$0xff]
    %v464 = vld [vmem:[#allocation5 + $0x88] sm:$0xff]
    %v465 = vld [vmem:[#allocation5 + $0x90] sm:$0xff]
    %v466 = vld [vmem:[#allocation5 + $0x98] sm:$0xff]
    %v467 = vld [vmem:[#allocation5 + $0xa0] sm:$0xff]
    %v468 = vld [vmem:[#allocation5 + $0xa8] sm:$0xff]
    %v469 = vld [vmem:[#allocation5 + $0xb0] sm:$0xff]
    %v470 = vld [vmem:[#allocation5 + $0xb8] sm:$0xff]
    %v471 = vld [vmem:[#allocation5 + $0xc0] sm:$0xff]
    %v472 = vld [vmem:[#allocation5 + $0xc8] sm:$0xff]
    %v473 = vld [vmem:[#allocation5 + $0xd0] sm:$0xff]
    %v474 = vld [vmem:[#allocation5 + $0xd8] sm:$0xff]
    %v475 = vld [vmem:[#allocation5 + $0xe0] sm:$0xff]
    %v476 = vld [vmem:[#allocation5 + $0xe8] sm:$0xff]
    %v477 = vld [vmem:[#allocation5 + $0xf0] sm:$0xff]
    %v478 = vld [vmem:[#allocation5 + $0xf8] sm:$0xff]
    %v479 = vld [vmem:[#allocation5 + $0x100] sm:$0xff]
    %v480 = vld [vmem:[#allocation5 + $0x108] sm:$0xff]
    %v481 = vld [vmem:[#allocation5 + $0x110] sm:$0xff]
    %v482 = vld [vmem:[#allocation5 + $0x118] sm:$0xff]
    %v483 = vld [vmem:[#allocation5 + $0x120] sm:$0xff]
    %v484 = vld [vmem:[#allocation5 + $0x128] sm:$0xff]
    %v485 = vld [vmem:[#allocation5 + $0x130] sm:$0xff]
    %v486 = vld [vmem:[#allocation5 + $0x138] sm:$0xff]
    %v487 = vld [vmem:[#allocation5 + $0x140] sm:$0xff]
    %v488 = vld [vmem:[#allocation5 + $0x148] sm:$0xff]
    %v489 = vld [vmem:[#allocation5 + $0x150] sm:$0xff]
    %v490 = vld [vmem:[#allocation5 + $0x158] sm:$0xff]
    %v491 = vld [vmem:[#allocation5 + $0x160] sm:$0xff]
    %v492 = vld [vmem:[#allocation5 + $0x168] sm:$0xff]
    %v493 = vld [vmem:[#allocation5 + $0x170] sm:$0xff]
    %v494 = vld [vmem:[#allocation5 + $0x178] sm:$0xff]
    %v495 = vld [vmem:[#allocation5 + $0x180] sm:$0xff]
    %v496 = vld [vmem:[#allocation5 + $0x188] sm:$0xff]
    %v497 = vld [vmem:[#allocation5 + $0x190] sm:$0xff]
    %v498 = vld [vmem:[#allocation5 + $0x198] sm:$0xff]
    %v499 = vld [vmem:[#allocation5 + $0x1a0] sm:$0xff]
    %v500 = vld [vmem:[#allocation5 + $0x1a8] sm:$0xff]
    %v501 = vld [vmem:[#allocation5 + $0x1b0] sm:$0xff]
    %v502 = vld [vmem:[#allocation5 + $0x1b8] sm:$0xff]
    %v503 = vld [vmem:[#allocation5 + $0x1c0] sm:$0xff]
    %v504 = vld [vmem:[#allocation5 + $0x1c8] sm:$0xff]
    %v505 = vld [vmem:[#allocation5 + $0x1d0] sm:$0xff]
    %v506 = vld [vmem:[#allocation5 + $0x1d8] sm:$0xff]
    %v507 = vld [vmem:[#allocation2] sm:$0x3f]
    %vm508 = vcmask 392192
    %v510 = vsel %vm508, 0.0, 0
    %512 = vmatprep.subr.mxu0 %v454
    %513 = vmatpush1.msra.mxu0 %v453
    %514 = vmatprep.subr.mxu0 %v457
    %515 = vmatpush1.msra.mxu0 %v456
    %516 = vmatprep.subr.mxu0 %v460
    %517 = vmatpush1.msra.mxu0 %v459
    %518 = vmatprep.subr.mxu0 %v463
    %519 = vmatpush1.msra.mxu0 %v462
    %520 = vmatprep.subr.mxu0 %v466
    %521 = vmatpush1.msra.mxu0 %v465
    %522 = vmatprep.subr.mxu0 %v469
    %523 = vmatpush1.msra.mxu0 %v468
    %524 = vmatprep.subr.mxu0 0.0
    %525 = vmatpush1.msra.mxu0 0.0
    %526 = vmatprep.subr.mxu0 0.0
    %527 = vmatpush1.msra.mxu0 0.0
    %528 = vmatprep.subr.mxu0 0.0
    %529 = vmatpush1.msra.mxu0 0.0
    %530 = vmatprep.subr.mxu0 0.0
    %531 = vmatpush1.msra.mxu0 0.0
    %532 = vmatprep.subr.mxu0 0.0
    %533 = vmatpush1.msra.mxu0 0.0
    %534 = vmatprep.subr.mxu0 0.0
    %535 = vmatpush1.msra.mxu0 0.0
    %536 = vmatprep.subr.mxu0 0.0
    %537 = vmatpush1.msra.mxu0 0.0
    %538 = vmatprep.subr.mxu0 0.0
    %539 = vmatpush1.msra.mxu0 0.0
    %540 = vmatprep.subr.mxu0 0.0
    %541 = vmatpush1.msra.mxu0 0.0
    %542 = vmatprep.subr.mxu0 0.0
    %543 = vmatpush1.msra.mxu0 0.0
    %544 = vmatprep.subr.mxu0 0.0
    %545 = vmatpush1.msra.mxu0 0.0
    %546 = vmatprep.subr.mxu0 0.0
    %547 = vmatpush1.msra.mxu0 0.0
    %548 = vmatprep.subr.mxu0 0.0
    %549 = vmatpush1.msra.mxu0 0.0
    %550 = vmatprep.subr.mxu0 0.0
    %551 = vmatpush1.msra.mxu0 0.0
    %552 = vmatprep.subr.mxu0 0.0
    %553 = vmatpush1.msra.mxu0 0.0
    %554 = vmatprep.subr.mxu0 0.0
    %555 = vmatpush1.msra.mxu0 0.0
    %556 = vmatprep.subr.mxu0 0.0
    %557 = vmatpush1.msra.mxu0 0.0
    %558 = vmatprep.subr.mxu0 0.0
    %559 = vmatpush1.msra.mxu0 0.0
    %560 = vmatprep.subr.mxu0 0.0
    %561 = vmatpush1.msra.mxu0 0.0
    %562 = vmatprep.subr.mxu0 0.0
    %563 = vmatpush1.msra.mxu0 0.0
    %564 = vmatprep.subr.mxu0 0.0
    %565 = vmatpush1.msra.mxu0 0.0
    %566 = vmatprep.subr.mxu0 0.0
    %567 = vmatpush1.msra.mxu0 0.0
    %568 = vmatprep.subr.mxu0 0.0
    %569 = vmatpush1.msra.mxu0 0.0
    %570 = vmatprep.subr.mxu0 0.0
    %571 = vmatpush1.msra.mxu0 0.0
    %572 = vmatprep.subr.mxu0 0.0
    %573 = vmatpush1.msra.mxu0 0.0
    %574 = vmatprep.subr.mxu0 0.0
    %575 = vmatpush1.msra.mxu0 0.0
    %576 = vmatprep.mubr.f32.mxu0 0.0
    %577 = vmatmul.mubr.f32.gmra.mrb[0].mxu0 %v510
    %v578 = vpop.f32.mrb[0].mxu0
    %v579 = vadd.f32 %v60, %v578
    %v580 = vpop.f32.mrb[0].mxu0
    %v581 = vadd.f32 %v64, %v580
    %582 = vdwg.mxu0
    %583 = vmatprep.subr.mxu0 0.0
    %584 = vmatpush1.msra.mxu0 %v455
    %585 = vmatprep.subr.mxu0 0.0
    %586 = vmatpush1.msra.mxu0 %v458
    %587 = vmatprep.subr.mxu0 0.0
    %588 = vmatpush1.msra.mxu0 %v461
    %589 = vmatprep.subr.mxu0 0.0
    %590 = vmatpush1.msra.mxu0 %v464
    %591 = vmatprep.subr.mxu0 0.0
    %592 = vmatpush1.msra.mxu0 %v467
    %593 = vmatprep.subr.mxu0 0.0
    %594 = vmatpush1.msra.mxu0 %v470
    %595 = vmatprep.subr.mxu0 0.0
    %596 = vmatpush1.msra.mxu0 0.0
    %597 = vmatprep.subr.mxu0 0.0
    %598 = vmatpush1.msra.mxu0 0.0
    %599 = vmatprep.subr.mxu0 0.0
    %600 = vmatpush1.msra.mxu0 0.0
    %601 = vmatprep.subr.mxu0 0.0
    %602 = vmatpush1.msra.mxu0 0.0
    %603 = vmatprep.subr.mxu0 0.0
    %604 = vmatpush1.msra.mxu0 0.0
    %605 = vmatprep.subr.mxu0 0.0
    %606 = vmatpush1.msra.mxu0 0.0
    %607 = vmatprep.subr.mxu0 0.0
    %608 = vmatpush1.msra.mxu0 0.0
    %609 = vmatprep.subr.mxu0 0.0
    %610 = vmatpush1.msra.mxu0 0.0
    %611 = vmatprep.subr.mxu0 0.0
    %612 = vmatpush1.msra.mxu0 0.0
    %613 = vmatprep.subr.mxu0 0.0
    %614 = vmatpush1.msra.mxu0 0.0
    %615 = vmatprep.subr.mxu0 0.0
    %616 = vmatpush1.msra.mxu0 0.0
    %617 = vmatprep.subr.mxu0 0.0
    %618 = vmatpush1.msra.mxu0 0.0
    %619 = vmatprep.subr.mxu0 0.0
    %620 = vmatpush1.msra.mxu0 0.0
    %621 = vmatprep.subr.mxu0 0.0
    %622 = vmatpush1.msra.mxu0 0.0
    %623 = vmatprep.subr.mxu0 0.0
    %624 = vmatpush1.msra.mxu0 0.0
    %625 = vmatprep.subr.mxu0 0.0
    %626 = vmatpush1.msra.mxu0 0.0
    %627 = vmatprep.subr.mxu0 0.0
    %628 = vmatpush1.msra.mxu0 0.0
    %629 = vmatprep.subr.mxu0 0.0
    %630 = vmatpush1.msra.mxu0 0.0
    %631 = vmatprep.subr.mxu0 0.0
    %632 = vmatpush1.msra.mxu0 0.0
    %633 = vmatprep.subr.mxu0 0.0
    %634 = vmatpush1.msra.mxu0 0.0
    %635 = vmatprep.subr.mxu0 0.0
    %636 = vmatpush1.msra.mxu0 0.0
    %637 = vmatprep.subr.mxu0 0.0
    %638 = vmatpush1.msra.mxu0 0.0
    %639 = vmatprep.subr.mxu0 0.0
    %640 = vmatpush1.msra.mxu0 0.0
    %641 = vmatprep.subr.mxu0 0.0
    %642 = vmatpush1.msra.mxu0 0.0
    %643 = vmatprep.subr.mxu0 0.0
    %644 = vmatpush1.msra.mxu0 0.0
    %645 = vmatprep.subr.mxu0 0.0
    %646 = vmatpush1.msra.mxu0 0.0
    %647 = vmatprep.mubr.f32.mxu0 0.0
    %648 = vmatmul.mubr.f32.gmra.mrb[0].mxu0 %v510
    %v649 = vpop.f32.mrb[0].mxu0
    %v650 = vadd.f32 %v68, %v649
    %v651 = vpop.f32.mrb[0].mxu0
    %652 = vdwg.mxu0
    %v653 = vadd.f32 %v507, %v579
    %v654 = vxor.u32 %v653, 2147483648
    %v655 = vmul.f32 %v654, 1.442695
    %v656 = vpow.pop %v655
    %v657 = vadd.f32 %v656, 1.0
    %v658 = vrcp.pop %v657
    %v659 = vmul.f32 1.0, %v658
    %v661 = vrot.slane %v507, 2
    %v663 = vadd.f32 %v661, %v581
    %v664 = vxor.u32 %v663, 2147483648
    %v665 = vmul.f32 %v664, 1.442695
    %v666 = vpow.pop %v665
    %v667 = vadd.f32 %v666, 1.0
    %v668 = vrcp.pop %v667
    %v669 = vmul.f32 1.0, %v668
    %v670 = vmul.f32 %v659, %v650
    %v671 = vrot.slane %v507, 4
    %v673 = vadd.f32 %v671, %v670
    %v674 = vtanh.pop %v673
    %v675 = vsub.f32 1.0, %v669
    %v676 = vmul.f32 %v675, %v674
    %v677 = vmul.f32 %v669, 0.0
    %v678 = vadd.f32 %v676, %v677
    %v680 = vsel %vm508, %v678, 0
    %682 = vmatprep.subr.mxu0 %v472
    %683 = vmatpush1.msra.mxu0 %v471
    %684 = vmatprep.subr.mxu0 %v475
    %685 = vmatpush1.msra.mxu0 %v474
    %686 = vmatprep.subr.mxu0 %v478
    %687 = vmatpush1.msra.mxu0 %v477
    %688 = vmatprep.subr.mxu0 %v481
    %689 = vmatpush1.msra.mxu0 %v480
    %690 = vmatprep.subr.mxu0 %v484
    %691 = vmatpush1.msra.mxu0 %v483
    %692 = vmatprep.subr.mxu0 %v487
    %693 = vmatpush1.msra.mxu0 %v486
    %694 = vmatprep.subr.mxu0 0.0
    %695 = vmatpush1.msra.mxu0 0.0
    %696 = vmatprep.subr.mxu0 0.0
    %697 = vmatpush1.msra.mxu0 0.0
    %698 = vmatprep.subr.mxu0 0.0
    %699 = vmatpush1.msra.mxu0 0.0
    %700 = vmatprep.subr.mxu0 0.0
    %701 = vmatpush1.msra.mxu0 0.0
    %702 = vmatprep.subr.mxu0 0.0
    %703 = vmatpush1.msra.mxu0 0.0
    %704 = vmatprep.subr.mxu0 0.0
    %705 = vmatpush1.msra.mxu0 0.0
    %706 = vmatprep.subr.mxu0 0.0
    %707 = vmatpush1.msra.mxu0 0.0
    %708 = vmatprep.subr.mxu0 0.0
    %709 = vmatpush1.msra.mxu0 0.0
    %710 = vmatprep.subr.mxu0 0.0
    %711 = vmatpush1.msra.mxu0 0.0
    %712 = vmatprep.subr.mxu0 0.0
    %713 = vmatpush1.msra.mxu0 0.0
    %714 = vmatprep.subr.mxu0 0.0
    %715 = vmatpush1.msra.mxu0 0.0
    %716 = vmatprep.subr.mxu0 0.0
    %717 = vmatpush1.msra.mxu0 0.0
    %718 = vmatprep.subr.mxu0 0.0
    %719 = vmatpush1.msra.mxu0 0.0
    %720 = vmatprep.subr.mxu0 0.0
    %721 = vmatpush1.msra.mxu0 0.0
    %722 = vmatprep.subr.mxu0 0.0
    %723 = vmatpush1.msra.mxu0 0.0
    %724 = vmatprep.subr.mxu0 0.0
    %725 = vmatpush1.msra.mxu0 0.0
    %726 = vmatprep.subr.mxu0 0.0
    %727 = vmatpush1.msra.mxu0 0.0
    %728 = vmatprep.subr.mxu0 0.0
    %729 = vmatpush1.msra.mxu0 0.0
    %730 = vmatprep.subr.mxu0 0.0
    %731 = vmatpush1.msra.mxu0 0.0
    %732 = vmatprep.subr.mxu0 0.0
    %733 = vmatpush1.msra.mxu0 0.0
    %734 = vmatprep.subr.mxu0 0.0
    %735 = vmatpush1.msra.mxu0 0.0
    %736 = vmatprep.subr.mxu0 0.0
    %737 = vmatpush1.msra.mxu0 0.0
    %738 = vmatprep.subr.mxu0 0.0
    %739 = vmatpush1.msra.mxu0 0.0
    %740 = vmatprep.subr.mxu0 0.0
    %741 = vmatpush1.msra.mxu0 0.0
    %742 = vmatprep.subr.mxu0 0.0
    %743 = vmatpush1.msra.mxu0 0.0
    %744 = vmatprep.subr.mxu0 0.0
    %745 = vmatpush1.msra.mxu0 0.0
    %746 = vmatprep.mubr.f32.mxu0 0.0
    %747 = vmatmul.mubr.f32.gmra.mrb[0].mxu0 %v680
    %v748 = vpop.f32.mrb[0].mxu0
    %v749 = vadd.f32 %v78, %v748
    %v750 = vpop.f32.mrb[0].mxu0
    %v751 = vadd.f32 %v82, %v750
    %752 = vdwg.mxu0
    %753 = vmatprep.subr.mxu0 0.0
    %754 = vmatpush1.msra.mxu0 %v473
    %755 = vmatprep.subr.mxu0 0.0
    %756 = vmatpush1.msra.mxu0 %v476
    %757 = vmatprep.subr.mxu0 0.0
    %758 = vmatpush1.msra.mxu0 %v479
    %759 = vmatprep.subr.mxu0 0.0
    %760 = vmatpush1.msra.mxu0 %v482
    %761 = vmatprep.subr.mxu0 0.0
    %762 = vmatpush1.msra.mxu0 %v485
    %763 = vmatprep.subr.mxu0 0.0
    %764 = vmatpush1.msra.mxu0 %v488
    %765 = vmatprep.subr.mxu0 0.0
    %766 = vmatpush1.msra.mxu0 0.0
    %767 = vmatprep.subr.mxu0 0.0
    %768 = vmatpush1.msra.mxu0 0.0
    %769 = vmatprep.subr.mxu0 0.0
    %770 = vmatpush1.msra.mxu0 0.0
    %771 = vmatprep.subr.mxu0 0.0
    %772 = vmatpush1.msra.mxu0 0.0
    %773 = vmatprep.subr.mxu0 0.0
    %774 = vmatpush1.msra.mxu0 0.0
    %775 = vmatprep.subr.mxu0 0.0
    %776 = vmatpush1.msra.mxu0 0.0
    %777 = vmatprep.subr.mxu0 0.0
    %778 = vmatpush1.msra.mxu0 0.0
    %779 = vmatprep.subr.mxu0 0.0
    %780 = vmatpush1.msra.mxu0 0.0
    %781 = vmatprep.subr.mxu0 0.0
    %782 = vmatpush1.msra.mxu0 0.0
    %783 = vmatprep.subr.mxu0 0.0
    %784 = vmatpush1.msra.mxu0 0.0
    %785 = vmatprep.subr.mxu0 0.0
    %786 = vmatpush1.msra.mxu0 0.0
    %787 = vmatprep.subr.mxu0 0.0
    %788 = vmatpush1.msra.mxu0 0.0
    %789 = vmatprep.subr.mxu0 0.0
    %790 = vmatpush1.msra.mxu0 0.0
    %791 = vmatprep.subr.mxu0 0.0
    %792 = vmatpush1.msra.mxu0 0.0
    %793 = vmatprep.subr.mxu0 0.0
    %794 = vmatpush1.msra.mxu0 0.0
    %795 = vmatprep.subr.mxu0 0.0
    %796 = vmatpush1.msra.mxu0 0.0
    %797 = vmatprep.subr.mxu0 0.0
    %798 = vmatpush1.msra.mxu0 0.0
    %799 = vmatprep.subr.mxu0 0.0
    %800 = vmatpush1.msra.mxu0 0.0
    %801 = vmatprep.subr.mxu0 0.0
    %802 = vmatpush1.msra.mxu0 0.0
    %803 = vmatprep.subr.mxu0 0.0
    %804 = vmatpush1.msra.mxu0 0.0
    %805 = vmatprep.subr.mxu0 0.0
    %806 = vmatpush1.msra.mxu0 0.0
    %807 = vmatprep.subr.mxu0 0.0
    %808 = vmatpush1.msra.mxu0 0.0
    %809 = vmatprep.subr.mxu0 0.0
    %810 = vmatpush1.msra.mxu0 0.0
    %811 = vmatprep.subr.mxu0 0.0
    %812 = vmatpush1.msra.mxu0 0.0
    %813 = vmatprep.subr.mxu0 0.0
    %814 = vmatpush1.msra.mxu0 0.0
    %815 = vmatprep.subr.mxu0 0.0
    %816 = vmatpush1.msra.mxu0 0.0
    %817 = vmatprep.mubr.f32.mxu0 0.0
    %818 = vmatmul.mubr.f32.gmra.mrb[0].mxu0 %v680
    %v819 = vpop.f32.mrb[0].mxu0
    %v820 = vadd.f32 %v86, %v819
    %v821 = vpop.f32.mrb[0].mxu0
    %822 = vdwg.mxu0
    %823 = vmatprep.subr.mxu0 %v490
    %824 = vmatpush1.msra.mxu0 %v489
    %825 = vmatprep.subr.mxu0 %v493
    %826 = vmatpush1.msra.mxu0 %v492
    %827 = vmatprep.subr.mxu0 %v496
    %828 = vmatpush1.msra.mxu0 %v495
    %829 = vmatprep.subr.mxu0 %v499
    %830 = vmatpush1.msra.mxu0 %v498
    %831 = vmatprep.subr.mxu0 %v502
    %832 = vmatpush1.msra.mxu0 %v501
    %833 = vmatprep.subr.mxu0 %v505
    %834 = vmatpush1.msra.mxu0 %v504
    %835 = vmatprep.subr.mxu0 0.0
    %836 = vmatpush1.msra.mxu0 0.0
    %837 = vmatprep.subr.mxu0 0.0
    %838 = vmatpush1.msra.mxu0 0.0
    %839 = vmatprep.subr.mxu0 0.0
    %840 = vmatpush1.msra.mxu0 0.0
    %841 = vmatprep.subr.mxu0 0.0
    %842 = vmatpush1.msra.mxu0 0.0
    %843 = vmatprep.subr.mxu0 0.0
    %844 = vmatpush1.msra.mxu0 0.0
    %845 = vmatprep.subr.mxu0 0.0
    %846 = vmatpush1.msra.mxu0 0.0
    %847 = vmatprep.subr.mxu0 0.0
    %848 = vmatpush1.msra.mxu0 0.0
    %849 = vmatprep.subr.mxu0 0.0
    %850 = vmatpush1.msra.mxu0 0.0
    %851 = vmatprep.subr.mxu0 0.0
    %852 = vmatpush1.msra.mxu0 0.0
    %853 = vmatprep.subr.mxu0 0.0
    %854 = vmatpush1.msra.mxu0 0.0
    %855 = vmatprep.subr.mxu0 0.0
    %856 = vmatpush1.msra.mxu0 0.0
    %857 = vmatprep.subr.mxu0 0.0
    %858 = vmatpush1.msra.mxu0 0.0
    %859 = vmatprep.subr.mxu0 0.0
    %860 = vmatpush1.msra.mxu0 0.0
    %861 = vmatprep.subr.mxu0 0.0
    %862 = vmatpush1.msra.mxu0 0.0
    %863 = vmatprep.subr.mxu0 0.0
    %864 = vmatpush1.msra.mxu0 0.0
    %865 = vmatprep.subr.mxu0 0.0
    %866 = vmatpush1.msra.mxu0 0.0
    %867 = vmatprep.subr.mxu0 0.0
    %868 = vmatpush1.msra.mxu0 0.0
    %869 = vmatprep.subr.mxu0 0.0
    %870 = vmatpush1.msra.mxu0 0.0
    %871 = vmatprep.subr.mxu0 0.0
    %872 = vmatpush1.msra.mxu0 0.0
    %873 = vmatprep.subr.mxu0 0.0
    %874 = vmatpush1.msra.mxu0 0.0
    %875 = vmatprep.subr.mxu0 0.0
    %876 = vmatpush1.msra.mxu0 0.0
    %877 = vmatprep.subr.mxu0 0.0
    %878 = vmatpush1.msra.mxu0 0.0
    %879 = vmatprep.subr.mxu0 0.0
    %880 = vmatpush1.msra.mxu0 0.0
    %881 = vmatprep.subr.mxu0 0.0
    %882 = vmatpush1.msra.mxu0 0.0
    %883 = vmatprep.subr.mxu0 0.0
    %884 = vmatpush1.msra.mxu0 0.0
    %885 = vmatprep.subr.mxu0 0.0
    %886 = vmatpush1.msra.mxu0 0.0
    %887 = vmatprep.mubr.f32.mxu0 0.0
    %888 = vmatmul.mubr.f32.gmra.mrb[0].mxu0 %v510
    %v889 = vpop.f32.mrb[0].mxu0
    %v890 = vadd.f32 %v96, %v889
    %v891 = vpop.f32.mrb[0].mxu0
    %v892 = vadd.f32 %v100, %v891
    %893 = vdwg.mxu0
    %894 = vmatprep.subr.mxu0 0.0
    %895 = vmatpush1.msra.mxu0 %v491
    %896 = vmatprep.subr.mxu0 0.0
    %897 = vmatpush1.msra.mxu0 %v494
    %898 = vmatprep.subr.mxu0 0.0
    %899 = vmatpush1.msra.mxu0 %v497
    %900 = vmatprep.subr.mxu0 0.0
    %901 = vmatpush1.msra.mxu0 %v500
    %902 = vmatprep.subr.mxu0 0.0
    %903 = vmatpush1.msra.mxu0 %v503
    %904 = vmatprep.subr.mxu0 0.0
    %905 = vmatpush1.msra.mxu0 %v506
    %906 = vmatprep.subr.mxu0 0.0
    %907 = vmatpush1.msra.mxu0 0.0
    %908 = vmatprep.subr.mxu0 0.0
    %909 = vmatpush1.msra.mxu0 0.0
    %910 = vmatprep.subr.mxu0 0.0
    %911 = vmatpush1.msra.mxu0 0.0
    %912 = vmatprep.subr.mxu0 0.0
    %913 = vmatpush1.msra.mxu0 0.0
    %914 = vmatprep.subr.mxu0 0.0
    %915 = vmatpush1.msra.mxu0 0.0
    %916 = vmatprep.subr.mxu0 0.0
    %917 = vmatpush1.msra.mxu0 0.0
    %918 = vmatprep.subr.mxu0 0.0
    %919 = vmatpush1.msra.mxu0 0.0
    %920 = vmatprep.subr.mxu0 0.0
    %921 = vmatpush1.msra.mxu0 0.0
    %922 = vmatprep.subr.mxu0 0.0
    %923 = vmatpush1.msra.mxu0 0.0
    %924 = vmatprep.subr.mxu0 0.0
    %925 = vmatpush1.msra.mxu0 0.0
    %926 = vmatprep.subr.mxu0 0.0
    %927 = vmatpush1.msra.mxu0 0.0
    %928 = vmatprep.subr.mxu0 0.0
    %929 = vmatpush1.msra.mxu0 0.0
    %930 = vmatprep.subr.mxu0 0.0
    %931 = vmatpush1.msra.mxu0 0.0
    %932 = vmatprep.subr.mxu0 0.0
    %933 = vmatpush1.msra.mxu0 0.0
    %934 = vmatprep.subr.mxu0 0.0
    %935 = vmatpush1.msra.mxu0 0.0
    %936 = vmatprep.subr.mxu0 0.0
    %937 = vmatpush1.msra.mxu0 0.0
    %938 = vmatprep.subr.mxu0 0.0
    %939 = vmatpush1.msra.mxu0 0.0
    %940 = vmatprep.subr.mxu0 0.0
    %941 = vmatpush1.msra.mxu0 0.0
    %942 = vmatprep.subr.mxu0 0.0
    %943 = vmatpush1.msra.mxu0 0.0
    %944 = vmatprep.subr.mxu0 0.0
    %945 = vmatpush1.msra.mxu0 0.0
    %946 = vmatprep.subr.mxu0 0.0
    %947 = vmatpush1.msra.mxu0 0.0
    %948 = vmatprep.subr.mxu0 0.0
    %949 = vmatpush1.msra.mxu0 0.0
    %950 = vmatprep.subr.mxu0 0.0
    %951 = vmatpush1.msra.mxu0 0.0
    %952 = vmatprep.subr.mxu0 0.0
    %953 = vmatpush1.msra.mxu0 0.0
    %954 = vmatprep.subr.mxu0 0.0
    %955 = vmatpush1.msra.mxu0 0.0
    %956 = vmatprep.subr.mxu0 0.0
    %957 = vmatpush1.msra.mxu0 0.0
    %958 = vmatprep.mubr.f32.mxu0 0.0
    %959 = vmatmul.mubr.f32.gmra.mrb[0].mxu0 %v510
    %v960 = vpop.f32.mrb[0].mxu0
    %v961 = vadd.f32 %v104, %v960
    %v962 = vpop.f32.mrb[0].mxu0
    %963 = vdwg.mxu0
    %v964 = vadd.f32 %v749, %v890
    %v965 = vxor.u32 %v964, 2147483648
    %v966 = vmul.f32 %v965, 1.442695
    %v967 = vpow.pop %v966
    %v968 = vadd.f32 %v967, 1.0
    %v969 = vrcp.pop %v968
    %v970 = vmul.f32 1.0, %v969
    %v971 = vadd.f32 %v751, %v892
    %v972 = vxor.u32 %v971, 2147483648
    %v973 = vmul.f32 %v972, 1.442695
    %v974 = vpow.pop %v973
    %v975 = vadd.f32 %v974, 1.0
    %v976 = vrcp.pop %v975
    %v977 = vmul.f32 1.0, %v976
    %v978 = vmul.f32 %v970, %v961
    %v979 = vadd.f32 %v820, %v978
    %v980 = vtanh.pop %v979
    %v981 = vsub.f32 1.0, %v977
    %v982 = vmul.f32 %v981, %v980
    %v983 = vmul.f32 %v977, 0.0
    %v984 = vadd.f32 %v982, %v983
    %s985 = scalar_lea.vmem [#allocation2], 6
    %v986 = vld [vmem:[%s985] sm:$0x3f]
    %987 = vmatprep.subr.mxu0 %v454
    %988 = vmatpush1.msra.mxu0 %v453
    %989 = vmatprep.subr.mxu0 %v457
    %990 = vmatpush1.msra.mxu0 %v456
    %991 = vmatprep.subr.mxu0 %v460
    %992 = vmatpush1.msra.mxu0 %v459
    %993 = vmatprep.subr.mxu0 %v463
    %994 = vmatpush1.msra.mxu0 %v462
    %995 = vmatprep.subr.mxu0 %v466
    %996 = vmatpush1.msra.mxu0 %v465
    %997 = vmatprep.subr.mxu0 %v469
    %998 = vmatpush1.msra.mxu0 %v468
    %999 = vmatprep.subr.mxu0 0.0
    %1000 = vmatpush1.msra.mxu0 0.0
    %1001 = vmatprep.subr.mxu0 0.0
    %1002 = vmatpush1.msra.mxu0 0.0
    %1003 = vmatprep.subr.mxu0 0.0
    %1004 = vmatpush1.msra.mxu0 0.0
    %1005 = vmatprep.subr.mxu0 0.0
    %1006 = vmatpush1.msra.mxu0 0.0
    %1007 = vmatprep.subr.mxu0 0.0
    %1008 = vmatpush1.msra.mxu0 0.0
    %1009 = vmatprep.subr.mxu0 0.0
    %1010 = vmatpush1.msra.mxu0 0.0
    %1011 = vmatprep.subr.mxu0 0.0
    %1012 = vmatpush1.msra.mxu0 0.0
    %1013 = vmatprep.subr.mxu0 0.0
    %1014 = vmatpush1.msra.mxu0 0.0
    %1015 = vmatprep.subr.mxu0 0.0
    %1016 = vmatpush1.msra.mxu0 0.0
    %1017 = vmatprep.subr.mxu0 0.0
    %1018 = vmatpush1.msra.mxu0 0.0
    %1019 = vmatprep.subr.mxu0 0.0
    %1020 = vmatpush1.msra.mxu0 0.0
    %1021 = vmatprep.subr.mxu0 0.0
    %1022 = vmatpush1.msra.mxu0 0.0
    %1023 = vmatprep.subr.mxu0 0.0
    %1024 = vmatpush1.msra.mxu0 0.0
    %1025 = vmatprep.subr.mxu0 0.0
    %1026 = vmatpush1.msra.mxu0 0.0
    %1027 = vmatprep.subr.mxu0 0.0
    %1028 = vmatpush1.msra.mxu0 0.0
    %1029 = vmatprep.subr.mxu0 0.0
    %1030 = vmatpush1.msra.mxu0 0.0
    %1031 = vmatprep.subr.mxu0 0.0
    %1032 = vmatpush1.msra.mxu0 0.0
    %1033 = vmatprep.subr.mxu0 0.0
    %1034 = vmatpush1.msra.mxu0 0.0
    %1035 = vmatprep.subr.mxu0 0.0
    %1036 = vmatpush1.msra.mxu0 0.0
    %1037 = vmatprep.subr.mxu0 0.0
    %1038 = vmatpush1.msra.mxu0 0.0
    %1039 = vmatprep.subr.mxu0 0.0
    %1040 = vmatpush1.msra.mxu0 0.0
    %1041 = vmatprep.subr.mxu0 0.0
    %1042 = vmatpush1.msra.mxu0 0.0
    %1043 = vmatprep.subr.mxu0 0.0
    %1044 = vmatpush1.msra.mxu0 0.0
    %1045 = vmatprep.subr.mxu0 0.0
    %1046 = vmatpush1.msra.mxu0 0.0
    %1047 = vmatprep.subr.mxu0 0.0
    %1048 = vmatpush1.msra.mxu0 0.0
    %1049 = vmatprep.subr.mxu0 0.0
    %1050 = vmatpush1.msra.mxu0 0.0
    %1051 = vmatprep.mubr.f32.mxu0 0.0
    %1052 = vmatmul.mubr.f32.gmra.mrb[0].mxu0 %v680
    %v1053 = vpop.f32.mrb[0].mxu0
    %v1054 = vadd.f32 %v60, %v1053
    %v1055 = vpop.f32.mrb[0].mxu0
    %v1056 = vadd.f32 %v64, %v1055
    %1057 = vdwg.mxu0
    %1058 = vmatprep.subr.mxu0 0.0
    %1059 = vmatpush1.msra.mxu0 %v455
    %1060 = vmatprep.subr.mxu0 0.0
    %1061 = vmatpush1.msra.mxu0 %v458
    %1062 = vmatprep.subr.mxu0 0.0
    %1063 = vmatpush1.msra.mxu0 %v461
    %1064 = vmatprep.subr.mxu0 0.0
    %1065 = vmatpush1.msra.mxu0 %v464
    %1066 = vmatprep.subr.mxu0 0.0
    %1067 = vmatpush1.msra.mxu0 %v467
    %1068 = vmatprep.subr.mxu0 0.0
    %1069 = vmatpush1.msra.mxu0 %v470
    %1070 = vmatprep.subr.mxu0 0.0
    %1071 = vmatpush1.msra.mxu0 0.0
    %1072 = vmatprep.subr.mxu0 0.0
    %1073 = vmatpush1.msra.mxu0 0.0
    %1074 = vmatprep.subr.mxu0 0.0
    %1075 = vmatpush1.msra.mxu0 0.0
    %1076 = vmatprep.subr.mxu0 0.0
    %1077 = vmatpush1.msra.mxu0 0.0
    %1078 = vmatprep.subr.mxu0 0.0
    %1079 = vmatpush1.msra.mxu0 0.0
    %1080 = vmatprep.subr.mxu0 0.0
    %1081 = vmatpush1.msra.mxu0 0.0
    %1082 = vmatprep.subr.mxu0 0.0
    %1083 = vmatpush1.msra.mxu0 0.0
    %1084 = vmatprep.subr.mxu0 0.0
    %1085 = vmatpush1.msra.mxu0 0.0
    %1086 = vmatprep.subr.mxu0 0.0
    %1087 = vmatpush1.msra.mxu0 0.0
    %1088 = vmatprep.subr.mxu0 0.0
    %1089 = vmatpush1.msra.mxu0 0.0
    %1090 = vmatprep.subr.mxu0 0.0
    %1091 = vmatpush1.msra.mxu0 0.0
    %1092 = vmatprep.subr.mxu0 0.0
    %1093 = vmatpush1.msra.mxu0 0.0
    %1094 = vmatprep.subr.mxu0 0.0
    %1095 = vmatpush1.msra.mxu0 0.0
    %1096 = vmatprep.subr.mxu0 0.0
    %1097 = vmatpush1.msra.mxu0 0.0
    %1098 = vmatprep.subr.mxu0 0.0
    %1099 = vmatpush1.msra.mxu0 0.0
    %1100 = vmatprep.subr.mxu0 0.0
    %1101 = vmatpush1.msra.mxu0 0.0
    %1102 = vmatprep.subr.mxu0 0.0
    %1103 = vmatpush1.msra.mxu0 0.0
    %1104 = vmatprep.subr.mxu0 0.0
    %1105 = vmatpush1.msra.mxu0 0.0
    %1106 = vmatprep.subr.mxu0 0.0
    %1107 = vmatpush1.msra.mxu0 0.0
    %1108 = vmatprep.subr.mxu0 0.0
    %1109 = vmatpush1.msra.mxu0 0.0
    %1110 = vmatprep.subr.mxu0 0.0
    %1111 = vmatpush1.msra.mxu0 0.0
    %1112 = vmatprep.subr.mxu0 0.0
    %1113 = vmatpush1.msra.mxu0 0.0
    %1114 = vmatprep.subr.mxu0 0.0
    %1115 = vmatpush1.msra.mxu0 0.0
    %1116 = vmatprep.subr.mxu0 0.0
    %1117 = vmatpush1.msra.mxu0 0.0
    %1118 = vmatprep.subr.mxu0 0.0
    %1119 = vmatpush1.msra.mxu0 0.0
    %1120 = vmatprep.subr.mxu0 0.0
    %1121 = vmatpush1.msra.mxu0 0.0
    %1122 = vmatprep.mubr.f32.mxu0 0.0
    %1123 = vmatmul.mubr.f32.gmra.mrb[0].mxu0 %v680
    %v1124 = vpop.f32.mrb[0].mxu0
    %v1125 = vadd.f32 %v68, %v1124
    %v1126 = vpop.f32.mrb[0].mxu0
    %1127 = vdwg.mxu0
    %v1128 = vadd.f32 %v986, %v1054
    %v1129 = vxor.u32 %v1128, 2147483648
    %v1130 = vmul.f32 %v1129, 1.442695
    %v1131 = vpow.pop %v1130
    %v1132 = vadd.f32 %v1131, 1.0
    %v1133 = vrcp.pop %v1132
    %v1134 = vmul.f32 1.0, %v1133
    %v1136 = vrot.slane %v986, 2
    %v1138 = vadd.f32 %v1136, %v1056
    %v1139 = vxor.u32 %v1138, 2147483648
    %v1140 = vmul.f32 %v1139, 1.442695
    %v1141 = vpow.pop %v1140
    %v1142 = vadd.f32 %v1141, 1.0
    %v1143 = vrcp.pop %v1142
    %v1144 = vmul.f32 1.0, %v1143
    %v1145 = vmul.f32 %v1134, %v1125
    %v1146 = vrot.slane %v986, 4
    %v1148 = vadd.f32 %v1146, %v1145
    %v1149 = vtanh.pop %v1148
    %v1150 = vsub.f32 1.0, %v1144
    %v1151 = vmul.f32 %v1150, %v1149
    %v1152 = vmul.f32 %v1144, %v678
    %v1153 = vadd.f32 %v1151, %v1152
    %v1155 = vsel %vm508, %v1153, 0
    %1157 = vmatprep.subr.mxu0 %v472
    %1158 = vmatpush1.msra.mxu0 %v471
    %1159 = vmatprep.subr.mxu0 %v475
    %1160 = vmatpush1.msra.mxu0 %v474
    %1161 = vmatprep.subr.mxu0 %v478
    %1162 = vmatpush1.msra.mxu0 %v477
    %1163 = vmatprep.subr.mxu0 %v481
    %1164 = vmatpush1.msra.mxu0 %v480
    %1165 = vmatprep.subr.mxu0 %v484
    %1166 = vmatpush1.msra.mxu0 %v483
    %1167 = vmatprep.subr.mxu0 %v487
    %1168 = vmatpush1.msra.mxu0 %v486
    %1169 = vmatprep.subr.mxu0 0.0
    %1170 = vmatpush1.msra.mxu0 0.0
    %1171 = vmatprep.subr.mxu0 0.0
    %1172 = vmatpush1.msra.mxu0 0.0
    %1173 = vmatprep.subr.mxu0 0.0
    %1174 = vmatpush1.msra.mxu0 0.0
    %1175 = vmatprep.subr.mxu0 0.0
    %1176 = vmatpush1.msra.mxu0 0.0
    %1177 = vmatprep.subr.mxu0 0.0
    %1178 = vmatpush1.msra.mxu0 0.0
    %1179 = vmatprep.subr.mxu0 0.0
    %1180 = vmatpush1.msra.mxu0 0.0
    %1181 = vmatprep.subr.mxu0 0.0
    %1182 = vmatpush1.msra.mxu0 0.0
    %1183 = vmatprep.subr.mxu0 0.0
    %1184 = vmatpush1.msra.mxu0 0.0
    %1185 = vmatprep.subr.mxu0 0.0
    %1186 = vmatpush1.msra.mxu0 0.0
    %1187 = vmatprep.subr.mxu0 0.0
    %1188 = vmatpush1.msra.mxu0 0.0
    %1189 = vmatprep.subr.mxu0 0.0
    %1190 = vmatpush1.msra.mxu0 0.0
    %1191 = vmatprep.subr.mxu0 0.0
    %1192 = vmatpush1.msra.mxu0 0.0
    %1193 = vmatprep.subr.mxu0 0.0
    %1194 = vmatpush1.msra.mxu0 0.0
    %1195 = vmatprep.subr.mxu0 0.0
    %1196 = vmatpush1.msra.mxu0 0.0
    %1197 = vmatprep.subr.mxu0 0.0
    %1198 = vmatpush1.msra.mxu0 0.0
    %1199 = vmatprep.subr.mxu0 0.0
    %1200 = vmatpush1.msra.mxu0 0.0
    %1201 = vmatprep.subr.mxu0 0.0
    %1202 = vmatpush1.msra.mxu0 0.0
    %1203 = vmatprep.subr.mxu0 0.0
    %1204 = vmatpush1.msra.mxu0 0.0
    %1205 = vmatprep.subr.mxu0 0.0
    %1206 = vmatpush1.msra.mxu0 0.0
    %1207 = vmatprep.subr.mxu0 0.0
    %1208 = vmatpush1.msra.mxu0 0.0
    %1209 = vmatprep.subr.mxu0 0.0
    %1210 = vmatpush1.msra.mxu0 0.0
    %1211 = vmatprep.subr.mxu0 0.0
    %1212 = vmatpush1.msra.mxu0 0.0
    %1213 = vmatprep.subr.mxu0 0.0
    %1214 = vmatpush1.msra.mxu0 0.0
    %1215 = vmatprep.subr.mxu0 0.0
    %1216 = vmatpush1.msra.mxu0 0.0
    %1217 = vmatprep.subr.mxu0 0.0
    %1218 = vmatpush1.msra.mxu0 0.0
    %1219 = vmatprep.subr.mxu0 0.0
    %1220 = vmatpush1.msra.mxu0 0.0
    %1221 = vmatprep.mubr.f32.mxu0 0.0
    %1222 = vmatmul.mubr.f32.gmra.mrb[0].mxu0 %v1155
    %v1223 = vpop.f32.mrb[0].mxu0
    %v1224 = vadd.f32 %v78, %v1223
    %v1225 = vpop.f32.mrb[0].mxu0
    %v1226 = vadd.f32 %v82, %v1225
    %1227 = vdwg.mxu0
    %1228 = vmatprep.subr.mxu0 0.0
    %1229 = vmatpush1.msra.mxu0 %v473
    %1230 = vmatprep.subr.mxu0 0.0
    %1231 = vmatpush1.msra.mxu0 %v476
    %1232 = vmatprep.subr.mxu0 0.0
    %1233 = vmatpush1.msra.mxu0 %v479
    %1234 = vmatprep.subr.mxu0 0.0
    %1235 = vmatpush1.msra.mxu0 %v482
    %1236 = vmatprep.subr.mxu0 0.0
    %1237 = vmatpush1.msra.mxu0 %v485
    %1238 = vmatprep.subr.mxu0 0.0
    %1239 = vmatpush1.msra.mxu0 %v488
    %1240 = vmatprep.subr.mxu0 0.0
    %1241 = vmatpush1.msra.mxu0 0.0
    %1242 = vmatprep.subr.mxu0 0.0
    %1243 = vmatpush1.msra.mxu0 0.0
    %1244 = vmatprep.subr.mxu0 0.0
    %1245 = vmatpush1.msra.mxu0 0.0
    %1246 = vmatprep.subr.mxu0 0.0
    %1247 = vmatpush1.msra.mxu0 0.0
    %1248 = vmatprep.subr.mxu0 0.0
    %1249 = vmatpush1.msra.mxu0 0.0
    %1250 = vmatprep.subr.mxu0 0.0
    %1251 = vmatpush1.msra.mxu0 0.0
    %1252 = vmatprep.subr.mxu0 0.0
    %1253 = vmatpush1.msra.mxu0 0.0
    %1254 = vmatprep.subr.mxu0 0.0
    %1255 = vmatpush1.msra.mxu0 0.0
    %1256 = vmatprep.subr.mxu0 0.0
    %1257 = vmatpush1.msra.mxu0 0.0
    %1258 = vmatprep.subr.mxu0 0.0
    %1259 = vmatpush1.msra.mxu0 0.0
    %1260 = vmatprep.subr.mxu0 0.0
    %1261 = vmatpush1.msra.mxu0 0.0
    %1262 = vmatprep.subr.mxu0 0.0
    %1263 = vmatpush1.msra.mxu0 0.0
    %1264 = vmatprep.subr.mxu0 0.0
    %1265 = vmatpush1.msra.mxu0 0.0
    %1266 = vmatprep.subr.mxu0 0.0
    %1267 = vmatpush1.msra.mxu0 0.0
    %1268 = vmatprep.subr.mxu0 0.0
    %1269 = vmatpush1.msra.mxu0 0.0
    %1270 = vmatprep.subr.mxu0 0.0
    %1271 = vmatpush1.msra.mxu0 0.0
    %1272 = vmatprep.subr.mxu0 0.0
    %1273 = vmatpush1.msra.mxu0 0.0
    %1274 = vmatprep.subr.mxu0 0.0
    %1275 = vmatpush1.msra.mxu0 0.0
    %1276 = vmatprep.subr.mxu0 0.0
    %1277 = vmatpush1.msra.mxu0 0.0
    %1278 = vmatprep.subr.mxu0 0.0
    %1279 = vmatpush1.msra.mxu0 0.0
    %1280 = vmatprep.subr.mxu0 0.0
    %1281 = vmatpush1.msra.mxu0 0.0
    %1282 = vmatprep.subr.mxu0 0.0
    %1283 = vmatpush1.msra.mxu0 0.0
    %1284 = vmatprep.subr.mxu0 0.0
    %1285 = vmatpush1.msra.mxu0 0.0
    %1286 = vmatprep.subr.mxu0 0.0
    %1287 = vmatpush1.msra.mxu0 0.0
    %1288 = vmatprep.subr.mxu0 0.0
    %1289 = vmatpush1.msra.mxu0 0.0
    %1290 = vmatprep.subr.mxu0 0.0
    %1291 = vmatpush1.msra.mxu0 0.0
    %1292 = vmatprep.mubr.f32.mxu0 0.0
    %1293 = vmatmul.mubr.f32.gmra.mrb[0].mxu0 %v1155
    %v1294 = vpop.f32.mrb[0].mxu0
    %v1295 = vadd.f32 %v86, %v1294
    %v1296 = vpop.f32.mrb[0].mxu0
    %1297 = vdwg.mxu0
    %v1299 = vsel %vm508, %v984, 0
    %1301 = vmatprep.subr.mxu0 %v490
    %1302 = vmatpush1.msra.mxu0 %v489
    %1303 = vmatprep.subr.mxu0 %v493
    %1304 = vmatpush1.msra.mxu0 %v492
    %1305 = vmatprep.subr.mxu0 %v496
    %1306 = vmatpush1.msra.mxu0 %v495
    %1307 = vmatprep.subr.mxu0 %v499
    %1308 = vmatpush1.msra.mxu0 %v498
    %1309 = vmatprep.subr.mxu0 %v502
    %1310 = vmatpush1.msra.mxu0 %v501
    %1311 = vmatprep.subr.mxu0 %v505
    %1312 = vmatpush1.msra.mxu0 %v504
    %1313 = vmatprep.subr.mxu0 0.0
    %1314 = vmatpush1.msra.mxu0 0.0
    %1315 = vmatprep.subr.mxu0 0.0
    %1316 = vmatpush1.msra.mxu0 0.0
    %1317 = vmatprep.subr.mxu0 0.0
    %1318 = vmatpush1.msra.mxu0 0.0
    %1319 = vmatprep.subr.mxu0 0.0
    %1320 = vmatpush1.msra.mxu0 0.0
    %1321 = vmatprep.subr.mxu0 0.0
    %1322 = vmatpush1.msra.mxu0 0.0
    %1323 = vmatprep.subr.mxu0 0.0
    %1324 = vmatpush1.msra.mxu0 0.0
    %1325 = vmatprep.subr.mxu0 0.0
    %1326 = vmatpush1.msra.mxu0 0.0
    %1327 = vmatprep.subr.mxu0 0.0
    %1328 = vmatpush1.msra.mxu0 0.0
    %1329 = vmatprep.subr.mxu0 0.0
    %1330 = vmatpush1.msra.mxu0 0.0
    %1331 = vmatprep.subr.mxu0 0.0
    %1332 = vmatpush1.msra.mxu0 0.0
    %1333 = vmatprep.subr.mxu0 0.0
    %1334 = vmatpush1.msra.mxu0 0.0
    %1335 = vmatprep.subr.mxu0 0.0
    %1336 = vmatpush1.msra.mxu0 0.0
    %1337 = vmatprep.subr.mxu0 0.0
    %1338 = vmatpush1.msra.mxu0 0.0
    %1339 = vmatprep.subr.mxu0 0.0
    %1340 = vmatpush1.msra.mxu0 0.0
    %1341 = vmatprep.subr.mxu0 0.0
    %1342 = vmatpush1.msra.mxu0 0.0
    %1343 = vmatprep.subr.mxu0 0.0
    %1344 = vmatpush1.msra.mxu0 0.0
    %1345 = vmatprep.subr.mxu0 0.0
    %1346 = vmatpush1.msra.mxu0 0.0
    %1347 = vmatprep.subr.mxu0 0.0
    %1348 = vmatpush1.msra.mxu0 0.0
    %1349 = vmatprep.subr.mxu0 0.0
    %1350 = vmatpush1.msra.mxu0 0.0
    %1351 = vmatprep.subr.mxu0 0.0
    %1352 = vmatpush1.msra.mxu0 0.0
    %1353 = vmatprep.subr.mxu0 0.0
    %1354 = vmatpush1.msra.mxu0 0.0
    %1355 = vmatprep.subr.mxu0 0.0
    %1356 = vmatpush1.msra.mxu0 0.0
    %1357 = vmatprep.subr.mxu0 0.0
    %1358 = vmatpush1.msra.mxu0 0.0
    %1359 = vmatprep.subr.mxu0 0.0
    %1360 = vmatpush1.msra.mxu0 0.0
    %1361 = vmatprep.subr.mxu0 0.0
    %1362 = vmatpush1.msra.mxu0 0.0
    %1363 = vmatprep.subr.mxu0 0.0
    %1364 = vmatpush1.msra.mxu0 0.0
    %1365 = vmatprep.mubr.f32.mxu0 0.0
    %1366 = vmatmul.mubr.f32.gmra.mrb[0].mxu0 %v1299
    %v1367 = vpop.f32.mrb[0].mxu0
    %v1368 = vadd.f32 %v96, %v1367
    %v1369 = vpop.f32.mrb[0].mxu0
    %v1370 = vadd.f32 %v100, %v1369
    %1371 = vdwg.mxu0
    %1372 = vmatprep.subr.mxu0 0.0
    %1373 = vmatpush1.msra.mxu0 %v491
    %1374 = vmatprep.subr.mxu0 0.0
    %1375 = vmatpush1.msra.mxu0 %v494
    %1376 = vmatprep.subr.mxu0 0.0
    %1377 = vmatpush1.msra.mxu0 %v497
    %1378 = vmatprep.subr.mxu0 0.0
    %1379 = vmatpush1.msra.mxu0 %v500
    %1380 = vmatprep.subr.mxu0 0.0
    %1381 = vmatpush1.msra.mxu0 %v503
    %1382 = vmatprep.subr.mxu0 0.0
    %1383 = vmatpush1.msra.mxu0 %v506
    %1384 = vmatprep.subr.mxu0 0.0
    %1385 = vmatpush1.msra.mxu0 0.0
    %1386 = vmatprep.subr.mxu0 0.0
    %1387 = vmatpush1.msra.mxu0 0.0
    %1388 = vmatprep.subr.mxu0 0.0
    %1389 = vmatpush1.msra.mxu0 0.0
    %1390 = vmatprep.subr.mxu0 0.0
    %1391 = vmatpush1.msra.mxu0 0.0
    %1392 = vmatprep.subr.mxu0 0.0
    %1393 = vmatpush1.msra.mxu0 0.0
    %1394 = vmatprep.subr.mxu0 0.0
    %1395 = vmatpush1.msra.mxu0 0.0
    %1396 = vmatprep.subr.mxu0 0.0
    %1397 = vmatpush1.msra.mxu0 0.0
    %1398 = vmatprep.subr.mxu0 0.0
    %1399 = vmatpush1.msra.mxu0 0.0
    %1400 = vmatprep.subr.mxu0 0.0
    %1401 = vmatpush1.msra.mxu0 0.0
    %1402 = vmatprep.subr.mxu0 0.0
    %1403 = vmatpush1.msra.mxu0 0.0
    %1404 = vmatprep.subr.mxu0 0.0
    %1405 = vmatpush1.msra.mxu0 0.0
    %1406 = vmatprep.subr.mxu0 0.0
    %1407 = vmatpush1.msra.mxu0 0.0
    %1408 = vmatprep.subr.mxu0 0.0
    %1409 = vmatpush1.msra.mxu0 0.0
    %1410 = vmatprep.subr.mxu0 0.0
    %1411 = vmatpush1.msra.mxu0 0.0
    %1412 = vmatprep.subr.mxu0 0.0
    %1413 = vmatpush1.msra.mxu0 0.0
    %1414 = vmatprep.subr.mxu0 0.0
    %1415 = vmatpush1.msra.mxu0 0.0
    %1416 = vmatprep.subr.mxu0 0.0
    %1417 = vmatpush1.msra.mxu0 0.0
    %1418 = vmatprep.subr.mxu0 0.0
    %1419 = vmatpush1.msra.mxu0 0.0
    %1420 = vmatprep.subr.mxu0 0.0
    %1421 = vmatpush1.msra.mxu0 0.0
    %1422 = vmatprep.subr.mxu0 0.0
    %1423 = vmatpush1.msra.mxu0 0.0
    %1424 = vmatprep.subr.mxu0 0.0
    %1425 = vmatpush1.msra.mxu0 0.0
    %1426 = vmatprep.subr.mxu0 0.0
    %1427 = vmatpush1.msra.mxu0 0.0
    %1428 = vmatprep.subr.mxu0 0.0
    %1429 = vmatpush1.msra.mxu0 0.0
    %1430 = vmatprep.subr.mxu0 0.0
    %1431 = vmatpush1.msra.mxu0 0.0
    %1432 = vmatprep.subr.mxu0 0.0
    %1433 = vmatpush1.msra.mxu0 0.0
    %1434 = vmatprep.subr.mxu0 0.0
    %1435 = vmatpush1.msra.mxu0 0.0
    %1436 = vmatprep.mubr.f32.mxu0 0.0
    %1437 = vmatmul.mubr.f32.gmra.mrb[0].mxu0 %v1299
    %v1438 = vpop.f32.mrb[0].mxu0
    %v1439 = vadd.f32 %v104, %v1438
    %v1440 = vpop.f32.mrb[0].mxu0
    %1441 = vdwg.mxu0
    %v1442 = vadd.f32 %v1224, %v1368
    %v1443 = vxor.u32 %v1442, 2147483648
    %v1444 = vmul.f32 %v1443, 1.442695
    %v1445 = vpow.pop %v1444
    %v1446 = vadd.f32 %v1445, 1.0
    %v1447 = vrcp.pop %v1446
    %v1448 = vmul.f32 1.0, %v1447
    %v1449 = vadd.f32 %v1226, %v1370
    %v1450 = vxor.u32 %v1449, 2147483648
    %v1451 = vmul.f32 %v1450, 1.442695
    %v1452 = vpow.pop %v1451
    %v1453 = vadd.f32 %v1452, 1.0
    %v1454 = vrcp.pop %v1453
    %v1455 = vmul.f32 1.0, %v1454
    %v1456 = vmul.f32 %v1448, %v1439
    %v1457 = vadd.f32 %v1295, %v1456
    %v1458 = vtanh.pop %v1457
    %v1459 = vsub.f32 1.0, %v1455
    %v1460 = vmul.f32 %v1459, %v1458
    %v1461 = vmul.f32 %v1455, %v984
    %v1462 = vadd.f32 %v1460, %v1461
    %s1463 = scalar_lea.vmem [#allocation2], 12
    %v1464 = vld [vmem:[%s1463] sm:$0x3f]
    %1465 = vmatprep.subr.mxu0 %v454
    %1466 = vmatpush1.msra.mxu0 %v453
    %1467 = vmatprep.subr.mxu0 %v457
    %1468 = vmatpush1.msra.mxu0 %v456
    %1469 = vmatprep.subr.mxu0 %v460
    %1470 = vmatpush1.msra.mxu0 %v459
    %1471 = vmatprep.subr.mxu0 %v463
    %1472 = vmatpush1.msra.mxu0 %v462
    %1473 = vmatprep.subr.mxu0 %v466
    %1474 = vmatpush1.msra.mxu0 %v465
    %1475 = vmatprep.subr.mxu0 %v469
    %1476 = vmatpush1.msra.mxu0 %v468
    %1477 = vmatprep.subr.mxu0 0.0
    %1478 = vmatpush1.msra.mxu0 0.0
    %1479 = vmatprep.subr.mxu0 0.0
    %1480 = vmatpush1.msra.mxu0 0.0
    %1481 = vmatprep.subr.mxu0 0.0
    %1482 = vmatpush1.msra.mxu0 0.0
    %1483 = vmatprep.subr.mxu0 0.0
    %1484 = vmatpush1.msra.mxu0 0.0
    %1485 = vmatprep.subr.mxu0 0.0
    %1486 = vmatpush1.msra.mxu0 0.0
    %1487 = vmatprep.subr.mxu0 0.0
    %1488 = vmatpush1.msra.mxu0 0.0
    %1489 = vmatprep.subr.mxu0 0.0
    %1490 = vmatpush1.msra.mxu0 0.0
    %1491 = vmatprep.subr.mxu0 0.0
    %1492 = vmatpush1.msra.mxu0 0.0
    %1493 = vmatprep.subr.mxu0 0.0
    %1494 = vmatpush1.msra.mxu0 0.0
    %1495 = vmatprep.subr.mxu0 0.0
    %1496 = vmatpush1.msra.mxu0 0.0
    %1497 = vmatprep.subr.mxu0 0.0
    %1498 = vmatpush1.msra.mxu0 0.0
    %1499 = vmatprep.subr.mxu0 0.0
    %1500 = vmatpush1.msra.mxu0 0.0
    %1501 = vmatprep.subr.mxu0 0.0
    %1502 = vmatpush1.msra.mxu0 0.0
    %1503 = vmatprep.subr.mxu0 0.0
    %1504 = vmatpush1.msra.mxu0 0.0
    %1505 = vmatprep.subr.mxu0 0.0
    %1506 = vmatpush1.msra.mxu0 0.0
    %1507 = vmatprep.subr.mxu0 0.0
    %1508 = vmatpush1.msra.mxu0 0.0
    %1509 = vmatprep.subr.mxu0 0.0
    %1510 = vmatpush1.msra.mxu0 0.0
    %1511 = vmatprep.subr.mxu0 0.0
    %1512 = vmatpush1.msra.mxu0 0.0
    %1513 = vmatprep.subr.mxu0 0.0
    %1514 = vmatpush1.msra.mxu0 0.0
    %1515 = vmatprep.subr.mxu0 0.0
    %1516 = vmatpush1.msra.mxu0 0.0
    %1517 = vmatprep.subr.mxu0 0.0
    %1518 = vmatpush1.msra.mxu0 0.0
    %1519 = vmatprep.subr.mxu0 0.0
    %1520 = vmatpush1.msra.mxu0 0.0
    %1521 = vmatprep.subr.mxu0 0.0
    %1522 = vmatpush1.msra.mxu0 0.0
    %1523 = vmatprep.subr.mxu0 0.0
    %1524 = vmatpush1.msra.mxu0 0.0
    %1525 = vmatprep.subr.mxu0 0.0
    %1526 = vmatpush1.msra.mxu0 0.0
    %1527 = vmatprep.subr.mxu0 0.0
    %1528 = vmatpush1.msra.mxu0 0.0
    %1529 = vmatprep.mubr.f32.mxu0 0.0
    %1530 = vmatmul.mubr.f32.gmra.mrb[0].mxu0 %v1155
    %v1531 = vpop.f32.mrb[0].mxu0
    %v1532 = vadd.f32 %v60, %v1531
    %v1533 = vpop.f32.mrb[0].mxu0
    %v1534 = vadd.f32 %v64, %v1533
    %1535 = vdwg.mxu0
    %1536 = vmatprep.subr.mxu0 0.0
    %1537 = vmatpush1.msra.mxu0 %v455
    %1538 = vmatprep.subr.mxu0 0.0
    %1539 = vmatpush1.msra.mxu0 %v458
    %1540 = vmatprep.subr.mxu0 0.0
    %1541 = vmatpush1.msra.mxu0 %v461
    %1542 = vmatprep.subr.mxu0 0.0
    %1543 = vmatpush1.msra.mxu0 %v464
    %1544 = vmatprep.subr.mxu0 0.0
    %1545 = vmatpush1.msra.mxu0 %v467
    %1546 = vmatprep.subr.mxu0 0.0
    %1547 = vmatpush1.msra.mxu0 %v470
    %1548 = vmatprep.subr.mxu0 0.0
    %1549 = vmatpush1.msra.mxu0 0.0
    %1550 = vmatprep.subr.mxu0 0.0
    %1551 = vmatpush1.msra.mxu0 0.0
    %1552 = vmatprep.subr.mxu0 0.0
    %1553 = vmatpush1.msra.mxu0 0.0
    %1554 = vmatprep.subr.mxu0 0.0
    %1555 = vmatpush1.msra.mxu0 0.0
    %1556 = vmatprep.subr.mxu0 0.0
    %1557 = vmatpush1.msra.mxu0 0.0
    %1558 = vmatprep.subr.mxu0 0.0
    %1559 = vmatpush1.msra.mxu0 0.0
    %1560 = vmatprep.subr.mxu0 0.0
    %1561 = vmatpush1.msra.mxu0 0.0
    %1562 = vmatprep.subr.mxu0 0.0
    %1563 = vmatpush1.msra.mxu0 0.0
    %1564 = vmatprep.subr.mxu0 0.0
    %1565 = vmatpush1.msra.mxu0 0.0
    %1566 = vmatprep.subr.mxu0 0.0
    %1567 = vmatpush1.msra.mxu0 0.0
    %1568 = vmatprep.subr.mxu0 0.0
    %1569 = vmatpush1.msra.mxu0 0.0
    %1570 = vmatprep.subr.mxu0 0.0
    %1571 = vmatpush1.msra.mxu0 0.0
    %1572 = vmatprep.subr.mxu0 0.0
    %1573 = vmatpush1.msra.mxu0 0.0
    %1574 = vmatprep.subr.mxu0 0.0
    %1575 = vmatpush1.msra.mxu0 0.0
    %1576 = vmatprep.subr.mxu0 0.0
    %1577 = vmatpush1.msra.mxu0 0.0
    %1578 = vmatprep.subr.mxu0 0.0
    %1579 = vmatpush1.msra.mxu0 0.0
    %1580 = vmatprep.subr.mxu0 0.0
    %1581 = vmatpush1.msra.mxu0 0.0
    %1582 = vmatprep.subr.mxu0 0.0
    %1583 = vmatpush1.msra.mxu0 0.0
    %1584 = vmatprep.subr.mxu0 0.0
    %1585 = vmatpush1.msra.mxu0 0.0
    %1586 = vmatprep.subr.mxu0 0.0
    %1587 = vmatpush1.msra.mxu0 0.0
    %1588 = vmatprep.subr.mxu0 0.0
    %1589 = vmatpush1.msra.mxu0 0.0
    %1590 = vmatprep.subr.mxu0 0.0
    %1591 = vmatpush1.msra.mxu0 0.0
    %1592 = vmatprep.subr.mxu0 0.0
    %1593 = vmatpush1.msra.mxu0 0.0
    %1594 = vmatprep.subr.mxu0 0.0
    %1595 = vmatpush1.msra.mxu0 0.0
    %1596 = vmatprep.subr.mxu0 0.0
    %1597 = vmatpush1.msra.mxu0 0.0
    %1598 = vmatprep.subr.mxu0 0.0
    %1599 = vmatpush1.msra.mxu0 0.0
    %1600 = vmatprep.mubr.f32.mxu0 0.0
    %1601 = vmatmul.mubr.f32.gmra.mrb[0].mxu0 %v1155
    %v1602 = vpop.f32.mrb[0].mxu0
    %v1603 = vadd.f32 %v68, %v1602
    %v1604 = vpop.f32.mrb[0].mxu0
    %1605 = vdwg.mxu0
    %v1606 = vadd.f32 %v1464, %v1532
    %v1607 = vxor.u32 %v1606, 2147483648
    %v1608 = vmul.f32 %v1607, 1.442695
    %v1609 = vpow.pop %v1608
    %v1610 = vadd.f32 %v1609, 1.0
    %v1611 = vrcp.pop %v1610
    %v1612 = vmul.f32 1.0, %v1611
    %v1614 = vrot.slane %v1464, 2
    %v1616 = vadd.f32 %v1614, %v1534
    %v1617 = vxor.u32 %v1616, 2147483648
    %v1618 = vmul.f32 %v1617, 1.442695
    %v1619 = vpow.pop %v1618
    %v1620 = vadd.f32 %v1619, 1.0
    %v1621 = vrcp.pop %v1620
    %v1622 = vmul.f32 1.0, %v1621
    %v1623 = vmul.f32 %v1612, %v1603
    %v1624 = vrot.slane %v1464, 4
    %v1626 = vadd.f32 %v1624, %v1623
    %v1627 = vtanh.pop %v1626
    %v1628 = vsub.f32 1.0, %v1622
    %v1629 = vmul.f32 %v1628, %v1627
    %v1630 = vmul.f32 %v1622, %v1153
    %v1631 = vadd.f32 %v1629, %v1630
    %v1633 = vsel %vm508, %v1631, 0
    %1635 = vmatprep.subr.mxu0 %v472
    %1636 = vmatpush1.msra.mxu0 %v471
    %1637 = vmatprep.subr.mxu0 %v475
    %1638 = vmatpush1.msra.mxu0 %v474
    %1639 = vmatprep.subr.mxu0 %v478
    %1640 = vmatpush1.msra.mxu0 %v477
    %1641 = vmatprep.subr.mxu0 %v481
    %1642 = vmatpush1.msra.mxu0 %v480
    %1643 = vmatprep.subr.mxu0 %v484
    %1644 = vmatpush1.msra.mxu0 %v483
    %1645 = vmatprep.subr.mxu0 %v487
    %1646 = vmatpush1.msra.mxu0 %v486
    %1647 = vmatprep.subr.mxu0 0.0
    %1648 = vmatpush1.msra.mxu0 0.0
    %1649 = vmatprep.subr.mxu0 0.0
    %1650 = vmatpush1.msra.mxu0 0.0
    %1651 = vmatprep.subr.mxu0 0.0
    %1652 = vmatpush1.msra.mxu0 0.0
    %1653 = vmatprep.subr.mxu0 0.0
    %1654 = vmatpush1.msra.mxu0 0.0
    %1655 = vmatprep.subr.mxu0 0.0
    %1656 = vmatpush1.msra.mxu0 0.0
    %1657 = vmatprep.subr.mxu0 0.0
    %1658 = vmatpush1.msra.mxu0 0.0
    %1659 = vmatprep.subr.mxu0 0.0
    %1660 = vmatpush1.msra.mxu0 0.0
    %1661 = vmatprep.subr.mxu0 0.0
    %1662 = vmatpush1.msra.mxu0 0.0
    %1663 = vmatprep.subr.mxu0 0.0
    %1664 = vmatpush1.msra.mxu0 0.0
    %1665 = vmatprep.subr.mxu0 0.0
    %1666 = vmatpush1.msra.mxu0 0.0
    %1667 = vmatprep.subr.mxu0 0.0
    %1668 = vmatpush1.msra.mxu0 0.0
    %1669 = vmatprep.subr.mxu0 0.0
    %1670 = vmatpush1.msra.mxu0 0.0
    %1671 = vmatprep.subr.mxu0 0.0
    %1672 = vmatpush1.msra.mxu0 0.0
    %1673 = vmatprep.subr.mxu0 0.0
    %1674 = vmatpush1.msra.mxu0 0.0
    %1675 = vmatprep.subr.mxu0 0.0
    %1676 = vmatpush1.msra.mxu0 0.0
    %1677 = vmatprep.subr.mxu0 0.0
    %1678 = vmatpush1.msra.mxu0 0.0
    %1679 = vmatprep.subr.mxu0 0.0
    %1680 = vmatpush1.msra.mxu0 0.0
    %1681 = vmatprep.subr.mxu0 0.0
    %1682 = vmatpush1.msra.mxu0 0.0
    %1683 = vmatprep.subr.mxu0 0.0
    %1684 = vmatpush1.msra.mxu0 0.0
    %1685 = vmatprep.subr.mxu0 0.0
    %1686 = vmatpush1.msra.mxu0 0.0
    %1687 = vmatprep.subr.mxu0 0.0
    %1688 = vmatpush1.msra.mxu0 0.0
    %1689 = vmatprep.subr.mxu0 0.0
    %1690 = vmatpush1.msra.mxu0 0.0
    %1691 = vmatprep.subr.mxu0 0.0
    %1692 = vmatpush1.msra.mxu0 0.0
    %1693 = vmatprep.subr.mxu0 0.0
    %1694 = vmatpush1.msra.mxu0 0.0
    %1695 = vmatprep.subr.mxu0 0.0
    %1696 = vmatpush1.msra.mxu0 0.0
    %1697 = vmatprep.subr.mxu0 0.0
    %1698 = vmatpush1.msra.mxu0 0.0
    %1699 = vmatprep.mubr.f32.mxu0 0.0
    %1700 = vmatmul.mubr.f32.gmra.mrb[0].mxu0 %v1633
    %v1701 = vpop.f32.mrb[0].mxu0
    %v1702 = vadd.f32 %v78, %v1701
    %v1703 = vpop.f32.mrb[0].mxu0
    %v1704 = vadd.f32 %v82, %v1703
    %1705 = vdwg.mxu0
    %1706 = vmatprep.subr.mxu0 0.0
    %1707 = vmatpush1.msra.mxu0 %v473
    %1708 = vmatprep.subr.mxu0 0.0
    %1709 = vmatpush1.msra.mxu0 %v476
    %1710 = vmatprep.subr.mxu0 0.0
    %1711 = vmatpush1.msra.mxu0 %v479
    %1712 = vmatprep.subr.mxu0 0.0
    %1713 = vmatpush1.msra.mxu0 %v482
    %1714 = vmatprep.subr.mxu0 0.0
    %1715 = vmatpush1.msra.mxu0 %v485
    %1716 = vmatprep.subr.mxu0 0.0
    %1717 = vmatpush1.msra.mxu0 %v488
    %1718 = vmatprep.subr.mxu0 0.0
    %1719 = vmatpush1.msra.mxu0 0.0
    %1720 = vmatprep.subr.mxu0 0.0
    %1721 = vmatpush1.msra.mxu0 0.0
    %1722 = vmatprep.subr.mxu0 0.0
    %1723 = vmatpush1.msra.mxu0 0.0
    %1724 = vmatprep.subr.mxu0 0.0
    %1725 = vmatpush1.msra.mxu0 0.0
    %1726 = vmatprep.subr.mxu0 0.0
    %1727 = vmatpush1.msra.mxu0 0.0
    %1728 = vmatprep.subr.mxu0 0.0
    %1729 = vmatpush1.msra.mxu0 0.0
    %1730 = vmatprep.subr.mxu0 0.0
    %1731 = vmatpush1.msra.mxu0 0.0
    %1732 = vmatprep.subr.mxu0 0.0
    %1733 = vmatpush1.msra.mxu0 0.0
    %1734 = vmatprep.subr.mxu0 0.0
    %1735 = vmatpush1.msra.mxu0 0.0
    %1736 = vmatprep.subr.mxu0 0.0
    %1737 = vmatpush1.msra.mxu0 0.0
    %1738 = vmatprep.subr.mxu0 0.0
    %1739 = vmatpush1.msra.mxu0 0.0
    %1740 = vmatprep.subr.mxu0 0.0
    %1741 = vmatpush1.msra.mxu0 0.0
    %1742 = vmatprep.subr.mxu0 0.0
    %1743 = vmatpush1.msra.mxu0 0.0
    %1744 = vmatprep.subr.mxu0 0.0
    %1745 = vmatpush1.msra.mxu0 0.0
    %1746 = vmatprep.subr.mxu0 0.0
    %1747 = vmatpush1.msra.mxu0 0.0
    %1748 = vmatprep.subr.mxu0 0.0
    %1749 = vmatpush1.msra.mxu0 0.0
    %1750 = vmatprep.subr.mxu0 0.0
    %1751 = vmatpush1.msra.mxu0 0.0
    %1752 = vmatprep.subr.mxu0 0.0
    %1753 = vmatpush1.msra.mxu0 0.0
    %1754 = vmatprep.subr.mxu0 0.0
    %1755 = vmatpush1.msra.mxu0 0.0
    %1756 = vmatprep.subr.mxu0 0.0
    %1757 = vmatpush1.msra.mxu0 0.0
    %1758 = vmatprep.subr.mxu0 0.0
    %1759 = vmatpush1.msra.mxu0 0.0
    %1760 = vmatprep.subr.mxu0 0.0
    %1761 = vmatpush1.msra.mxu0 0.0
    %1762 = vmatprep.subr.mxu0 0.0
    %1763 = vmatpush1.msra.mxu0 0.0
    %1764 = vmatprep.subr.mxu0 0.0
    %1765 = vmatpush1.msra.mxu0 0.0
    %1766 = vmatprep.subr.mxu0 0.0
    %1767 = vmatpush1.msra.mxu0 0.0
    %1768 = vmatprep.subr.mxu0 0.0
    %1769 = vmatpush1.msra.mxu0 0.0
    %1770 = vmatprep.mubr.f32.mxu0 0.0
    %1771 = vmatmul.mubr.f32.gmra.mrb[0].mxu0 %v1633
    %v1772 = vpop.f32.mrb[0].mxu0
    %v1773 = vadd.f32 %v86, %v1772
    %v1774 = vpop.f32.mrb[0].mxu0
    %1775 = vdwg.mxu0
    %v1777 = vsel %vm508, %v1462, 0
    %1779 = vmatprep.subr.mxu0 %v490
    %1780 = vmatpush1.msra.mxu0 %v489
    %1781 = vmatprep.subr.mxu0 %v493
    %1782 = vmatpush1.msra.mxu0 %v492
    %1783 = vmatprep.subr.mxu0 %v496
    %1784 = vmatpush1.msra.mxu0 %v495
    %1785 = vmatprep.subr.mxu0 %v499
    %1786 = vmatpush1.msra.mxu0 %v498
    %1787 = vmatprep.subr.mxu0 %v502
    %1788 = vmatpush1.msra.mxu0 %v501
    %1789 = vmatprep.subr.mxu0 %v505
    %1790 = vmatpush1.msra.mxu0 %v504
    %1791 = vmatprep.subr.mxu0 0.0
    %1792 = vmatpush1.msra.mxu0 0.0
    %1793 = vmatprep.subr.mxu0 0.0
    %1794 = vmatpush1.msra.mxu0 0.0
    %1795 = vmatprep.subr.mxu0 0.0
    %1796 = vmatpush1.msra.mxu0 0.0
    %1797 = vmatprep.subr.mxu0 0.0
    %1798 = vmatpush1.msra.mxu0 0.0
    %1799 = vmatprep.subr.mxu0 0.0
    %1800 = vmatpush1.msra.mxu0 0.0
    %1801 = vmatprep.subr.mxu0 0.0
    %1802 = vmatpush1.msra.mxu0 0.0
    %1803 = vmatprep.subr.mxu0 0.0
    %1804 = vmatpush1.msra.mxu0 0.0
    %1805 = vmatprep.subr.mxu0 0.0
    %1806 = vmatpush1.msra.mxu0 0.0
    %1807 = vmatprep.subr.mxu0 0.0
    %1808 = vmatpush1.msra.mxu0 0.0
    %1809 = vmatprep.subr.mxu0 0.0
    %1810 = vmatpush1.msra.mxu0 0.0
    %1811 = vmatprep.subr.mxu0 0.0
    %1812 = vmatpush1.msra.mxu0 0.0
    %1813 = vmatprep.subr.mxu0 0.0
    %1814 = vmatpush1.msra.mxu0 0.0
    %1815 = vmatprep.subr.mxu0 0.0
    %1816 = vmatpush1.msra.mxu0 0.0
    %1817 = vmatprep.subr.mxu0 0.0
    %1818 = vmatpush1.msra.mxu0 0.0
    %1819 = vmatprep.subr.mxu0 0.0
    %1820 = vmatpush1.msra.mxu0 0.0
    %1821 = vmatprep.subr.mxu0 0.0
    %1822 = vmatpush1.msra.mxu0 0.0
    %1823 = vmatprep.subr.mxu0 0.0
    %1824 = vmatpush1.msra.mxu0 0.0
    %1825 = vmatprep.subr.mxu0 0.0
    %1826 = vmatpush1.msra.mxu0 0.0
    %1827 = vmatprep.subr.mxu0 0.0
    %1828 = vmatpush1.msra.mxu0 0.0
    %1829 = vmatprep.subr.mxu0 0.0
    %1830 = vmatpush1.msra.mxu0 0.0
    %1831 = vmatprep.subr.mxu0 0.0
    %1832 = vmatpush1.msra.mxu0 0.0
    %1833 = vmatprep.subr.mxu0 0.0
    %1834 = vmatpush1.msra.mxu0 0.0
    %1835 = vmatprep.subr.mxu0 0.0
    %1836 = vmatpush1.msra.mxu0 0.0
    %1837 = vmatprep.subr.mxu0 0.0
    %1838 = vmatpush1.msra.mxu0 0.0
    %1839 = vmatprep.subr.mxu0 0.0
    %1840 = vmatpush1.msra.mxu0 0.0
    %1841 = vmatprep.subr.mxu0 0.0
    %1842 = vmatpush1.msra.mxu0 0.0
    %1843 = vmatprep.mubr.f32.mxu0 0.0
    %1844 = vmatmul.mubr.f32.gmra.mrb[0].mxu0 %v1777
    %v1845 = vpop.f32.mrb[0].mxu0
    %v1846 = vadd.f32 %v96, %v1845
    %v1847 = vpop.f32.mrb[0].mxu0
    %v1848 = vadd.f32 %v100, %v1847
    %1849 = vdwg.mxu0
    %1850 = vmatprep.subr.mxu0 0.0
    %1851 = vmatpush1.msra.mxu0 %v491
    %1852 = vmatprep.subr.mxu0 0.0
    %1853 = vmatpush1.msra.mxu0 %v494
    %1854 = vmatprep.subr.mxu0 0.0
    %1855 = vmatpush1.msra.mxu0 %v497
    %1856 = vmatprep.subr.mxu0 0.0
    %1857 = vmatpush1.msra.mxu0 %v500
    %1858 = vmatprep.subr.mxu0 0.0
    %1859 = vmatpush1.msra.mxu0 %v503
    %1860 = vmatprep.subr.mxu0 0.0
    %1861 = vmatpush1.msra.mxu0 %v506
    %1862 = vmatprep.subr.mxu0 0.0
    %1863 = vmatpush1.msra.mxu0 0.0
    %1864 = vmatprep.subr.mxu0 0.0
    %1865 = vmatpush1.msra.mxu0 0.0
    %1866 = vmatprep.subr.mxu0 0.0
    %1867 = vmatpush1.msra.mxu0 0.0
    %1868 = vmatprep.subr.mxu0 0.0
    %1869 = vmatpush1.msra.mxu0 0.0
    %1870 = vmatprep.subr.mxu0 0.0
    %1871 = vmatpush1.msra.mxu0 0.0
    %1872 = vmatprep.subr.mxu0 0.0
    %1873 = vmatpush1.msra.mxu0 0.0
    %1874 = vmatprep.subr.mxu0 0.0
    %1875 = vmatpush1.msra.mxu0 0.0
    %1876 = vmatprep.subr.mxu0 0.0
    %1877 = vmatpush1.msra.mxu0 0.0
    %1878 = vmatprep.subr.mxu0 0.0
    %1879 = vmatpush1.msra.mxu0 0.0
    %1880 = vmatprep.subr.mxu0 0.0
    %1881 = vmatpush1.msra.mxu0 0.0
    %1882 = vmatprep.subr.mxu0 0.0
    %1883 = vmatpush1.msra.mxu0 0.0
    %1884 = vmatprep.subr.mxu0 0.0
    %1885 = vmatpush1.msra.mxu0 0.0
    %1886 = vmatprep.subr.mxu0 0.0
    %1887 = vmatpush1.msra.mxu0 0.0
    %1888 = vmatprep.subr.mxu0 0.0
    %1889 = vmatpush1.msra.mxu0 0.0
    %1890 = vmatprep.subr.mxu0 0.0
    %1891 = vmatpush1.msra.mxu0 0.0
    %1892 = vmatprep.subr.mxu0 0.0
    %1893 = vmatpush1.msra.mxu0 0.0
    %1894 = vmatprep.subr.mxu0 0.0
    %1895 = vmatpush1.msra.mxu0 0.0
    %1896 = vmatprep.subr.mxu0 0.0
    %1897 = vmatpush1.msra.mxu0 0.0
    %1898 = vmatprep.subr.mxu0 0.0
    %1899 = vmatpush1.msra.mxu0 0.0
    %1900 = vmatprep.subr.mxu0 0.0
    %1901 = vmatpush1.msra.mxu0 0.0
    %1902 = vmatprep.subr.mxu0 0.0
    %1903 = vmatpush1.msra.mxu0 0.0
    %1904 = vmatprep.subr.mxu0 0.0
    %1905 = vmatpush1.msra.mxu0 0.0
    %1906 = vmatprep.subr.mxu0 0.0
    %1907 = vmatpush1.msra.mxu0 0.0
    %1908 = vmatprep.subr.mxu0 0.0
    %1909 = vmatpush1.msra.mxu0 0.0
    %1910 = vmatprep.subr.mxu0 0.0
    %1911 = vmatpush1.msra.mxu0 0.0
    %1912 = vmatprep.subr.mxu0 0.0
    %1913 = vmatpush1.msra.mxu0 0.0
    %1914 = vmatprep.mubr.f32.mxu0 0.0
    %1915 = vmatmul.mubr.f32.gmra.mrb[0].mxu0 %v1777
    %v1916 = vpop.f32.mrb[0].mxu0
    %v1917 = vadd.f32 %v104, %v1916
    %v1918 = vpop.f32.mrb[0].mxu0
    %1919 = vdwg.mxu0
    %v1920 = vadd.f32 %v1702, %v1846
    %v1921 = vxor.u32 %v1920, 2147483648
    %v1922 = vmul.f32 %v1921, 1.442695
    %v1923 = vpow.pop %v1922
    %v1924 = vadd.f32 %v1923, 1.0
    %v1925 = vrcp.pop %v1924
    %v1926 = vmul.f32 1.0, %v1925
    %v1927 = vadd.f32 %v1704, %v1848
    %v1928 = vxor.u32 %v1927, 2147483648
    %v1929 = vmul.f32 %v1928, 1.442695
    %v1930 = vpow.pop %v1929
    %v1931 = vadd.f32 %v1930, 1.0
    %v1932 = vrcp.pop %v1931
    %v1933 = vmul.f32 1.0, %v1932
    %v1934 = vmul.f32 %v1926, %v1917
    %v1935 = vadd.f32 %v1773, %v1934
    %v1936 = vtanh.pop %v1935
    %v1937 = vsub.f32 1.0, %v1933
    %v1938 = vmul.f32 %v1937, %v1936
    %v1939 = vmul.f32 %v1933, %v1462
    %v1940 = vadd.f32 %v1938, %v1939
    %s1941 = scalar_lea.vmem [#allocation2], 18
    %v1942 = vld [vmem:[%s1941] sm:$0x3f]
    %1943 = vmatprep.subr.mxu0 %v454
    %1944 = vmatpush1.msra.mxu0 %v453
    %1945 = vmatprep.subr.mxu0 %v457
    %1946 = vmatpush1.msra.mxu0 %v456
    %1947 = vmatprep.subr.mxu0 %v460
    %1948 = vmatpush1.msra.mxu0 %v459
    %1949 = vmatprep.subr.mxu0 %v463
    %1950 = vmatpush1.msra.mxu0 %v462
    %1951 = vmatprep.subr.mxu0 %v466
    %1952 = vmatpush1.msra.mxu0 %v465
    %1953 = vmatprep.subr.mxu0 %v469
    %1954 = vmatpush1.msra.mxu0 %v468
    %1955 = vmatprep.subr.mxu0 0.0
    %1956 = vmatpush1.msra.mxu0 0.0
    %1957 = vmatprep.subr.mxu0 0.0
    %1958 = vmatpush1.msra.mxu0 0.0
    %1959 = vmatprep.subr.mxu0 0.0
    %1960 = vmatpush1.msra.mxu0 0.0
    %1961 = vmatprep.subr.mxu0 0.0
    %1962 = vmatpush1.msra.mxu0 0.0
    %1963 = vmatprep.subr.mxu0 0.0
    %1964 = vmatpush1.msra.mxu0 0.0
    %1965 = vmatprep.subr.mxu0 0.0
    %1966 = vmatpush1.msra.mxu0 0.0
    %1967 = vmatprep.subr.mxu0 0.0
    %1968 = vmatpush1.msra.mxu0 0.0
    %1969 = vmatprep.subr.mxu0 0.0
    %1970 = vmatpush1.msra.mxu0 0.0
    %1971 = vmatprep.subr.mxu0 0.0
    %1972 = vmatpush1.msra.mxu0 0.0
    %1973 = vmatprep.subr.mxu0 0.0
    %1974 = vmatpush1.msra.mxu0 0.0
    %1975 = vmatprep.subr.mxu0 0.0
    %1976 = vmatpush1.msra.mxu0 0.0
    %1977 = vmatprep.subr.mxu0 0.0
    %1978 = vmatpush1.msra.mxu0 0.0
    %1979 = vmatprep.subr.mxu0 0.0
    %1980 = vmatpush1.msra.mxu0 0.0
    %1981 = vmatprep.subr.mxu0 0.0
    %1982 = vmatpush1.msra.mxu0 0.0
    %1983 = vmatprep.subr.mxu0 0.0
    %1984 = vmatpush1.msra.mxu0 0.0
    %1985 = vmatprep.subr.mxu0 0.0
    %1986 = vmatpush1.msra.mxu0 0.0
    %1987 = vmatprep.subr.mxu0 0.0
    %1988 = vmatpush1.msra.mxu0 0.0
    %1989 = vmatprep.subr.mxu0 0.0
    %1990 = vmatpush1.msra.mxu0 0.0
    %1991 = vmatprep.subr.mxu0 0.0
    %1992 = vmatpush1.msra.mxu0 0.0
    %1993 = vmatprep.subr.mxu0 0.0
    %1994 = vmatpush1.msra.mxu0 0.0
    %1995 = vmatprep.subr.mxu0 0.0
    %1996 = vmatpush1.msra.mxu0 0.0
    %1997 = vmatprep.subr.mxu0 0.0
    %1998 = vmatpush1.msra.mxu0 0.0
    %1999 = vmatprep.subr.mxu0 0.0
    %2000 = vmatpush1.msra.mxu0 0.0
    %2001 = vmatprep.subr.mxu0 0.0
    %2002 = vmatpush1.msra.mxu0 0.0
    %2003 = vmatprep.subr.mxu0 0.0
    %2004 = vmatpush1.msra.mxu0 0.0
    %2005 = vmatprep.subr.mxu0 0.0
    %2006 = vmatpush1.msra.mxu0 0.0
    %2007 = vmatprep.mubr.f32.mxu0 0.0
    %2008 = vmatmul.mubr.f32.gmra.mrb[0].mxu0 %v1633
    %v2009 = vpop.f32.mrb[0].mxu0
    %v2010 = vadd.f32 %v60, %v2009
    %v2011 = vpop.f32.mrb[0].mxu0
    %v2012 = vadd.f32 %v64, %v2011
    %2013 = vdwg.mxu0
    %2014 = vmatprep.subr.mxu0 0.0
    %2015 = vmatpush1.msra.mxu0 %v455
    %2016 = vmatprep.subr.mxu0 0.0
    %2017 = vmatpush1.msra.mxu0 %v458
    %2018 = vmatprep.subr.mxu0 0.0
    %2019 = vmatpush1.msra.mxu0 %v461
    %2020 = vmatprep.subr.mxu0 0.0
    %2021 = vmatpush1.msra.mxu0 %v464
    %2022 = vmatprep.subr.mxu0 0.0
    %2023 = vmatpush1.msra.mxu0 %v467
    %2024 = vmatprep.subr.mxu0 0.0
    %2025 = vmatpush1.msra.mxu0 %v470
    %2026 = vmatprep.subr.mxu0 0.0
    %2027 = vmatpush1.msra.mxu0 0.0
    %2028 = vmatprep.subr.mxu0 0.0
    %2029 = vmatpush1.msra.mxu0 0.0
    %2030 = vmatprep.subr.mxu0 0.0
    %2031 = vmatpush1.msra.mxu0 0.0
    %2032 = vmatprep.subr.mxu0 0.0
    %2033 = vmatpush1.msra.mxu0 0.0
    %2034 = vmatprep.subr.mxu0 0.0
    %2035 = vmatpush1.msra.mxu0 0.0
    %2036 = vmatprep.subr.mxu0 0.0
    %2037 = vmatpush1.msra.mxu0 0.0
    %2038 = vmatprep.subr.mxu0 0.0
    %2039 = vmatpush1.msra.mxu0 0.0
    %2040 = vmatprep.subr.mxu0 0.0
    %2041 = vmatpush1.msra.mxu0 0.0
    %2042 = vmatprep.subr.mxu0 0.0
    %2043 = vmatpush1.msra.mxu0 0.0
    %2044 = vmatprep.subr.mxu0 0.0
    %2045 = vmatpush1.msra.mxu0 0.0
    %2046 = vmatprep.subr.mxu0 0.0
    %2047 = vmatpush1.msra.mxu0 0.0
    %2048 = vmatprep.subr.mxu0 0.0
    %2049 = vmatpush1.msra.mxu0 0.0
    %2050 = vmatprep.subr.mxu0 0.0
    %2051 = vmatpush1.msra.mxu0 0.0
    %2052 = vmatprep.subr.mxu0 0.0
    %2053 = vmatpush1.msra.mxu0 0.0
    %2054 = vmatprep.subr.mxu0 0.0
    %2055 = vmatpush1.msra.mxu0 0.0
    %2056 = vmatprep.subr.mxu0 0.0
    %2057 = vmatpush1.msra.mxu0 0.0
    %2058 = vmatprep.subr.mxu0 0.0
    %2059 = vmatpush1.msra.mxu0 0.0
    %2060 = vmatprep.subr.mxu0 0.0
    %2061 = vmatpush1.msra.mxu0 0.0
    %2062 = vmatprep.subr.mxu0 0.0
    %2063 = vmatpush1.msra.mxu0 0.0
    %2064 = vmatprep.subr.mxu0 0.0
    %2065 = vmatpush1.msra.mxu0 0.0
    %2066 = vmatprep.subr.mxu0 0.0
    %2067 = vmatpush1.msra.mxu0 0.0
    %2068 = vmatprep.subr.mxu0 0.0
    %2069 = vmatpush1.msra.mxu0 0.0
    %2070 = vmatprep.subr.mxu0 0.0
    %2071 = vmatpush1.msra.mxu0 0.0
    %2072 = vmatprep.subr.mxu0 0.0
    %2073 = vmatpush1.msra.mxu0 0.0
    %2074 = vmatprep.subr.mxu0 0.0
    %2075 = vmatpush1.msra.mxu0 0.0
    %2076 = vmatprep.subr.mxu0 0.0
    %2077 = vmatpush1.msra.mxu0 0.0
    %2078 = vmatprep.mubr.f32.mxu0 0.0
    %2079 = vmatmul.mubr.f32.gmra.mrb[0].mxu0 %v1633
    %v2080 = vpop.f32.mrb[0].mxu0
    %v2081 = vadd.f32 %v68, %v2080
    %v2082 = vpop.f32.mrb[0].mxu0
    %2083 = vdwg.mxu0
    %v2084 = vadd.f32 %v1942, %v2010
    %v2085 = vxor.u32 %v2084, 2147483648
    %v2086 = vmul.f32 %v2085, 1.442695
    %v2087 = vpow.pop %v2086
    %v2088 = vadd.f32 %v2087, 1.0
    %v2089 = vrcp.pop %v2088
    %v2090 = vmul.f32 1.0, %v2089
    %v2092 = vrot.slane %v1942, 2
    %v2094 = vadd.f32 %v2092, %v2012
    %v2095 = vxor.u32 %v2094, 2147483648
    %v2096 = vmul.f32 %v2095, 1.442695
    %v2097 = vpow.pop %v2096
    %v2098 = vadd.f32 %v2097, 1.0
    %v2099 = vrcp.pop %v2098
    %v2100 = vmul.f32 1.0, %v2099
    %v2101 = vmul.f32 %v2090, %v2081
    %v2102 = vrot.slane %v1942, 4
    %v2104 = vadd.f32 %v2102, %v2101
    %v2105 = vtanh.pop %v2104
    %v2106 = vsub.f32 1.0, %v2100
    %v2107 = vmul.f32 %v2106, %v2105
    %v2108 = vmul.f32 %v2100, %v1631
    %v2109 = vadd.f32 %v2107, %v2108
    %v2111 = vsel %vm508, %v2109, 0
    %2113 = vmatprep.subr.mxu0 %v472
    %2114 = vmatpush1.msra.mxu0 %v471
    %2115 = vmatprep.subr.mxu0 %v475
    %2116 = vmatpush1.msra.mxu0 %v474
    %2117 = vmatprep.subr.mxu0 %v478
    %2118 = vmatpush1.msra.mxu0 %v477
    %2119 = vmatprep.subr.mxu0 %v481
    %2120 = vmatpush1.msra.mxu0 %v480
    %2121 = vmatprep.subr.mxu0 %v484
    %2122 = vmatpush1.msra.mxu0 %v483
    %2123 = vmatprep.subr.mxu0 %v487
    %2124 = vmatpush1.msra.mxu0 %v486
    %2125 = vmatprep.subr.mxu0 0.0
    %2126 = vmatpush1.msra.mxu0 0.0
    %2127 = vmatprep.subr.mxu0 0.0
    %2128 = vmatpush1.msra.mxu0 0.0
    %2129 = vmatprep.subr.mxu0 0.0
    %2130 = vmatpush1.msra.mxu0 0.0
    %2131 = vmatprep.subr.mxu0 0.0
    %2132 = vmatpush1.msra.mxu0 0.0
    %2133 = vmatprep.subr.mxu0 0.0
    %2134 = vmatpush1.msra.mxu0 0.0
    %2135 = vmatprep.subr.mxu0 0.0
    %2136 = vmatpush1.msra.mxu0 0.0
    %2137 = vmatprep.subr.mxu0 0.0
    %2138 = vmatpush1.msra.mxu0 0.0
    %2139 = vmatprep.subr.mxu0 0.0
    %2140 = vmatpush1.msra.mxu0 0.0
    %2141 = vmatprep.subr.mxu0 0.0
    %2142 = vmatpush1.msra.mxu0 0.0
    %2143 = vmatprep.subr.mxu0 0.0
    %2144 = vmatpush1.msra.mxu0 0.0
    %2145 = vmatprep.subr.mxu0 0.0
    %2146 = vmatpush1.msra.mxu0 0.0
    %2147 = vmatprep.subr.mxu0 0.0
    %2148 = vmatpush1.msra.mxu0 0.0
    %2149 = vmatprep.subr.mxu0 0.0
    %2150 = vmatpush1.msra.mxu0 0.0
    %2151 = vmatprep.subr.mxu0 0.0
    %2152 = vmatpush1.msra.mxu0 0.0
    %2153 = vmatprep.subr.mxu0 0.0
    %2154 = vmatpush1.msra.mxu0 0.0
    %2155 = vmatprep.subr.mxu0 0.0
    %2156 = vmatpush1.msra.mxu0 0.0
    %2157 = vmatprep.subr.mxu0 0.0
    %2158 = vmatpush1.msra.mxu0 0.0
    %2159 = vmatprep.subr.mxu0 0.0
    %2160 = vmatpush1.msra.mxu0 0.0
    %2161 = vmatprep.subr.mxu0 0.0
    %2162 = vmatpush1.msra.mxu0 0.0
    %2163 = vmatprep.subr.mxu0 0.0
    %2164 = vmatpush1.msra.mxu0 0.0
    %2165 = vmatprep.subr.mxu0 0.0
    %2166 = vmatpush1.msra.mxu0 0.0
    %2167 = vmatprep.subr.mxu0 0.0
    %2168 = vmatpush1.msra.mxu0 0.0
    %2169 = vmatprep.subr.mxu0 0.0
    %2170 = vmatpush1.msra.mxu0 0.0
    %2171 = vmatprep.subr.mxu0 0.0
    %2172 = vmatpush1.msra.mxu0 0.0
    %2173 = vmatprep.subr.mxu0 0.0
    %2174 = vmatpush1.msra.mxu0 0.0
    %2175 = vmatprep.subr.mxu0 0.0
    %2176 = vmatpush1.msra.mxu0 0.0
    %2177 = vmatprep.mubr.f32.mxu0 0.0
    %2178 = vmatmul.mubr.f32.gmra.mrb[0].mxu0 %v2111
    %v2179 = vpop.f32.mrb[0].mxu0
    %v2180 = vadd.f32 %v78, %v2179
    %v2181 = vpop.f32.mrb[0].mxu0
    %v2182 = vadd.f32 %v82, %v2181
    %2183 = vdwg.mxu0
    %2184 = vmatprep.subr.mxu0 0.0
    %2185 = vmatpush1.msra.mxu0 %v473
    %2186 = vmatprep.subr.mxu0 0.0
    %2187 = vmatpush1.msra.mxu0 %v476
    %2188 = vmatprep.subr.mxu0 0.0
    %2189 = vmatpush1.msra.mxu0 %v479
    %2190 = vmatprep.subr.mxu0 0.0
    %2191 = vmatpush1.msra.mxu0 %v482
    %2192 = vmatprep.subr.mxu0 0.0
    %2193 = vmatpush1.msra.mxu0 %v485
    %2194 = vmatprep.subr.mxu0 0.0
    %2195 = vmatpush1.msra.mxu0 %v488
    %2196 = vmatprep.subr.mxu0 0.0
    %2197 = vmatpush1.msra.mxu0 0.0
    %2198 = vmatprep.subr.mxu0 0.0
    %2199 = vmatpush1.msra.mxu0 0.0
    %2200 = vmatprep.subr.mxu0 0.0
    %2201 = vmatpush1.msra.mxu0 0.0
    %2202 = vmatprep.subr.mxu0 0.0
    %2203 = vmatpush1.msra.mxu0 0.0
    %2204 = vmatprep.subr.mxu0 0.0
    %2205 = vmatpush1.msra.mxu0 0.0
    %2206 = vmatprep.subr.mxu0 0.0
    %2207 = vmatpush1.msra.mxu0 0.0
    %2208 = vmatprep.subr.mxu0 0.0
    %2209 = vmatpush1.msra.mxu0 0.0
    %2210 = vmatprep.subr.mxu0 0.0
    %2211 = vmatpush1.msra.mxu0 0.0
    %2212 = vmatprep.subr.mxu0 0.0
    %2213 = vmatpush1.msra.mxu0 0.0
    %2214 = vmatprep.subr.mxu0 0.0
    %2215 = vmatpush1.msra.mxu0 0.0
    %2216 = vmatprep.subr.mxu0 0.0
    %2217 = vmatpush1.msra.mxu0 0.0
    %2218 = vmatprep.subr.mxu0 0.0
    %2219 = vmatpush1.msra.mxu0 0.0
    %2220 = vmatprep.subr.mxu0 0.0
    %2221 = vmatpush1.msra.mxu0 0.0
    %2222 = vmatprep.subr.mxu0 0.0
    %2223 = vmatpush1.msra.mxu0 0.0
    %2224 = vmatprep.subr.mxu0 0.0
    %2225 = vmatpush1.msra.mxu0 0.0
    %2226 = vmatprep.subr.mxu0 0.0
    %2227 = vmatpush1.msra.mxu0 0.0
    %2228 = vmatprep.subr.mxu0 0.0
    %2229 = vmatpush1.msra.mxu0 0.0
    %2230 = vmatprep.subr.mxu0 0.0
    %2231 = vmatpush1.msra.mxu0 0.0
    %2232 = vmatprep.subr.mxu0 0.0
    %2233 = vmatpush1.msra.mxu0 0.0
    %2234 = vmatprep.subr.mxu0 0.0
    %2235 = vmatpush1.msra.mxu0 0.0
    %2236 = vmatprep.subr.mxu0 0.0
    %2237 = vmatpush1.msra.mxu0 0.0
    %2238 = vmatprep.subr.mxu0 0.0
    %2239 = vmatpush1.msra.mxu0 0.0
    %2240 = vmatprep.subr.mxu0 0.0
    %2241 = vmatpush1.msra.mxu0 0.0
    %2242 = vmatprep.subr.mxu0 0.0
    %2243 = vmatpush1.msra.mxu0 0.0
    %2244 = vmatprep.subr.mxu0 0.0
    %2245 = vmatpush1.msra.mxu0 0.0
    %2246 = vmatprep.subr.mxu0 0.0
    %2247 = vmatpush1.msra.mxu0 0.0
    %2248 = vmatprep.mubr.f32.mxu0 0.0
    %2249 = vmatmul.mubr.f32.gmra.mrb[0].mxu0 %v2111
    %v2250 = vpop.f32.mrb[0].mxu0
    %v2251 = vadd.f32 %v86, %v2250
    %v2252 = vpop.f32.mrb[0].mxu0
    %2253 = vdwg.mxu0
    %v2255 = vsel %vm508, %v1940, 0
    %2257 = vmatprep.subr.mxu0 %v490
    %2258 = vmatpush1.msra.mxu0 %v489
    %2259 = vmatprep.subr.mxu0 %v493
    %2260 = vmatpush1.msra.mxu0 %v492
    %2261 = vmatprep.subr.mxu0 %v496
    %2262 = vmatpush1.msra.mxu0 %v495
    %2263 = vmatprep.subr.mxu0 %v499
    %2264 = vmatpush1.msra.mxu0 %v498
    %2265 = vmatprep.subr.mxu0 %v502
    %2266 = vmatpush1.msra.mxu0 %v501
    %2267 = vmatprep.subr.mxu0 %v505
    %2268 = vmatpush1.msra.mxu0 %v504
    %2269 = vmatprep.subr.mxu0 0.0
    %2270 = vmatpush1.msra.mxu0 0.0
    %2271 = vmatprep.subr.mxu0 0.0
    %2272 = vmatpush1.msra.mxu0 0.0
    %2273 = vmatprep.subr.mxu0 0.0
    %2274 = vmatpush1.msra.mxu0 0.0
    %2275 = vmatprep.subr.mxu0 0.0
    %2276 = vmatpush1.msra.mxu0 0.0
    %2277 = vmatprep.subr.mxu0 0.0
    %2278 = vmatpush1.msra.mxu0 0.0
    %2279 = vmatprep.subr.mxu0 0.0
    %2280 = vmatpush1.msra.mxu0 0.0
    %2281 = vmatprep.subr.mxu0 0.0
    %2282 = vmatpush1.msra.mxu0 0.0
    %2283 = vmatprep.subr.mxu0 0.0
    %2284 = vmatpush1.msra.mxu0 0.0
    %2285 = vmatprep.subr.mxu0 0.0
    %2286 = vmatpush1.msra.mxu0 0.0
    %2287 = vmatprep.subr.mxu0 0.0
    %2288 = vmatpush1.msra.mxu0 0.0
    %2289 = vmatprep.subr.mxu0 0.0
    %2290 = vmatpush1.msra.mxu0 0.0
    %2291 = vmatprep.subr.mxu0 0.0
    %2292 = vmatpush1.msra.mxu0 0.0
    %2293 = vmatprep.subr.mxu0 0.0
    %2294 = vmatpush1.msra.mxu0 0.0
    %2295 = vmatprep.subr.mxu0 0.0
    %2296 = vmatpush1.msra.mxu0 0.0
    %2297 = vmatprep.subr.mxu0 0.0
    %2298 = vmatpush1.msra.mxu0 0.0
    %2299 = vmatprep.subr.mxu0 0.0
    %2300 = vmatpush1.msra.mxu0 0.0
    %2301 = vmatprep.subr.mxu0 0.0
    %2302 = vmatpush1.msra.mxu0 0.0
    %2303 = vmatprep.subr.mxu0 0.0
    %2304 = vmatpush1.msra.mxu0 0.0
    %2305 = vmatprep.subr.mxu0 0.0
    %2306 = vmatpush1.msra.mxu0 0.0
    %2307 = vmatprep.subr.mxu0 0.0
    %2308 = vmatpush1.msra.mxu0 0.0
    %2309 = vmatprep.subr.mxu0 0.0
    %2310 = vmatpush1.msra.mxu0 0.0
    %2311 = vmatprep.subr.mxu0 0.0
    %2312 = vmatpush1.msra.mxu0 0.0
    %2313 = vmatprep.subr.mxu0 0.0
    %2314 = vmatpush1.msra.mxu0 0.0
    %2315 = vmatprep.subr.mxu0 0.0
    %2316 = vmatpush1.msra.mxu0 0.0
    %2317 = vmatprep.subr.mxu0 0.0
    %2318 = vmatpush1.msra.mxu0 0.0
    %2319 = vmatprep.subr.mxu0 0.0
    %2320 = vmatpush1.msra.mxu0 0.0
    %2321 = vmatprep.mubr.f32.mxu0 0.0
    %2322 = vmatmul.mubr.f32.gmra.mrb[0].mxu0 %v2255
    %v2323 = vpop.f32.mrb[0].mxu0
    %v2324 = vadd.f32 %v96, %v2323
    %v2325 = vpop.f32.mrb[0].mxu0
    %v2326 = vadd.f32 %v100, %v2325
    %2327 = vdwg.mxu0
    %2328 = vmatprep.subr.mxu0 0.0
    %2329 = vmatpush1.msra.mxu0 %v491
    %2330 = vmatprep.subr.mxu0 0.0
    %2331 = vmatpush1.msra.mxu0 %v494
    %2332 = vmatprep.subr.mxu0 0.0
    %2333 = vmatpush1.msra.mxu0 %v497
    %2334 = vmatprep.subr.mxu0 0.0
    %2335 = vmatpush1.msra.mxu0 %v500
    %2336 = vmatprep.subr.mxu0 0.0
    %2337 = vmatpush1.msra.mxu0 %v503
    %2338 = vmatprep.subr.mxu0 0.0
    %2339 = vmatpush1.msra.mxu0 %v506
    %2340 = vmatprep.subr.mxu0 0.0
    %2341 = vmatpush1.msra.mxu0 0.0
    %2342 = vmatprep.subr.mxu0 0.0
    %2343 = vmatpush1.msra.mxu0 0.0
    %2344 = vmatprep.subr.mxu0 0.0
    %2345 = vmatpush1.msra.mxu0 0.0
    %2346 = vmatprep.subr.mxu0 0.0
    %2347 = vmatpush1.msra.mxu0 0.0
    %2348 = vmatprep.subr.mxu0 0.0
    %2349 = vmatpush1.msra.mxu0 0.0
    %2350 = vmatprep.subr.mxu0 0.0
    %2351 = vmatpush1.msra.mxu0 0.0
    %2352 = vmatprep.subr.mxu0 0.0
    %2353 = vmatpush1.msra.mxu0 0.0
    %2354 = vmatprep.subr.mxu0 0.0
    %2355 = vmatpush1.msra.mxu0 0.0
    %2356 = vmatprep.subr.mxu0 0.0
    %2357 = vmatpush1.msra.mxu0 0.0
    %2358 = vmatprep.subr.mxu0 0.0
    %2359 = vmatpush1.msra.mxu0 0.0
    %2360 = vmatprep.subr.mxu0 0.0
    %2361 = vmatpush1.msra.mxu0 0.0
    %2362 = vmatprep.subr.mxu0 0.0
    %2363 = vmatpush1.msra.mxu0 0.0
    %2364 = vmatprep.subr.mxu0 0.0
    %2365 = vmatpush1.msra.mxu0 0.0
    %2366 = vmatprep.subr.mxu0 0.0
    %2367 = vmatpush1.msra.mxu0 0.0
    %2368 = vmatprep.subr.mxu0 0.0
    %2369 = vmatpush1.msra.mxu0 0.0
    %2370 = vmatprep.subr.mxu0 0.0
    %2371 = vmatpush1.msra.mxu0 0.0
    %2372 = vmatprep.subr.mxu0 0.0
    %2373 = vmatpush1.msra.mxu0 0.0
    %2374 = vmatprep.subr.mxu0 0.0
    %2375 = vmatpush1.msra.mxu0 0.0
    %2376 = vmatprep.subr.mxu0 0.0
    %2377 = vmatpush1.msra.mxu0 0.0
    %2378 = vmatprep.subr.mxu0 0.0
    %2379 = vmatpush1.msra.mxu0 0.0
    %2380 = vmatprep.subr.mxu0 0.0
    %2381 = vmatpush1.msra.mxu0 0.0
    %2382 = vmatprep.subr.mxu0 0.0
    %2383 = vmatpush1.msra.mxu0 0.0
    %2384 = vmatprep.subr.mxu0 0.0
    %2385 = vmatpush1.msra.mxu0 0.0
    %2386 = vmatprep.subr.mxu0 0.0
    %2387 = vmatpush1.msra.mxu0 0.0
    %2388 = vmatprep.subr.mxu0 0.0
    %2389 = vmatpush1.msra.mxu0 0.0
    %2390 = vmatprep.subr.mxu0 0.0
    %2391 = vmatpush1.msra.mxu0 0.0
    %2392 = vmatprep.mubr.f32.mxu0 0.0
    %2393 = vmatmul.mubr.f32.gmra.mrb[0].mxu0 %v2255
    %v2394 = vpop.f32.mrb[0].mxu0
    %v2395 = vadd.f32 %v104, %v2394
    %v2396 = vpop.f32.mrb[0].mxu0
    %2397 = vdwg.mxu0
    %v2398 = vadd.f32 %v2180, %v2324
    %v2399 = vxor.u32 %v2398, 2147483648
    %v2400 = vmul.f32 %v2399, 1.442695
    %v2401 = vpow.pop %v2400
    %v2402 = vadd.f32 %v2401, 1.0
    %v2403 = vrcp.pop %v2402
    %v2404 = vmul.f32 1.0, %v2403
    %v2405 = vadd.f32 %v2182, %v2326
    %v2406 = vxor.u32 %v2405, 2147483648
    %v2407 = vmul.f32 %v2406, 1.442695
    %v2408 = vpow.pop %v2407
    %v2409 = vadd.f32 %v2408, 1.0
    %v2410 = vrcp.pop %v2409
    %v2411 = vmul.f32 1.0, %v2410
    %v2412 = vmul.f32 %v2404, %v2395
    %v2413 = vadd.f32 %v2251, %v2412
    %v2414 = vtanh.pop %v2413
    %v2415 = vsub.f32 1.0, %v2411
    %v2416 = vmul.f32 %v2415, %v2414
    %v2417 = vmul.f32 %v2411, %v1940
    %v2418 = vadd.f32 %v2416, %v2417
    %s2419 = scalar_lea.vmem [#allocation2], 24
    %v2420 = vld [vmem:[%s2419] sm:$0x3f]
    %2421 = vmatprep.subr.mxu0 %v454
    %2422 = vmatpush1.msra.mxu0 %v453
    %2423 = vmatprep.subr.mxu0 %v457
    %2424 = vmatpush1.msra.mxu0 %v456
    %2425 = vmatprep.subr.mxu0 %v460
    %2426 = vmatpush1.msra.mxu0 %v459
    %2427 = vmatprep.subr.mxu0 %v463
    %2428 = vmatpush1.msra.mxu0 %v462
    %2429 = vmatprep.subr.mxu0 %v466
    %2430 = vmatpush1.msra.mxu0 %v465
    %2431 = vmatprep.subr.mxu0 %v469
    %2432 = vmatpush1.msra.mxu0 %v468
    %2433 = vmatprep.subr.mxu0 0.0
    %2434 = vmatpush1.msra.mxu0 0.0
    %2435 = vmatprep.subr.mxu0 0.0
    %2436 = vmatpush1.msra.mxu0 0.0
    %2437 = vmatprep.subr.mxu0 0.0
    %2438 = vmatpush1.msra.mxu0 0.0
    %2439 = vmatprep.subr.mxu0 0.0
    %2440 = vmatpush1.msra.mxu0 0.0
    %2441 = vmatprep.subr.mxu0 0.0
    %2442 = vmatpush1.msra.mxu0 0.0
    %2443 = vmatprep.subr.mxu0 0.0
    %2444 = vmatpush1.msra.mxu0 0.0
    %2445 = vmatprep.subr.mxu0 0.0
    %2446 = vmatpush1.msra.mxu0 0.0
    %2447 = vmatprep.subr.mxu0 0.0
    %2448 = vmatpush1.msra.mxu0 0.0
    %2449 = vmatprep.subr.mxu0 0.0
    %2450 = vmatpush1.msra.mxu0 0.0
    %2451 = vmatprep.subr.mxu0 0.0
    %2452 = vmatpush1.msra.mxu0 0.0
    %2453 = vmatprep.subr.mxu0 0.0
    %2454 = vmatpush1.msra.mxu0 0.0
    %2455 = vmatprep.subr.mxu0 0.0
    %2456 = vmatpush1.msra.mxu0 0.0
    %2457 = vmatprep.subr.mxu0 0.0
    %2458 = vmatpush1.msra.mxu0 0.0
    %2459 = vmatprep.subr.mxu0 0.0
    %2460 = vmatpush1.msra.mxu0 0.0
    %2461 = vmatprep.subr.mxu0 0.0
    %2462 = vmatpush1.msra.mxu0 0.0
    %2463 = vmatprep.subr.mxu0 0.0
    %2464 = vmatpush1.msra.mxu0 0.0
    %2465 = vmatprep.subr.mxu0 0.0
    %2466 = vmatpush1.msra.mxu0 0.0
    %2467 = vmatprep.subr.mxu0 0.0
    %2468 = vmatpush1.msra.mxu0 0.0
    %2469 = vmatprep.subr.mxu0 0.0
    %2470 = vmatpush1.msra.mxu0 0.0
    %2471 = vmatprep.subr.mxu0 0.0
    %2472 = vmatpush1.msra.mxu0 0.0
    %2473 = vmatprep.subr.mxu0 0.0
    %2474 = vmatpush1.msra.mxu0 0.0
    %2475 = vmatprep.subr.mxu0 0.0
    %2476 = vmatpush1.msra.mxu0 0.0
    %2477 = vmatprep.subr.mxu0 0.0
    %2478 = vmatpush1.msra.mxu0 0.0
    %2479 = vmatprep.subr.mxu0 0.0
    %2480 = vmatpush1.msra.mxu0 0.0
    %2481 = vmatprep.subr.mxu0 0.0
    %2482 = vmatpush1.msra.mxu0 0.0
    %2483 = vmatprep.subr.mxu0 0.0
    %2484 = vmatpush1.msra.mxu0 0.0
    %2485 = vmatprep.mubr.f32.mxu0 0.0
    %2486 = vmatmul.mubr.f32.gmra.mrb[0].mxu0 %v2111
    %v2487 = vpop.f32.mrb[0].mxu0
    %v2488 = vadd.f32 %v60, %v2487
    %v2489 = vpop.f32.mrb[0].mxu0
    %v2490 = vadd.f32 %v64, %v2489
    %2491 = vdwg.mxu0
    %2492 = vmatprep.subr.mxu0 0.0
    %2493 = vmatpush1.msra.mxu0 %v455
    %2494 = vmatprep.subr.mxu0 0.0
    %2495 = vmatpush1.msra.mxu0 %v458
    %2496 = vmatprep.subr.mxu0 0.0
    %2497 = vmatpush1.msra.mxu0 %v461
    %2498 = vmatprep.subr.mxu0 0.0
    %2499 = vmatpush1.msra.mxu0 %v464
    %2500 = vmatprep.subr.mxu0 0.0
    %2501 = vmatpush1.msra.mxu0 %v467
    %2502 = vmatprep.subr.mxu0 0.0
    %2503 = vmatpush1.msra.mxu0 %v470
    %2504 = vmatprep.subr.mxu0 0.0
    %2505 = vmatpush1.msra.mxu0 0.0
    %2506 = vmatprep.subr.mxu0 0.0
    %2507 = vmatpush1.msra.mxu0 0.0
    %2508 = vmatprep.subr.mxu0 0.0
    %2509 = vmatpush1.msra.mxu0 0.0
    %2510 = vmatprep.subr.mxu0 0.0
    %2511 = vmatpush1.msra.mxu0 0.0
    %2512 = vmatprep.subr.mxu0 0.0
    %2513 = vmatpush1.msra.mxu0 0.0
    %2514 = vmatprep.subr.mxu0 0.0
    %2515 = vmatpush1.msra.mxu0 0.0
    %2516 = vmatprep.subr.mxu0 0.0
    %2517 = vmatpush1.msra.mxu0 0.0
    %2518 = vmatprep.subr.mxu0 0.0
    %2519 = vmatpush1.msra.mxu0 0.0
    %2520 = vmatprep.subr.mxu0 0.0
    %2521 = vmatpush1.msra.mxu0 0.0
    %2522 = vmatprep.subr.mxu0 0.0
    %2523 = vmatpush1.msra.mxu0 0.0
    %2524 = vmatprep.subr.mxu0 0.0
    %2525 = vmatpush1.msra.mxu0 0.0
    %2526 = vmatprep.subr.mxu0 0.0
    %2527 = vmatpush1.msra.mxu0 0.0
    %2528 = vmatprep.subr.mxu0 0.0
    %2529 = vmatpush1.msra.mxu0 0.0
    %2530 = vmatprep.subr.mxu0 0.0
    %2531 = vmatpush1.msra.mxu0 0.0
    %2532 = vmatprep.subr.mxu0 0.0
    %2533 = vmatpush1.msra.mxu0 0.0
    %2534 = vmatprep.subr.mxu0 0.0
    %2535 = vmatpush1.msra.mxu0 0.0
    %2536 = vmatprep.subr.mxu0 0.0
    %2537 = vmatpush1.msra.mxu0 0.0
    %2538 = vmatprep.subr.mxu0 0.0
    %2539 = vmatpush1.msra.mxu0 0.0
    %2540 = vmatprep.subr.mxu0 0.0
    %2541 = vmatpush1.msra.mxu0 0.0
    %2542 = vmatprep.subr.mxu0 0.0
    %2543 = vmatpush1.msra.mxu0 0.0
    %2544 = vmatprep.subr.mxu0 0.0
    %2545 = vmatpush1.msra.mxu0 0.0
    %2546 = vmatprep.subr.mxu0 0.0
    %2547 = vmatpush1.msra.mxu0 0.0
    %2548 = vmatprep.subr.mxu0 0.0
    %2549 = vmatpush1.msra.mxu0 0.0
    %2550 = vmatprep.subr.mxu0 0.0
    %2551 = vmatpush1.msra.mxu0 0.0
    %2552 = vmatprep.subr.mxu0 0.0
    %2553 = vmatpush1.msra.mxu0 0.0
    %2554 = vmatprep.subr.mxu0 0.0
    %2555 = vmatpush1.msra.mxu0 0.0
    %2556 = vmatprep.mubr.f32.mxu0 0.0
    %2557 = vmatmul.mubr.f32.gmra.mrb[0].mxu0 %v2111
    %v2558 = vpop.f32.mrb[0].mxu0
    %v2559 = vadd.f32 %v68, %v2558
    %v2560 = vpop.f32.mrb[0].mxu0
    %2561 = vdwg.mxu0
    %v2562 = vadd.f32 %v2420, %v2488
    %v2563 = vxor.u32 %v2562, 2147483648
    %v2564 = vmul.f32 %v2563, 1.442695
    %v2565 = vpow.pop %v2564
    %v2566 = vadd.f32 %v2565, 1.0
    %v2567 = vrcp.pop %v2566
    %v2568 = vmul.f32 1.0, %v2567
    %v2570 = vrot.slane %v2420, 2
    %v2572 = vadd.f32 %v2570, %v2490
    %v2573 = vxor.u32 %v2572, 2147483648
    %v2574 = vmul.f32 %v2573, 1.442695
    %v2575 = vpow.pop %v2574
    %v2576 = vadd.f32 %v2575, 1.0
    %v2577 = vrcp.pop %v2576
    %v2578 = vmul.f32 1.0, %v2577
    %v2579 = vmul.f32 %v2568, %v2559
    %v2580 = vrot.slane %v2420, 4
    %v2582 = vadd.f32 %v2580, %v2579
    %v2583 = vtanh.pop %v2582
    %v2584 = vsub.f32 1.0, %v2578
    %v2585 = vmul.f32 %v2584, %v2583
    %v2586 = vmul.f32 %v2578, %v2109
    %v2587 = vadd.f32 %v2585, %v2586
    %v2589 = vsel %vm508, %v2587, 0
    %2591 = vmatprep.subr.mxu0 %v472
    %2592 = vmatpush1.msra.mxu0 %v471
    %2593 = vmatprep.subr.mxu0 %v475
    %2594 = vmatpush1.msra.mxu0 %v474
    %2595 = vmatprep.subr.mxu0 %v478
    %2596 = vmatpush1.msra.mxu0 %v477
    %2597 = vmatprep.subr.mxu0 %v481
    %2598 = vmatpush1.msra.mxu0 %v480
    %2599 = vmatprep.subr.mxu0 %v484
    %2600 = vmatpush1.msra.mxu0 %v483
    %2601 = vmatprep.subr.mxu0 %v487
    %2602 = vmatpush1.msra.mxu0 %v486
    %2603 = vmatprep.subr.mxu0 0.0
    %2604 = vmatpush1.msra.mxu0 0.0
    %2605 = vmatprep.subr.mxu0 0.0
    %2606 = vmatpush1.msra.mxu0 0.0
    %2607 = vmatprep.subr.mxu0 0.0
    %2608 = vmatpush1.msra.mxu0 0.0
    %2609 = vmatprep.subr.mxu0 0.0
    %2610 = vmatpush1.msra.mxu0 0.0
    %2611 = vmatprep.subr.mxu0 0.0
    %2612 = vmatpush1.msra.mxu0 0.0
    %2613 = vmatprep.subr.mxu0 0.0
    %2614 = vmatpush1.msra.mxu0 0.0
    %2615 = vmatprep.subr.mxu0 0.0
    %2616 = vmatpush1.msra.mxu0 0.0
    %2617 = vmatprep.subr.mxu0 0.0
    %2618 = vmatpush1.msra.mxu0 0.0
    %2619 = vmatprep.subr.mxu0 0.0
    %2620 = vmatpush1.msra.mxu0 0.0
    %2621 = vmatprep.subr.mxu0 0.0
    %2622 = vmatpush1.msra.mxu0 0.0
    %2623 = vmatprep.subr.mxu0 0.0
    %2624 = vmatpush1.msra.mxu0 0.0
    %2625 = vmatprep.subr.mxu0 0.0
    %2626 = vmatpush1.msra.mxu0 0.0
    %2627 = vmatprep.subr.mxu0 0.0
    %2628 = vmatpush1.msra.mxu0 0.0
    %2629 = vmatprep.subr.mxu0 0.0
    %2630 = vmatpush1.msra.mxu0 0.0
    %2631 = vmatprep.subr.mxu0 0.0
    %2632 = vmatpush1.msra.mxu0 0.0
    %2633 = vmatprep.subr.mxu0 0.0
    %2634 = vmatpush1.msra.mxu0 0.0
    %2635 = vmatprep.subr.mxu0 0.0
    %2636 = vmatpush1.msra.mxu0 0.0
    %2637 = vmatprep.subr.mxu0 0.0
    %2638 = vmatpush1.msra.mxu0 0.0
    %2639 = vmatprep.subr.mxu0 0.0
    %2640 = vmatpush1.msra.mxu0 0.0
    %2641 = vmatprep.subr.mxu0 0.0
    %2642 = vmatpush1.msra.mxu0 0.0
    %2643 = vmatprep.subr.mxu0 0.0
    %2644 = vmatpush1.msra.mxu0 0.0
    %2645 = vmatprep.subr.mxu0 0.0
    %2646 = vmatpush1.msra.mxu0 0.0
    %2647 = vmatprep.subr.mxu0 0.0
    %2648 = vmatpush1.msra.mxu0 0.0
    %2649 = vmatprep.subr.mxu0 0.0
    %2650 = vmatpush1.msra.mxu0 0.0
    %2651 = vmatprep.subr.mxu0 0.0
    %2652 = vmatpush1.msra.mxu0 0.0
    %2653 = vmatprep.subr.mxu0 0.0
    %2654 = vmatpush1.msra.mxu0 0.0
    %2655 = vmatprep.mubr.f32.mxu0 0.0
    %2656 = vmatmul.mubr.f32.gmra.mrb[0].mxu0 %v2589
    %v2657 = vpop.f32.mrb[0].mxu0
    %v2658 = vadd.f32 %v78, %v2657
    %v2659 = vpop.f32.mrb[0].mxu0
    %v2660 = vadd.f32 %v82, %v2659
    %2661 = vdwg.mxu0
    %2662 = vmatprep.subr.mxu0 0.0
    %2663 = vmatpush1.msra.mxu0 %v473
    %2664 = vmatprep.subr.mxu0 0.0
    %2665 = vmatpush1.msra.mxu0 %v476
    %2666 = vmatprep.subr.mxu0 0.0
    %2667 = vmatpush1.msra.mxu0 %v479
    %2668 = vmatprep.subr.mxu0 0.0
    %2669 = vmatpush1.msra.mxu0 %v482
    %2670 = vmatprep.subr.mxu0 0.0
    %2671 = vmatpush1.msra.mxu0 %v485
    %2672 = vmatprep.subr.mxu0 0.0
    %2673 = vmatpush1.msra.mxu0 %v488
    %2674 = vmatprep.subr.mxu0 0.0
    %2675 = vmatpush1.msra.mxu0 0.0
    %2676 = vmatprep.subr.mxu0 0.0
    %2677 = vmatpush1.msra.mxu0 0.0
    %2678 = vmatprep.subr.mxu0 0.0
    %2679 = vmatpush1.msra.mxu0 0.0
    %2680 = vmatprep.subr.mxu0 0.0
    %2681 = vmatpush1.msra.mxu0 0.0
    %2682 = vmatprep.subr.mxu0 0.0
    %2683 = vmatpush1.msra.mxu0 0.0
    %2684 = vmatprep.subr.mxu0 0.0
    %2685 = vmatpush1.msra.mxu0 0.0
    %2686 = vmatprep.subr.mxu0 0.0
    %2687 = vmatpush1.msra.mxu0 0.0
    %2688 = vmatprep.subr.mxu0 0.0
    %2689 = vmatpush1.msra.mxu0 0.0
    %2690 = vmatprep.subr.mxu0 0.0
    %2691 = vmatpush1.msra.mxu0 0.0
    %2692 = vmatprep.subr.mxu0 0.0
    %2693 = vmatpush1.msra.mxu0 0.0
    %2694 = vmatprep.subr.mxu0 0.0
    %2695 = vmatpush1.msra.mxu0 0.0
    %2696 = vmatprep.subr.mxu0 0.0
    %2697 = vmatpush1.msra.mxu0 0.0
    %2698 = vmatprep.subr.mxu0 0.0
    %2699 = vmatpush1.msra.mxu0 0.0
    %2700 = vmatprep.subr.mxu0 0.0
    %2701 = vmatpush1.msra.mxu0 0.0
    %2702 = vmatprep.subr.mxu0 0.0
    %2703 = vmatpush1.msra.mxu0 0.0
    %2704 = vmatprep.subr.mxu0 0.0
    %2705 = vmatpush1.msra.mxu0 0.0
    %2706 = vmatprep.subr.mxu0 0.0
    %2707 = vmatpush1.msra.mxu0 0.0
    %2708 = vmatprep.subr.mxu0 0.0
    %2709 = vmatpush1.msra.mxu0 0.0
    %2710 = vmatprep.subr.mxu0 0.0
    %2711 = vmatpush1.msra.mxu0 0.0
    %2712 = vmatprep.subr.mxu0 0.0
    %2713 = vmatpush1.msra.mxu0 0.0
    %2714 = vmatprep.subr.mxu0 0.0
    %2715 = vmatpush1.msra.mxu0 0.0
    %2716 = vmatprep.subr.mxu0 0.0
    %2717 = vmatpush1.msra.mxu0 0.0
    %2718 = vmatprep.subr.mxu0 0.0
    %2719 = vmatpush1.msra.mxu0 0.0
    %2720 = vmatprep.subr.mxu0 0.0
    %2721 = vmatpush1.msra.mxu0 0.0
    %2722 = vmatprep.subr.mxu0 0.0
    %2723 = vmatpush1.msra.mxu0 0.0
    %2724 = vmatprep.subr.mxu0 0.0
    %2725 = vmatpush1.msra.mxu0 0.0
    %2726 = vmatprep.mubr.f32.mxu0 0.0
    %2727 = vmatmul.mubr.f32.gmra.mrb[0].mxu0 %v2589
    %v2728 = vpop.f32.mrb[0].mxu0
    %v2729 = vadd.f32 %v86, %v2728
    %v2730 = vpop.f32.mrb[0].mxu0
    %2731 = vdwg.mxu0
    %v2733 = vsel %vm508, %v2418, 0
    %2735 = vmatprep.subr.mxu0 %v490
    %2736 = vmatpush1.msra.mxu0 %v489
    %2737 = vmatprep.subr.mxu0 %v493
    %2738 = vmatpush1.msra.mxu0 %v492
    %2739 = vmatprep.subr.mxu0 %v496
    %2740 = vmatpush1.msra.mxu0 %v495
    %2741 = vmatprep.subr.mxu0 %v499
    %2742 = vmatpush1.msra.mxu0 %v498
    %2743 = vmatprep.subr.mxu0 %v502
    %2744 = vmatpush1.msra.mxu0 %v501
    %2745 = vmatprep.subr.mxu0 %v505
    %2746 = vmatpush1.msra.mxu0 %v504
    %2747 = vmatprep.subr.mxu0 0.0
    %2748 = vmatpush1.msra.mxu0 0.0
    %2749 = vmatprep.subr.mxu0 0.0
    %2750 = vmatpush1.msra.mxu0 0.0
    %2751 = vmatprep.subr.mxu0 0.0
    %2752 = vmatpush1.msra.mxu0 0.0
    %2753 = vmatprep.subr.mxu0 0.0
    %2754 = vmatpush1.msra.mxu0 0.0
    %2755 = vmatprep.subr.mxu0 0.0
    %2756 = vmatpush1.msra.mxu0 0.0
    %2757 = vmatprep.subr.mxu0 0.0
    %2758 = vmatpush1.msra.mxu0 0.0
    %2759 = vmatprep.subr.mxu0 0.0
    %2760 = vmatpush1.msra.mxu0 0.0
    %2761 = vmatprep.subr.mxu0 0.0
    %2762 = vmatpush1.msra.mxu0 0.0
    %2763 = vmatprep.subr.mxu0 0.0
    %2764 = vmatpush1.msra.mxu0 0.0
    %2765 = vmatprep.subr.mxu0 0.0
    %2766 = vmatpush1.msra.mxu0 0.0
    %2767 = vmatprep.subr.mxu0 0.0
    %2768 = vmatpush1.msra.mxu0 0.0
    %2769 = vmatprep.subr.mxu0 0.0
    %2770 = vmatpush1.msra.mxu0 0.0
    %2771 = vmatprep.subr.mxu0 0.0
    %2772 = vmatpush1.msra.mxu0 0.0
    %2773 = vmatprep.subr.mxu0 0.0
    %2774 = vmatpush1.msra.mxu0 0.0
    %2775 = vmatprep.subr.mxu0 0.0
    %2776 = vmatpush1.msra.mxu0 0.0
    %2777 = vmatprep.subr.mxu0 0.0
    %2778 = vmatpush1.msra.mxu0 0.0
    %2779 = vmatprep.subr.mxu0 0.0
    %2780 = vmatpush1.msra.mxu0 0.0
    %2781 = vmatprep.subr.mxu0 0.0
    %2782 = vmatpush1.msra.mxu0 0.0
    %2783 = vmatprep.subr.mxu0 0.0
    %2784 = vmatpush1.msra.mxu0 0.0
    %2785 = vmatprep.subr.mxu0 0.0
    %2786 = vmatpush1.msra.mxu0 0.0
    %2787 = vmatprep.subr.mxu0 0.0
    %2788 = vmatpush1.msra.mxu0 0.0
    %2789 = vmatprep.subr.mxu0 0.0
    %2790 = vmatpush1.msra.mxu0 0.0
    %2791 = vmatprep.subr.mxu0 0.0
    %2792 = vmatpush1.msra.mxu0 0.0
    %2793 = vmatprep.subr.mxu0 0.0
    %2794 = vmatpush1.msra.mxu0 0.0
    %2795 = vmatprep.subr.mxu0 0.0
    %2796 = vmatpush1.msra.mxu0 0.0
    %2797 = vmatprep.subr.mxu0 0.0
    %2798 = vmatpush1.msra.mxu0 0.0
    %2799 = vmatprep.mubr.f32.mxu0 0.0
    %2800 = vmatmul.mubr.f32.gmra.mrb[0].mxu0 %v2733
    %v2801 = vpop.f32.mrb[0].mxu0
    %v2802 = vadd.f32 %v96, %v2801
    %v2803 = vpop.f32.mrb[0].mxu0
    %v2804 = vadd.f32 %v100, %v2803
    %2805 = vdwg.mxu0
    %2806 = vmatprep.subr.mxu0 0.0
    %2807 = vmatpush1.msra.mxu0 %v491
    %2808 = vmatprep.subr.mxu0 0.0
    %2809 = vmatpush1.msra.mxu0 %v494
    %2810 = vmatprep.subr.mxu0 0.0
    %2811 = vmatpush1.msra.mxu0 %v497
    %2812 = vmatprep.subr.mxu0 0.0
    %2813 = vmatpush1.msra.mxu0 %v500
    %2814 = vmatprep.subr.mxu0 0.0
    %2815 = vmatpush1.msra.mxu0 %v503
    %2816 = vmatprep.subr.mxu0 0.0
    %2817 = vmatpush1.msra.mxu0 %v506
    %2818 = vmatprep.subr.mxu0 0.0
    %2819 = vmatpush1.msra.mxu0 0.0
    %2820 = vmatprep.subr.mxu0 0.0
    %2821 = vmatpush1.msra.mxu0 0.0
    %2822 = vmatprep.subr.mxu0 0.0
    %2823 = vmatpush1.msra.mxu0 0.0
    %2824 = vmatprep.subr.mxu0 0.0
    %2825 = vmatpush1.msra.mxu0 0.0
    %2826 = vmatprep.subr.mxu0 0.0
    %2827 = vmatpush1.msra.mxu0 0.0
    %2828 = vmatprep.subr.mxu0 0.0
    %2829 = vmatpush1.msra.mxu0 0.0
    %2830 = vmatprep.subr.mxu0 0.0
    %2831 = vmatpush1.msra.mxu0 0.0
    %2832 = vmatprep.subr.mxu0 0.0
    %2833 = vmatpush1.msra.mxu0 0.0
    %2834 = vmatprep.subr.mxu0 0.0
    %2835 = vmatpush1.msra.mxu0 0.0
    %2836 = vmatprep.subr.mxu0 0.0
    %2837 = vmatpush1.msra.mxu0 0.0
    %2838 = vmatprep.subr.mxu0 0.0
    %2839 = vmatpush1.msra.mxu0 0.0
    %2840 = vmatprep.subr.mxu0 0.0
    %2841 = vmatpush1.msra.mxu0 0.0
    %2842 = vmatprep.subr.mxu0 0.0
    %2843 = vmatpush1.msra.mxu0 0.0
    %2844 = vmatprep.subr.mxu0 0.0
    %2845 = vmatpush1.msra.mxu0 0.0
    %2846 = vmatprep.subr.mxu0 0.0
    %2847 = vmatpush1.msra.mxu0 0.0
    %2848 = vmatprep.subr.mxu0 0.0
    %2849 = vmatpush1.msra.mxu0 0.0
    %2850 = vmatprep.subr.mxu0 0.0
    %2851 = vmatpush1.msra.mxu0 0.0
    %2852 = vmatprep.subr.mxu0 0.0
    %2853 = vmatpush1.msra.mxu0 0.0
    %2854 = vmatprep.subr.mxu0 0.0
    %2855 = vmatpush1.msra.mxu0 0.0
    %2856 = vmatprep.subr.mxu0 0.0
    %2857 = vmatpush1.msra.mxu0 0.0
    %2858 = vmatprep.subr.mxu0 0.0
    %2859 = vmatpush1.msra.mxu0 0.0
    %2860 = vmatprep.subr.mxu0 0.0
    %2861 = vmatpush1.msra.mxu0 0.0
    %2862 = vmatprep.subr.mxu0 0.0
    %2863 = vmatpush1.msra.mxu0 0.0
    %2864 = vmatprep.subr.mxu0 0.0
    %2865 = vmatpush1.msra.mxu0 0.0
    %2866 = vmatprep.subr.mxu0 0.0
    %2867 = vmatpush1.msra.mxu0 0.0
    %2868 = vmatprep.subr.mxu0 0.0
    %2869 = vmatpush1.msra.mxu0 0.0
    %2870 = vmatprep.mubr.f32.mxu0 0.0
    %2871 = vmatmul.mubr.f32.gmra.mrb[0].mxu0 %v2733
    %v2872 = vpop.f32.mrb[0].mxu0
    %v2873 = vadd.f32 %v104, %v2872
    %v2874 = vpop.f32.mrb[0].mxu0
    %2875 = vdwg.mxu0
    %v2876 = vadd.f32 %v2658, %v2802
    %v2877 = vxor.u32 %v2876, 2147483648
    %v2878 = vmul.f32 %v2877, 1.442695
    %v2879 = vpow.pop %v2878
    %v2880 = vadd.f32 %v2879, 1.0
    %v2881 = vrcp.pop %v2880
    %v2882 = vmul.f32 1.0, %v2881
    %v2883 = vadd.f32 %v2660, %v2804
    %v2884 = vxor.u32 %v2883, 2147483648
    %v2885 = vmul.f32 %v2884, 1.442695
    %v2886 = vpow.pop %v2885
    %v2887 = vadd.f32 %v2886, 1.0
    %v2888 = vrcp.pop %v2887
    %v2889 = vmul.f32 1.0, %v2888
    %v2890 = vmul.f32 %v2882, %v2873
    %v2891 = vadd.f32 %v2729, %v2890
    %v2892 = vtanh.pop %v2891
    %v2893 = vsub.f32 1.0, %v2889
    %v2894 = vmul.f32 %v2893, %v2892
    %v2895 = vmul.f32 %v2889, %v2418
    %v2896 = vadd.f32 %v2894, %v2895
    %s2897 = scalar_lea.vmem [#allocation2], 30
    %v2898 = vld [vmem:[%s2897] sm:$0x3f]
    %2899 = vmatprep.subr.mxu0 %v454
    %2900 = vmatpush1.msra.mxu0 %v453
    %2901 = vmatprep.subr.mxu0 %v457
    %2902 = vmatpush1.msra.mxu0 %v456
    %2903 = vmatprep.subr.mxu0 %v460
    %2904 = vmatpush1.msra.mxu0 %v459
    %2905 = vmatprep.subr.mxu0 %v463
    %2906 = vmatpush1.msra.mxu0 %v462
    %2907 = vmatprep.subr.mxu0 %v466
    %2908 = vmatpush1.msra.mxu0 %v465
    %2909 = vmatprep.subr.mxu0 %v469
    %2910 = vmatpush1.msra.mxu0 %v468
    %2911 = vmatprep.subr.mxu0 0.0
    %2912 = vmatpush1.msra.mxu0 0.0
    %2913 = vmatprep.subr.mxu0 0.0
    %2914 = vmatpush1.msra.mxu0 0.0
    %2915 = vmatprep.subr.mxu0 0.0
    %2916 = vmatpush1.msra.mxu0 0.0
    %2917 = vmatprep.subr.mxu0 0.0
    %2918 = vmatpush1.msra.mxu0 0.0
    %2919 = vmatprep.subr.mxu0 0.0
    %2920 = vmatpush1.msra.mxu0 0.0
    %2921 = vmatprep.subr.mxu0 0.0
    %2922 = vmatpush1.msra.mxu0 0.0
    %2923 = vmatprep.subr.mxu0 0.0
    %2924 = vmatpush1.msra.mxu0 0.0
    %2925 = vmatprep.subr.mxu0 0.0
    %2926 = vmatpush1.msra.mxu0 0.0
    %2927 = vmatprep.subr.mxu0 0.0
    %2928 = vmatpush1.msra.mxu0 0.0
    %2929 = vmatprep.subr.mxu0 0.0
    %2930 = vmatpush1.msra.mxu0 0.0
    %2931 = vmatprep.subr.mxu0 0.0
    %2932 = vmatpush1.msra.mxu0 0.0
    %2933 = vmatprep.subr.mxu0 0.0
    %2934 = vmatpush1.msra.mxu0 0.0
    %2935 = vmatprep.subr.mxu0 0.0
    %2936 = vmatpush1.msra.mxu0 0.0
    %2937 = vmatprep.subr.mxu0 0.0
    %2938 = vmatpush1.msra.mxu0 0.0
    %2939 = vmatprep.subr.mxu0 0.0
    %2940 = vmatpush1.msra.mxu0 0.0
    %2941 = vmatprep.subr.mxu0 0.0
    %2942 = vmatpush1.msra.mxu0 0.0
    %2943 = vmatprep.subr.mxu0 0.0
    %2944 = vmatpush1.msra.mxu0 0.0
    %2945 = vmatprep.subr.mxu0 0.0
    %2946 = vmatpush1.msra.mxu0 0.0
    %2947 = vmatprep.subr.mxu0 0.0
    %2948 = vmatpush1.msra.mxu0 0.0
    %2949 = vmatprep.subr.mxu0 0.0
    %2950 = vmatpush1.msra.mxu0 0.0
    %2951 = vmatprep.subr.mxu0 0.0
    %2952 = vmatpush1.msra.mxu0 0.0
    %2953 = vmatprep.subr.mxu0 0.0
    %2954 = vmatpush1.msra.mxu0 0.0
    %2955 = vmatprep.subr.mxu0 0.0
    %2956 = vmatpush1.msra.mxu0 0.0
    %2957 = vmatprep.subr.mxu0 0.0
    %2958 = vmatpush1.msra.mxu0 0.0
    %2959 = vmatprep.subr.mxu0 0.0
    %2960 = vmatpush1.msra.mxu0 0.0
    %2961 = vmatprep.subr.mxu0 0.0
    %2962 = vmatpush1.msra.mxu0 0.0
    %2963 = vmatprep.mubr.f32.mxu0 0.0
    %2964 = vmatmul.mubr.f32.gmra.mrb[0].mxu0 %v2589
    %v2965 = vpop.f32.mrb[0].mxu0
    %v2966 = vadd.f32 %v60, %v2965
    %v2967 = vpop.f32.mrb[0].mxu0
    %v2968 = vadd.f32 %v64, %v2967
    %2969 = vdwg.mxu0
    %2970 = vmatprep.subr.mxu0 0.0
    %2971 = vmatpush1.msra.mxu0 %v455
    %2972 = vmatprep.subr.mxu0 0.0
    %2973 = vmatpush1.msra.mxu0 %v458
    %2974 = vmatprep.subr.mxu0 0.0
    %2975 = vmatpush1.msra.mxu0 %v461
    %2976 = vmatprep.subr.mxu0 0.0
    %2977 = vmatpush1.msra.mxu0 %v464
    %2978 = vmatprep.subr.mxu0 0.0
    %2979 = vmatpush1.msra.mxu0 %v467
    %2980 = vmatprep.subr.mxu0 0.0
    %2981 = vmatpush1.msra.mxu0 %v470
    %2982 = vmatprep.subr.mxu0 0.0
    %2983 = vmatpush1.msra.mxu0 0.0
    %2984 = vmatprep.subr.mxu0 0.0
    %2985 = vmatpush1.msra.mxu0 0.0
    %2986 = vmatprep.subr.mxu0 0.0
    %2987 = vmatpush1.msra.mxu0 0.0
    %2988 = vmatprep.subr.mxu0 0.0
    %2989 = vmatpush1.msra.mxu0 0.0
    %2990 = vmatprep.subr.mxu0 0.0
    %2991 = vmatpush1.msra.mxu0 0.0
    %2992 = vmatprep.subr.mxu0 0.0
    %2993 = vmatpush1.msra.mxu0 0.0
    %2994 = vmatprep.subr.mxu0 0.0
    %2995 = vmatpush1.msra.mxu0 0.0
    %2996 = vmatprep.subr.mxu0 0.0
    %2997 = vmatpush1.msra.mxu0 0.0
    %2998 = vmatprep.subr.mxu0 0.0
    %2999 = vmatpush1.msra.mxu0 0.0
    %3000 = vmatprep.subr.mxu0 0.0
    %3001 = vmatpush1.msra.mxu0 0.0
    %3002 = vmatprep.subr.mxu0 0.0
    %3003 = vmatpush1.msra.mxu0 0.0
    %3004 = vmatprep.subr.mxu0 0.0
    %3005 = vmatpush1.msra.mxu0 0.0
    %3006 = vmatprep.subr.mxu0 0.0
    %3007 = vmatpush1.msra.mxu0 0.0
    %3008 = vmatprep.subr.mxu0 0.0
    %3009 = vmatpush1.msra.mxu0 0.0
    %3010 = vmatprep.subr.mxu0 0.0
    %3011 = vmatpush1.msra.mxu0 0.0
    %3012 = vmatprep.subr.mxu0 0.0
    %3013 = vmatpush1.msra.mxu0 0.0
    %3014 = vmatprep.subr.mxu0 0.0
    %3015 = vmatpush1.msra.mxu0 0.0
    %3016 = vmatprep.subr.mxu0 0.0
    %3017 = vmatpush1.msra.mxu0 0.0
    %3018 = vmatprep.subr.mxu0 0.0
    %3019 = vmatpush1.msra.mxu0 0.0
    %3020 = vmatprep.subr.mxu0 0.0
    %3021 = vmatpush1.msra.mxu0 0.0
    %3022 = vmatprep.subr.mxu0 0.0
    %3023 = vmatpush1.msra.mxu0 0.0
    %3024 = vmatprep.subr.mxu0 0.0
    %3025 = vmatpush1.msra.mxu0 0.0
    %3026 = vmatprep.subr.mxu0 0.0
    %3027 = vmatpush1.msra.mxu0 0.0
    %3028 = vmatprep.subr.mxu0 0.0
    %3029 = vmatpush1.msra.mxu0 0.0
    %3030 = vmatprep.subr.mxu0 0.0
    %3031 = vmatpush1.msra.mxu0 0.0
    %3032 = vmatprep.subr.mxu0 0.0
    %3033 = vmatpush1.msra.mxu0 0.0
    %3034 = vmatprep.mubr.f32.mxu0 0.0
    %3035 = vmatmul.mubr.f32.gmra.mrb[0].mxu0 %v2589
    %v3036 = vpop.f32.mrb[0].mxu0
    %v3037 = vadd.f32 %v68, %v3036
    %v3038 = vpop.f32.mrb[0].mxu0
    %3039 = vdwg.mxu0
    %v3040 = vadd.f32 %v2898, %v2966
    %v3041 = vxor.u32 %v3040, 2147483648
    %v3042 = vmul.f32 %v3041, 1.442695
    %v3043 = vpow.pop %v3042
    %v3044 = vadd.f32 %v3043, 1.0
    %v3045 = vrcp.pop %v3044
    %v3046 = vmul.f32 1.0, %v3045
    %v3048 = vrot.slane %v2898, 2
    %v3050 = vadd.f32 %v3048, %v2968
    %v3051 = vxor.u32 %v3050, 2147483648
    %v3052 = vmul.f32 %v3051, 1.442695
    %v3053 = vpow.pop %v3052
    %v3054 = vadd.f32 %v3053, 1.0
    %v3055 = vrcp.pop %v3054
    %v3056 = vmul.f32 1.0, %v3055
    %v3057 = vmul.f32 %v3046, %v3037
    %v3058 = vrot.slane %v2898, 4
    %v3060 = vadd.f32 %v3058, %v3057
    %v3061 = vtanh.pop %v3060
    %v3062 = vsub.f32 1.0, %v3056
    %v3063 = vmul.f32 %v3062, %v3061
    %v3064 = vmul.f32 %v3056, %v2587
    %v3065 = vadd.f32 %v3063, %v3064
    %v3067 = vsel %vm508, %v3065, 0
    %3069 = vmatprep.subr.mxu0 %v472
    %3070 = vmatpush1.msra.mxu0 %v471
    %3071 = vmatprep.subr.mxu0 %v475
    %3072 = vmatpush1.msra.mxu0 %v474
    %3073 = vmatprep.subr.mxu0 %v478
    %3074 = vmatpush1.msra.mxu0 %v477
    %3075 = vmatprep.subr.mxu0 %v481
    %3076 = vmatpush1.msra.mxu0 %v480
    %3077 = vmatprep.subr.mxu0 %v484
    %3078 = vmatpush1.msra.mxu0 %v483
    %3079 = vmatprep.subr.mxu0 %v487
    %3080 = vmatpush1.msra.mxu0 %v486
    %3081 = vmatprep.subr.mxu0 0.0
    %3082 = vmatpush1.msra.mxu0 0.0
    %3083 = vmatprep.subr.mxu0 0.0
    %3084 = vmatpush1.msra.mxu0 0.0
    %3085 = vmatprep.subr.mxu0 0.0
    %3086 = vmatpush1.msra.mxu0 0.0
    %3087 = vmatprep.subr.mxu0 0.0
    %3088 = vmatpush1.msra.mxu0 0.0
    %3089 = vmatprep.subr.mxu0 0.0
    %3090 = vmatpush1.msra.mxu0 0.0
    %3091 = vmatprep.subr.mxu0 0.0
    %3092 = vmatpush1.msra.mxu0 0.0
    %3093 = vmatprep.subr.mxu0 0.0
    %3094 = vmatpush1.msra.mxu0 0.0
    %3095 = vmatprep.subr.mxu0 0.0
    %3096 = vmatpush1.msra.mxu0 0.0
    %3097 = vmatprep.subr.mxu0 0.0
    %3098 = vmatpush1.msra.mxu0 0.0
    %3099 = vmatprep.subr.mxu0 0.0
    %3100 = vmatpush1.msra.mxu0 0.0
    %3101 = vmatprep.subr.mxu0 0.0
    %3102 = vmatpush1.msra.mxu0 0.0
    %3103 = vmatprep.subr.mxu0 0.0
    %3104 = vmatpush1.msra.mxu0 0.0
    %3105 = vmatprep.subr.mxu0 0.0
    %3106 = vmatpush1.msra.mxu0 0.0
    %3107 = vmatprep.subr.mxu0 0.0
    %3108 = vmatpush1.msra.mxu0 0.0
    %3109 = vmatprep.subr.mxu0 0.0
    %3110 = vmatpush1.msra.mxu0 0.0
    %3111 = vmatprep.subr.mxu0 0.0
    %3112 = vmatpush1.msra.mxu0 0.0
    %3113 = vmatprep.subr.mxu0 0.0
    %3114 = vmatpush1.msra.mxu0 0.0
    %3115 = vmatprep.subr.mxu0 0.0
    %3116 = vmatpush1.msra.mxu0 0.0
    %3117 = vmatprep.subr.mxu0 0.0
    %3118 = vmatpush1.msra.mxu0 0.0
    %3119 = vmatprep.subr.mxu0 0.0
    %3120 = vmatpush1.msra.mxu0 0.0
    %3121 = vmatprep.subr.mxu0 0.0
    %3122 = vmatpush1.msra.mxu0 0.0
    %3123 = vmatprep.subr.mxu0 0.0
    %3124 = vmatpush1.msra.mxu0 0.0
    %3125 = vmatprep.subr.mxu0 0.0
    %3126 = vmatpush1.msra.mxu0 0.0
    %3127 = vmatprep.subr.mxu0 0.0
    %3128 = vmatpush1.msra.mxu0 0.0
    %3129 = vmatprep.subr.mxu0 0.0
    %3130 = vmatpush1.msra.mxu0 0.0
    %3131 = vmatprep.subr.mxu0 0.0
    %3132 = vmatpush1.msra.mxu0 0.0
    %3133 = vmatprep.mubr.f32.mxu0 0.0
    %3134 = vmatmul.mubr.f32.gmra.mrb[0].mxu0 %v3067
    %v3135 = vpop.f32.mrb[0].mxu0
    %v3136 = vadd.f32 %v78, %v3135
    %v3137 = vpop.f32.mrb[0].mxu0
    %v3138 = vadd.f32 %v82, %v3137
    %3139 = vdwg.mxu0
    %3140 = vmatprep.subr.mxu0 0.0
    %3141 = vmatpush1.msra.mxu0 %v473
    %3142 = vmatprep.subr.mxu0 0.0
    %3143 = vmatpush1.msra.mxu0 %v476
    %3144 = vmatprep.subr.mxu0 0.0
    %3145 = vmatpush1.msra.mxu0 %v479
    %3146 = vmatprep.subr.mxu0 0.0
    %3147 = vmatpush1.msra.mxu0 %v482
    %3148 = vmatprep.subr.mxu0 0.0
    %3149 = vmatpush1.msra.mxu0 %v485
    %3150 = vmatprep.subr.mxu0 0.0
    %3151 = vmatpush1.msra.mxu0 %v488
    %3152 = vmatprep.subr.mxu0 0.0
    %3153 = vmatpush1.msra.mxu0 0.0
    %3154 = vmatprep.subr.mxu0 0.0
    %3155 = vmatpush1.msra.mxu0 0.0
    %3156 = vmatprep.subr.mxu0 0.0
    %3157 = vmatpush1.msra.mxu0 0.0
    %3158 = vmatprep.subr.mxu0 0.0
    %3159 = vmatpush1.msra.mxu0 0.0
    %3160 = vmatprep.subr.mxu0 0.0
    %3161 = vmatpush1.msra.mxu0 0.0
    %3162 = vmatprep.subr.mxu0 0.0
    %3163 = vmatpush1.msra.mxu0 0.0
    %3164 = vmatprep.subr.mxu0 0.0
    %3165 = vmatpush1.msra.mxu0 0.0
    %3166 = vmatprep.subr.mxu0 0.0
    %3167 = vmatpush1.msra.mxu0 0.0
    %3168 = vmatprep.subr.mxu0 0.0
    %3169 = vmatpush1.msra.mxu0 0.0
    %3170 = vmatprep.subr.mxu0 0.0
    %3171 = vmatpush1.msra.mxu0 0.0
    %3172 = vmatprep.subr.mxu0 0.0
    %3173 = vmatpush1.msra.mxu0 0.0
    %3174 = vmatprep.subr.mxu0 0.0
    %3175 = vmatpush1.msra.mxu0 0.0
    %3176 = vmatprep.subr.mxu0 0.0
    %3177 = vmatpush1.msra.mxu0 0.0
    %3178 = vmatprep.subr.mxu0 0.0
    %3179 = vmatpush1.msra.mxu0 0.0
    %3180 = vmatprep.subr.mxu0 0.0
    %3181 = vmatpush1.msra.mxu0 0.0
    %3182 = vmatprep.subr.mxu0 0.0
    %3183 = vmatpush1.msra.mxu0 0.0
    %3184 = vmatprep.subr.mxu0 0.0
    %3185 = vmatpush1.msra.mxu0 0.0
    %3186 = vmatprep.subr.mxu0 0.0
    %3187 = vmatpush1.msra.mxu0 0.0
    %3188 = vmatprep.subr.mxu0 0.0
    %3189 = vmatpush1.msra.mxu0 0.0
    %3190 = vmatprep.subr.mxu0 0.0
    %3191 = vmatpush1.msra.mxu0 0.0
    %3192 = vmatprep.subr.mxu0 0.0
    %3193 = vmatpush1.msra.mxu0 0.0
    %3194 = vmatprep.subr.mxu0 0.0
    %3195 = vmatpush1.msra.mxu0 0.0
    %3196 = vmatprep.subr.mxu0 0.0
    %3197 = vmatpush1.msra.mxu0 0.0
    %3198 = vmatprep.subr.mxu0 0.0
    %3199 = vmatpush1.msra.mxu0 0.0
    %3200 = vmatprep.subr.mxu0 0.0
    %3201 = vmatpush1.msra.mxu0 0.0
    %3202 = vmatprep.subr.mxu0 0.0
    %3203 = vmatpush1.msra.mxu0 0.0
    %3204 = vmatprep.mubr.f32.mxu0 0.0
    %3205 = vmatmul.mubr.f32.gmra.mrb[0].mxu0 %v3067
    %v3206 = vpop.f32.mrb[0].mxu0
    %v3207 = vadd.f32 %v86, %v3206
    %v3208 = vpop.f32.mrb[0].mxu0
    %3209 = vdwg.mxu0
    %v3211 = vsel %vm508, %v2896, 0
    %3213 = vmatprep.subr.mxu0 %v490
    %3214 = vmatpush1.msra.mxu0 %v489
    %3215 = vmatprep.subr.mxu0 %v493
    %3216 = vmatpush1.msra.mxu0 %v492
    %3217 = vmatprep.subr.mxu0 %v496
    %3218 = vmatpush1.msra.mxu0 %v495
    %3219 = vmatprep.subr.mxu0 %v499
    %3220 = vmatpush1.msra.mxu0 %v498
    %3221 = vmatprep.subr.mxu0 %v502
    %3222 = vmatpush1.msra.mxu0 %v501
    %3223 = vmatprep.subr.mxu0 %v505
    %3224 = vmatpush1.msra.mxu0 %v504
    %3225 = vmatprep.subr.mxu0 0.0
    %3226 = vmatpush1.msra.mxu0 0.0
    %3227 = vmatprep.subr.mxu0 0.0
    %3228 = vmatpush1.msra.mxu0 0.0
    %3229 = vmatprep.subr.mxu0 0.0
    %3230 = vmatpush1.msra.mxu0 0.0
    %3231 = vmatprep.subr.mxu0 0.0
    %3232 = vmatpush1.msra.mxu0 0.0
    %3233 = vmatprep.subr.mxu0 0.0
    %3234 = vmatpush1.msra.mxu0 0.0
    %3235 = vmatprep.subr.mxu0 0.0
    %3236 = vmatpush1.msra.mxu0 0.0
    %3237 = vmatprep.subr.mxu0 0.0
    %3238 = vmatpush1.msra.mxu0 0.0
    %3239 = vmatprep.subr.mxu0 0.0
    %3240 = vmatpush1.msra.mxu0 0.0
    %3241 = vmatprep.subr.mxu0 0.0
    %3242 = vmatpush1.msra.mxu0 0.0
    %3243 = vmatprep.subr.mxu0 0.0
    %3244 = vmatpush1.msra.mxu0 0.0
    %3245 = vmatprep.subr.mxu0 0.0
    %3246 = vmatpush1.msra.mxu0 0.0
    %3247 = vmatprep.subr.mxu0 0.0
    %3248 = vmatpush1.msra.mxu0 0.0
    %3249 = vmatprep.subr.mxu0 0.0
    %3250 = vmatpush1.msra.mxu0 0.0
    %3251 = vmatprep.subr.mxu0 0.0
    %3252 = vmatpush1.msra.mxu0 0.0
    %3253 = vmatprep.subr.mxu0 0.0
    %3254 = vmatpush1.msra.mxu0 0.0
    %3255 = vmatprep.subr.mxu0 0.0
    %3256 = vmatpush1.msra.mxu0 0.0
    %3257 = vmatprep.subr.mxu0 0.0
    %3258 = vmatpush1.msra.mxu0 0.0
    %3259 = vmatprep.subr.mxu0 0.0
    %3260 = vmatpush1.msra.mxu0 0.0
    %3261 = vmatprep.subr.mxu0 0.0
    %3262 = vmatpush1.msra.mxu0 0.0
    %3263 = vmatprep.subr.mxu0 0.0
    %3264 = vmatpush1.msra.mxu0 0.0
    %3265 = vmatprep.subr.mxu0 0.0
    %3266 = vmatpush1.msra.mxu0 0.0
    %3267 = vmatprep.subr.mxu0 0.0
    %3268 = vmatpush1.msra.mxu0 0.0
    %3269 = vmatprep.subr.mxu0 0.0
    %3270 = vmatpush1.msra.mxu0 0.0
    %3271 = vmatprep.subr.mxu0 0.0
    %3272 = vmatpush1.msra.mxu0 0.0
    %3273 = vmatprep.subr.mxu0 0.0
    %3274 = vmatpush1.msra.mxu0 0.0
    %3275 = vmatprep.subr.mxu0 0.0
    %3276 = vmatpush1.msra.mxu0 0.0
    %3277 = vmatprep.mubr.f32.mxu0 0.0
    %3278 = vmatmul.mubr.f32.gmra.mrb[0].mxu0 %v3211
    %v3279 = vpop.f32.mrb[0].mxu0
    %v3280 = vadd.f32 %v96, %v3279
    %v3281 = vpop.f32.mrb[0].mxu0
    %v3282 = vadd.f32 %v100, %v3281
    %3283 = vdwg.mxu0
    %3284 = vmatprep.subr.mxu0 0.0
    %3285 = vmatpush1.msra.mxu0 %v491
    %3286 = vmatprep.subr.mxu0 0.0
    %3287 = vmatpush1.msra.mxu0 %v494
    %3288 = vmatprep.subr.mxu0 0.0
    %3289 = vmatpush1.msra.mxu0 %v497
    %3290 = vmatprep.subr.mxu0 0.0
    %3291 = vmatpush1.msra.mxu0 %v500
    %3292 = vmatprep.subr.mxu0 0.0
    %3293 = vmatpush1.msra.mxu0 %v503
    %3294 = vmatprep.subr.mxu0 0.0
    %3295 = vmatpush1.msra.mxu0 %v506
    %3296 = vmatprep.subr.mxu0 0.0
    %3297 = vmatpush1.msra.mxu0 0.0
    %3298 = vmatprep.subr.mxu0 0.0
    %3299 = vmatpush1.msra.mxu0 0.0
    %3300 = vmatprep.subr.mxu0 0.0
    %3301 = vmatpush1.msra.mxu0 0.0
    %3302 = vmatprep.subr.mxu0 0.0
    %3303 = vmatpush1.msra.mxu0 0.0
    %3304 = vmatprep.subr.mxu0 0.0
    %3305 = vmatpush1.msra.mxu0 0.0
    %3306 = vmatprep.subr.mxu0 0.0
    %3307 = vmatpush1.msra.mxu0 0.0
    %3308 = vmatprep.subr.mxu0 0.0
    %3309 = vmatpush1.msra.mxu0 0.0
    %3310 = vmatprep.subr.mxu0 0.0
    %3311 = vmatpush1.msra.mxu0 0.0
    %3312 = vmatprep.subr.mxu0 0.0
    %3313 = vmatpush1.msra.mxu0 0.0
    %3314 = vmatprep.subr.mxu0 0.0
    %3315 = vmatpush1.msra.mxu0 0.0
    %3316 = vmatprep.subr.mxu0 0.0
    %3317 = vmatpush1.msra.mxu0 0.0
    %3318 = vmatprep.subr.mxu0 0.0
    %3319 = vmatpush1.msra.mxu0 0.0
    %3320 = vmatprep.subr.mxu0 0.0
    %3321 = vmatpush1.msra.mxu0 0.0
    %3322 = vmatprep.subr.mxu0 0.0
    %3323 = vmatpush1.msra.mxu0 0.0
    %3324 = vmatprep.subr.mxu0 0.0
    %3325 = vmatpush1.msra.mxu0 0.0
    %3326 = vmatprep.subr.mxu0 0.0
    %3327 = vmatpush1.msra.mxu0 0.0
    %3328 = vmatprep.subr.mxu0 0.0
    %3329 = vmatpush1.msra.mxu0 0.0
    %3330 = vmatprep.subr.mxu0 0.0
    %3331 = vmatpush1.msra.mxu0 0.0
    %3332 = vmatprep.subr.mxu0 0.0
    %3333 = vmatpush1.msra.mxu0 0.0
    %3334 = vmatprep.subr.mxu0 0.0
    %3335 = vmatpush1.msra.mxu0 0.0
    %3336 = vmatprep.subr.mxu0 0.0
    %3337 = vmatpush1.msra.mxu0 0.0
    %3338 = vmatprep.subr.mxu0 0.0
    %3339 = vmatpush1.msra.mxu0 0.0
    %3340 = vmatprep.subr.mxu0 0.0
    %3341 = vmatpush1.msra.mxu0 0.0
    %3342 = vmatprep.subr.mxu0 0.0
    %3343 = vmatpush1.msra.mxu0 0.0
    %3344 = vmatprep.subr.mxu0 0.0
    %3345 = vmatpush1.msra.mxu0 0.0
    %3346 = vmatprep.subr.mxu0 0.0
    %3347 = vmatpush1.msra.mxu0 0.0
    %3348 = vmatprep.mubr.f32.mxu0 0.0
    %3349 = vmatmul.mubr.f32.gmra.mrb[0].mxu0 %v3211
    %v3350 = vpop.f32.mrb[0].mxu0
    %v3351 = vadd.f32 %v104, %v3350
    %v3352 = vpop.f32.mrb[0].mxu0
    %3353 = vdwg.mxu0
    %v3354 = vadd.f32 %v3136, %v3280
    %v3355 = vxor.u32 %v3354, 2147483648
    %v3356 = vmul.f32 %v3355, 1.442695
    %v3357 = vpow.pop %v3356
    %v3358 = vadd.f32 %v3357, 1.0
    %v3359 = vrcp.pop %v3358
    %v3360 = vmul.f32 1.0, %v3359
    %v3361 = vadd.f32 %v3138, %v3282
    %v3362 = vxor.u32 %v3361, 2147483648
    %v3363 = vmul.f32 %v3362, 1.442695
    %v3364 = vpow.pop %v3363
    %v3365 = vadd.f32 %v3364, 1.0
    %v3366 = vrcp.pop %v3365
    %v3367 = vmul.f32 1.0, %v3366
    %v3368 = vmul.f32 %v3360, %v3351
    %v3369 = vadd.f32 %v3207, %v3368
    %v3370 = vtanh.pop %v3369
    %v3371 = vsub.f32 1.0, %v3367
    %v3372 = vmul.f32 %v3371, %v3370
    %v3373 = vmul.f32 %v3367, %v2896
    %v3374 = vadd.f32 %v3372, %v3373
    %s3375 = scalar_lea.vmem [#allocation2], 36
    %v3376 = vld [vmem:[%s3375] sm:$0x3f]
    %3377 = vmatprep.subr.mxu0 %v454
    %3378 = vmatpush1.msra.mxu0 %v453
    %3379 = vmatprep.subr.mxu0 %v457
    %3380 = vmatpush1.msra.mxu0 %v456
    %3381 = vmatprep.subr.mxu0 %v460
    %3382 = vmatpush1.msra.mxu0 %v459
    %3383 = vmatprep.subr.mxu0 %v463
    %3384 = vmatpush1.msra.mxu0 %v462
    %3385 = vmatprep.subr.mxu0 %v466
    %3386 = vmatpush1.msra.mxu0 %v465
    %3387 = vmatprep.subr.mxu0 %v469
    %3388 = vmatpush1.msra.mxu0 %v468
    %3389 = vmatprep.subr.mxu0 0.0
    %3390 = vmatpush1.msra.mxu0 0.0
    %3391 = vmatprep.subr.mxu0 0.0
    %3392 = vmatpush1.msra.mxu0 0.0
    %3393 = vmatprep.subr.mxu0 0.0
    %3394 = vmatpush1.msra.mxu0 0.0
    %3395 = vmatprep.subr.mxu0 0.0
    %3396 = vmatpush1.msra.mxu0 0.0
    %3397 = vmatprep.subr.mxu0 0.0
    %3398 = vmatpush1.msra.mxu0 0.0
    %3399 = vmatprep.subr.mxu0 0.0
    %3400 = vmatpush1.msra.mxu0 0.0
    %3401 = vmatprep.subr.mxu0 0.0
    %3402 = vmatpush1.msra.mxu0 0.0
    %3403 = vmatprep.subr.mxu0 0.0
    %3404 = vmatpush1.msra.mxu0 0.0
    %3405 = vmatprep.subr.mxu0 0.0
    %3406 = vmatpush1.msra.mxu0 0.0
    %3407 = vmatprep.subr.mxu0 0.0
    %3408 = vmatpush1.msra.mxu0 0.0
    %3409 = vmatprep.subr.mxu0 0.0
    %3410 = vmatpush1.msra.mxu0 0.0
    %3411 = vmatprep.subr.mxu0 0.0
    %3412 = vmatpush1.msra.mxu0 0.0
    %3413 = vmatprep.subr.mxu0 0.0
    %3414 = vmatpush1.msra.mxu0 0.0
    %3415 = vmatprep.subr.mxu0 0.0
    %3416 = vmatpush1.msra.mxu0 0.0
    %3417 = vmatprep.subr.mxu0 0.0
    %3418 = vmatpush1.msra.mxu0 0.0
    %3419 = vmatprep.subr.mxu0 0.0
    %3420 = vmatpush1.msra.mxu0 0.0
    %3421 = vmatprep.subr.mxu0 0.0
    %3422 = vmatpush1.msra.mxu0 0.0
    %3423 = vmatprep.subr.mxu0 0.0
    %3424 = vmatpush1.msra.mxu0 0.0
    %3425 = vmatprep.subr.mxu0 0.0
    %3426 = vmatpush1.msra.mxu0 0.0
    %3427 = vmatprep.subr.mxu0 0.0
    %3428 = vmatpush1.msra.mxu0 0.0
    %3429 = vmatprep.subr.mxu0 0.0
    %3430 = vmatpush1.msra.mxu0 0.0
    %3431 = vmatprep.subr.mxu0 0.0
    %3432 = vmatpush1.msra.mxu0 0.0
    %3433 = vmatprep.subr.mxu0 0.0
    %3434 = vmatpush1.msra.mxu0 0.0
    %3435 = vmatprep.subr.mxu0 0.0
    %3436 = vmatpush1.msra.mxu0 0.0
    %3437 = vmatprep.subr.mxu0 0.0
    %3438 = vmatpush1.msra.mxu0 0.0
    %3439 = vmatprep.subr.mxu0 0.0
    %3440 = vmatpush1.msra.mxu0 0.0
    %3441 = vmatprep.mubr.f32.mxu0 0.0
    %3442 = vmatmul.mubr.f32.gmra.mrb[0].mxu0 %v3067
    %v3443 = vpop.f32.mrb[0].mxu0
    %v3444 = vadd.f32 %v60, %v3443
    %v3445 = vpop.f32.mrb[0].mxu0
    %v3446 = vadd.f32 %v64, %v3445
    %3447 = vdwg.mxu0
    %3448 = vmatprep.subr.mxu0 0.0
    %3449 = vmatpush1.msra.mxu0 %v455
    %3450 = vmatprep.subr.mxu0 0.0
    %3451 = vmatpush1.msra.mxu0 %v458
    %3452 = vmatprep.subr.mxu0 0.0
    %3453 = vmatpush1.msra.mxu0 %v461
    %3454 = vmatprep.subr.mxu0 0.0
    %3455 = vmatpush1.msra.mxu0 %v464
    %3456 = vmatprep.subr.mxu0 0.0
    %3457 = vmatpush1.msra.mxu0 %v467
    %3458 = vmatprep.subr.mxu0 0.0
    %3459 = vmatpush1.msra.mxu0 %v470
    %3460 = vmatprep.subr.mxu0 0.0
    %3461 = vmatpush1.msra.mxu0 0.0
    %3462 = vmatprep.subr.mxu0 0.0
    %3463 = vmatpush1.msra.mxu0 0.0
    %3464 = vmatprep.subr.mxu0 0.0
    %3465 = vmatpush1.msra.mxu0 0.0
    %3466 = vmatprep.subr.mxu0 0.0
    %3467 = vmatpush1.msra.mxu0 0.0
    %3468 = vmatprep.subr.mxu0 0.0
    %3469 = vmatpush1.msra.mxu0 0.0
    %3470 = vmatprep.subr.mxu0 0.0
    %3471 = vmatpush1.msra.mxu0 0.0
    %3472 = vmatprep.subr.mxu0 0.0
    %3473 = vmatpush1.msra.mxu0 0.0
    %3474 = vmatprep.subr.mxu0 0.0
    %3475 = vmatpush1.msra.mxu0 0.0
    %3476 = vmatprep.subr.mxu0 0.0
    %3477 = vmatpush1.msra.mxu0 0.0
    %3478 = vmatprep.subr.mxu0 0.0
    %3479 = vmatpush1.msra.mxu0 0.0
    %3480 = vmatprep.subr.mxu0 0.0
    %3481 = vmatpush1.msra.mxu0 0.0
    %3482 = vmatprep.subr.mxu0 0.0
    %3483 = vmatpush1.msra.mxu0 0.0
    %3484 = vmatprep.subr.mxu0 0.0
    %3485 = vmatpush1.msra.mxu0 0.0
    %3486 = vmatprep.subr.mxu0 0.0
    %3487 = vmatpush1.msra.mxu0 0.0
    %3488 = vmatprep.subr.mxu0 0.0
    %3489 = vmatpush1.msra.mxu0 0.0
    %3490 = vmatprep.subr.mxu0 0.0
    %3491 = vmatpush1.msra.mxu0 0.0
    %3492 = vmatprep.subr.mxu0 0.0
    %3493 = vmatpush1.msra.mxu0 0.0
    %3494 = vmatprep.subr.mxu0 0.0
    %3495 = vmatpush1.msra.mxu0 0.0
    %3496 = vmatprep.subr.mxu0 0.0
    %3497 = vmatpush1.msra.mxu0 0.0
    %3498 = vmatprep.subr.mxu0 0.0
    %3499 = vmatpush1.msra.mxu0 0.0
    %3500 = vmatprep.subr.mxu0 0.0
    %3501 = vmatpush1.msra.mxu0 0.0
    %3502 = vmatprep.subr.mxu0 0.0
    %3503 = vmatpush1.msra.mxu0 0.0
    %3504 = vmatprep.subr.mxu0 0.0
    %3505 = vmatpush1.msra.mxu0 0.0
    %3506 = vmatprep.subr.mxu0 0.0
    %3507 = vmatpush1.msra.mxu0 0.0
    %3508 = vmatprep.subr.mxu0 0.0
    %3509 = vmatpush1.msra.mxu0 0.0
    %3510 = vmatprep.subr.mxu0 0.0
    %3511 = vmatpush1.msra.mxu0 0.0
    %3512 = vmatprep.mubr.f32.mxu0 0.0
    %3513 = vmatmul.mubr.f32.gmra.mrb[0].mxu0 %v3067
    %v3514 = vpop.f32.mrb[0].mxu0
    %v3515 = vadd.f32 %v68, %v3514
    %v3516 = vpop.f32.mrb[0].mxu0
    %3517 = vdwg.mxu0
    %v3518 = vadd.f32 %v3376, %v3444
    %v3519 = vxor.u32 %v3518, 2147483648
    %v3520 = vmul.f32 %v3519, 1.442695
    %v3521 = vpow.pop %v3520
    %v3522 = vadd.f32 %v3521, 1.0
    %v3523 = vrcp.pop %v3522
    %v3524 = vmul.f32 1.0, %v3523
    %v3526 = vrot.slane %v3376, 2
    %v3528 = vadd.f32 %v3526, %v3446
    %v3529 = vxor.u32 %v3528, 2147483648
    %v3530 = vmul.f32 %v3529, 1.442695
    %v3531 = vpow.pop %v3530
    %v3532 = vadd.f32 %v3531, 1.0
    %v3533 = vrcp.pop %v3532
    %v3534 = vmul.f32 1.0, %v3533
    %v3535 = vmul.f32 %v3524, %v3515
    %v3536 = vrot.slane %v3376, 4
    %v3538 = vadd.f32 %v3536, %v3535
    %v3539 = vtanh.pop %v3538
    %v3540 = vsub.f32 1.0, %v3534
    %v3541 = vmul.f32 %v3540, %v3539
    %v3542 = vmul.f32 %v3534, %v3065
    %v3543 = vadd.f32 %v3541, %v3542
    %v3545 = vsel %vm508, %v3543, 0
    %3547 = vmatprep.subr.mxu0 %v472
    %3548 = vmatpush1.msra.mxu0 %v471
    %3549 = vmatprep.subr.mxu0 %v475
    %3550 = vmatpush1.msra.mxu0 %v474
    %3551 = vmatprep.subr.mxu0 %v478
    %3552 = vmatpush1.msra.mxu0 %v477
    %3553 = vmatprep.subr.mxu0 %v481
    %3554 = vmatpush1.msra.mxu0 %v480
    %3555 = vmatprep.subr.mxu0 %v484
    %3556 = vmatpush1.msra.mxu0 %v483
    %3557 = vmatprep.subr.mxu0 %v487
    %3558 = vmatpush1.msra.mxu0 %v486
    %3559 = vmatprep.subr.mxu0 0.0
    %3560 = vmatpush1.msra.mxu0 0.0
    %3561 = vmatprep.subr.mxu0 0.0
    %3562 = vmatpush1.msra.mxu0 0.0
    %3563 = vmatprep.subr.mxu0 0.0
    %3564 = vmatpush1.msra.mxu0 0.0
    %3565 = vmatprep.subr.mxu0 0.0
    %3566 = vmatpush1.msra.mxu0 0.0
    %3567 = vmatprep.subr.mxu0 0.0
    %3568 = vmatpush1.msra.mxu0 0.0
    %3569 = vmatprep.subr.mxu0 0.0
    %3570 = vmatpush1.msra.mxu0 0.0
    %3571 = vmatprep.subr.mxu0 0.0
    %3572 = vmatpush1.msra.mxu0 0.0
    %3573 = vmatprep.subr.mxu0 0.0
    %3574 = vmatpush1.msra.mxu0 0.0
    %3575 = vmatprep.subr.mxu0 0.0
    %3576 = vmatpush1.msra.mxu0 0.0
    %3577 = vmatprep.subr.mxu0 0.0
    %3578 = vmatpush1.msra.mxu0 0.0
    %3579 = vmatprep.subr.mxu0 0.0
    %3580 = vmatpush1.msra.mxu0 0.0
    %3581 = vmatprep.subr.mxu0 0.0
    %3582 = vmatpush1.msra.mxu0 0.0
    %3583 = vmatprep.subr.mxu0 0.0
    %3584 = vmatpush1.msra.mxu0 0.0
    %3585 = vmatprep.subr.mxu0 0.0
    %3586 = vmatpush1.msra.mxu0 0.0
    %3587 = vmatprep.subr.mxu0 0.0
    %3588 = vmatpush1.msra.mxu0 0.0
    %3589 = vmatprep.subr.mxu0 0.0
    %3590 = vmatpush1.msra.mxu0 0.0
    %3591 = vmatprep.subr.mxu0 0.0
    %3592 = vmatpush1.msra.mxu0 0.0
    %3593 = vmatprep.subr.mxu0 0.0
    %3594 = vmatpush1.msra.mxu0 0.0
    %3595 = vmatprep.subr.mxu0 0.0
    %3596 = vmatpush1.msra.mxu0 0.0
    %3597 = vmatprep.subr.mxu0 0.0
    %3598 = vmatpush1.msra.mxu0 0.0
    %3599 = vmatprep.subr.mxu0 0.0
    %3600 = vmatpush1.msra.mxu0 0.0
    %3601 = vmatprep.subr.mxu0 0.0
    %3602 = vmatpush1.msra.mxu0 0.0
    %3603 = vmatprep.subr.mxu0 0.0
    %3604 = vmatpush1.msra.mxu0 0.0
    %3605 = vmatprep.subr.mxu0 0.0
    %3606 = vmatpush1.msra.mxu0 0.0
    %3607 = vmatprep.subr.mxu0 0.0
    %3608 = vmatpush1.msra.mxu0 0.0
    %3609 = vmatprep.subr.mxu0 0.0
    %3610 = vmatpush1.msra.mxu0 0.0
    %3611 = vmatprep.mubr.f32.mxu0 0.0
    %3612 = vmatmul.mubr.f32.gmra.mrb[0].mxu0 %v3545
    %v3613 = vpop.f32.mrb[0].mxu0
    %v3614 = vadd.f32 %v78, %v3613
    %v3615 = vpop.f32.mrb[0].mxu0
    %v3616 = vadd.f32 %v82, %v3615
    %3617 = vdwg.mxu0
    %3618 = vmatprep.subr.mxu0 0.0
    %3619 = vmatpush1.msra.mxu0 %v473
    %3620 = vmatprep.subr.mxu0 0.0
    %3621 = vmatpush1.msra.mxu0 %v476
    %3622 = vmatprep.subr.mxu0 0.0
    %3623 = vmatpush1.msra.mxu0 %v479
    %3624 = vmatprep.subr.mxu0 0.0
    %3625 = vmatpush1.msra.mxu0 %v482
    %3626 = vmatprep.subr.mxu0 0.0
    %3627 = vmatpush1.msra.mxu0 %v485
    %3628 = vmatprep.subr.mxu0 0.0
    %3629 = vmatpush1.msra.mxu0 %v488
    %3630 = vmatprep.subr.mxu0 0.0
    %3631 = vmatpush1.msra.mxu0 0.0
    %3632 = vmatprep.subr.mxu0 0.0
    %3633 = vmatpush1.msra.mxu0 0.0
    %3634 = vmatprep.subr.mxu0 0.0
    %3635 = vmatpush1.msra.mxu0 0.0
    %3636 = vmatprep.subr.mxu0 0.0
    %3637 = vmatpush1.msra.mxu0 0.0
    %3638 = vmatprep.subr.mxu0 0.0
    %3639 = vmatpush1.msra.mxu0 0.0
    %3640 = vmatprep.subr.mxu0 0.0
    %3641 = vmatpush1.msra.mxu0 0.0
    %3642 = vmatprep.subr.mxu0 0.0
    %3643 = vmatpush1.msra.mxu0 0.0
    %3644 = vmatprep.subr.mxu0 0.0
    %3645 = vmatpush1.msra.mxu0 0.0
    %3646 = vmatprep.subr.mxu0 0.0
    %3647 = vmatpush1.msra.mxu0 0.0
    %3648 = vmatprep.subr.mxu0 0.0
    %3649 = vmatpush1.msra.mxu0 0.0
    %3650 = vmatprep.subr.mxu0 0.0
    %3651 = vmatpush1.msra.mxu0 0.0
    %3652 = vmatprep.subr.mxu0 0.0
    %3653 = vmatpush1.msra.mxu0 0.0
    %3654 = vmatprep.subr.mxu0 0.0
    %3655 = vmatpush1.msra.mxu0 0.0
    %3656 = vmatprep.subr.mxu0 0.0
    %3657 = vmatpush1.msra.mxu0 0.0
    %3658 = vmatprep.subr.mxu0 0.0
    %3659 = vmatpush1.msra.mxu0 0.0
    %3660 = vmatprep.subr.mxu0 0.0
    %3661 = vmatpush1.msra.mxu0 0.0
    %3662 = vmatprep.subr.mxu0 0.0
    %3663 = vmatpush1.msra.mxu0 0.0
    %3664 = vmatprep.subr.mxu0 0.0
    %3665 = vmatpush1.msra.mxu0 0.0
    %3666 = vmatprep.subr.mxu0 0.0
    %3667 = vmatpush1.msra.mxu0 0.0
    %3668 = vmatprep.subr.mxu0 0.0
    %3669 = vmatpush1.msra.mxu0 0.0
    %3670 = vmatprep.subr.mxu0 0.0
    %3671 = vmatpush1.msra.mxu0 0.0
    %3672 = vmatprep.subr.mxu0 0.0
    %3673 = vmatpush1.msra.mxu0 0.0
    %3674 = vmatprep.subr.mxu0 0.0
    %3675 = vmatpush1.msra.mxu0 0.0
    %3676 = vmatprep.subr.mxu0 0.0
    %3677 = vmatpush1.msra.mxu0 0.0
    %3678 = vmatprep.subr.mxu0 0.0
    %3679 = vmatpush1.msra.mxu0 0.0
    %3680 = vmatprep.subr.mxu0 0.0
    %3681 = vmatpush1.msra.mxu0 0.0
    %3682 = vmatprep.mubr.f32.mxu0 0.0
    %3683 = vmatmul.mubr.f32.gmra.mrb[0].mxu0 %v3545
    %v3684 = vpop.f32.mrb[0].mxu0
    %v3685 = vadd.f32 %v86, %v3684
    %v3686 = vpop.f32.mrb[0].mxu0
    %3687 = vdwg.mxu0
    %v3689 = vsel %vm508, %v3374, 0
    %3691 = vmatprep.subr.mxu0 %v490
    %3692 = vmatpush1.msra.mxu0 %v489
    %3693 = vmatprep.subr.mxu0 %v493
    %3694 = vmatpush1.msra.mxu0 %v492
    %3695 = vmatprep.subr.mxu0 %v496
    %3696 = vmatpush1.msra.mxu0 %v495
    %3697 = vmatprep.subr.mxu0 %v499
    %3698 = vmatpush1.msra.mxu0 %v498
    %3699 = vmatprep.subr.mxu0 %v502
    %3700 = vmatpush1.msra.mxu0 %v501
    %3701 = vmatprep.subr.mxu0 %v505
    %3702 = vmatpush1.msra.mxu0 %v504
    %3703 = vmatprep.subr.mxu0 0.0
    %3704 = vmatpush1.msra.mxu0 0.0
    %3705 = vmatprep.subr.mxu0 0.0
    %3706 = vmatpush1.msra.mxu0 0.0
    %3707 = vmatprep.subr.mxu0 0.0
    %3708 = vmatpush1.msra.mxu0 0.0
    %3709 = vmatprep.subr.mxu0 0.0
    %3710 = vmatpush1.msra.mxu0 0.0
    %3711 = vmatprep.subr.mxu0 0.0
    %3712 = vmatpush1.msra.mxu0 0.0
    %3713 = vmatprep.subr.mxu0 0.0
    %3714 = vmatpush1.msra.mxu0 0.0
    %3715 = vmatprep.subr.mxu0 0.0
    %3716 = vmatpush1.msra.mxu0 0.0
    %3717 = vmatprep.subr.mxu0 0.0
    %3718 = vmatpush1.msra.mxu0 0.0
    %3719 = vmatprep.subr.mxu0 0.0
    %3720 = vmatpush1.msra.mxu0 0.0
    %3721 = vmatprep.subr.mxu0 0.0
    %3722 = vmatpush1.msra.mxu0 0.0
    %3723 = vmatprep.subr.mxu0 0.0
    %3724 = vmatpush1.msra.mxu0 0.0
    %3725 = vmatprep.subr.mxu0 0.0
    %3726 = vmatpush1.msra.mxu0 0.0
    %3727 = vmatprep.subr.mxu0 0.0
    %3728 = vmatpush1.msra.mxu0 0.0
    %3729 = vmatprep.subr.mxu0 0.0
    %3730 = vmatpush1.msra.mxu0 0.0
    %3731 = vmatprep.subr.mxu0 0.0
    %3732 = vmatpush1.msra.mxu0 0.0
    %3733 = vmatprep.subr.mxu0 0.0
    %3734 = vmatpush1.msra.mxu0 0.0
    %3735 = vmatprep.subr.mxu0 0.0
    %3736 = vmatpush1.msra.mxu0 0.0
    %3737 = vmatprep.subr.mxu0 0.0
    %3738 = vmatpush1.msra.mxu0 0.0
    %3739 = vmatprep.subr.mxu0 0.0
    %3740 = vmatpush1.msra.mxu0 0.0
    %3741 = vmatprep.subr.mxu0 0.0
    %3742 = vmatpush1.msra.mxu0 0.0
    %3743 = vmatprep.subr.mxu0 0.0
    %3744 = vmatpush1.msra.mxu0 0.0
    %3745 = vmatprep.subr.mxu0 0.0
    %3746 = vmatpush1.msra.mxu0 0.0
    %3747 = vmatprep.subr.mxu0 0.0
    %3748 = vmatpush1.msra.mxu0 0.0
    %3749 = vmatprep.subr.mxu0 0.0
    %3750 = vmatpush1.msra.mxu0 0.0
    %3751 = vmatprep.subr.mxu0 0.0
    %3752 = vmatpush1.msra.mxu0 0.0
    %3753 = vmatprep.subr.mxu0 0.0
    %3754 = vmatpush1.msra.mxu0 0.0
    %3755 = vmatprep.mubr.f32.mxu0 0.0
    %3756 = vmatmul.mubr.f32.gmra.mrb[0].mxu0 %v3689
    %v3757 = vpop.f32.mrb[0].mxu0
    %v3758 = vadd.f32 %v96, %v3757
    %v3759 = vpop.f32.mrb[0].mxu0
    %v3760 = vadd.f32 %v100, %v3759
    %3761 = vdwg.mxu0
    %3762 = vmatprep.subr.mxu0 0.0
    %3763 = vmatpush1.msra.mxu0 %v491
    %3764 = vmatprep.subr.mxu0 0.0
    %3765 = vmatpush1.msra.mxu0 %v494
    %3766 = vmatprep.subr.mxu0 0.0
    %3767 = vmatpush1.msra.mxu0 %v497
    %3768 = vmatprep.subr.mxu0 0.0
    %3769 = vmatpush1.msra.mxu0 %v500
    %3770 = vmatprep.subr.mxu0 0.0
    %3771 = vmatpush1.msra.mxu0 %v503
    %3772 = vmatprep.subr.mxu0 0.0
    %3773 = vmatpush1.msra.mxu0 %v506
    %3774 = vmatprep.subr.mxu0 0.0
    %3775 = vmatpush1.msra.mxu0 0.0
    %3776 = vmatprep.subr.mxu0 0.0
    %3777 = vmatpush1.msra.mxu0 0.0
    %3778 = vmatprep.subr.mxu0 0.0
    %3779 = vmatpush1.msra.mxu0 0.0
    %3780 = vmatprep.subr.mxu0 0.0
    %3781 = vmatpush1.msra.mxu0 0.0
    %3782 = vmatprep.subr.mxu0 0.0
    %3783 = vmatpush1.msra.mxu0 0.0
    %3784 = vmatprep.subr.mxu0 0.0
    %3785 = vmatpush1.msra.mxu0 0.0
    %3786 = vmatprep.subr.mxu0 0.0
    %3787 = vmatpush1.msra.mxu0 0.0
    %3788 = vmatprep.subr.mxu0 0.0
    %3789 = vmatpush1.msra.mxu0 0.0
    %3790 = vmatprep.subr.mxu0 0.0
    %3791 = vmatpush1.msra.mxu0 0.0
    %3792 = vmatprep.subr.mxu0 0.0
    %3793 = vmatpush1.msra.mxu0 0.0
    %3794 = vmatprep.subr.mxu0 0.0
    %3795 = vmatpush1.msra.mxu0 0.0
    %3796 = vmatprep.subr.mxu0 0.0
    %3797 = vmatpush1.msra.mxu0 0.0
    %3798 = vmatprep.subr.mxu0 0.0
    %3799 = vmatpush1.msra.mxu0 0.0
    %3800 = vmatprep.subr.mxu0 0.0
    %3801 = vmatpush1.msra.mxu0 0.0
    %3802 = vmatprep.subr.mxu0 0.0
    %3803 = vmatpush1.msra.mxu0 0.0
    %3804 = vmatprep.subr.mxu0 0.0
    %3805 = vmatpush1.msra.mxu0 0.0
    %3806 = vmatprep.subr.mxu0 0.0
    %3807 = vmatpush1.msra.mxu0 0.0
    %3808 = vmatprep.subr.mxu0 0.0
    %3809 = vmatpush1.msra.mxu0 0.0
    %3810 = vmatprep.subr.mxu0 0.0
    %3811 = vmatpush1.msra.mxu0 0.0
    %3812 = vmatprep.subr.mxu0 0.0
    %3813 = vmatpush1.msra.mxu0 0.0
    %3814 = vmatprep.subr.mxu0 0.0
    %3815 = vmatpush1.msra.mxu0 0.0
    %3816 = vmatprep.subr.mxu0 0.0
    %3817 = vmatpush1.msra.mxu0 0.0
    %3818 = vmatprep.subr.mxu0 0.0
    %3819 = vmatpush1.msra.mxu0 0.0
    %3820 = vmatprep.subr.mxu0 0.0
    %3821 = vmatpush1.msra.mxu0 0.0
    %3822 = vmatprep.subr.mxu0 0.0
    %3823 = vmatpush1.msra.mxu0 0.0
    %3824 = vmatprep.subr.mxu0 0.0
    %3825 = vmatpush1.msra.mxu0 0.0
    %3826 = vmatprep.mubr.f32.mxu0 0.0
    %3827 = vmatmul.mubr.f32.gmra.mrb[0].mxu0 %v3689
    %v3828 = vpop.f32.mrb[0].mxu0
    %v3829 = vadd.f32 %v104, %v3828
    %v3830 = vpop.f32.mrb[0].mxu0
    %3831 = vdwg.mxu0
    %v3832 = vadd.f32 %v3614, %v3758
    %v3833 = vxor.u32 %v3832, 2147483648
    %v3834 = vmul.f32 %v3833, 1.442695
    %v3835 = vpow.pop %v3834
    %v3836 = vadd.f32 %v3835, 1.0
    %v3837 = vrcp.pop %v3836
    %v3838 = vmul.f32 1.0, %v3837
    %v3839 = vadd.f32 %v3616, %v3760
    %v3840 = vxor.u32 %v3839, 2147483648
    %v3841 = vmul.f32 %v3840, 1.442695
    %v3842 = vpow.pop %v3841
    %v3843 = vadd.f32 %v3842, 1.0
    %v3844 = vrcp.pop %v3843
    %v3845 = vmul.f32 1.0, %v3844
    %v3846 = vmul.f32 %v3838, %v3829
    %v3847 = vadd.f32 %v3685, %v3846
    %v3848 = vtanh.pop %v3847
    %v3849 = vsub.f32 1.0, %v3845
    %v3850 = vmul.f32 %v3849, %v3848
    %v3851 = vmul.f32 %v3845, %v3374
    %v3852 = vadd.f32 %v3850, %v3851
    %s3853 = scalar_lea.vmem [#allocation2], 42
    %v3854 = vld [vmem:[%s3853] sm:$0x3f]
    %3855 = vmatprep.subr.mxu0 %v454
    %3856 = vmatpush1.msra.mxu0 %v453
    %3857 = vmatprep.subr.mxu0 %v457
    %3858 = vmatpush1.msra.mxu0 %v456
    %3859 = vmatprep.subr.mxu0 %v460
    %3860 = vmatpush1.msra.mxu0 %v459
    %3861 = vmatprep.subr.mxu0 %v463
    %3862 = vmatpush1.msra.mxu0 %v462
    %3863 = vmatprep.subr.mxu0 %v466
    %3864 = vmatpush1.msra.mxu0 %v465
    %3865 = vmatprep.subr.mxu0 %v469
    %3866 = vmatpush1.msra.mxu0 %v468
    %3867 = vmatprep.subr.mxu0 0.0
    %3868 = vmatpush1.msra.mxu0 0.0
    %3869 = vmatprep.subr.mxu0 0.0
    %3870 = vmatpush1.msra.mxu0 0.0
    %3871 = vmatprep.subr.mxu0 0.0
    %3872 = vmatpush1.msra.mxu0 0.0
    %3873 = vmatprep.subr.mxu0 0.0
    %3874 = vmatpush1.msra.mxu0 0.0
    %3875 = vmatprep.subr.mxu0 0.0
    %3876 = vmatpush1.msra.mxu0 0.0
    %3877 = vmatprep.subr.mxu0 0.0
    %3878 = vmatpush1.msra.mxu0 0.0
    %3879 = vmatprep.subr.mxu0 0.0
    %3880 = vmatpush1.msra.mxu0 0.0
    %3881 = vmatprep.subr.mxu0 0.0
    %3882 = vmatpush1.msra.mxu0 0.0
    %3883 = vmatprep.subr.mxu0 0.0
    %3884 = vmatpush1.msra.mxu0 0.0
    %3885 = vmatprep.subr.mxu0 0.0
    %3886 = vmatpush1.msra.mxu0 0.0
    %3887 = vmatprep.subr.mxu0 0.0
    %3888 = vmatpush1.msra.mxu0 0.0
    %3889 = vmatprep.subr.mxu0 0.0
    %3890 = vmatpush1.msra.mxu0 0.0
    %3891 = vmatprep.subr.mxu0 0.0
    %3892 = vmatpush1.msra.mxu0 0.0
    %3893 = vmatprep.subr.mxu0 0.0
    %3894 = vmatpush1.msra.mxu0 0.0
    %3895 = vmatprep.subr.mxu0 0.0
    %3896 = vmatpush1.msra.mxu0 0.0
    %3897 = vmatprep.subr.mxu0 0.0
    %3898 = vmatpush1.msra.mxu0 0.0
    %3899 = vmatprep.subr.mxu0 0.0
    %3900 = vmatpush1.msra.mxu0 0.0
    %3901 = vmatprep.subr.mxu0 0.0
    %3902 = vmatpush1.msra.mxu0 0.0
    %3903 = vmatprep.subr.mxu0 0.0
    %3904 = vmatpush1.msra.mxu0 0.0
    %3905 = vmatprep.subr.mxu0 0.0
    %3906 = vmatpush1.msra.mxu0 0.0
    %3907 = vmatprep.subr.mxu0 0.0
    %3908 = vmatpush1.msra.mxu0 0.0
    %3909 = vmatprep.subr.mxu0 0.0
    %3910 = vmatpush1.msra.mxu0 0.0
    %3911 = vmatprep.subr.mxu0 0.0
    %3912 = vmatpush1.msra.mxu0 0.0
    %3913 = vmatprep.subr.mxu0 0.0
    %3914 = vmatpush1.msra.mxu0 0.0
    %3915 = vmatprep.subr.mxu0 0.0
    %3916 = vmatpush1.msra.mxu0 0.0
    %3917 = vmatprep.subr.mxu0 0.0
    %3918 = vmatpush1.msra.mxu0 0.0
    %3919 = vmatprep.mubr.f32.mxu0 0.0
    %3920 = vmatmul.mubr.f32.gmra.mrb[0].mxu0 %v3545
    %v3921 = vpop.f32.mrb[0].mxu0
    %v3922 = vadd.f32 %v60, %v3921
    %v3923 = vpop.f32.mrb[0].mxu0
    %v3924 = vadd.f32 %v64, %v3923
    %3925 = vdwg.mxu0
    %3926 = vmatprep.subr.mxu0 0.0
    %3927 = vmatpush1.msra.mxu0 %v455
    %3928 = vmatprep.subr.mxu0 0.0
    %3929 = vmatpush1.msra.mxu0 %v458
    %3930 = vmatprep.subr.mxu0 0.0
    %3931 = vmatpush1.msra.mxu0 %v461
    %3932 = vmatprep.subr.mxu0 0.0
    %3933 = vmatpush1.msra.mxu0 %v464
    %3934 = vmatprep.subr.mxu0 0.0
    %3935 = vmatpush1.msra.mxu0 %v467
    %3936 = vmatprep.subr.mxu0 0.0
    %3937 = vmatpush1.msra.mxu0 %v470
    %3938 = vmatprep.subr.mxu0 0.0
    %3939 = vmatpush1.msra.mxu0 0.0
    %3940 = vmatprep.subr.mxu0 0.0
    %3941 = vmatpush1.msra.mxu0 0.0
    %3942 = vmatprep.subr.mxu0 0.0
    %3943 = vmatpush1.msra.mxu0 0.0
    %3944 = vmatprep.subr.mxu0 0.0
    %3945 = vmatpush1.msra.mxu0 0.0
    %3946 = vmatprep.subr.mxu0 0.0
    %3947 = vmatpush1.msra.mxu0 0.0
    %3948 = vmatprep.subr.mxu0 0.0
    %3949 = vmatpush1.msra.mxu0 0.0
    %3950 = vmatprep.subr.mxu0 0.0
    %3951 = vmatpush1.msra.mxu0 0.0
    %3952 = vmatprep.subr.mxu0 0.0
    %3953 = vmatpush1.msra.mxu0 0.0
    %3954 = vmatprep.subr.mxu0 0.0
    %3955 = vmatpush1.msra.mxu0 0.0
    %3956 = vmatprep.subr.mxu0 0.0
    %3957 = vmatpush1.msra.mxu0 0.0
    %3958 = vmatprep.subr.mxu0 0.0
    %3959 = vmatpush1.msra.mxu0 0.0
    %3960 = vmatprep.subr.mxu0 0.0
    %3961 = vmatpush1.msra.mxu0 0.0
    %3962 = vmatprep.subr.mxu0 0.0
    %3963 = vmatpush1.msra.mxu0 0.0
    %3964 = vmatprep.subr.mxu0 0.0
    %3965 = vmatpush1.msra.mxu0 0.0
    %3966 = vmatprep.subr.mxu0 0.0
    %3967 = vmatpush1.msra.mxu0 0.0
    %3968 = vmatprep.subr.mxu0 0.0
    %3969 = vmatpush1.msra.mxu0 0.0
    %3970 = vmatprep.subr.mxu0 0.0
    %3971 = vmatpush1.msra.mxu0 0.0
    %3972 = vmatprep.subr.mxu0 0.0
    %3973 = vmatpush1.msra.mxu0 0.0
    %3974 = vmatprep.subr.mxu0 0.0
    %3975 = vmatpush1.msra.mxu0 0.0
    %3976 = vmatprep.subr.mxu0 0.0
    %3977 = vmatpush1.msra.mxu0 0.0
    %3978 = vmatprep.subr.mxu0 0.0
    %3979 = vmatpush1.msra.mxu0 0.0
    %3980 = vmatprep.subr.mxu0 0.0
    %3981 = vmatpush1.msra.mxu0 0.0
    %3982 = vmatprep.subr.mxu0 0.0
    %3983 = vmatpush1.msra.mxu0 0.0
    %3984 = vmatprep.subr.mxu0 0.0
    %3985 = vmatpush1.msra.mxu0 0.0
    %3986 = vmatprep.subr.mxu0 0.0
    %3987 = vmatpush1.msra.mxu0 0.0
    %3988 = vmatprep.subr.mxu0 0.0
    %3989 = vmatpush1.msra.mxu0 0.0
    %3990 = vmatprep.mubr.f32.mxu0 0.0
    %3991 = vmatmul.mubr.f32.gmra.mrb[0].mxu0 %v3545
    %v3992 = vpop.f32.mrb[0].mxu0
    %v3993 = vadd.f32 %v68, %v3992
    %v3994 = vpop.f32.mrb[0].mxu0
    %3995 = vdwg.mxu0
    %v3996 = vadd.f32 %v3854, %v3922
    %v3997 = vxor.u32 %v3996, 2147483648
    %v3998 = vmul.f32 %v3997, 1.442695
    %v3999 = vpow.pop %v3998
    %v4000 = vadd.f32 %v3999, 1.0
    %v4001 = vrcp.pop %v4000
    %v4002 = vmul.f32 1.0, %v4001
    %v4004 = vrot.slane %v3854, 2
    %v4006 = vadd.f32 %v4004, %v3924
    %v4007 = vxor.u32 %v4006, 2147483648
    %v4008 = vmul.f32 %v4007, 1.442695
    %v4009 = vpow.pop %v4008
    %v4010 = vadd.f32 %v4009, 1.0
    %v4011 = vrcp.pop %v4010
    %v4012 = vmul.f32 1.0, %v4011
    %v4013 = vmul.f32 %v4002, %v3993
    %v4014 = vrot.slane %v3854, 4
    %v4016 = vadd.f32 %v4014, %v4013
    %v4017 = vtanh.pop %v4016
    %v4018 = vsub.f32 1.0, %v4012
    %v4019 = vmul.f32 %v4018, %v4017
    %v4020 = vmul.f32 %v4012, %v3543
    %v4021 = vadd.f32 %v4019, %v4020
    %v4023 = vsel %vm508, %v4021, 0
    %4025 = vmatprep.subr.mxu0 %v472
    %4026 = vmatpush1.msra.mxu0 %v471
    %4027 = vmatprep.subr.mxu0 %v475
    %4028 = vmatpush1.msra.mxu0 %v474
    %4029 = vmatprep.subr.mxu0 %v478
    %4030 = vmatpush1.msra.mxu0 %v477
    %4031 = vmatprep.subr.mxu0 %v481
    %4032 = vmatpush1.msra.mxu0 %v480
    %4033 = vmatprep.subr.mxu0 %v484
    %4034 = vmatpush1.msra.mxu0 %v483
    %4035 = vmatprep.subr.mxu0 %v487
    %4036 = vmatpush1.msra.mxu0 %v486
    %4037 = vmatprep.subr.mxu0 0.0
    %4038 = vmatpush1.msra.mxu0 0.0
    %4039 = vmatprep.subr.mxu0 0.0
    %4040 = vmatpush1.msra.mxu0 0.0
    %4041 = vmatprep.subr.mxu0 0.0
    %4042 = vmatpush1.msra.mxu0 0.0
    %4043 = vmatprep.subr.mxu0 0.0
    %4044 = vmatpush1.msra.mxu0 0.0
    %4045 = vmatprep.subr.mxu0 0.0
    %4046 = vmatpush1.msra.mxu0 0.0
    %4047 = vmatprep.subr.mxu0 0.0
    %4048 = vmatpush1.msra.mxu0 0.0
    %4049 = vmatprep.subr.mxu0 0.0
    %4050 = vmatpush1.msra.mxu0 0.0
    %4051 = vmatprep.subr.mxu0 0.0
    %4052 = vmatpush1.msra.mxu0 0.0
    %4053 = vmatprep.subr.mxu0 0.0
    %4054 = vmatpush1.msra.mxu0 0.0
    %4055 = vmatprep.subr.mxu0 0.0
    %4056 = vmatpush1.msra.mxu0 0.0
    %4057 = vmatprep.subr.mxu0 0.0
    %4058 = vmatpush1.msra.mxu0 0.0
    %4059 = vmatprep.subr.mxu0 0.0
    %4060 = vmatpush1.msra.mxu0 0.0
    %4061 = vmatprep.subr.mxu0 0.0
    %4062 = vmatpush1.msra.mxu0 0.0
    %4063 = vmatprep.subr.mxu0 0.0
    %4064 = vmatpush1.msra.mxu0 0.0
    %4065 = vmatprep.subr.mxu0 0.0
    %4066 = vmatpush1.msra.mxu0 0.0
    %4067 = vmatprep.subr.mxu0 0.0
    %4068 = vmatpush1.msra.mxu0 0.0
    %4069 = vmatprep.subr.mxu0 0.0
    %4070 = vmatpush1.msra.mxu0 0.0
    %4071 = vmatprep.subr.mxu0 0.0
    %4072 = vmatpush1.msra.mxu0 0.0
    %4073 = vmatprep.subr.mxu0 0.0
    %4074 = vmatpush1.msra.mxu0 0.0
    %4075 = vmatprep.subr.mxu0 0.0
    %4076 = vmatpush1.msra.mxu0 0.0
    %4077 = vmatprep.subr.mxu0 0.0
    %4078 = vmatpush1.msra.mxu0 0.0
    %4079 = vmatprep.subr.mxu0 0.0
    %4080 = vmatpush1.msra.mxu0 0.0
    %4081 = vmatprep.subr.mxu0 0.0
    %4082 = vmatpush1.msra.mxu0 0.0
    %4083 = vmatprep.subr.mxu0 0.0
    %4084 = vmatpush1.msra.mxu0 0.0
    %4085 = vmatprep.subr.mxu0 0.0
    %4086 = vmatpush1.msra.mxu0 0.0
    %4087 = vmatprep.subr.mxu0 0.0
    %4088 = vmatpush1.msra.mxu0 0.0
    %4089 = vmatprep.mubr.f32.mxu0 0.0
    %4090 = vmatmul.mubr.f32.gmra.mrb[0].mxu0 %v4023
    %v4091 = vpop.f32.mrb[0].mxu0
    %v4092 = vadd.f32 %v78, %v4091
    %v4093 = vpop.f32.mrb[0].mxu0
    %v4094 = vadd.f32 %v82, %v4093
    %4095 = vdwg.mxu0
    %4096 = vmatprep.subr.mxu0 0.0
    %4097 = vmatpush1.msra.mxu0 %v473
    %4098 = vmatprep.subr.mxu0 0.0
    %4099 = vmatpush1.msra.mxu0 %v476
    %4100 = vmatprep.subr.mxu0 0.0
    %4101 = vmatpush1.msra.mxu0 %v479
    %4102 = vmatprep.subr.mxu0 0.0
    %4103 = vmatpush1.msra.mxu0 %v482
    %4104 = vmatprep.subr.mxu0 0.0
    %4105 = vmatpush1.msra.mxu0 %v485
    %4106 = vmatprep.subr.mxu0 0.0
    %4107 = vmatpush1.msra.mxu0 %v488
    %4108 = vmatprep.subr.mxu0 0.0
    %4109 = vmatpush1.msra.mxu0 0.0
    %4110 = vmatprep.subr.mxu0 0.0
    %4111 = vmatpush1.msra.mxu0 0.0
    %4112 = vmatprep.subr.mxu0 0.0
    %4113 = vmatpush1.msra.mxu0 0.0
    %4114 = vmatprep.subr.mxu0 0.0
    %4115 = vmatpush1.msra.mxu0 0.0
    %4116 = vmatprep.subr.mxu0 0.0
    %4117 = vmatpush1.msra.mxu0 0.0
    %4118 = vmatprep.subr.mxu0 0.0
    %4119 = vmatpush1.msra.mxu0 0.0
    %4120 = vmatprep.subr.mxu0 0.0
    %4121 = vmatpush1.msra.mxu0 0.0
    %4122 = vmatprep.subr.mxu0 0.0
    %4123 = vmatpush1.msra.mxu0 0.0
    %4124 = vmatprep.subr.mxu0 0.0
    %4125 = vmatpush1.msra.mxu0 0.0
    %4126 = vmatprep.subr.mxu0 0.0
    %4127 = vmatpush1.msra.mxu0 0.0
    %4128 = vmatprep.subr.mxu0 0.0
    %4129 = vmatpush1.msra.mxu0 0.0
    %4130 = vmatprep.subr.mxu0 0.0
    %4131 = vmatpush1.msra.mxu0 0.0
    %4132 = vmatprep.subr.mxu0 0.0
    %4133 = vmatpush1.msra.mxu0 0.0
    %4134 = vmatprep.subr.mxu0 0.0
    %4135 = vmatpush1.msra.mxu0 0.0
    %4136 = vmatprep.subr.mxu0 0.0
    %4137 = vmatpush1.msra.mxu0 0.0
    %4138 = vmatprep.subr.mxu0 0.0
    %4139 = vmatpush1.msra.mxu0 0.0
    %4140 = vmatprep.subr.mxu0 0.0
    %4141 = vmatpush1.msra.mxu0 0.0
    %4142 = vmatprep.subr.mxu0 0.0
    %4143 = vmatpush1.msra.mxu0 0.0
    %4144 = vmatprep.subr.mxu0 0.0
    %4145 = vmatpush1.msra.mxu0 0.0
    %4146 = vmatprep.subr.mxu0 0.0
    %4147 = vmatpush1.msra.mxu0 0.0
    %4148 = vmatprep.subr.mxu0 0.0
    %4149 = vmatpush1.msra.mxu0 0.0
    %4150 = vmatprep.subr.mxu0 0.0
    %4151 = vmatpush1.msra.mxu0 0.0
    %4152 = vmatprep.subr.mxu0 0.0
    %4153 = vmatpush1.msra.mxu0 0.0
    %4154 = vmatprep.subr.mxu0 0.0
    %4155 = vmatpush1.msra.mxu0 0.0
    %4156 = vmatprep.subr.mxu0 0.0
    %4157 = vmatpush1.msra.mxu0 0.0
    %4158 = vmatprep.subr.mxu0 0.0
    %4159 = vmatpush1.msra.mxu0 0.0
    %4160 = vmatprep.mubr.f32.mxu0 0.0
    %4161 = vmatmul.mubr.f32.gmra.mrb[0].mxu0 %v4023
    %v4162 = vpop.f32.mrb[0].mxu0
    %v4163 = vadd.f32 %v86, %v4162
    %v4164 = vpop.f32.mrb[0].mxu0
    %4165 = vdwg.mxu0
    %v4167 = vsel %vm508, %v3852, 0
    %4169 = vmatprep.subr.mxu0 %v490
    %4170 = vmatpush1.msra.mxu0 %v489
    %4171 = vmatprep.subr.mxu0 %v493
    %4172 = vmatpush1.msra.mxu0 %v492
    %4173 = vmatprep.subr.mxu0 %v496
    %4174 = vmatpush1.msra.mxu0 %v495
    %4175 = vmatprep.subr.mxu0 %v499
    %4176 = vmatpush1.msra.mxu0 %v498
    %4177 = vmatprep.subr.mxu0 %v502
    %4178 = vmatpush1.msra.mxu0 %v501
    %4179 = vmatprep.subr.mxu0 %v505
    %4180 = vmatpush1.msra.mxu0 %v504
    %4181 = vmatprep.subr.mxu0 0.0
    %4182 = vmatpush1.msra.mxu0 0.0
    %4183 = vmatprep.subr.mxu0 0.0
    %4184 = vmatpush1.msra.mxu0 0.0
    %4185 = vmatprep.subr.mxu0 0.0
    %4186 = vmatpush1.msra.mxu0 0.0
    %4187 = vmatprep.subr.mxu0 0.0
    %4188 = vmatpush1.msra.mxu0 0.0
    %4189 = vmatprep.subr.mxu0 0.0
    %4190 = vmatpush1.msra.mxu0 0.0
    %4191 = vmatprep.subr.mxu0 0.0
    %4192 = vmatpush1.msra.mxu0 0.0
    %4193 = vmatprep.subr.mxu0 0.0
    %4194 = vmatpush1.msra.mxu0 0.0
    %4195 = vmatprep.subr.mxu0 0.0
    %4196 = vmatpush1.msra.mxu0 0.0
    %4197 = vmatprep.subr.mxu0 0.0
    %4198 = vmatpush1.msra.mxu0 0.0
    %4199 = vmatprep.subr.mxu0 0.0
    %4200 = vmatpush1.msra.mxu0 0.0
    %4201 = vmatprep.subr.mxu0 0.0
    %4202 = vmatpush1.msra.mxu0 0.0
    %4203 = vmatprep.subr.mxu0 0.0
    %4204 = vmatpush1.msra.mxu0 0.0
    %4205 = vmatprep.subr.mxu0 0.0
    %4206 = vmatpush1.msra.mxu0 0.0
    %4207 = vmatprep.subr.mxu0 0.0
    %4208 = vmatpush1.msra.mxu0 0.0
    %4209 = vmatprep.subr.mxu0 0.0
    %4210 = vmatpush1.msra.mxu0 0.0
    %4211 = vmatprep.subr.mxu0 0.0
    %4212 = vmatpush1.msra.mxu0 0.0
    %4213 = vmatprep.subr.mxu0 0.0
    %4214 = vmatpush1.msra.mxu0 0.0
    %4215 = vmatprep.subr.mxu0 0.0
    %4216 = vmatpush1.msra.mxu0 0.0
    %4217 = vmatprep.subr.mxu0 0.0
    %4218 = vmatpush1.msra.mxu0 0.0
    %4219 = vmatprep.subr.mxu0 0.0
    %4220 = vmatpush1.msra.mxu0 0.0
    %4221 = vmatprep.subr.mxu0 0.0
    %4222 = vmatpush1.msra.mxu0 0.0
    %4223 = vmatprep.subr.mxu0 0.0
    %4224 = vmatpush1.msra.mxu0 0.0
    %4225 = vmatprep.subr.mxu0 0.0
    %4226 = vmatpush1.msra.mxu0 0.0
    %4227 = vmatprep.subr.mxu0 0.0
    %4228 = vmatpush1.msra.mxu0 0.0
    %4229 = vmatprep.subr.mxu0 0.0
    %4230 = vmatpush1.msra.mxu0 0.0
    %4231 = vmatprep.subr.mxu0 0.0
    %4232 = vmatpush1.msra.mxu0 0.0
    %4233 = vmatprep.mubr.f32.mxu0 0.0
    %4234 = vmatmul.mubr.f32.gmra.mrb[0].mxu0 %v4167
    %v4235 = vpop.f32.mrb[0].mxu0
    %v4236 = vadd.f32 %v96, %v4235
    %v4237 = vpop.f32.mrb[0].mxu0
    %v4238 = vadd.f32 %v100, %v4237
    %4239 = vdwg.mxu0
    %4240 = vmatprep.subr.mxu0 0.0
    %4241 = vmatpush1.msra.mxu0 %v491
    %4242 = vmatprep.subr.mxu0 0.0
    %4243 = vmatpush1.msra.mxu0 %v494
    %4244 = vmatprep.subr.mxu0 0.0
    %4245 = vmatpush1.msra.mxu0 %v497
    %4246 = vmatprep.subr.mxu0 0.0
    %4247 = vmatpush1.msra.mxu0 %v500
    %4248 = vmatprep.subr.mxu0 0.0
    %4249 = vmatpush1.msra.mxu0 %v503
    %4250 = vmatprep.subr.mxu0 0.0
    %4251 = vmatpush1.msra.mxu0 %v506
    %4252 = vmatprep.subr.mxu0 0.0
    %4253 = vmatpush1.msra.mxu0 0.0
    %4254 = vmatprep.subr.mxu0 0.0
    %4255 = vmatpush1.msra.mxu0 0.0
    %4256 = vmatprep.subr.mxu0 0.0
    %4257 = vmatpush1.msra.mxu0 0.0
    %4258 = vmatprep.subr.mxu0 0.0
    %4259 = vmatpush1.msra.mxu0 0.0
    %4260 = vmatprep.subr.mxu0 0.0
    %4261 = vmatpush1.msra.mxu0 0.0
    %4262 = vmatprep.subr.mxu0 0.0
    %4263 = vmatpush1.msra.mxu0 0.0
    %4264 = vmatprep.subr.mxu0 0.0
    %4265 = vmatpush1.msra.mxu0 0.0
    %4266 = vmatprep.subr.mxu0 0.0
    %4267 = vmatpush1.msra.mxu0 0.0
    %4268 = vmatprep.subr.mxu0 0.0
    %4269 = vmatpush1.msra.mxu0 0.0
    %4270 = vmatprep.subr.mxu0 0.0
    %4271 = vmatpush1.msra.mxu0 0.0
    %4272 = vmatprep.subr.mxu0 0.0
    %4273 = vmatpush1.msra.mxu0 0.0
    %4274 = vmatprep.subr.mxu0 0.0
    %4275 = vmatpush1.msra.mxu0 0.0
    %4276 = vmatprep.subr.mxu0 0.0
    %4277 = vmatpush1.msra.mxu0 0.0
    %4278 = vmatprep.subr.mxu0 0.0
    %4279 = vmatpush1.msra.mxu0 0.0
    %4280 = vmatprep.subr.mxu0 0.0
    %4281 = vmatpush1.msra.mxu0 0.0
    %4282 = vmatprep.subr.mxu0 0.0
    %4283 = vmatpush1.msra.mxu0 0.0
    %4284 = vmatprep.subr.mxu0 0.0
    %4285 = vmatpush1.msra.mxu0 0.0
    %4286 = vmatprep.subr.mxu0 0.0
    %4287 = vmatpush1.msra.mxu0 0.0
    %4288 = vmatprep.subr.mxu0 0.0
    %4289 = vmatpush1.msra.mxu0 0.0
    %4290 = vmatprep.subr.mxu0 0.0
    %4291 = vmatpush1.msra.mxu0 0.0
    %4292 = vmatprep.subr.mxu0 0.0
    %4293 = vmatpush1.msra.mxu0 0.0
    %4294 = vmatprep.subr.mxu0 0.0
    %4295 = vmatpush1.msra.mxu0 0.0
    %4296 = vmatprep.subr.mxu0 0.0
    %4297 = vmatpush1.msra.mxu0 0.0
    %4298 = vmatprep.subr.mxu0 0.0
    %4299 = vmatpush1.msra.mxu0 0.0
    %4300 = vmatprep.subr.mxu0 0.0
    %4301 = vmatpush1.msra.mxu0 0.0
    %4302 = vmatprep.subr.mxu0 0.0
    %4303 = vmatpush1.msra.mxu0 0.0
    %4304 = vmatprep.mubr.f32.mxu0 0.0
    %4305 = vmatmul.mubr.f32.gmra.mrb[0].mxu0 %v4167
    %v4306 = vpop.f32.mrb[0].mxu0
    %v4307 = vadd.f32 %v104, %v4306
    %v4308 = vpop.f32.mrb[0].mxu0
    %4309 = vdwg.mxu0
    %v4310 = vadd.f32 %v4092, %v4236
    %v4311 = vxor.u32 %v4310, 2147483648
    %v4312 = vmul.f32 %v4311, 1.442695
    %v4313 = vpow.pop %v4312
    %v4314 = vadd.f32 %v4313, 1.0
    %v4315 = vrcp.pop %v4314
    %v4316 = vmul.f32 1.0, %v4315
    %v4317 = vadd.f32 %v4094, %v4238
    %v4318 = vxor.u32 %v4317, 2147483648
    %v4319 = vmul.f32 %v4318, 1.442695
    %v4320 = vpow.pop %v4319
    %v4321 = vadd.f32 %v4320, 1.0
    %v4322 = vrcp.pop %v4321
    %v4323 = vmul.f32 1.0, %v4322
    %v4324 = vmul.f32 %v4316, %v4307
    %v4325 = vadd.f32 %v4163, %v4324
    %v4326 = vtanh.pop %v4325
    %v4327 = vsub.f32 1.0, %v4323
    %v4328 = vmul.f32 %v4327, %v4326
    %v4329 = vmul.f32 %v4323, %v3852
    %v4330 = vadd.f32 %v4328, %v4329
    %v4331 = vld [vmem:[%s448] sm:$0x3f]
    %4332 = vmatprep.subr.mxu0 %v454
    %4333 = vmatpush1.msra.mxu0 %v453
    %4334 = vmatprep.subr.mxu0 %v457
    %4335 = vmatpush1.msra.mxu0 %v456
    %4336 = vmatprep.subr.mxu0 %v460
    %4337 = vmatpush1.msra.mxu0 %v459
    %4338 = vmatprep.subr.mxu0 %v463
    %4339 = vmatpush1.msra.mxu0 %v462
    %4340 = vmatprep.subr.mxu0 %v466
    %4341 = vmatpush1.msra.mxu0 %v465
    %4342 = vmatprep.subr.mxu0 %v469
    %4343 = vmatpush1.msra.mxu0 %v468
    %4344 = vmatprep.subr.mxu0 0.0
    %4345 = vmatpush1.msra.mxu0 0.0
    %4346 = vmatprep.subr.mxu0 0.0
    %4347 = vmatpush1.msra.mxu0 0.0
    %4348 = vmatprep.subr.mxu0 0.0
    %4349 = vmatpush1.msra.mxu0 0.0
    %4350 = vmatprep.subr.mxu0 0.0
    %4351 = vmatpush1.msra.mxu0 0.0
    %4352 = vmatprep.subr.mxu0 0.0
    %4353 = vmatpush1.msra.mxu0 0.0
    %4354 = vmatprep.subr.mxu0 0.0
    %4355 = vmatpush1.msra.mxu0 0.0
    %4356 = vmatprep.subr.mxu0 0.0
    %4357 = vmatpush1.msra.mxu0 0.0
    %4358 = vmatprep.subr.mxu0 0.0
    %4359 = vmatpush1.msra.mxu0 0.0
    %4360 = vmatprep.subr.mxu0 0.0
    %4361 = vmatpush1.msra.mxu0 0.0
    %4362 = vmatprep.subr.mxu0 0.0
    %4363 = vmatpush1.msra.mxu0 0.0
    %4364 = vmatprep.subr.mxu0 0.0
    %4365 = vmatpush1.msra.mxu0 0.0
    %4366 = vmatprep.subr.mxu0 0.0
    %4367 = vmatpush1.msra.mxu0 0.0
    %4368 = vmatprep.subr.mxu0 0.0
    %4369 = vmatpush1.msra.mxu0 0.0
    %4370 = vmatprep.subr.mxu0 0.0
    %4371 = vmatpush1.msra.mxu0 0.0
    %4372 = vmatprep.subr.mxu0 0.0
    %4373 = vmatpush1.msra.mxu0 0.0
    %4374 = vmatprep.subr.mxu0 0.0
    %4375 = vmatpush1.msra.mxu0 0.0
    %4376 = vmatprep.subr.mxu0 0.0
    %4377 = vmatpush1.msra.mxu0 0.0
    %4378 = vmatprep.subr.mxu0 0.0
    %4379 = vmatpush1.msra.mxu0 0.0
    %4380 = vmatprep.subr.mxu0 0.0
    %4381 = vmatpush1.msra.mxu0 0.0
    %4382 = vmatprep.subr.mxu0 0.0
    %4383 = vmatpush1.msra.mxu0 0.0
    %4384 = vmatprep.subr.mxu0 0.0
    %4385 = vmatpush1.msra.mxu0 0.0
    %4386 = vmatprep.subr.mxu0 0.0
    %4387 = vmatpush1.msra.mxu0 0.0
    %4388 = vmatprep.subr.mxu0 0.0
    %4389 = vmatpush1.msra.mxu0 0.0
    %4390 = vmatprep.subr.mxu0 0.0
    %4391 = vmatpush1.msra.mxu0 0.0
    %4392 = vmatprep.subr.mxu0 0.0
    %4393 = vmatpush1.msra.mxu0 0.0
    %4394 = vmatprep.subr.mxu0 0.0
    %4395 = vmatpush1.msra.mxu0 0.0
    %4396 = vmatprep.mubr.f32.mxu0 0.0
    %4397 = vmatmul.mubr.f32.gmra.mrb[0].mxu0 %v4023
    %v4398 = vpop.f32.mrb[0].mxu0
    %v4399 = vadd.f32 %v60, %v4398
    %v4400 = vpop.f32.mrb[0].mxu0
    %v4401 = vadd.f32 %v64, %v4400
    %4402 = vdwg.mxu0
    %4403 = vmatprep.subr.mxu0 0.0
    %4404 = vmatpush1.msra.mxu0 %v455
    %4405 = vmatprep.subr.mxu0 0.0
    %4406 = vmatpush1.msra.mxu0 %v458
    %4407 = vmatprep.subr.mxu0 0.0
    %4408 = vmatpush1.msra.mxu0 %v461
    %4409 = vmatprep.subr.mxu0 0.0
    %4410 = vmatpush1.msra.mxu0 %v464
    %4411 = vmatprep.subr.mxu0 0.0
    %4412 = vmatpush1.msra.mxu0 %v467
    %4413 = vmatprep.subr.mxu0 0.0
    %4414 = vmatpush1.msra.mxu0 %v470
    %4415 = vmatprep.subr.mxu0 0.0
    %4416 = vmatpush1.msra.mxu0 0.0
    %4417 = vmatprep.subr.mxu0 0.0
    %4418 = vmatpush1.msra.mxu0 0.0
    %4419 = vmatprep.subr.mxu0 0.0
    %4420 = vmatpush1.msra.mxu0 0.0
    %4421 = vmatprep.subr.mxu0 0.0
    %4422 = vmatpush1.msra.mxu0 0.0
    %4423 = vmatprep.subr.mxu0 0.0
    %4424 = vmatpush1.msra.mxu0 0.0
    %4425 = vmatprep.subr.mxu0 0.0
    %4426 = vmatpush1.msra.mxu0 0.0
    %4427 = vmatprep.subr.mxu0 0.0
    %4428 = vmatpush1.msra.mxu0 0.0
    %4429 = vmatprep.subr.mxu0 0.0
    %4430 = vmatpush1.msra.mxu0 0.0
    %4431 = vmatprep.subr.mxu0 0.0
    %4432 = vmatpush1.msra.mxu0 0.0
    %4433 = vmatprep.subr.mxu0 0.0
    %4434 = vmatpush1.msra.mxu0 0.0
    %4435 = vmatprep.subr.mxu0 0.0
    %4436 = vmatpush1.msra.mxu0 0.0
    %4437 = vmatprep.subr.mxu0 0.0
    %4438 = vmatpush1.msra.mxu0 0.0
    %4439 = vmatprep.subr.mxu0 0.0
    %4440 = vmatpush1.msra.mxu0 0.0
    %4441 = vmatprep.subr.mxu0 0.0
    %4442 = vmatpush1.msra.mxu0 0.0
    %4443 = vmatprep.subr.mxu0 0.0
    %4444 = vmatpush1.msra.mxu0 0.0
    %4445 = vmatprep.subr.mxu0 0.0
    %4446 = vmatpush1.msra.mxu0 0.0
    %4447 = vmatprep.subr.mxu0 0.0
    %4448 = vmatpush1.msra.mxu0 0.0
    %4449 = vmatprep.subr.mxu0 0.0
    %4450 = vmatpush1.msra.mxu0 0.0
    %4451 = vmatprep.subr.mxu0 0.0
    %4452 = vmatpush1.msra.mxu0 0.0
    %4453 = vmatprep.subr.mxu0 0.0
    %4454 = vmatpush1.msra.mxu0 0.0
    %4455 = vmatprep.subr.mxu0 0.0
    %4456 = vmatpush1.msra.mxu0 0.0
    %4457 = vmatprep.subr.mxu0 0.0
    %4458 = vmatpush1.msra.mxu0 0.0
    %4459 = vmatprep.subr.mxu0 0.0
    %4460 = vmatpush1.msra.mxu0 0.0
    %4461 = vmatprep.subr.mxu0 0.0
    %4462 = vmatpush1.msra.mxu0 0.0
    %4463 = vmatprep.subr.mxu0 0.0
    %4464 = vmatpush1.msra.mxu0 0.0
    %4465 = vmatprep.subr.mxu0 0.0
    %4466 = vmatpush1.msra.mxu0 0.0
    %4467 = vmatprep.mubr.f32.mxu0 0.0
    %4468 = vmatmul.mubr.f32.gmra.mrb[0].mxu0 %v4023
    %v4469 = vpop.f32.mrb[0].mxu0
    %v4470 = vadd.f32 %v68, %v4469
    %v4471 = vpop.f32.mrb[0].mxu0
    %4472 = vdwg.mxu0
    %v4473 = vadd.f32 %v4331, %v4399
    %v4474 = vxor.u32 %v4473, 2147483648
    %v4475 = vmul.f32 %v4474, 1.442695
    %v4476 = vpow.pop %v4475
    %v4477 = vadd.f32 %v4476, 1.0
    %v4478 = vrcp.pop %v4477
    %v4479 = vmul.f32 1.0, %v4478
    %v4481 = vrot.slane %v4331, 2
    %v4483 = vadd.f32 %v4481, %v4401
    %v4484 = vxor.u32 %v4483, 2147483648
    %v4485 = vmul.f32 %v4484, 1.442695
    %v4486 = vpow.pop %v4485
    %v4487 = vadd.f32 %v4486, 1.0
    %v4488 = vrcp.pop %v4487
    %v4489 = vmul.f32 1.0, %v4488
    %v4490 = vmul.f32 %v4479, %v4470
    %v4491 = vrot.slane %v4331, 4
    %v4493 = vadd.f32 %v4491, %v4490
    %v4494 = vtanh.pop %v4493
    %v4495 = vsub.f32 1.0, %v4489
    %v4496 = vmul.f32 %v4495, %v4494
    %v4497 = vmul.f32 %v4489, %v4021
    %v4498 = vadd.f32 %v4496, %v4497
    %v4500 = vsel %vm508, %v4498, 0
    %4502 = vmatprep.subr.mxu0 %v472
    %4503 = vmatpush1.msra.mxu0 %v471
    %4504 = vmatprep.subr.mxu0 %v475
    %4505 = vmatpush1.msra.mxu0 %v474
    %4506 = vmatprep.subr.mxu0 %v478
    %4507 = vmatpush1.msra.mxu0 %v477
    %4508 = vmatprep.subr.mxu0 %v481
    %4509 = vmatpush1.msra.mxu0 %v480
    %4510 = vmatprep.subr.mxu0 %v484
    %4511 = vmatpush1.msra.mxu0 %v483
    %4512 = vmatprep.subr.mxu0 %v487
    %4513 = vmatpush1.msra.mxu0 %v486
    %4514 = vmatprep.subr.mxu0 0.0
    %4515 = vmatpush1.msra.mxu0 0.0
    %4516 = vmatprep.subr.mxu0 0.0
    %4517 = vmatpush1.msra.mxu0 0.0
    %4518 = vmatprep.subr.mxu0 0.0
    %4519 = vmatpush1.msra.mxu0 0.0
    %4520 = vmatprep.subr.mxu0 0.0
    %4521 = vmatpush1.msra.mxu0 0.0
    %4522 = vmatprep.subr.mxu0 0.0
    %4523 = vmatpush1.msra.mxu0 0.0
    %4524 = vmatprep.subr.mxu0 0.0
    %4525 = vmatpush1.msra.mxu0 0.0
    %4526 = vmatprep.subr.mxu0 0.0
    %4527 = vmatpush1.msra.mxu0 0.0
    %4528 = vmatprep.subr.mxu0 0.0
    %4529 = vmatpush1.msra.mxu0 0.0
    %4530 = vmatprep.subr.mxu0 0.0
    %4531 = vmatpush1.msra.mxu0 0.0
    %4532 = vmatprep.subr.mxu0 0.0
    %4533 = vmatpush1.msra.mxu0 0.0
    %4534 = vmatprep.subr.mxu0 0.0
    %4535 = vmatpush1.msra.mxu0 0.0
    %4536 = vmatprep.subr.mxu0 0.0
    %4537 = vmatpush1.msra.mxu0 0.0
    %4538 = vmatprep.subr.mxu0 0.0
    %4539 = vmatpush1.msra.mxu0 0.0
    %4540 = vmatprep.subr.mxu0 0.0
    %4541 = vmatpush1.msra.mxu0 0.0
    %4542 = vmatprep.subr.mxu0 0.0
    %4543 = vmatpush1.msra.mxu0 0.0
    %4544 = vmatprep.subr.mxu0 0.0
    %4545 = vmatpush1.msra.mxu0 0.0
    %4546 = vmatprep.subr.mxu0 0.0
    %4547 = vmatpush1.msra.mxu0 0.0
    %4548 = vmatprep.subr.mxu0 0.0
    %4549 = vmatpush1.msra.mxu0 0.0
    %4550 = vmatprep.subr.mxu0 0.0
    %4551 = vmatpush1.msra.mxu0 0.0
    %4552 = vmatprep.subr.mxu0 0.0
    %4553 = vmatpush1.msra.mxu0 0.0
    %4554 = vmatprep.subr.mxu0 0.0
    %4555 = vmatpush1.msra.mxu0 0.0
    %4556 = vmatprep.subr.mxu0 0.0
    %4557 = vmatpush1.msra.mxu0 0.0
    %4558 = vmatprep.subr.mxu0 0.0
    %4559 = vmatpush1.msra.mxu0 0.0
    %4560 = vmatprep.subr.mxu0 0.0
    %4561 = vmatpush1.msra.mxu0 0.0
    %4562 = vmatprep.subr.mxu0 0.0
    %4563 = vmatpush1.msra.mxu0 0.0
    %4564 = vmatprep.subr.mxu0 0.0
    %4565 = vmatpush1.msra.mxu0 0.0
    %4566 = vmatprep.mubr.f32.mxu0 0.0
    %4567 = vmatmul.mubr.f32.gmra.mrb[0].mxu0 %v4500
    %v4568 = vpop.f32.mrb[0].mxu0
    %v4569 = vadd.f32 %v78, %v4568
    %v4570 = vpop.f32.mrb[0].mxu0
    %v4571 = vadd.f32 %v82, %v4570
    %4572 = vdwg.mxu0
    %4573 = vmatprep.subr.mxu0 0.0
    %4574 = vmatpush1.msra.mxu0 %v473
    %4575 = vmatprep.subr.mxu0 0.0
    %4576 = vmatpush1.msra.mxu0 %v476
    %4577 = vmatprep.subr.mxu0 0.0
    %4578 = vmatpush1.msra.mxu0 %v479
    %4579 = vmatprep.subr.mxu0 0.0
    %4580 = vmatpush1.msra.mxu0 %v482
    %4581 = vmatprep.subr.mxu0 0.0
    %4582 = vmatpush1.msra.mxu0 %v485
    %4583 = vmatprep.subr.mxu0 0.0
    %4584 = vmatpush1.msra.mxu0 %v488
    %4585 = vmatprep.subr.mxu0 0.0
    %4586 = vmatpush1.msra.mxu0 0.0
    %4587 = vmatprep.subr.mxu0 0.0
    %4588 = vmatpush1.msra.mxu0 0.0
    %4589 = vmatprep.subr.mxu0 0.0
    %4590 = vmatpush1.msra.mxu0 0.0
    %4591 = vmatprep.subr.mxu0 0.0
    %4592 = vmatpush1.msra.mxu0 0.0
    %4593 = vmatprep.subr.mxu0 0.0
    %4594 = vmatpush1.msra.mxu0 0.0
    %4595 = vmatprep.subr.mxu0 0.0
    %4596 = vmatpush1.msra.mxu0 0.0
    %4597 = vmatprep.subr.mxu0 0.0
    %4598 = vmatpush1.msra.mxu0 0.0
    %4599 = vmatprep.subr.mxu0 0.0
    %4600 = vmatpush1.msra.mxu0 0.0
    %4601 = vmatprep.subr.mxu0 0.0
    %4602 = vmatpush1.msra.mxu0 0.0
    %4603 = vmatprep.subr.mxu0 0.0
    %4604 = vmatpush1.msra.mxu0 0.0
    %4605 = vmatprep.subr.mxu0 0.0
    %4606 = vmatpush1.msra.mxu0 0.0
    %4607 = vmatprep.subr.mxu0 0.0
    %4608 = vmatpush1.msra.mxu0 0.0
    %4609 = vmatprep.subr.mxu0 0.0
    %4610 = vmatpush1.msra.mxu0 0.0
    %4611 = vmatprep.subr.mxu0 0.0
    %4612 = vmatpush1.msra.mxu0 0.0
    %4613 = vmatprep.subr.mxu0 0.0
    %4614 = vmatpush1.msra.mxu0 0.0
    %4615 = vmatprep.subr.mxu0 0.0
    %4616 = vmatpush1.msra.mxu0 0.0
    %4617 = vmatprep.subr.mxu0 0.0
    %4618 = vmatpush1.msra.mxu0 0.0
    %4619 = vmatprep.subr.mxu0 0.0
    %4620 = vmatpush1.msra.mxu0 0.0
    %4621 = vmatprep.subr.mxu0 0.0
    %4622 = vmatpush1.msra.mxu0 0.0
    %4623 = vmatprep.subr.mxu0 0.0
    %4624 = vmatpush1.msra.mxu0 0.0
    %4625 = vmatprep.subr.mxu0 0.0
    %4626 = vmatpush1.msra.mxu0 0.0
    %4627 = vmatprep.subr.mxu0 0.0
    %4628 = vmatpush1.msra.mxu0 0.0
    %4629 = vmatprep.subr.mxu0 0.0
    %4630 = vmatpush1.msra.mxu0 0.0
    %4631 = vmatprep.subr.mxu0 0.0
    %4632 = vmatpush1.msra.mxu0 0.0
    %4633 = vmatprep.subr.mxu0 0.0
    %4634 = vmatpush1.msra.mxu0 0.0
    %4635 = vmatprep.subr.mxu0 0.0
    %4636 = vmatpush1.msra.mxu0 0.0
    %4637 = vmatprep.mubr.f32.mxu0 0.0
    %4638 = vmatmul.mubr.f32.gmra.mrb[0].mxu0 %v4500
    %v4639 = vpop.f32.mrb[0].mxu0
    %v4640 = vadd.f32 %v86, %v4639
    %v4641 = vpop.f32.mrb[0].mxu0
    %4642 = vdwg.mxu0
    %v4644 = vsel %vm508, %v4330, 0
    %4646 = vmatprep.subr.mxu0 %v490
    %4647 = vmatpush1.msra.mxu0 %v489
    %4648 = vmatprep.subr.mxu0 %v493
    %4649 = vmatpush1.msra.mxu0 %v492
    %4650 = vmatprep.subr.mxu0 %v496
    %4651 = vmatpush1.msra.mxu0 %v495
    %4652 = vmatprep.subr.mxu0 %v499
    %4653 = vmatpush1.msra.mxu0 %v498
    %4654 = vmatprep.subr.mxu0 %v502
    %4655 = vmatpush1.msra.mxu0 %v501
    %4656 = vmatprep.subr.mxu0 %v505
    %4657 = vmatpush1.msra.mxu0 %v504
    %4658 = vmatprep.subr.mxu0 0.0
    %4659 = vmatpush1.msra.mxu0 0.0
    %4660 = vmatprep.subr.mxu0 0.0
    %4661 = vmatpush1.msra.mxu0 0.0
    %4662 = vmatprep.subr.mxu0 0.0
    %4663 = vmatpush1.msra.mxu0 0.0
    %4664 = vmatprep.subr.mxu0 0.0
    %4665 = vmatpush1.msra.mxu0 0.0
    %4666 = vmatprep.subr.mxu0 0.0
    %4667 = vmatpush1.msra.mxu0 0.0
    %4668 = vmatprep.subr.mxu0 0.0
    %4669 = vmatpush1.msra.mxu0 0.0
    %4670 = vmatprep.subr.mxu0 0.0
    %4671 = vmatpush1.msra.mxu0 0.0
    %4672 = vmatprep.subr.mxu0 0.0
    %4673 = vmatpush1.msra.mxu0 0.0
    %4674 = vmatprep.subr.mxu0 0.0
    %4675 = vmatpush1.msra.mxu0 0.0
    %4676 = vmatprep.subr.mxu0 0.0
    %4677 = vmatpush1.msra.mxu0 0.0
    %4678 = vmatprep.subr.mxu0 0.0
    %4679 = vmatpush1.msra.mxu0 0.0
    %4680 = vmatprep.subr.mxu0 0.0
    %4681 = vmatpush1.msra.mxu0 0.0
    %4682 = vmatprep.subr.mxu0 0.0
    %4683 = vmatpush1.msra.mxu0 0.0
    %4684 = vmatprep.subr.mxu0 0.0
    %4685 = vmatpush1.msra.mxu0 0.0
    %4686 = vmatprep.subr.mxu0 0.0
    %4687 = vmatpush1.msra.mxu0 0.0
    %4688 = vmatprep.subr.mxu0 0.0
    %4689 = vmatpush1.msra.mxu0 0.0
    %4690 = vmatprep.subr.mxu0 0.0
    %4691 = vmatpush1.msra.mxu0 0.0
    %4692 = vmatprep.subr.mxu0 0.0
    %4693 = vmatpush1.msra.mxu0 0.0
    %4694 = vmatprep.subr.mxu0 0.0
    %4695 = vmatpush1.msra.mxu0 0.0
    %4696 = vmatprep.subr.mxu0 0.0
    %4697 = vmatpush1.msra.mxu0 0.0
    %4698 = vmatprep.subr.mxu0 0.0
    %4699 = vmatpush1.msra.mxu0 0.0
    %4700 = vmatprep.subr.mxu0 0.0
    %4701 = vmatpush1.msra.mxu0 0.0
    %4702 = vmatprep.subr.mxu0 0.0
    %4703 = vmatpush1.msra.mxu0 0.0
    %4704 = vmatprep.subr.mxu0 0.0
    %4705 = vmatpush1.msra.mxu0 0.0
    %4706 = vmatprep.subr.mxu0 0.0
    %4707 = vmatpush1.msra.mxu0 0.0
    %4708 = vmatprep.subr.mxu0 0.0
    %4709 = vmatpush1.msra.mxu0 0.0
    %4710 = vmatprep.mubr.f32.mxu0 0.0
    %4711 = vmatmul.mubr.f32.gmra.mrb[0].mxu0 %v4644
    %v4712 = vpop.f32.mrb[0].mxu0
    %v4713 = vadd.f32 %v96, %v4712
    %v4714 = vpop.f32.mrb[0].mxu0
    %v4715 = vadd.f32 %v100, %v4714
    %4716 = vdwg.mxu0
    %4717 = vmatprep.subr.mxu0 0.0
    %4718 = vmatpush1.msra.mxu0 %v491
    %4719 = vmatprep.subr.mxu0 0.0
    %4720 = vmatpush1.msra.mxu0 %v494
    %4721 = vmatprep.subr.mxu0 0.0
    %4722 = vmatpush1.msra.mxu0 %v497
    %4723 = vmatprep.subr.mxu0 0.0
    %4724 = vmatpush1.msra.mxu0 %v500
    %4725 = vmatprep.subr.mxu0 0.0
    %4726 = vmatpush1.msra.mxu0 %v503
    %4727 = vmatprep.subr.mxu0 0.0
    %4728 = vmatpush1.msra.mxu0 %v506
    %4729 = vmatprep.subr.mxu0 0.0
    %4730 = vmatpush1.msra.mxu0 0.0
    %4731 = vmatprep.subr.mxu0 0.0
    %4732 = vmatpush1.msra.mxu0 0.0
    %4733 = vmatprep.subr.mxu0 0.0
    %4734 = vmatpush1.msra.mxu0 0.0
    %4735 = vmatprep.subr.mxu0 0.0
    %4736 = vmatpush1.msra.mxu0 0.0
    %4737 = vmatprep.subr.mxu0 0.0
    %4738 = vmatpush1.msra.mxu0 0.0
    %4739 = vmatprep.subr.mxu0 0.0
    %4740 = vmatpush1.msra.mxu0 0.0
    %4741 = vmatprep.subr.mxu0 0.0
    %4742 = vmatpush1.msra.mxu0 0.0
    %4743 = vmatprep.subr.mxu0 0.0
    %4744 = vmatpush1.msra.mxu0 0.0
    %4745 = vmatprep.subr.mxu0 0.0
    %4746 = vmatpush1.msra.mxu0 0.0
    %4747 = vmatprep.subr.mxu0 0.0
    %4748 = vmatpush1.msra.mxu0 0.0
    %4749 = vmatprep.subr.mxu0 0.0
    %4750 = vmatpush1.msra.mxu0 0.0
    %4751 = vmatprep.subr.mxu0 0.0
    %4752 = vmatpush1.msra.mxu0 0.0
    %4753 = vmatprep.subr.mxu0 0.0
    %4754 = vmatpush1.msra.mxu0 0.0
    %4755 = vmatprep.subr.mxu0 0.0
    %4756 = vmatpush1.msra.mxu0 0.0
    %4757 = vmatprep.subr.mxu0 0.0
    %4758 = vmatpush1.msra.mxu0 0.0
    %4759 = vmatprep.subr.mxu0 0.0
    %4760 = vmatpush1.msra.mxu0 0.0
    %4761 = vmatprep.subr.mxu0 0.0
    %4762 = vmatpush1.msra.mxu0 0.0
    %4763 = vmatprep.subr.mxu0 0.0
    %4764 = vmatpush1.msra.mxu0 0.0
    %4765 = vmatprep.subr.mxu0 0.0
    %4766 = vmatpush1.msra.mxu0 0.0
    %4767 = vmatprep.subr.mxu0 0.0
    %4768 = vmatpush1.msra.mxu0 0.0
    %4769 = vmatprep.subr.mxu0 0.0
    %4770 = vmatpush1.msra.mxu0 0.0
    %4771 = vmatprep.subr.mxu0 0.0
    %4772 = vmatpush1.msra.mxu0 0.0
    %4773 = vmatprep.subr.mxu0 0.0
    %4774 = vmatpush1.msra.mxu0 0.0
    %4775 = vmatprep.subr.mxu0 0.0
    %4776 = vmatpush1.msra.mxu0 0.0
    %4777 = vmatprep.subr.mxu0 0.0
    %4778 = vmatpush1.msra.mxu0 0.0
    %4779 = vmatprep.subr.mxu0 0.0
    %4780 = vmatpush1.msra.mxu0 0.0
    %4781 = vmatprep.mubr.f32.mxu0 0.0
    %4782 = vmatmul.mubr.f32.gmra.mrb[0].mxu0 %v4644
    %v4783 = vpop.f32.mrb[0].mxu0
    %v4784 = vadd.f32 %v104, %v4783
    %v4785 = vpop.f32.mrb[0].mxu0
    %4786 = vdwg.mxu0
    %v4787 = vadd.f32 %v4569, %v4713
    %v4788 = vxor.u32 %v4787, 2147483648
    %v4789 = vmul.f32 %v4788, 1.442695
    %v4790 = vpow.pop %v4789
    %v4791 = vadd.f32 %v4790, 1.0
    %v4792 = vrcp.pop %v4791
    %v4793 = vmul.f32 1.0, %v4792
    %v4794 = vadd.f32 %v4571, %v4715
    %v4795 = vxor.u32 %v4794, 2147483648
    %v4796 = vmul.f32 %v4795, 1.442695
    %v4797 = vpow.pop %v4796
    %v4798 = vadd.f32 %v4797, 1.0
    %v4799 = vrcp.pop %v4798
    %v4800 = vmul.f32 1.0, %v4799
    %v4801 = vmul.f32 %v4793, %v4784
    %v4802 = vadd.f32 %v4640, %v4801
    %v4803 = vtanh.pop %v4802
    %v4804 = vsub.f32 1.0, %v4800
    %v4805 = vmul.f32 %v4804, %v4803
    %v4806 = vmul.f32 %v4800, %v4330
    %v4807 = vadd.f32 %v4805, %v4806
    %s4808 = scalar_lea.vmem [#allocation2], 54
    %v4809 = vld [vmem:[%s4808] sm:$0x3f]
    %4810 = vmatprep.subr.mxu0 %v454
    %4811 = vmatpush1.msra.mxu0 %v453
    %4812 = vmatprep.subr.mxu0 %v457
    %4813 = vmatpush1.msra.mxu0 %v456
    %4814 = vmatprep.subr.mxu0 %v460
    %4815 = vmatpush1.msra.mxu0 %v459
    %4816 = vmatprep.subr.mxu0 %v463
    %4817 = vmatpush1.msra.mxu0 %v462
    %4818 = vmatprep.subr.mxu0 %v466
    %4819 = vmatpush1.msra.mxu0 %v465
    %4820 = vmatprep.subr.mxu0 %v469
    %4821 = vmatpush1.msra.mxu0 %v468
    %4822 = vmatprep.subr.mxu0 0.0
    %4823 = vmatpush1.msra.mxu0 0.0
    %4824 = vmatprep.subr.mxu0 0.0
    %4825 = vmatpush1.msra.mxu0 0.0
    %4826 = vmatprep.subr.mxu0 0.0
    %4827 = vmatpush1.msra.mxu0 0.0
    %4828 = vmatprep.subr.mxu0 0.0
    %4829 = vmatpush1.msra.mxu0 0.0
    %4830 = vmatprep.subr.mxu0 0.0
    %4831 = vmatpush1.msra.mxu0 0.0
    %4832 = vmatprep.subr.mxu0 0.0
    %4833 = vmatpush1.msra.mxu0 0.0
    %4834 = vmatprep.subr.mxu0 0.0
    %4835 = vmatpush1.msra.mxu0 0.0
    %4836 = vmatprep.subr.mxu0 0.0
    %4837 = vmatpush1.msra.mxu0 0.0
    %4838 = vmatprep.subr.mxu0 0.0
    %4839 = vmatpush1.msra.mxu0 0.0
    %4840 = vmatprep.subr.mxu0 0.0
    %4841 = vmatpush1.msra.mxu0 0.0
    %4842 = vmatprep.subr.mxu0 0.0
    %4843 = vmatpush1.msra.mxu0 0.0
    %4844 = vmatprep.subr.mxu0 0.0
    %4845 = vmatpush1.msra.mxu0 0.0
    %4846 = vmatprep.subr.mxu0 0.0
    %4847 = vmatpush1.msra.mxu0 0.0
    %4848 = vmatprep.subr.mxu0 0.0
    %4849 = vmatpush1.msra.mxu0 0.0
    %4850 = vmatprep.subr.mxu0 0.0
    %4851 = vmatpush1.msra.mxu0 0.0
    %4852 = vmatprep.subr.mxu0 0.0
    %4853 = vmatpush1.msra.mxu0 0.0
    %4854 = vmatprep.subr.mxu0 0.0
    %4855 = vmatpush1.msra.mxu0 0.0
    %4856 = vmatprep.subr.mxu0 0.0
    %4857 = vmatpush1.msra.mxu0 0.0
    %4858 = vmatprep.subr.mxu0 0.0
    %4859 = vmatpush1.msra.mxu0 0.0
    %4860 = vmatprep.subr.mxu0 0.0
    %4861 = vmatpush1.msra.mxu0 0.0
    %4862 = vmatprep.subr.mxu0 0.0
    %4863 = vmatpush1.msra.mxu0 0.0
    %4864 = vmatprep.subr.mxu0 0.0
    %4865 = vmatpush1.msra.mxu0 0.0
    %4866 = vmatprep.subr.mxu0 0.0
    %4867 = vmatpush1.msra.mxu0 0.0
    %4868 = vmatprep.subr.mxu0 0.0
    %4869 = vmatpush1.msra.mxu0 0.0
    %4870 = vmatprep.subr.mxu0 0.0
    %4871 = vmatpush1.msra.mxu0 0.0
    %4872 = vmatprep.subr.mxu0 0.0
    %4873 = vmatpush1.msra.mxu0 0.0
    %4874 = vmatprep.mubr.f32.mxu0 0.0
    %4875 = vmatmul.mubr.f32.gmra.mrb[0].mxu0 %v4500
    %v4876 = vpop.f32.mrb[0].mxu0
    %v4877 = vadd.f32 %v60, %v4876
    %v4878 = vpop.f32.mrb[0].mxu0
    %v4879 = vadd.f32 %v64, %v4878
    %4880 = vdwg.mxu0
    %4881 = vmatprep.subr.mxu0 0.0
    %4882 = vmatpush1.msra.mxu0 %v455
    %4883 = vmatprep.subr.mxu0 0.0
    %4884 = vmatpush1.msra.mxu0 %v458
    %4885 = vmatprep.subr.mxu0 0.0
    %4886 = vmatpush1.msra.mxu0 %v461
    %4887 = vmatprep.subr.mxu0 0.0
    %4888 = vmatpush1.msra.mxu0 %v464
    %4889 = vmatprep.subr.mxu0 0.0
    %4890 = vmatpush1.msra.mxu0 %v467
    %4891 = vmatprep.subr.mxu0 0.0
    %4892 = vmatpush1.msra.mxu0 %v470
    %4893 = vmatprep.subr.mxu0 0.0
    %4894 = vmatpush1.msra.mxu0 0.0
    %4895 = vmatprep.subr.mxu0 0.0
    %4896 = vmatpush1.msra.mxu0 0.0
    %4897 = vmatprep.subr.mxu0 0.0
    %4898 = vmatpush1.msra.mxu0 0.0
    %4899 = vmatprep.subr.mxu0 0.0
    %4900 = vmatpush1.msra.mxu0 0.0
    %4901 = vmatprep.subr.mxu0 0.0
    %4902 = vmatpush1.msra.mxu0 0.0
    %4903 = vmatprep.subr.mxu0 0.0
    %4904 = vmatpush1.msra.mxu0 0.0
    %4905 = vmatprep.subr.mxu0 0.0
    %4906 = vmatpush1.msra.mxu0 0.0
    %4907 = vmatprep.subr.mxu0 0.0
    %4908 = vmatpush1.msra.mxu0 0.0
    %4909 = vmatprep.subr.mxu0 0.0
    %4910 = vmatpush1.msra.mxu0 0.0
    %4911 = vmatprep.subr.mxu0 0.0
    %4912 = vmatpush1.msra.mxu0 0.0
    %4913 = vmatprep.subr.mxu0 0.0
    %4914 = vmatpush1.msra.mxu0 0.0
    %4915 = vmatprep.subr.mxu0 0.0
    %4916 = vmatpush1.msra.mxu0 0.0
    %4917 = vmatprep.subr.mxu0 0.0
    %4918 = vmatpush1.msra.mxu0 0.0
    %4919 = vmatprep.subr.mxu0 0.0
    %4920 = vmatpush1.msra.mxu0 0.0
    %4921 = vmatprep.subr.mxu0 0.0
    %4922 = vmatpush1.msra.mxu0 0.0
    %4923 = vmatprep.subr.mxu0 0.0
    %4924 = vmatpush1.msra.mxu0 0.0
    %4925 = vmatprep.subr.mxu0 0.0
    %4926 = vmatpush1.msra.mxu0 0.0
    %4927 = vmatprep.subr.mxu0 0.0
    %4928 = vmatpush1.msra.mxu0 0.0
    %4929 = vmatprep.subr.mxu0 0.0
    %4930 = vmatpush1.msra.mxu0 0.0
    %4931 = vmatprep.subr.mxu0 0.0
    %4932 = vmatpush1.msra.mxu0 0.0
    %4933 = vmatprep.subr.mxu0 0.0
    %4934 = vmatpush1.msra.mxu0 0.0
    %4935 = vmatprep.subr.mxu0 0.0
    %4936 = vmatpush1.msra.mxu0 0.0
    %4937 = vmatprep.subr.mxu0 0.0
    %4938 = vmatpush1.msra.mxu0 0.0
    %4939 = vmatprep.subr.mxu0 0.0
    %4940 = vmatpush1.msra.mxu0 0.0
    %4941 = vmatprep.subr.mxu0 0.0
    %4942 = vmatpush1.msra.mxu0 0.0
    %4943 = vmatprep.subr.mxu0 0.0
    %4944 = vmatpush1.msra.mxu0 0.0
    %4945 = vmatprep.mubr.f32.mxu0 0.0
    %4946 = vmatmul.mubr.f32.gmra.mrb[0].mxu0 %v4500
    %v4947 = vpop.f32.mrb[0].mxu0
    %v4948 = vadd.f32 %v68, %v4947
    %v4949 = vpop.f32.mrb[0].mxu0
    %4950 = vdwg.mxu0
    %v4951 = vadd.f32 %v4809, %v4877
    %v4952 = vxor.u32 %v4951, 2147483648
    %v4953 = vmul.f32 %v4952, 1.442695
    %v4954 = vpow.pop %v4953
    %v4955 = vadd.f32 %v4954, 1.0
    %v4956 = vrcp.pop %v4955
    %v4957 = vmul.f32 1.0, %v4956
    %v4959 = vrot.slane %v4809, 2
    %v4961 = vadd.f32 %v4959, %v4879
    %v4962 = vxor.u32 %v4961, 2147483648
    %v4963 = vmul.f32 %v4962, 1.442695
    %v4964 = vpow.pop %v4963
    %v4965 = vadd.f32 %v4964, 1.0
    %v4966 = vrcp.pop %v4965
    %v4967 = vmul.f32 1.0, %v4966
    %v4968 = vmul.f32 %v4957, %v4948
    %v4969 = vrot.slane %v4809, 4
    %v4971 = vadd.f32 %v4969, %v4968
    %v4972 = vtanh.pop %v4971
    %v4973 = vsub.f32 1.0, %v4967
    %v4974 = vmul.f32 %v4973, %v4972
    %v4975 = vmul.f32 %v4967, %v4498
    %v4976 = vadd.f32 %v4974, %v4975
    %v4978 = vsel %vm508, %v4976, 0
    %4980 = vmatprep.subr.mxu0 %v472
    %4981 = vmatpush1.msra.mxu0 %v471
    %4982 = vmatprep.subr.mxu0 %v475
    %4983 = vmatpush1.msra.mxu0 %v474
    %4984 = vmatprep.subr.mxu0 %v478
    %4985 = vmatpush1.msra.mxu0 %v477
    %4986 = vmatprep.subr.mxu0 %v481
    %4987 = vmatpush1.msra.mxu0 %v480
    %4988 = vmatprep.subr.mxu0 %v484
    %4989 = vmatpush1.msra.mxu0 %v483
    %4990 = vmatprep.subr.mxu0 %v487
    %4991 = vmatpush1.msra.mxu0 %v486
    %4992 = vmatprep.subr.mxu0 0.0
    %4993 = vmatpush1.msra.mxu0 0.0
    %4994 = vmatprep.subr.mxu0 0.0
    %4995 = vmatpush1.msra.mxu0 0.0
    %4996 = vmatprep.subr.mxu0 0.0
    %4997 = vmatpush1.msra.mxu0 0.0
    %4998 = vmatprep.subr.mxu0 0.0
    %4999 = vmatpush1.msra.mxu0 0.0
    %5000 = vmatprep.subr.mxu0 0.0
    %5001 = vmatpush1.msra.mxu0 0.0
    %5002 = vmatprep.subr.mxu0 0.0
    %5003 = vmatpush1.msra.mxu0 0.0
    %5004 = vmatprep.subr.mxu0 0.0
    %5005 = vmatpush1.msra.mxu0 0.0
    %5006 = vmatprep.subr.mxu0 0.0
    %5007 = vmatpush1.msra.mxu0 0.0
    %5008 = vmatprep.subr.mxu0 0.0
    %5009 = vmatpush1.msra.mxu0 0.0
    %5010 = vmatprep.subr.mxu0 0.0
    %5011 = vmatpush1.msra.mxu0 0.0
    %5012 = vmatprep.subr.mxu0 0.0
    %5013 = vmatpush1.msra.mxu0 0.0
    %5014 = vmatprep.subr.mxu0 0.0
    %5015 = vmatpush1.msra.mxu0 0.0
    %5016 = vmatprep.subr.mxu0 0.0
    %5017 = vmatpush1.msra.mxu0 0.0
    %5018 = vmatprep.subr.mxu0 0.0
    %5019 = vmatpush1.msra.mxu0 0.0
    %5020 = vmatprep.subr.mxu0 0.0
    %5021 = vmatpush1.msra.mxu0 0.0
    %5022 = vmatprep.subr.mxu0 0.0
    %5023 = vmatpush1.msra.mxu0 0.0
    %5024 = vmatprep.subr.mxu0 0.0
    %5025 = vmatpush1.msra.mxu0 0.0
    %5026 = vmatprep.subr.mxu0 0.0
    %5027 = vmatpush1.msra.mxu0 0.0
    %5028 = vmatprep.subr.mxu0 0.0
    %5029 = vmatpush1.msra.mxu0 0.0
    %5030 = vmatprep.subr.mxu0 0.0
    %5031 = vmatpush1.msra.mxu0 0.0
    %5032 = vmatprep.subr.mxu0 0.0
    %5033 = vmatpush1.msra.mxu0 0.0
    %5034 = vmatprep.subr.mxu0 0.0
    %5035 = vmatpush1.msra.mxu0 0.0
    %5036 = vmatprep.subr.mxu0 0.0
    %5037 = vmatpush1.msra.mxu0 0.0
    %5038 = vmatprep.subr.mxu0 0.0
    %5039 = vmatpush1.msra.mxu0 0.0
    %5040 = vmatprep.subr.mxu0 0.0
    %5041 = vmatpush1.msra.mxu0 0.0
    %5042 = vmatprep.subr.mxu0 0.0
    %5043 = vmatpush1.msra.mxu0 0.0
    %5044 = vmatprep.mubr.f32.mxu0 0.0
    %5045 = vmatmul.mubr.f32.gmra.mrb[0].mxu0 %v4978
    %v5046 = vpop.f32.mrb[0].mxu0
    %v5047 = vadd.f32 %v78, %v5046
    %v5048 = vpop.f32.mrb[0].mxu0
    %v5049 = vadd.f32 %v82, %v5048
    %5050 = vdwg.mxu0
    %5051 = vmatprep.subr.mxu0 0.0
    %5052 = vmatpush1.msra.mxu0 %v473
    %5053 = vmatprep.subr.mxu0 0.0
    %5054 = vmatpush1.msra.mxu0 %v476
    %5055 = vmatprep.subr.mxu0 0.0
    %5056 = vmatpush1.msra.mxu0 %v479
    %5057 = vmatprep.subr.mxu0 0.0
    %5058 = vmatpush1.msra.mxu0 %v482
    %5059 = vmatprep.subr.mxu0 0.0
    %5060 = vmatpush1.msra.mxu0 %v485
    %5061 = vmatprep.subr.mxu0 0.0
    %5062 = vmatpush1.msra.mxu0 %v488
    %5063 = vmatprep.subr.mxu0 0.0
    %5064 = vmatpush1.msra.mxu0 0.0
    %5065 = vmatprep.subr.mxu0 0.0
    %5066 = vmatpush1.msra.mxu0 0.0
    %5067 = vmatprep.subr.mxu0 0.0
    %5068 = vmatpush1.msra.mxu0 0.0
    %5069 = vmatprep.subr.mxu0 0.0
    %5070 = vmatpush1.msra.mxu0 0.0
    %5071 = vmatprep.subr.mxu0 0.0
    %5072 = vmatpush1.msra.mxu0 0.0
    %5073 = vmatprep.subr.mxu0 0.0
    %5074 = vmatpush1.msra.mxu0 0.0
    %5075 = vmatprep.subr.mxu0 0.0
    %5076 = vmatpush1.msra.mxu0 0.0
    %5077 = vmatprep.subr.mxu0 0.0
    %5078 = vmatpush1.msra.mxu0 0.0
    %5079 = vmatprep.subr.mxu0 0.0
    %5080 = vmatpush1.msra.mxu0 0.0
    %5081 = vmatprep.subr.mxu0 0.0
    %5082 = vmatpush1.msra.mxu0 0.0
    %5083 = vmatprep.subr.mxu0 0.0
    %5084 = vmatpush1.msra.mxu0 0.0
    %5085 = vmatprep.subr.mxu0 0.0
    %5086 = vmatpush1.msra.mxu0 0.0
    %5087 = vmatprep.subr.mxu0 0.0
    %5088 = vmatpush1.msra.mxu0 0.0
    %5089 = vmatprep.subr.mxu0 0.0
    %5090 = vmatpush1.msra.mxu0 0.0
    %5091 = vmatprep.subr.mxu0 0.0
    %5092 = vmatpush1.msra.mxu0 0.0
    %5093 = vmatprep.subr.mxu0 0.0
    %5094 = vmatpush1.msra.mxu0 0.0
    %5095 = vmatprep.subr.mxu0 0.0
    %5096 = vmatpush1.msra.mxu0 0.0
    %5097 = vmatprep.subr.mxu0 0.0
    %5098 = vmatpush1.msra.mxu0 0.0
    %5099 = vmatprep.subr.mxu0 0.0
    %5100 = vmatpush1.msra.mxu0 0.0
    %5101 = vmatprep.subr.mxu0 0.0
    %5102 = vmatpush1.msra.mxu0 0.0
    %5103 = vmatprep.subr.mxu0 0.0
    %5104 = vmatpush1.msra.mxu0 0.0
    %5105 = vmatprep.subr.mxu0 0.0
    %5106 = vmatpush1.msra.mxu0 0.0
    %5107 = vmatprep.subr.mxu0 0.0
    %5108 = vmatpush1.msra.mxu0 0.0
    %5109 = vmatprep.subr.mxu0 0.0
    %5110 = vmatpush1.msra.mxu0 0.0
    %5111 = vmatprep.subr.mxu0 0.0
    %5112 = vmatpush1.msra.mxu0 0.0
    %5113 = vmatprep.subr.mxu0 0.0
    %5114 = vmatpush1.msra.mxu0 0.0
    %5115 = vmatprep.mubr.f32.mxu0 0.0
    %5116 = vmatmul.mubr.f32.gmra.mrb[0].mxu0 %v4978
    %v5117 = vpop.f32.mrb[0].mxu0
    %v5118 = vadd.f32 %v86, %v5117
    %v5119 = vpop.f32.mrb[0].mxu0
    %5120 = vdwg.mxu0
    %v5122 = vsel %vm508, %v4807, 0
    %5124 = vmatprep.subr.mxu0 %v490
    %5125 = vmatpush1.msra.mxu0 %v489
    %5126 = vmatprep.subr.mxu0 %v493
    %5127 = vmatpush1.msra.mxu0 %v492
    %5128 = vmatprep.subr.mxu0 %v496
    %5129 = vmatpush1.msra.mxu0 %v495
    %5130 = vmatprep.subr.mxu0 %v499
    %5131 = vmatpush1.msra.mxu0 %v498
    %5132 = vmatprep.subr.mxu0 %v502
    %5133 = vmatpush1.msra.mxu0 %v501
    %5134 = vmatprep.subr.mxu0 %v505
    %5135 = vmatpush1.msra.mxu0 %v504
    %5136 = vmatprep.subr.mxu0 0.0
    %5137 = vmatpush1.msra.mxu0 0.0
    %5138 = vmatprep.subr.mxu0 0.0
    %5139 = vmatpush1.msra.mxu0 0.0
    %5140 = vmatprep.subr.mxu0 0.0
    %5141 = vmatpush1.msra.mxu0 0.0
    %5142 = vmatprep.subr.mxu0 0.0
    %5143 = vmatpush1.msra.mxu0 0.0
    %5144 = vmatprep.subr.mxu0 0.0
    %5145 = vmatpush1.msra.mxu0 0.0
    %5146 = vmatprep.subr.mxu0 0.0
    %5147 = vmatpush1.msra.mxu0 0.0
    %5148 = vmatprep.subr.mxu0 0.0
    %5149 = vmatpush1.msra.mxu0 0.0
    %5150 = vmatprep.subr.mxu0 0.0
    %5151 = vmatpush1.msra.mxu0 0.0
    %5152 = vmatprep.subr.mxu0 0.0
    %5153 = vmatpush1.msra.mxu0 0.0
    %5154 = vmatprep.subr.mxu0 0.0
    %5155 = vmatpush1.msra.mxu0 0.0
    %5156 = vmatprep.subr.mxu0 0.0
    %5157 = vmatpush1.msra.mxu0 0.0
    %5158 = vmatprep.subr.mxu0 0.0
    %5159 = vmatpush1.msra.mxu0 0.0
    %5160 = vmatprep.subr.mxu0 0.0
    %5161 = vmatpush1.msra.mxu0 0.0
    %5162 = vmatprep.subr.mxu0 0.0
    %5163 = vmatpush1.msra.mxu0 0.0
    %5164 = vmatprep.subr.mxu0 0.0
    %5165 = vmatpush1.msra.mxu0 0.0
    %5166 = vmatprep.subr.mxu0 0.0
    %5167 = vmatpush1.msra.mxu0 0.0
    %5168 = vmatprep.subr.mxu0 0.0
    %5169 = vmatpush1.msra.mxu0 0.0
    %5170 = vmatprep.subr.mxu0 0.0
    %5171 = vmatpush1.msra.mxu0 0.0
    %5172 = vmatprep.subr.mxu0 0.0
    %5173 = vmatpush1.msra.mxu0 0.0
    %5174 = vmatprep.subr.mxu0 0.0
    %5175 = vmatpush1.msra.mxu0 0.0
    %5176 = vmatprep.subr.mxu0 0.0
    %5177 = vmatpush1.msra.mxu0 0.0
    %5178 = vmatprep.subr.mxu0 0.0
    %5179 = vmatpush1.msra.mxu0 0.0
    %5180 = vmatprep.subr.mxu0 0.0
    %5181 = vmatpush1.msra.mxu0 0.0
    %5182 = vmatprep.subr.mxu0 0.0
    %5183 = vmatpush1.msra.mxu0 0.0
    %5184 = vmatprep.subr.mxu0 0.0
    %5185 = vmatpush1.msra.mxu0 0.0
    %5186 = vmatprep.subr.mxu0 0.0
    %5187 = vmatpush1.msra.mxu0 0.0
    %5188 = vmatprep.mubr.f32.mxu0 0.0
    %5189 = vmatmul.mubr.f32.gmra.mrb[0].mxu0 %v5122
    %v5190 = vpop.f32.mrb[0].mxu0
    %v5191 = vadd.f32 %v96, %v5190
    %v5192 = vpop.f32.mrb[0].mxu0
    %v5193 = vadd.f32 %v100, %v5192
    %5194 = vdwg.mxu0
    %5195 = vmatprep.subr.mxu0 0.0
    %5196 = vmatpush1.msra.mxu0 %v491
    %5197 = vmatprep.subr.mxu0 0.0
    %5198 = vmatpush1.msra.mxu0 %v494
    %5199 = vmatprep.subr.mxu0 0.0
    %5200 = vmatpush1.msra.mxu0 %v497
    %5201 = vmatprep.subr.mxu0 0.0
    %5202 = vmatpush1.msra.mxu0 %v500
    %5203 = vmatprep.subr.mxu0 0.0
    %5204 = vmatpush1.msra.mxu0 %v503
    %5205 = vmatprep.subr.mxu0 0.0
    %5206 = vmatpush1.msra.mxu0 %v506
    %5207 = vmatprep.subr.mxu0 0.0
    %5208 = vmatpush1.msra.mxu0 0.0
    %5209 = vmatprep.subr.mxu0 0.0
    %5210 = vmatpush1.msra.mxu0 0.0
    %5211 = vmatprep.subr.mxu0 0.0
    %5212 = vmatpush1.msra.mxu0 0.0
    %5213 = vmatprep.subr.mxu0 0.0
    %5214 = vmatpush1.msra.mxu0 0.0
    %5215 = vmatprep.subr.mxu0 0.0
    %5216 = vmatpush1.msra.mxu0 0.0
    %5217 = vmatprep.subr.mxu0 0.0
    %5218 = vmatpush1.msra.mxu0 0.0
    %5219 = vmatprep.subr.mxu0 0.0
    %5220 = vmatpush1.msra.mxu0 0.0
    %5221 = vmatprep.subr.mxu0 0.0
    %5222 = vmatpush1.msra.mxu0 0.0
    %5223 = vmatprep.subr.mxu0 0.0
    %5224 = vmatpush1.msra.mxu0 0.0
    %5225 = vmatprep.subr.mxu0 0.0
    %5226 = vmatpush1.msra.mxu0 0.0
    %5227 = vmatprep.subr.mxu0 0.0
    %5228 = vmatpush1.msra.mxu0 0.0
    %5229 = vmatprep.subr.mxu0 0.0
    %5230 = vmatpush1.msra.mxu0 0.0
    %5231 = vmatprep.subr.mxu0 0.0
    %5232 = vmatpush1.msra.mxu0 0.0
    %5233 = vmatprep.subr.mxu0 0.0
    %5234 = vmatpush1.msra.mxu0 0.0
    %5235 = vmatprep.subr.mxu0 0.0
    %5236 = vmatpush1.msra.mxu0 0.0
    %5237 = vmatprep.subr.mxu0 0.0
    %5238 = vmatpush1.msra.mxu0 0.0
    %5239 = vmatprep.subr.mxu0 0.0
    %5240 = vmatpush1.msra.mxu0 0.0
    %5241 = vmatprep.subr.mxu0 0.0
    %5242 = vmatpush1.msra.mxu0 0.0
    %5243 = vmatprep.subr.mxu0 0.0
    %5244 = vmatpush1.msra.mxu0 0.0
    %5245 = vmatprep.subr.mxu0 0.0
    %5246 = vmatpush1.msra.mxu0 0.0
    %5247 = vmatprep.subr.mxu0 0.0
    %5248 = vmatpush1.msra.mxu0 0.0
    %5249 = vmatprep.subr.mxu0 0.0
    %5250 = vmatpush1.msra.mxu0 0.0
    %5251 = vmatprep.subr.mxu0 0.0
    %5252 = vmatpush1.msra.mxu0 0.0
    %5253 = vmatprep.subr.mxu0 0.0
    %5254 = vmatpush1.msra.mxu0 0.0
    %5255 = vmatprep.subr.mxu0 0.0
    %5256 = vmatpush1.msra.mxu0 0.0
    %5257 = vmatprep.subr.mxu0 0.0
    %5258 = vmatpush1.msra.mxu0 0.0
    %5259 = vmatprep.mubr.f32.mxu0 0.0
    %5260 = vmatmul.mubr.f32.gmra.mrb[0].mxu0 %v5122
    %v5261 = vpop.f32.mrb[0].mxu0
    %v5262 = vadd.f32 %v104, %v5261
    %v5263 = vpop.f32.mrb[0].mxu0
    %5264 = vdwg.mxu0
    %v5265 = vadd.f32 %v5047, %v5191
    %v5266 = vxor.u32 %v5265, 2147483648
    %v5267 = vmul.f32 %v5266, 1.442695
    %v5268 = vpow.pop %v5267
    %v5269 = vadd.f32 %v5268, 1.0
    %v5270 = vrcp.pop %v5269
    %v5271 = vmul.f32 1.0, %v5270
    %v5272 = vadd.f32 %v5049, %v5193
    %v5273 = vxor.u32 %v5272, 2147483648
    %v5274 = vmul.f32 %v5273, 1.442695
    %v5275 = vpow.pop %v5274
    %v5276 = vadd.f32 %v5275, 1.0
    %v5277 = vrcp.pop %v5276
    %v5278 = vmul.f32 1.0, %v5277
    %v5279 = vmul.f32 %v5271, %v5262
    %v5280 = vadd.f32 %v5118, %v5279
    %v5281 = vtanh.pop %v5280
    %v5282 = vsub.f32 1.0, %v5278
    %v5283 = vmul.f32 %v5282, %v5281
    %v5284 = vmul.f32 %v5278, %v4807
    %v5285 = vadd.f32 %v5283, %v5284
    %s5286 = scalar_lea.vmem [#allocation2], 60
    %v5287 = vld [vmem:[%s5286] sm:$0x3f]
    %5288 = vmatprep.subr.mxu0 %v454
    %5289 = vmatpush1.msra.mxu0 %v453
    %5290 = vmatprep.subr.mxu0 %v457
    %5291 = vmatpush1.msra.mxu0 %v456
    %5292 = vmatprep.subr.mxu0 %v460
    %5293 = vmatpush1.msra.mxu0 %v459
    %5294 = vmatprep.subr.mxu0 %v463
    %5295 = vmatpush1.msra.mxu0 %v462
    %5296 = vmatprep.subr.mxu0 %v466
    %5297 = vmatpush1.msra.mxu0 %v465
    %5298 = vmatprep.subr.mxu0 %v469
    %5299 = vmatpush1.msra.mxu0 %v468
    %5300 = vmatprep.subr.mxu0 0.0
    %5301 = vmatpush1.msra.mxu0 0.0
    %5302 = vmatprep.subr.mxu0 0.0
    %5303 = vmatpush1.msra.mxu0 0.0
    %5304 = vmatprep.subr.mxu0 0.0
    %5305 = vmatpush1.msra.mxu0 0.0
    %5306 = vmatprep.subr.mxu0 0.0
    %5307 = vmatpush1.msra.mxu0 0.0
    %5308 = vmatprep.subr.mxu0 0.0
    %5309 = vmatpush1.msra.mxu0 0.0
    %5310 = vmatprep.subr.mxu0 0.0
    %5311 = vmatpush1.msra.mxu0 0.0
    %5312 = vmatprep.subr.mxu0 0.0
    %5313 = vmatpush1.msra.mxu0 0.0
    %5314 = vmatprep.subr.mxu0 0.0
    %5315 = vmatpush1.msra.mxu0 0.0
    %5316 = vmatprep.subr.mxu0 0.0
    %5317 = vmatpush1.msra.mxu0 0.0
    %5318 = vmatprep.subr.mxu0 0.0
    %5319 = vmatpush1.msra.mxu0 0.0
    %5320 = vmatprep.subr.mxu0 0.0
    %5321 = vmatpush1.msra.mxu0 0.0
    %5322 = vmatprep.subr.mxu0 0.0
    %5323 = vmatpush1.msra.mxu0 0.0
    %5324 = vmatprep.subr.mxu0 0.0
    %5325 = vmatpush1.msra.mxu0 0.0
    %5326 = vmatprep.subr.mxu0 0.0
    %5327 = vmatpush1.msra.mxu0 0.0
    %5328 = vmatprep.subr.mxu0 0.0
    %5329 = vmatpush1.msra.mxu0 0.0
    %5330 = vmatprep.subr.mxu0 0.0
    %5331 = vmatpush1.msra.mxu0 0.0
    %5332 = vmatprep.subr.mxu0 0.0
    %5333 = vmatpush1.msra.mxu0 0.0
    %5334 = vmatprep.subr.mxu0 0.0
    %5335 = vmatpush1.msra.mxu0 0.0
    %5336 = vmatprep.subr.mxu0 0.0
    %5337 = vmatpush1.msra.mxu0 0.0
    %5338 = vmatprep.subr.mxu0 0.0
    %5339 = vmatpush1.msra.mxu0 0.0
    %5340 = vmatprep.subr.mxu0 0.0
    %5341 = vmatpush1.msra.mxu0 0.0
    %5342 = vmatprep.subr.mxu0 0.0
    %5343 = vmatpush1.msra.mxu0 0.0
    %5344 = vmatprep.subr.mxu0 0.0
    %5345 = vmatpush1.msra.mxu0 0.0
    %5346 = vmatprep.subr.mxu0 0.0
    %5347 = vmatpush1.msra.mxu0 0.0
    %5348 = vmatprep.subr.mxu0 0.0
    %5349 = vmatpush1.msra.mxu0 0.0
    %5350 = vmatprep.subr.mxu0 0.0
    %5351 = vmatpush1.msra.mxu0 0.0
    %5352 = vmatprep.mubr.f32.mxu0 0.0
    %5353 = vmatmul.mubr.f32.gmra.mrb[0].mxu0 %v4978
    %v5354 = vpop.f32.mrb[0].mxu0
    %v5355 = vadd.f32 %v60, %v5354
    %v5356 = vpop.f32.mrb[0].mxu0
    %v5357 = vadd.f32 %v64, %v5356
    %5358 = vdwg.mxu0
    %5359 = vmatprep.subr.mxu0 0.0
    %5360 = vmatpush1.msra.mxu0 %v455
    %5361 = vmatprep.subr.mxu0 0.0
    %5362 = vmatpush1.msra.mxu0 %v458
    %5363 = vmatprep.subr.mxu0 0.0
    %5364 = vmatpush1.msra.mxu0 %v461
    %5365 = vmatprep.subr.mxu0 0.0
    %5366 = vmatpush1.msra.mxu0 %v464
    %5367 = vmatprep.subr.mxu0 0.0
    %5368 = vmatpush1.msra.mxu0 %v467
    %5369 = vmatprep.subr.mxu0 0.0
    %5370 = vmatpush1.msra.mxu0 %v470
    %5371 = vmatprep.subr.mxu0 0.0
    %5372 = vmatpush1.msra.mxu0 0.0
    %5373 = vmatprep.subr.mxu0 0.0
    %5374 = vmatpush1.msra.mxu0 0.0
    %5375 = vmatprep.subr.mxu0 0.0
    %5376 = vmatpush1.msra.mxu0 0.0
    %5377 = vmatprep.subr.mxu0 0.0
    %5378 = vmatpush1.msra.mxu0 0.0
    %5379 = vmatprep.subr.mxu0 0.0
    %5380 = vmatpush1.msra.mxu0 0.0
    %5381 = vmatprep.subr.mxu0 0.0
    %5382 = vmatpush1.msra.mxu0 0.0
    %5383 = vmatprep.subr.mxu0 0.0
    %5384 = vmatpush1.msra.mxu0 0.0
    %5385 = vmatprep.subr.mxu0 0.0
    %5386 = vmatpush1.msra.mxu0 0.0
    %5387 = vmatprep.subr.mxu0 0.0
    %5388 = vmatpush1.msra.mxu0 0.0
    %5389 = vmatprep.subr.mxu0 0.0
    %5390 = vmatpush1.msra.mxu0 0.0
    %5391 = vmatprep.subr.mxu0 0.0
    %5392 = vmatpush1.msra.mxu0 0.0
    %5393 = vmatprep.subr.mxu0 0.0
    %5394 = vmatpush1.msra.mxu0 0.0
    %5395 = vmatprep.subr.mxu0 0.0
    %5396 = vmatpush1.msra.mxu0 0.0
    %5397 = vmatprep.subr.mxu0 0.0
    %5398 = vmatpush1.msra.mxu0 0.0
    %5399 = vmatprep.subr.mxu0 0.0
    %5400 = vmatpush1.msra.mxu0 0.0
    %5401 = vmatprep.subr.mxu0 0.0
    %5402 = vmatpush1.msra.mxu0 0.0
    %5403 = vmatprep.subr.mxu0 0.0
    %5404 = vmatpush1.msra.mxu0 0.0
    %5405 = vmatprep.subr.mxu0 0.0
    %5406 = vmatpush1.msra.mxu0 0.0
    %5407 = vmatprep.subr.mxu0 0.0
    %5408 = vmatpush1.msra.mxu0 0.0
    %5409 = vmatprep.subr.mxu0 0.0
    %5410 = vmatpush1.msra.mxu0 0.0
    %5411 = vmatprep.subr.mxu0 0.0
    %5412 = vmatpush1.msra.mxu0 0.0
    %5413 = vmatprep.subr.mxu0 0.0
    %5414 = vmatpush1.msra.mxu0 0.0
    %5415 = vmatprep.subr.mxu0 0.0
    %5416 = vmatpush1.msra.mxu0 0.0
    %5417 = vmatprep.subr.mxu0 0.0
    %5418 = vmatpush1.msra.mxu0 0.0
    %5419 = vmatprep.subr.mxu0 0.0
    %5420 = vmatpush1.msra.mxu0 0.0
    %5421 = vmatprep.subr.mxu0 0.0
    %5422 = vmatpush1.msra.mxu0 0.0
    %5423 = vmatprep.mubr.f32.mxu0 0.0
    %5424 = vmatmul.mubr.f32.gmra.mrb[0].mxu0 %v4978
    %v5425 = vpop.f32.mrb[0].mxu0
    %v5426 = vadd.f32 %v68, %v5425
    %v5427 = vpop.f32.mrb[0].mxu0
    %5428 = vdwg.mxu0
    %v5429 = vadd.f32 %v5287, %v5355
    %v5430 = vxor.u32 %v5429, 2147483648
    %v5431 = vmul.f32 %v5430, 1.442695
    %v5432 = vpow.pop %v5431
    %v5433 = vadd.f32 %v5432, 1.0
    %v5434 = vrcp.pop %v5433
    %v5435 = vmul.f32 1.0, %v5434
    %v5437 = vrot.slane %v5287, 2
    %v5439 = vadd.f32 %v5437, %v5357
    %v5440 = vxor.u32 %v5439, 2147483648
    %v5441 = vmul.f32 %v5440, 1.442695
    %v5442 = vpow.pop %v5441
    %v5443 = vadd.f32 %v5442, 1.0
    %v5444 = vrcp.pop %v5443
    %v5445 = vmul.f32 1.0, %v5444
    %v5446 = vmul.f32 %v5435, %v5426
    %v5447 = vrot.slane %v5287, 4
    %v5449 = vadd.f32 %v5447, %v5446
    %v5450 = vtanh.pop %v5449
    %v5451 = vsub.f32 1.0, %v5445
    %v5452 = vmul.f32 %v5451, %v5450
    %v5453 = vmul.f32 %v5445, %v4976
    %v5454 = vadd.f32 %v5452, %v5453
    %v5456 = vsel %vm508, %v5454, 0
    %5458 = vmatprep.subr.mxu0 %v472
    %5459 = vmatpush1.msra.mxu0 %v471
    %5460 = vmatprep.subr.mxu0 %v475
    %5461 = vmatpush1.msra.mxu0 %v474
    %5462 = vmatprep.subr.mxu0 %v478
    %5463 = vmatpush1.msra.mxu0 %v477
    %5464 = vmatprep.subr.mxu0 %v481
    %5465 = vmatpush1.msra.mxu0 %v480
    %5466 = vmatprep.subr.mxu0 %v484
    %5467 = vmatpush1.msra.mxu0 %v483
    %5468 = vmatprep.subr.mxu0 %v487
    %5469 = vmatpush1.msra.mxu0 %v486
    %5470 = vmatprep.subr.mxu0 0.0
    %5471 = vmatpush1.msra.mxu0 0.0
    %5472 = vmatprep.subr.mxu0 0.0
    %5473 = vmatpush1.msra.mxu0 0.0
    %5474 = vmatprep.subr.mxu0 0.0
    %5475 = vmatpush1.msra.mxu0 0.0
    %5476 = vmatprep.subr.mxu0 0.0
    %5477 = vmatpush1.msra.mxu0 0.0
    %5478 = vmatprep.subr.mxu0 0.0
    %5479 = vmatpush1.msra.mxu0 0.0
    %5480 = vmatprep.subr.mxu0 0.0
    %5481 = vmatpush1.msra.mxu0 0.0
    %5482 = vmatprep.subr.mxu0 0.0
    %5483 = vmatpush1.msra.mxu0 0.0
    %5484 = vmatprep.subr.mxu0 0.0
    %5485 = vmatpush1.msra.mxu0 0.0
    %5486 = vmatprep.subr.mxu0 0.0
    %5487 = vmatpush1.msra.mxu0 0.0
    %5488 = vmatprep.subr.mxu0 0.0
    %5489 = vmatpush1.msra.mxu0 0.0
    %5490 = vmatprep.subr.mxu0 0.0
    %5491 = vmatpush1.msra.mxu0 0.0
    %5492 = vmatprep.subr.mxu0 0.0
    %5493 = vmatpush1.msra.mxu0 0.0
    %5494 = vmatprep.subr.mxu0 0.0
    %5495 = vmatpush1.msra.mxu0 0.0
    %5496 = vmatprep.subr.mxu0 0.0
    %5497 = vmatpush1.msra.mxu0 0.0
    %5498 = vmatprep.subr.mxu0 0.0
    %5499 = vmatpush1.msra.mxu0 0.0
    %5500 = vmatprep.subr.mxu0 0.0
    %5501 = vmatpush1.msra.mxu0 0.0
    %5502 = vmatprep.subr.mxu0 0.0
    %5503 = vmatpush1.msra.mxu0 0.0
    %5504 = vmatprep.subr.mxu0 0.0
    %5505 = vmatpush1.msra.mxu0 0.0
    %5506 = vmatprep.subr.mxu0 0.0
    %5507 = vmatpush1.msra.mxu0 0.0
    %5508 = vmatprep.subr.mxu0 0.0
    %5509 = vmatpush1.msra.mxu0 0.0
    %5510 = vmatprep.subr.mxu0 0.0
    %5511 = vmatpush1.msra.mxu0 0.0
    %5512 = vmatprep.subr.mxu0 0.0
    %5513 = vmatpush1.msra.mxu0 0.0
    %5514 = vmatprep.subr.mxu0 0.0
    %5515 = vmatpush1.msra.mxu0 0.0
    %5516 = vmatprep.subr.mxu0 0.0
    %5517 = vmatpush1.msra.mxu0 0.0
    %5518 = vmatprep.subr.mxu0 0.0
    %5519 = vmatpush1.msra.mxu0 0.0
    %5520 = vmatprep.subr.mxu0 0.0
    %5521 = vmatpush1.msra.mxu0 0.0
    %5522 = vmatprep.mubr.f32.mxu0 0.0
    %5523 = vmatmul.mubr.f32.gmra.mrb[0].mxu0 %v5456
    %v5524 = vpop.f32.mrb[0].mxu0
    %v5525 = vadd.f32 %v78, %v5524
    %v5526 = vpop.f32.mrb[0].mxu0
    %v5527 = vadd.f32 %v82, %v5526
    %5528 = vdwg.mxu0
    %5529 = vmatprep.subr.mxu0 0.0
    %5530 = vmatpush1.msra.mxu0 %v473
    %5531 = vmatprep.subr.mxu0 0.0
    %5532 = vmatpush1.msra.mxu0 %v476
    %5533 = vmatprep.subr.mxu0 0.0
    %5534 = vmatpush1.msra.mxu0 %v479
    %5535 = vmatprep.subr.mxu0 0.0
    %5536 = vmatpush1.msra.mxu0 %v482
    %5537 = vmatprep.subr.mxu0 0.0
    %5538 = vmatpush1.msra.mxu0 %v485
    %5539 = vmatprep.subr.mxu0 0.0
    %5540 = vmatpush1.msra.mxu0 %v488
    %5541 = vmatprep.subr.mxu0 0.0
    %5542 = vmatpush1.msra.mxu0 0.0
    %5543 = vmatprep.subr.mxu0 0.0
    %5544 = vmatpush1.msra.mxu0 0.0
    %5545 = vmatprep.subr.mxu0 0.0
    %5546 = vmatpush1.msra.mxu0 0.0
    %5547 = vmatprep.subr.mxu0 0.0
    %5548 = vmatpush1.msra.mxu0 0.0
    %5549 = vmatprep.subr.mxu0 0.0
    %5550 = vmatpush1.msra.mxu0 0.0
    %5551 = vmatprep.subr.mxu0 0.0
    %5552 = vmatpush1.msra.mxu0 0.0
    %5553 = vmatprep.subr.mxu0 0.0
    %5554 = vmatpush1.msra.mxu0 0.0
    %5555 = vmatprep.subr.mxu0 0.0
    %5556 = vmatpush1.msra.mxu0 0.0
    %5557 = vmatprep.subr.mxu0 0.0
    %5558 = vmatpush1.msra.mxu0 0.0
    %5559 = vmatprep.subr.mxu0 0.0
    %5560 = vmatpush1.msra.mxu0 0.0
    %5561 = vmatprep.subr.mxu0 0.0
    %5562 = vmatpush1.msra.mxu0 0.0
    %5563 = vmatprep.subr.mxu0 0.0
    %5564 = vmatpush1.msra.mxu0 0.0
    %5565 = vmatprep.subr.mxu0 0.0
    %5566 = vmatpush1.msra.mxu0 0.0
    %5567 = vmatprep.subr.mxu0 0.0
    %5568 = vmatpush1.msra.mxu0 0.0
    %5569 = vmatprep.subr.mxu0 0.0
    %5570 = vmatpush1.msra.mxu0 0.0
    %5571 = vmatprep.subr.mxu0 0.0
    %5572 = vmatpush1.msra.mxu0 0.0
    %5573 = vmatprep.subr.mxu0 0.0
    %5574 = vmatpush1.msra.mxu0 0.0
    %5575 = vmatprep.subr.mxu0 0.0
    %5576 = vmatpush1.msra.mxu0 0.0
    %5577 = vmatprep.subr.mxu0 0.0
    %5578 = vmatpush1.msra.mxu0 0.0
    %5579 = vmatprep.subr.mxu0 0.0
    %5580 = vmatpush1.msra.mxu0 0.0
    %5581 = vmatprep.subr.mxu0 0.0
    %5582 = vmatpush1.msra.mxu0 0.0
    %5583 = vmatprep.subr.mxu0 0.0
    %5584 = vmatpush1.msra.mxu0 0.0
    %5585 = vmatprep.subr.mxu0 0.0
    %5586 = vmatpush1.msra.mxu0 0.0
    %5587 = vmatprep.subr.mxu0 0.0
    %5588 = vmatpush1.msra.mxu0 0.0
    %5589 = vmatprep.subr.mxu0 0.0
    %5590 = vmatpush1.msra.mxu0 0.0
    %5591 = vmatprep.subr.mxu0 0.0
    %5592 = vmatpush1.msra.mxu0 0.0
    %5593 = vmatprep.mubr.f32.mxu0 0.0
    %5594 = vmatmul.mubr.f32.gmra.mrb[0].mxu0 %v5456
    %v5595 = vpop.f32.mrb[0].mxu0
    %v5596 = vadd.f32 %v86, %v5595
    %v5597 = vpop.f32.mrb[0].mxu0
    %5598 = vdwg.mxu0
    %v5600 = vsel %vm508, %v5285, 0
    %5602 = vmatprep.subr.mxu0 %v490
    %5603 = vmatpush1.msra.mxu0 %v489
    %5604 = vmatprep.subr.mxu0 %v493
    %5605 = vmatpush1.msra.mxu0 %v492
    %5606 = vmatprep.subr.mxu0 %v496
    %5607 = vmatpush1.msra.mxu0 %v495
    %5608 = vmatprep.subr.mxu0 %v499
    %5609 = vmatpush1.msra.mxu0 %v498
    %5610 = vmatprep.subr.mxu0 %v502
    %5611 = vmatpush1.msra.mxu0 %v501
    %5612 = vmatprep.subr.mxu0 %v505
    %5613 = vmatpush1.msra.mxu0 %v504
    %5614 = vmatprep.subr.mxu0 0.0
    %5615 = vmatpush1.msra.mxu0 0.0
    %5616 = vmatprep.subr.mxu0 0.0
    %5617 = vmatpush1.msra.mxu0 0.0
    %5618 = vmatprep.subr.mxu0 0.0
    %5619 = vmatpush1.msra.mxu0 0.0
    %5620 = vmatprep.subr.mxu0 0.0
    %5621 = vmatpush1.msra.mxu0 0.0
    %5622 = vmatprep.subr.mxu0 0.0
    %5623 = vmatpush1.msra.mxu0 0.0
    %5624 = vmatprep.subr.mxu0 0.0
    %5625 = vmatpush1.msra.mxu0 0.0
    %5626 = vmatprep.subr.mxu0 0.0
    %5627 = vmatpush1.msra.mxu0 0.0
    %5628 = vmatprep.subr.mxu0 0.0
    %5629 = vmatpush1.msra.mxu0 0.0
    %5630 = vmatprep.subr.mxu0 0.0
    %5631 = vmatpush1.msra.mxu0 0.0
    %5632 = vmatprep.subr.mxu0 0.0
    %5633 = vmatpush1.msra.mxu0 0.0
    %5634 = vmatprep.subr.mxu0 0.0
    %5635 = vmatpush1.msra.mxu0 0.0
    %5636 = vmatprep.subr.mxu0 0.0
    %5637 = vmatpush1.msra.mxu0 0.0
    %5638 = vmatprep.subr.mxu0 0.0
    %5639 = vmatpush1.msra.mxu0 0.0
    %5640 = vmatprep.subr.mxu0 0.0
    %5641 = vmatpush1.msra.mxu0 0.0
    %5642 = vmatprep.subr.mxu0 0.0
    %5643 = vmatpush1.msra.mxu0 0.0
    %5644 = vmatprep.subr.mxu0 0.0
    %5645 = vmatpush1.msra.mxu0 0.0
    %5646 = vmatprep.subr.mxu0 0.0
    %5647 = vmatpush1.msra.mxu0 0.0
    %5648 = vmatprep.subr.mxu0 0.0
    %5649 = vmatpush1.msra.mxu0 0.0
    %5650 = vmatprep.subr.mxu0 0.0
    %5651 = vmatpush1.msra.mxu0 0.0
    %5652 = vmatprep.subr.mxu0 0.0
    %5653 = vmatpush1.msra.mxu0 0.0
    %5654 = vmatprep.subr.mxu0 0.0
    %5655 = vmatpush1.msra.mxu0 0.0
    %5656 = vmatprep.subr.mxu0 0.0
    %5657 = vmatpush1.msra.mxu0 0.0
    %5658 = vmatprep.subr.mxu0 0.0
    %5659 = vmatpush1.msra.mxu0 0.0
    %5660 = vmatprep.subr.mxu0 0.0
    %5661 = vmatpush1.msra.mxu0 0.0
    %5662 = vmatprep.subr.mxu0 0.0
    %5663 = vmatpush1.msra.mxu0 0.0
    %5664 = vmatprep.subr.mxu0 0.0
    %5665 = vmatpush1.msra.mxu0 0.0
    %5666 = vmatprep.mubr.f32.mxu0 0.0
    %5667 = vmatmul.mubr.f32.gmra.mrb[0].mxu0 %v5600
    %v5668 = vpop.f32.mrb[0].mxu0
    %v5669 = vadd.f32 %v96, %v5668
    %v5670 = vpop.f32.mrb[0].mxu0
    %v5671 = vadd.f32 %v100, %v5670
    %5672 = vdwg.mxu0
    %5673 = vmatprep.subr.mxu0 0.0
    %5674 = vmatpush1.msra.mxu0 %v491
    %5675 = vmatprep.subr.mxu0 0.0
    %5676 = vmatpush1.msra.mxu0 %v494
    %5677 = vmatprep.subr.mxu0 0.0
    %5678 = vmatpush1.msra.mxu0 %v497
    %5679 = vmatprep.subr.mxu0 0.0
    %5680 = vmatpush1.msra.mxu0 %v500
    %5681 = vmatprep.subr.mxu0 0.0
    %5682 = vmatpush1.msra.mxu0 %v503
    %5683 = vmatprep.subr.mxu0 0.0
    %5684 = vmatpush1.msra.mxu0 %v506
    %5685 = vmatprep.subr.mxu0 0.0
    %5686 = vmatpush1.msra.mxu0 0.0
    %5687 = vmatprep.subr.mxu0 0.0
    %5688 = vmatpush1.msra.mxu0 0.0
    %5689 = vmatprep.subr.mxu0 0.0
    %5690 = vmatpush1.msra.mxu0 0.0
    %5691 = vmatprep.subr.mxu0 0.0
    %5692 = vmatpush1.msra.mxu0 0.0
    %5693 = vmatprep.subr.mxu0 0.0
    %5694 = vmatpush1.msra.mxu0 0.0
    %5695 = vmatprep.subr.mxu0 0.0
    %5696 = vmatpush1.msra.mxu0 0.0
    %5697 = vmatprep.subr.mxu0 0.0
    %5698 = vmatpush1.msra.mxu0 0.0
    %5699 = vmatprep.subr.mxu0 0.0
    %5700 = vmatpush1.msra.mxu0 0.0
    %5701 = vmatprep.subr.mxu0 0.0
    %5702 = vmatpush1.msra.mxu0 0.0
    %5703 = vmatprep.subr.mxu0 0.0
    %5704 = vmatpush1.msra.mxu0 0.0
    %5705 = vmatprep.subr.mxu0 0.0
    %5706 = vmatpush1.msra.mxu0 0.0
    %5707 = vmatprep.subr.mxu0 0.0
    %5708 = vmatpush1.msra.mxu0 0.0
    %5709 = vmatprep.subr.mxu0 0.0
    %5710 = vmatpush1.msra.mxu0 0.0
    %5711 = vmatprep.subr.mxu0 0.0
    %5712 = vmatpush1.msra.mxu0 0.0
    %5713 = vmatprep.subr.mxu0 0.0
    %5714 = vmatpush1.msra.mxu0 0.0
    %5715 = vmatprep.subr.mxu0 0.0
    %5716 = vmatpush1.msra.mxu0 0.0
    %5717 = vmatprep.subr.mxu0 0.0
    %5718 = vmatpush1.msra.mxu0 0.0
    %5719 = vmatprep.subr.mxu0 0.0
    %5720 = vmatpush1.msra.mxu0 0.0
    %5721 = vmatprep.subr.mxu0 0.0
    %5722 = vmatpush1.msra.mxu0 0.0
    %5723 = vmatprep.subr.mxu0 0.0
    %5724 = vmatpush1.msra.mxu0 0.0
    %5725 = vmatprep.subr.mxu0 0.0
    %5726 = vmatpush1.msra.mxu0 0.0
    %5727 = vmatprep.subr.mxu0 0.0
    %5728 = vmatpush1.msra.mxu0 0.0
    %5729 = vmatprep.subr.mxu0 0.0
    %5730 = vmatpush1.msra.mxu0 0.0
    %5731 = vmatprep.subr.mxu0 0.0
    %5732 = vmatpush1.msra.mxu0 0.0
    %5733 = vmatprep.subr.mxu0 0.0
    %5734 = vmatpush1.msra.mxu0 0.0
    %5735 = vmatprep.subr.mxu0 0.0
    %5736 = vmatpush1.msra.mxu0 0.0
    %5737 = vmatprep.mubr.f32.mxu0 0.0
    %5738 = vmatmul.mubr.f32.gmra.mrb[0].mxu0 %v5600
    %v5739 = vpop.f32.mrb[0].mxu0
    %v5740 = vadd.f32 %v104, %v5739
    %v5741 = vpop.f32.mrb[0].mxu0
    %5742 = vdwg.mxu0
    %v5743 = vadd.f32 %v5525, %v5669
    %v5744 = vxor.u32 %v5743, 2147483648
    %v5745 = vmul.f32 %v5744, 1.442695
    %v5746 = vpow.pop %v5745
    %v5747 = vadd.f32 %v5746, 1.0
    %v5748 = vrcp.pop %v5747
    %v5749 = vmul.f32 1.0, %v5748
    %v5750 = vadd.f32 %v5527, %v5671
    %v5751 = vxor.u32 %v5750, 2147483648
    %v5752 = vmul.f32 %v5751, 1.442695
    %v5753 = vpow.pop %v5752
    %v5754 = vadd.f32 %v5753, 1.0
    %v5755 = vrcp.pop %v5754
    %v5756 = vmul.f32 1.0, %v5755
    %v5757 = vmul.f32 %v5749, %v5740
    %v5758 = vadd.f32 %v5596, %v5757
    %v5759 = vtanh.pop %v5758
    %v5760 = vsub.f32 1.0, %v5756
    %v5761 = vmul.f32 %v5760, %v5759
    %v5762 = vmul.f32 %v5756, %v5285
    %v5763 = vadd.f32 %v5761, %v5762
    %s5764 = scalar_lea.vmem [#allocation2], 66
    %v5765 = vld [vmem:[%s5764] sm:$0x3f]
    %5766 = vmatprep.subr.mxu0 %v454
    %5767 = vmatpush1.msra.mxu0 %v453
    %5768 = vmatprep.subr.mxu0 %v457
    %5769 = vmatpush1.msra.mxu0 %v456
    %5770 = vmatprep.subr.mxu0 %v460
    %5771 = vmatpush1.msra.mxu0 %v459
    %5772 = vmatprep.subr.mxu0 %v463
    %5773 = vmatpush1.msra.mxu0 %v462
    %5774 = vmatprep.subr.mxu0 %v466
    %5775 = vmatpush1.msra.mxu0 %v465
    %5776 = vmatprep.subr.mxu0 %v469
    %5777 = vmatpush1.msra.mxu0 %v468
    %5778 = vmatprep.subr.mxu0 0.0
    %5779 = vmatpush1.msra.mxu0 0.0
    %5780 = vmatprep.subr.mxu0 0.0
    %5781 = vmatpush1.msra.mxu0 0.0
    %5782 = vmatprep.subr.mxu0 0.0
    %5783 = vmatpush1.msra.mxu0 0.0
    %5784 = vmatprep.subr.mxu0 0.0
    %5785 = vmatpush1.msra.mxu0 0.0
    %5786 = vmatprep.subr.mxu0 0.0
    %5787 = vmatpush1.msra.mxu0 0.0
    %5788 = vmatprep.subr.mxu0 0.0
    %5789 = vmatpush1.msra.mxu0 0.0
    %5790 = vmatprep.subr.mxu0 0.0
    %5791 = vmatpush1.msra.mxu0 0.0
    %5792 = vmatprep.subr.mxu0 0.0
    %5793 = vmatpush1.msra.mxu0 0.0
    %5794 = vmatprep.subr.mxu0 0.0
    %5795 = vmatpush1.msra.mxu0 0.0
    %5796 = vmatprep.subr.mxu0 0.0
    %5797 = vmatpush1.msra.mxu0 0.0
    %5798 = vmatprep.subr.mxu0 0.0
    %5799 = vmatpush1.msra.mxu0 0.0
    %5800 = vmatprep.subr.mxu0 0.0
    %5801 = vmatpush1.msra.mxu0 0.0
    %5802 = vmatprep.subr.mxu0 0.0
    %5803 = vmatpush1.msra.mxu0 0.0
    %5804 = vmatprep.subr.mxu0 0.0
    %5805 = vmatpush1.msra.mxu0 0.0
    %5806 = vmatprep.subr.mxu0 0.0
    %5807 = vmatpush1.msra.mxu0 0.0
    %5808 = vmatprep.subr.mxu0 0.0
    %5809 = vmatpush1.msra.mxu0 0.0
    %5810 = vmatprep.subr.mxu0 0.0
    %5811 = vmatpush1.msra.mxu0 0.0
    %5812 = vmatprep.subr.mxu0 0.0
    %5813 = vmatpush1.msra.mxu0 0.0
    %5814 = vmatprep.subr.mxu0 0.0
    %5815 = vmatpush1.msra.mxu0 0.0
    %5816 = vmatprep.subr.mxu0 0.0
    %5817 = vmatpush1.msra.mxu0 0.0
    %5818 = vmatprep.subr.mxu0 0.0
    %5819 = vmatpush1.msra.mxu0 0.0
    %5820 = vmatprep.subr.mxu0 0.0
    %5821 = vmatpush1.msra.mxu0 0.0
    %5822 = vmatprep.subr.mxu0 0.0
    %5823 = vmatpush1.msra.mxu0 0.0
    %5824 = vmatprep.subr.mxu0 0.0
    %5825 = vmatpush1.msra.mxu0 0.0
    %5826 = vmatprep.subr.mxu0 0.0
    %5827 = vmatpush1.msra.mxu0 0.0
    %5828 = vmatprep.subr.mxu0 0.0
    %5829 = vmatpush1.msra.mxu0 0.0
    %5830 = vmatprep.mubr.f32.mxu0 0.0
    %5831 = vmatmul.mubr.f32.gmra.mrb[0].mxu0 %v5456
    %v5832 = vpop.f32.mrb[0].mxu0
    %v5833 = vadd.f32 %v60, %v5832
    %v5834 = vpop.f32.mrb[0].mxu0
    %v5835 = vadd.f32 %v64, %v5834
    %5836 = vdwg.mxu0
    %5837 = vmatprep.subr.mxu0 0.0
    %5838 = vmatpush1.msra.mxu0 %v455
    %5839 = vmatprep.subr.mxu0 0.0
    %5840 = vmatpush1.msra.mxu0 %v458
    %5841 = vmatprep.subr.mxu0 0.0
    %5842 = vmatpush1.msra.mxu0 %v461
    %5843 = vmatprep.subr.mxu0 0.0
    %5844 = vmatpush1.msra.mxu0 %v464
    %5845 = vmatprep.subr.mxu0 0.0
    %5846 = vmatpush1.msra.mxu0 %v467
    %5847 = vmatprep.subr.mxu0 0.0
    %5848 = vmatpush1.msra.mxu0 %v470
    %5849 = vmatprep.subr.mxu0 0.0
    %5850 = vmatpush1.msra.mxu0 0.0
    %5851 = vmatprep.subr.mxu0 0.0
    %5852 = vmatpush1.msra.mxu0 0.0
    %5853 = vmatprep.subr.mxu0 0.0
    %5854 = vmatpush1.msra.mxu0 0.0
    %5855 = vmatprep.subr.mxu0 0.0
    %5856 = vmatpush1.msra.mxu0 0.0
    %5857 = vmatprep.subr.mxu0 0.0
    %5858 = vmatpush1.msra.mxu0 0.0
    %5859 = vmatprep.subr.mxu0 0.0
    %5860 = vmatpush1.msra.mxu0 0.0
    %5861 = vmatprep.subr.mxu0 0.0
    %5862 = vmatpush1.msra.mxu0 0.0
    %5863 = vmatprep.subr.mxu0 0.0
    %5864 = vmatpush1.msra.mxu0 0.0
    %5865 = vmatprep.subr.mxu0 0.0
    %5866 = vmatpush1.msra.mxu0 0.0
    %5867 = vmatprep.subr.mxu0 0.0
    %5868 = vmatpush1.msra.mxu0 0.0
    %5869 = vmatprep.subr.mxu0 0.0
    %5870 = vmatpush1.msra.mxu0 0.0
    %5871 = vmatprep.subr.mxu0 0.0
    %5872 = vmatpush1.msra.mxu0 0.0
    %5873 = vmatprep.subr.mxu0 0.0
    %5874 = vmatpush1.msra.mxu0 0.0
    %5875 = vmatprep.subr.mxu0 0.0
    %5876 = vmatpush1.msra.mxu0 0.0
    %5877 = vmatprep.subr.mxu0 0.0
    %5878 = vmatpush1.msra.mxu0 0.0
    %5879 = vmatprep.subr.mxu0 0.0
    %5880 = vmatpush1.msra.mxu0 0.0
    %5881 = vmatprep.subr.mxu0 0.0
    %5882 = vmatpush1.msra.mxu0 0.0
    %5883 = vmatprep.subr.mxu0 0.0
    %5884 = vmatpush1.msra.mxu0 0.0
    %5885 = vmatprep.subr.mxu0 0.0
    %5886 = vmatpush1.msra.mxu0 0.0
    %5887 = vmatprep.subr.mxu0 0.0
    %5888 = vmatpush1.msra.mxu0 0.0
    %5889 = vmatprep.subr.mxu0 0.0
    %5890 = vmatpush1.msra.mxu0 0.0
    %5891 = vmatprep.subr.mxu0 0.0
    %5892 = vmatpush1.msra.mxu0 0.0
    %5893 = vmatprep.subr.mxu0 0.0
    %5894 = vmatpush1.msra.mxu0 0.0
    %5895 = vmatprep.subr.mxu0 0.0
    %5896 = vmatpush1.msra.mxu0 0.0
    %5897 = vmatprep.subr.mxu0 0.0
    %5898 = vmatpush1.msra.mxu0 0.0
    %5899 = vmatprep.subr.mxu0 0.0
    %5900 = vmatpush1.msra.mxu0 0.0
    %5901 = vmatprep.mubr.f32.mxu0 0.0
    %5902 = vmatmul.mubr.f32.gmra.mrb[0].mxu0 %v5456
    %v5903 = vpop.f32.mrb[0].mxu0
    %v5904 = vadd.f32 %v68, %v5903
    %v5905 = vpop.f32.mrb[0].mxu0
    %5906 = vdwg.mxu0
    %v5907 = vadd.f32 %v5765, %v5833
    %v5908 = vxor.u32 %v5907, 2147483648
    %v5909 = vmul.f32 %v5908, 1.442695
    %v5910 = vpow.pop %v5909
    %v5911 = vadd.f32 %v5910, 1.0
    %v5912 = vrcp.pop %v5911
    %v5913 = vmul.f32 1.0, %v5912
    %v5915 = vrot.slane %v5765, 2
    %v5917 = vadd.f32 %v5915, %v5835
    %v5918 = vxor.u32 %v5917, 2147483648
    %v5919 = vmul.f32 %v5918, 1.442695
    %v5920 = vpow.pop %v5919
    %v5921 = vadd.f32 %v5920, 1.0
    %v5922 = vrcp.pop %v5921
    %v5923 = vmul.f32 1.0, %v5922
    %v5924 = vmul.f32 %v5913, %v5904
    %v5925 = vrot.slane %v5765, 4
    %v5927 = vadd.f32 %v5925, %v5924
    %v5928 = vtanh.pop %v5927
    %v5929 = vsub.f32 1.0, %v5923
    %v5930 = vmul.f32 %v5929, %v5928
    %v5931 = vmul.f32 %v5923, %v5454
    %v5932 = vadd.f32 %v5930, %v5931
    %v5934 = vsel %vm508, %v5932, 0
    %5936 = vmatprep.subr.mxu0 %v472
    %5937 = vmatpush1.msra.mxu0 %v471
    %5938 = vmatprep.subr.mxu0 %v475
    %5939 = vmatpush1.msra.mxu0 %v474
    %5940 = vmatprep.subr.mxu0 %v478
    %5941 = vmatpush1.msra.mxu0 %v477
    %5942 = vmatprep.subr.mxu0 %v481
    %5943 = vmatpush1.msra.mxu0 %v480
    %5944 = vmatprep.subr.mxu0 %v484
    %5945 = vmatpush1.msra.mxu0 %v483
    %5946 = vmatprep.subr.mxu0 %v487
    %5947 = vmatpush1.msra.mxu0 %v486
    %5948 = vmatprep.subr.mxu0 0.0
    %5949 = vmatpush1.msra.mxu0 0.0
    %5950 = vmatprep.subr.mxu0 0.0
    %5951 = vmatpush1.msra.mxu0 0.0
    %5952 = vmatprep.subr.mxu0 0.0
    %5953 = vmatpush1.msra.mxu0 0.0
    %5954 = vmatprep.subr.mxu0 0.0
    %5955 = vmatpush1.msra.mxu0 0.0
    %5956 = vmatprep.subr.mxu0 0.0
    %5957 = vmatpush1.msra.mxu0 0.0
    %5958 = vmatprep.subr.mxu0 0.0
    %5959 = vmatpush1.msra.mxu0 0.0
    %5960 = vmatprep.subr.mxu0 0.0
    %5961 = vmatpush1.msra.mxu0 0.0
    %5962 = vmatprep.subr.mxu0 0.0
    %5963 = vmatpush1.msra.mxu0 0.0
    %5964 = vmatprep.subr.mxu0 0.0
    %5965 = vmatpush1.msra.mxu0 0.0
    %5966 = vmatprep.subr.mxu0 0.0
    %5967 = vmatpush1.msra.mxu0 0.0
    %5968 = vmatprep.subr.mxu0 0.0
    %5969 = vmatpush1.msra.mxu0 0.0
    %5970 = vmatprep.subr.mxu0 0.0
    %5971 = vmatpush1.msra.mxu0 0.0
    %5972 = vmatprep.subr.mxu0 0.0
    %5973 = vmatpush1.msra.mxu0 0.0
    %5974 = vmatprep.subr.mxu0 0.0
    %5975 = vmatpush1.msra.mxu0 0.0
    %5976 = vmatprep.subr.mxu0 0.0
    %5977 = vmatpush1.msra.mxu0 0.0
    %5978 = vmatprep.subr.mxu0 0.0
    %5979 = vmatpush1.msra.mxu0 0.0
    %5980 = vmatprep.subr.mxu0 0.0
    %5981 = vmatpush1.msra.mxu0 0.0
    %5982 = vmatprep.subr.mxu0 0.0
    %5983 = vmatpush1.msra.mxu0 0.0
    %5984 = vmatprep.subr.mxu0 0.0
    %5985 = vmatpush1.msra.mxu0 0.0
    %5986 = vmatprep.subr.mxu0 0.0
    %5987 = vmatpush1.msra.mxu0 0.0
    %5988 = vmatprep.subr.mxu0 0.0
    %5989 = vmatpush1.msra.mxu0 0.0
    %5990 = vmatprep.subr.mxu0 0.0
    %5991 = vmatpush1.msra.mxu0 0.0
    %5992 = vmatprep.subr.mxu0 0.0
    %5993 = vmatpush1.msra.mxu0 0.0
    %5994 = vmatprep.subr.mxu0 0.0
    %5995 = vmatpush1.msra.mxu0 0.0
    %5996 = vmatprep.subr.mxu0 0.0
    %5997 = vmatpush1.msra.mxu0 0.0
    %5998 = vmatprep.subr.mxu0 0.0
    %5999 = vmatpush1.msra.mxu0 0.0
    %6000 = vmatprep.mubr.f32.mxu0 0.0
    %6001 = vmatmul.mubr.f32.gmra.mrb[0].mxu0 %v5934
    %v6002 = vpop.f32.mrb[0].mxu0
    %v6003 = vadd.f32 %v78, %v6002
    %v6004 = vpop.f32.mrb[0].mxu0
    %v6005 = vadd.f32 %v82, %v6004
    %6006 = vdwg.mxu0
    %6007 = vmatprep.subr.mxu0 0.0
    %6008 = vmatpush1.msra.mxu0 %v473
    %6009 = vmatprep.subr.mxu0 0.0
    %6010 = vmatpush1.msra.mxu0 %v476
    %6011 = vmatprep.subr.mxu0 0.0
    %6012 = vmatpush1.msra.mxu0 %v479
    %6013 = vmatprep.subr.mxu0 0.0
    %6014 = vmatpush1.msra.mxu0 %v482
    %6015 = vmatprep.subr.mxu0 0.0
    %6016 = vmatpush1.msra.mxu0 %v485
    %6017 = vmatprep.subr.mxu0 0.0
    %6018 = vmatpush1.msra.mxu0 %v488
    %6019 = vmatprep.subr.mxu0 0.0
    %6020 = vmatpush1.msra.mxu0 0.0
    %6021 = vmatprep.subr.mxu0 0.0
    %6022 = vmatpush1.msra.mxu0 0.0
    %6023 = vmatprep.subr.mxu0 0.0
    %6024 = vmatpush1.msra.mxu0 0.0
    %6025 = vmatprep.subr.mxu0 0.0
    %6026 = vmatpush1.msra.mxu0 0.0
    %6027 = vmatprep.subr.mxu0 0.0
    %6028 = vmatpush1.msra.mxu0 0.0
    %6029 = vmatprep.subr.mxu0 0.0
    %6030 = vmatpush1.msra.mxu0 0.0
    %6031 = vmatprep.subr.mxu0 0.0
    %6032 = vmatpush1.msra.mxu0 0.0
    %6033 = vmatprep.subr.mxu0 0.0
    %6034 = vmatpush1.msra.mxu0 0.0
    %6035 = vmatprep.subr.mxu0 0.0
    %6036 = vmatpush1.msra.mxu0 0.0
    %6037 = vmatprep.subr.mxu0 0.0
    %6038 = vmatpush1.msra.mxu0 0.0
    %6039 = vmatprep.subr.mxu0 0.0
    %6040 = vmatpush1.msra.mxu0 0.0
    %6041 = vmatprep.subr.mxu0 0.0
    %6042 = vmatpush1.msra.mxu0 0.0
    %6043 = vmatprep.subr.mxu0 0.0
    %6044 = vmatpush1.msra.mxu0 0.0
    %6045 = vmatprep.subr.mxu0 0.0
    %6046 = vmatpush1.msra.mxu0 0.0
    %6047 = vmatprep.subr.mxu0 0.0
    %6048 = vmatpush1.msra.mxu0 0.0
    %6049 = vmatprep.subr.mxu0 0.0
    %6050 = vmatpush1.msra.mxu0 0.0
    %6051 = vmatprep.subr.mxu0 0.0
    %6052 = vmatpush1.msra.mxu0 0.0
    %6053 = vmatprep.subr.mxu0 0.0
    %6054 = vmatpush1.msra.mxu0 0.0
    %6055 = vmatprep.subr.mxu0 0.0
    %6056 = vmatpush1.msra.mxu0 0.0
    %6057 = vmatprep.subr.mxu0 0.0
    %6058 = vmatpush1.msra.mxu0 0.0
    %6059 = vmatprep.subr.mxu0 0.0
    %6060 = vmatpush1.msra.mxu0 0.0
    %6061 = vmatprep.subr.mxu0 0.0
    %6062 = vmatpush1.msra.mxu0 0.0
    %6063 = vmatprep.subr.mxu0 0.0
    %6064 = vmatpush1.msra.mxu0 0.0
    %6065 = vmatprep.subr.mxu0 0.0
    %6066 = vmatpush1.msra.mxu0 0.0
    %6067 = vmatprep.subr.mxu0 0.0
    %6068 = vmatpush1.msra.mxu0 0.0
    %6069 = vmatprep.subr.mxu0 0.0
    %6070 = vmatpush1.msra.mxu0 0.0
    %6071 = vmatprep.mubr.f32.mxu0 0.0
    %6072 = vmatmul.mubr.f32.gmra.mrb[0].mxu0 %v5934
    %v6073 = vpop.f32.mrb[0].mxu0
    %v6074 = vadd.f32 %v86, %v6073
    %v6075 = vpop.f32.mrb[0].mxu0
    %6076 = vdwg.mxu0
    %v6078 = vsel %vm508, %v5763, 0
    %6080 = vmatprep.subr.mxu0 %v490
    %6081 = vmatpush1.msra.mxu0 %v489
    %6082 = vmatprep.subr.mxu0 %v493
    %6083 = vmatpush1.msra.mxu0 %v492
    %6084 = vmatprep.subr.mxu0 %v496
    %6085 = vmatpush1.msra.mxu0 %v495
    %6086 = vmatprep.subr.mxu0 %v499
    %6087 = vmatpush1.msra.mxu0 %v498
    %6088 = vmatprep.subr.mxu0 %v502
    %6089 = vmatpush1.msra.mxu0 %v501
    %6090 = vmatprep.subr.mxu0 %v505
    %6091 = vmatpush1.msra.mxu0 %v504
    %6092 = vmatprep.subr.mxu0 0.0
    %6093 = vmatpush1.msra.mxu0 0.0
    %6094 = vmatprep.subr.mxu0 0.0
    %6095 = vmatpush1.msra.mxu0 0.0
    %6096 = vmatprep.subr.mxu0 0.0
    %6097 = vmatpush1.msra.mxu0 0.0
    %6098 = vmatprep.subr.mxu0 0.0
    %6099 = vmatpush1.msra.mxu0 0.0
    %6100 = vmatprep.subr.mxu0 0.0
    %6101 = vmatpush1.msra.mxu0 0.0
    %6102 = vmatprep.subr.mxu0 0.0
    %6103 = vmatpush1.msra.mxu0 0.0
    %6104 = vmatprep.subr.mxu0 0.0
    %6105 = vmatpush1.msra.mxu0 0.0
    %6106 = vmatprep.subr.mxu0 0.0
    %6107 = vmatpush1.msra.mxu0 0.0
    %6108 = vmatprep.subr.mxu0 0.0
    %6109 = vmatpush1.msra.mxu0 0.0
    %6110 = vmatprep.subr.mxu0 0.0
    %6111 = vmatpush1.msra.mxu0 0.0
    %6112 = vmatprep.subr.mxu0 0.0
    %6113 = vmatpush1.msra.mxu0 0.0
    %6114 = vmatprep.subr.mxu0 0.0
    %6115 = vmatpush1.msra.mxu0 0.0
    %6116 = vmatprep.subr.mxu0 0.0
    %6117 = vmatpush1.msra.mxu0 0.0
    %6118 = vmatprep.subr.mxu0 0.0
    %6119 = vmatpush1.msra.mxu0 0.0
    %6120 = vmatprep.subr.mxu0 0.0
    %6121 = vmatpush1.msra.mxu0 0.0
    %6122 = vmatprep.subr.mxu0 0.0
    %6123 = vmatpush1.msra.mxu0 0.0
    %6124 = vmatprep.subr.mxu0 0.0
    %6125 = vmatpush1.msra.mxu0 0.0
    %6126 = vmatprep.subr.mxu0 0.0
    %6127 = vmatpush1.msra.mxu0 0.0
    %6128 = vmatprep.subr.mxu0 0.0
    %6129 = vmatpush1.msra.mxu0 0.0
    %6130 = vmatprep.subr.mxu0 0.0
    %6131 = vmatpush1.msra.mxu0 0.0
    %6132 = vmatprep.subr.mxu0 0.0
    %6133 = vmatpush1.msra.mxu0 0.0
    %6134 = vmatprep.subr.mxu0 0.0
    %6135 = vmatpush1.msra.mxu0 0.0
    %6136 = vmatprep.subr.mxu0 0.0
    %6137 = vmatpush1.msra.mxu0 0.0
    %6138 = vmatprep.subr.mxu0 0.0
    %6139 = vmatpush1.msra.mxu0 0.0
    %6140 = vmatprep.subr.mxu0 0.0
    %6141 = vmatpush1.msra.mxu0 0.0
    %6142 = vmatprep.subr.mxu0 0.0
    %6143 = vmatpush1.msra.mxu0 0.0
    %6144 = vmatprep.mubr.f32.mxu0 0.0
    %6145 = vmatmul.mubr.f32.gmra.mrb[0].mxu0 %v6078
    %v6146 = vpop.f32.mrb[0].mxu0
    %v6147 = vadd.f32 %v96, %v6146
    %v6148 = vpop.f32.mrb[0].mxu0
    %v6149 = vadd.f32 %v100, %v6148
    %6150 = vdwg.mxu0
    %6151 = vmatprep.subr.mxu0 0.0
    %6152 = vmatpush1.msra.mxu0 %v491
    %6153 = vmatprep.subr.mxu0 0.0
    %6154 = vmatpush1.msra.mxu0 %v494
    %6155 = vmatprep.subr.mxu0 0.0
    %6156 = vmatpush1.msra.mxu0 %v497
    %6157 = vmatprep.subr.mxu0 0.0
    %6158 = vmatpush1.msra.mxu0 %v500
    %6159 = vmatprep.subr.mxu0 0.0
    %6160 = vmatpush1.msra.mxu0 %v503
    %6161 = vmatprep.subr.mxu0 0.0
    %6162 = vmatpush1.msra.mxu0 %v506
    %6163 = vmatprep.subr.mxu0 0.0
    %6164 = vmatpush1.msra.mxu0 0.0
    %6165 = vmatprep.subr.mxu0 0.0
    %6166 = vmatpush1.msra.mxu0 0.0
    %6167 = vmatprep.subr.mxu0 0.0
    %6168 = vmatpush1.msra.mxu0 0.0
    %6169 = vmatprep.subr.mxu0 0.0
    %6170 = vmatpush1.msra.mxu0 0.0
    %6171 = vmatprep.subr.mxu0 0.0
    %6172 = vmatpush1.msra.mxu0 0.0
    %6173 = vmatprep.subr.mxu0 0.0
    %6174 = vmatpush1.msra.mxu0 0.0
    %6175 = vmatprep.subr.mxu0 0.0
    %6176 = vmatpush1.msra.mxu0 0.0
    %6177 = vmatprep.subr.mxu0 0.0
    %6178 = vmatpush1.msra.mxu0 0.0
    %6179 = vmatprep.subr.mxu0 0.0
    %6180 = vmatpush1.msra.mxu0 0.0
    %6181 = vmatprep.subr.mxu0 0.0
    %6182 = vmatpush1.msra.mxu0 0.0
    %6183 = vmatprep.subr.mxu0 0.0
    %6184 = vmatpush1.msra.mxu0 0.0
    %6185 = vmatprep.subr.mxu0 0.0
    %6186 = vmatpush1.msra.mxu0 0.0
    %6187 = vmatprep.subr.mxu0 0.0
    %6188 = vmatpush1.msra.mxu0 0.0
    %6189 = vmatprep.subr.mxu0 0.0
    %6190 = vmatpush1.msra.mxu0 0.0
    %6191 = vmatprep.subr.mxu0 0.0
    %6192 = vmatpush1.msra.mxu0 0.0
    %6193 = vmatprep.subr.mxu0 0.0
    %6194 = vmatpush1.msra.mxu0 0.0
    %6195 = vmatprep.subr.mxu0 0.0
    %6196 = vmatpush1.msra.mxu0 0.0
    %6197 = vmatprep.subr.mxu0 0.0
    %6198 = vmatpush1.msra.mxu0 0.0
    %6199 = vmatprep.subr.mxu0 0.0
    %6200 = vmatpush1.msra.mxu0 0.0
    %6201 = vmatprep.subr.mxu0 0.0
    %6202 = vmatpush1.msra.mxu0 0.0
    %6203 = vmatprep.subr.mxu0 0.0
    %6204 = vmatpush1.msra.mxu0 0.0
    %6205 = vmatprep.subr.mxu0 0.0
    %6206 = vmatpush1.msra.mxu0 0.0
    %6207 = vmatprep.subr.mxu0 0.0
    %6208 = vmatpush1.msra.mxu0 0.0
    %6209 = vmatprep.subr.mxu0 0.0
    %6210 = vmatpush1.msra.mxu0 0.0
    %6211 = vmatprep.subr.mxu0 0.0
    %6212 = vmatpush1.msra.mxu0 0.0
    %6213 = vmatprep.subr.mxu0 0.0
    %6214 = vmatpush1.msra.mxu0 0.0
    %6215 = vmatprep.mubr.f32.mxu0 0.0
    %6216 = vmatmul.mubr.f32.gmra.mrb[0].mxu0 %v6078
    %v6217 = vpop.f32.mrb[0].mxu0
    %v6218 = vadd.f32 %v104, %v6217
    %v6219 = vpop.f32.mrb[0].mxu0
    %6220 = vdwg.mxu0
    %v6221 = vadd.f32 %v6003, %v6147
    %v6222 = vxor.u32 %v6221, 2147483648
    %v6223 = vmul.f32 %v6222, 1.442695
    %v6224 = vpow.pop %v6223
    %v6225 = vadd.f32 %v6224, 1.0
    %v6226 = vrcp.pop %v6225
    %v6227 = vmul.f32 1.0, %v6226
    %v6228 = vadd.f32 %v6005, %v6149
    %v6229 = vxor.u32 %v6228, 2147483648
    %v6230 = vmul.f32 %v6229, 1.442695
    %v6231 = vpow.pop %v6230
    %v6232 = vadd.f32 %v6231, 1.0
    %v6233 = vrcp.pop %v6232
    %v6234 = vmul.f32 1.0, %v6233
    %v6235 = vmul.f32 %v6227, %v6218
    %v6236 = vadd.f32 %v6074, %v6235
    %v6237 = vtanh.pop %v6236
    %v6238 = vsub.f32 1.0, %v6234
    %v6239 = vmul.f32 %v6238, %v6237
    %v6240 = vmul.f32 %v6234, %v5763
    %v6241 = vadd.f32 %v6239, %v6240
    %v6242 = vrot.slane %v5285, 6
    %v6244 = vrot.slane %v5763, 4
    %v6247 = vrot.slane %v6241, 2
    %vm6249 = vcmask 1041408
    %v6250 = vsel %vm6249, %v4807, %v6242
    %vm6251 = vcmask 1043456
    %v6252 = vsel %vm6251, %v6250, %v6244
    %vm6253 = vcmask 1045504
    %v6254 = vsel %vm6253, %v6252, %v6247
    %v6255 = vld [vmem:[#allocation5 + $0x1e0] sm:$0xff]
    %v6256 = vld [vmem:[#allocation5 + $0x1e8] sm:$0xff]
    %v6257 = vld [vmem:[#allocation5 + $0x1f8] sm:$0xff]
    %v6258 = vld [vmem:[#allocation5 + $0x200] sm:$0xff]
    %v6259 = vld [vmem:[#allocation5 + $0x210] sm:$0xff]
    %v6260 = vld [vmem:[#allocation5 + $0x218] sm:$0xff]
    %v6261 = vld [vmem:[#allocation5 + $0x228] sm:$0xff]
    %v6262 = vld [vmem:[#allocation5 + $0x230] sm:$0xff]
    %v6263 = vld [vmem:[#allocation5 + $0x240] sm:$0xff]
    %v6264 = vld [vmem:[#allocation5 + $0x248] sm:$0xff]
    %v6265 = vld [vmem:[#allocation5 + $0x258] sm:$0xff]
    %v6266 = vld [vmem:[#allocation5 + $0x260] sm:$0xff]
    %v6268 = vlaneseq
    %v6269 = vshrl.u32 %v6268, 7
    %v6270 = vsub.s32 0, %v6269
    %v6271 = vrot.slane %v109, %v6270
    %v6274 = vsel %vm508, %v6254, 0
    %6276 = vmatprep.subr.mxu0 %v6256
    %6277 = vmatpush1.msra.mxu0 %v6255
    %6278 = vmatprep.subr.mxu0 %v6258
    %6279 = vmatpush1.msra.mxu0 %v6257
    %6280 = vmatprep.subr.mxu0 %v6260
    %6281 = vmatpush1.msra.mxu0 %v6259
    %6282 = vmatprep.subr.mxu0 %v6262
    %6283 = vmatpush1.msra.mxu0 %v6261
    %6284 = vmatprep.subr.mxu0 %v6264
    %6285 = vmatpush1.msra.mxu0 %v6263
    %6286 = vmatprep.subr.mxu0 %v6266
    %6287 = vmatpush1.msra.mxu0 %v6265
    %6288 = vmatprep.subr.mxu0 0.0
    %6289 = vmatpush1.msra.mxu0 0.0
    %6290 = vmatprep.subr.mxu0 0.0
    %6291 = vmatpush1.msra.mxu0 0.0
    %6292 = vmatprep.subr.mxu0 0.0
    %6293 = vmatpush1.msra.mxu0 0.0
    %6294 = vmatprep.subr.mxu0 0.0
    %6295 = vmatpush1.msra.mxu0 0.0
    %6296 = vmatprep.subr.mxu0 0.0
    %6297 = vmatpush1.msra.mxu0 0.0
    %6298 = vmatprep.subr.mxu0 0.0
    %6299 = vmatpush1.msra.mxu0 0.0
    %6300 = vmatprep.subr.mxu0 0.0
    %6301 = vmatpush1.msra.mxu0 0.0
    %6302 = vmatprep.subr.mxu0 0.0
    %6303 = vmatpush1.msra.mxu0 0.0
    %6304 = vmatprep.subr.mxu0 0.0
    %6305 = vmatpush1.msra.mxu0 0.0
    %6306 = vmatprep.subr.mxu0 0.0
    %6307 = vmatpush1.msra.mxu0 0.0
    %6308 = vmatprep.subr.mxu0 0.0
    %6309 = vmatpush1.msra.mxu0 0.0
    %6310 = vmatprep.subr.mxu0 0.0
    %6311 = vmatpush1.msra.mxu0 0.0
    %6312 = vmatprep.subr.mxu0 0.0
    %6313 = vmatpush1.msra.mxu0 0.0
    %6314 = vmatprep.subr.mxu0 0.0
    %6315 = vmatpush1.msra.mxu0 0.0
    %6316 = vmatprep.subr.mxu0 0.0
    %6317 = vmatpush1.msra.mxu0 0.0
    %6318 = vmatprep.subr.mxu0 0.0
    %6319 = vmatpush1.msra.mxu0 0.0
    %6320 = vmatprep.subr.mxu0 0.0
    %6321 = vmatpush1.msra.mxu0 0.0
    %6322 = vmatprep.subr.mxu0 0.0
    %6323 = vmatpush1.msra.mxu0 0.0
    %6324 = vmatprep.subr.mxu0 0.0
    %6325 = vmatpush1.msra.mxu0 0.0
    %6326 = vmatprep.subr.mxu0 0.0
    %6327 = vmatpush1.msra.mxu0 0.0
    %6328 = vmatprep.subr.mxu0 0.0
    %6329 = vmatpush1.msra.mxu0 0.0
    %6330 = vmatprep.subr.mxu0 0.0
    %6331 = vmatpush1.msra.mxu0 0.0
    %6332 = vmatprep.subr.mxu0 0.0
    %6333 = vmatpush1.msra.mxu0 0.0
    %6334 = vmatprep.subr.mxu0 0.0
    %6335 = vmatpush1.msra.mxu0 0.0
    %6336 = vmatprep.subr.mxu0 0.0
    %6337 = vmatpush1.msra.mxu0 0.0
    %6338 = vmatprep.subr.mxu0 0.0
    %6339 = vmatpush1.msra.mxu0 0.0
    %6340 = vmatprep.mubr.f32.mxu0 0.0
    %6341 = vmatmul.mubr.f32.gmra.mrb[0].mxu0 %v6274
    %v6342 = vpop.f32.mrb[0].mxu0
    %v6343 = vadd.f32 %v6271, %v6342
    %v6344 = vpop.f32.mrb[0].mxu0
    %6345 = vdwg.mxu0
    %v6347 = vcombine.high %v6343, %v6343
    %v6349 = vunpack.c.l.s4 1983009808
    %v6350 = vunpack.c.0.s8 %v6349
    %v6351 = vlaneseq
    %v6352 = vshrl.u32 %v6351, 7
    %v6353 = vsub.s32 %v6350, %v6352
    %v6354 = vrot.slane %v6343, %v6353
    %v6356 = vunpack.c.l.s4 1983009808
    %v6357 = vunpack.c.0.s8 %v6356
    %v6358 = vlaneseq
    %v6359 = vshrl.u32 %v6358, 7
    %v6360 = vsub.s32 %v6357, %v6359
    %v6361 = vrot.slane %v6347, %v6360
    %v6362 = vcombine.high %v6354, %v6354
    %v6363 = vcombine.high %v6361, %v6361
    %vm6368 = vcmask 17408
    %6369 = vst.msk [vmem:[%s3] sm:$0x3] %vm6368, %v6354
    %6370 = vst.msk [vmem:[%s3 + $0x2] sm:$0x3] %vm6368, %v6362
    %6371 = vst.msk [vmem:[%s3 + $0x4] sm:$0x3] %vm6368, %v6361
    %6372 = vst.msk [vmem:[%s3 + $0x6] sm:$0x3] %vm6368, %v6363
    // Predicated region
    $region26: #{tpu_custom_call.1} parent=1 // pred_check
      _
    $region27: #{tpu_custom_call.1} parent=1 // pred_check_branch
      %6374 = sbr.rel (0) target = $region29
    $region28: #{tpu_custom_call.1} parent=1 // pred_region
      _
    $region29: #{tpu_custom_call.1} parent=1 // pred_fallthru
      _
    // Predicated region
    $region30: #{tpu_custom_call.1} parent=1 // pred_check
      _
    $region31: #{tpu_custom_call.1} parent=1 // pred_check_branch
      %6376 = sbr.rel (0) target = $region33
    $region32: #{tpu_custom_call.1} parent=1 // pred_region
      _
    $region33: #{tpu_custom_call.1} parent=1 // pred_fallthru
      _
    %6377 = vsyncpa [#allocation4], 1
    %6378 = vsyncpa [#allocation6], 1

</llo_original>
